<compile_context>
chip_gen: v6e
topology: v6e:2x2x1
jax: 0.10.0
libtpu: 0.0.40
codegen_flags: <defaults>
</compile_context>

<pallas_src>
import functools

import jax
import jax.numpy as jnp
from jax.experimental import pallas as pl
from jax.experimental.pallas import tpu as pltpu

LANES = 128


def _round_up(n, m=LANES):
    return ((n + m - 1) // m) * m


def _act(y, act):
    if act == "relu6":
        return jnp.clip(y, 0.0, 6.0)
    if act == "relu":
        return jnp.maximum(y, 0.0)
    return y


# ----------------------------------------------------------------------------
# Fused InvertedResidualBlock kernel (one batch item per grid step)
# ----------------------------------------------------------------------------
def _irb_kernel(x_ref, w1_ref, s1_ref, b1_ref,
                wd_ref, sd_ref, bd_ref,
                w2_ref, s2_ref, b2_ref,
                wse1_ref, bse1_ref, wse2_ref, bse2_ref,
                o_ref, hid_ref,
                *, H, W, Ho, Wo, k, stride, padding, dilation,
                has_pw1, use_res, use_se, act):
    x = x_ref[0]                                    # (H, W, CINP)  f32
    cinp = x.shape[-1]
    hidp = hid_ref.shape[-1]

    # ---- pw1: 1x1 expansion + folded BN + activation ------------------------
    if has_pw1:
        a = x.reshape(H * W, cinp)
        h = jnp.dot(a.astype(jnp.bfloat16), w1_ref[...],
                    preferred_element_type=jnp.float32)
        h = _act(h * s1_ref[...] + b1_ref[...], act)
        h = h.reshape(H, W, hidp)
    else:
        h = x                                       # hidden channels == input

    # ---- stage hidden activation into spatially padded VMEM scratch ---------
    hid_ref[...] = jnp.zeros_like(hid_ref)
    hid_ref[padding:padding + H, padding:padding + W, :] = h

    # ---- depthwise kxk conv (stride / dilation applied in-kernel) + BN + act
    wd = wd_ref[...]                                # (k*k, HIDP)
    acc = jnp.zeros((Ho, Wo, hidp), jnp.float32)
    for kh in range(k):
        for kw in range(k):
            h0 = kh * dilation
            w0 = kw * dilation
            if stride == 1:
                tap = hid_ref[pl.ds(h0, Ho), pl.ds(w0, Wo), :]
            else:
                tap = hid_ref[pl.ds(h0, Ho, stride), pl.ds(w0, Wo, stride), :]
            acc = acc + tap * wd[kh * k + kw]
    hd = _act(acc * sd_ref[...] + bd_ref[...], act)

    # ---- pw2: 1x1 projection + folded BN + activation ------------------------
    y = jnp.dot(hd.reshape(Ho * Wo, hidp).astype(jnp.bfloat16), w2_ref[...],
                preferred_element_type=jnp.float32)
    y = _act(y * s2_ref[...] + b2_ref[...], act)

    # ---- residual add (fused epilogue; matches reference ordering) ----------
    if use_res:
        y = y + x.reshape(H * W, cinp)

    # ---- squeeze & excite on the block output (reference ordering) ----------
    if use_se:
        gap = jnp.mean(y, axis=0, keepdims=True)    # (1, COUTP)
        e = jnp.dot(gap.astype(jnp.bfloat16), wse1_ref[...],
                    preferred_element_type=jnp.float32) + bse1_ref[...]
        e = jnp.maximum(e, 0.0)
        s = jnp.dot(e.astype(jnp.bfloat16), wse2_ref[...],
                    preferred_element_type=jnp.float32) + bse2_ref[...]
        s = jax.nn.sigmoid(s)
        y = y * s

    o_ref[0] = y.reshape(Ho, Wo, y.shape[-1])


# ----------------------------------------------------------------------------
# Wrapper: NCHW in / NCHW out, lane-dense padding handled outside the kernel
# ----------------------------------------------------------------------------
def inverted_residual_block(x_nchw, tensors, cfg):
    cin, cout, hidden = cfg["cin"], cfg["cout"], cfg["hidden"]
    k, stride = cfg["kernel_size"], cfg["stride"]
    padding, dilation = cfg["padding"], cfg["dilation"]
    se, act = cfg["se"], cfg["act"]
    has_pw1 = cfg["expand_ratio"] != 1
    use_res = (stride == 1) and (cin == cout)

    B, C, H, W = x_nchw.shape
    assert C == cin, (C, cin)

    CINP = _round_up(cin)
    HIDP = _round_up(hidden)
    COUTP = _round_up(cout)
    SEP = _round_up(max(cout // 4, 1))

    Ho = (H + 2 * padding - dilation * (k - 1) - 1) // stride + 1
    Wo = (W + 2 * padding - dilation * (k - 1) - 1) // stride + 1
    Hp, Wp = H + 2 * padding, W + 2 * padding

    x = jnp.transpose(x_nchw, (0, 2, 3, 1)).astype(jnp.float32)       # NHWC
    x = jnp.pad(x, ((0, 0), (0, 0), (0, 0), (0, CINP - cin)))          # lane-dense

    kernel = functools.partial(
        _irb_kernel, H=H, W=W, Ho=Ho, Wo=Wo, k=k, stride=stride,
        padding=padding, dilation=dilation,
        has_pw1=has_pw1, use_res=use_res, use_se=se, act=act)

    flops = 2 * B * (H * W * CINP * HIDP
                     + Ho * Wo * k * k * HIDP
                     + Ho * Wo * HIDP * COUTP
                     + 2 * COUTP * SEP)
    bytes_accessed = 4 * B * (H * W * CINP + Ho * Wo * COUTP)

    out = pl.pallas_call(
        kernel,
        out_shape=jax.ShapeDtypeStruct((B, Ho, Wo, COUTP), jnp.float32),
        grid=(B,),
        in_specs=[
            pl.BlockSpec((1, H, W, CINP), lambda b: (b, 0, 0, 0)),
            pl.BlockSpec((CINP, HIDP), lambda b: (0, 0)),
            pl.BlockSpec((1, HIDP), lambda b: (0, 0)),
            pl.BlockSpec((1, HIDP), lambda b: (0, 0)),
            pl.BlockSpec((k * k, HIDP), lambda b: (0, 0)),
            pl.BlockSpec((1, HIDP), lambda b: (0, 0)),
            pl.BlockSpec((1, HIDP), lambda b: (0, 0)),
            pl.BlockSpec((HIDP, COUTP), lambda b: (0, 0)),
            pl.BlockSpec((1, COUTP), lambda b: (0, 0)),
            pl.BlockSpec((1, COUTP), lambda b: (0, 0)),
            pl.BlockSpec((COUTP, SEP), lambda b: (0, 0)),
            pl.BlockSpec((1, SEP), lambda b: (0, 0)),
            pl.BlockSpec((SEP, COUTP), lambda b: (0, 0)),
            pl.BlockSpec((1, COUTP), lambda b: (0, 0)),
        ],
        out_specs=pl.BlockSpec((1, Ho, Wo, COUTP), lambda b: (b, 0, 0, 0)),
        scratch_shapes=[pltpu.VMEM((Hp, Wp, HIDP), jnp.float32)],
        compiler_params=pltpu.CompilerParams(
            dimension_semantics=("parallel",)),
        cost_estimate=pl.CostEstimate(
            flops=int(flops), transcendentals=int(B * (COUTP + SEP)),
            bytes_accessed=int(bytes_accessed)),
    )(x, tensors["w1"], tensors["s1"], tensors["b1"],
      tensors["wd"], tensors["sd"], tensors["bd"],
      tensors["w2"], tensors["s2"], tensors["b2"],
      tensors["wse1"], tensors["bse1"], tensors["wse2"], tensors["bse2"])

    out = out[..., :cout]                                              # drop lane pad
    return jnp.transpose(out, (0, 3, 1, 2))                           # NHWC -> NCHW


# ----------------------------------------------------------------------------
# Deterministic synthetic parameter construction (eval-mode BN folded)
# ----------------------------------------------------------------------------
def _bn_fold(key, c, eps=1e-5):
    k1, k2, k3, k4 = jax.random.split(key, 4)
    gamma = 1.0 + 0.1 * jax.random.normal(k1, (c,))
    beta = 0.05 * jax.random.normal(k2, (c,))
    mean = 0.02 * jax.random.normal(k3, (c,))
    var = jnp.abs(1.0 + 0.1 * jax.random.normal(k4, (c,)))
    s = gamma / jnp.sqrt(var + eps)
    b = beta - mean * s
    return s.astype(jnp.float32), b.astype(jnp.float32)


def _pad2(a, rows, cols):
    return jnp.pad(a, ((0, rows - a.shape[0]), (0, cols - a.shape[1])))


def _pad_row(v, cols):
    v = v.reshape(1, -1)
    return jnp.pad(v, ((0, 0), (0, cols - v.shape[1])))


def make_irb(key, cin, cout, *, kernel_size=3, stride=1, padding=0, dilation=1,
             expand_ratio=1, se=True, act="relu6"):
    hidden = int(round(cin * expand_ratio))
    CINP, HIDP, COUTP = _round_up(cin), _round_up(hidden), _round_up(cout)
    se_hidden = max(cout // 4, 1)
    SEP = _round_up(se_hidden)
    keys = jax.random.split(key, 10)

    cfg = dict(cin=cin, cout=cout, hidden=hidden, kernel_size=kernel_size,
               stride=stride, padding=padding, dilation=dilation,
               expand_ratio=expand_ratio, se=se, act=act)
    t = {}

    # pw1 (1x1 expansion); placeholders (unused in-kernel) when expand_ratio==1.
    if expand_ratio != 1:
        w1 = 0.1 * jax.random.normal(keys[0], (cin, hidden))
        s1, b1 = _bn_fold(keys[1], hidden)
    else:
        w1 = jnp.zeros((cin, hidden), jnp.float32)
        s1 = jnp.zeros((hidden,), jnp.float32)
        b1 = jnp.zeros((hidden,), jnp.float32)
    t["w1"] = _pad2(w1, CINP, HIDP).astype(jnp.bfloat16)
    t["s1"] = _pad_row(s1, HIDP).astype(jnp.float32)
    t["b1"] = _pad_row(b1, HIDP).astype(jnp.float32)

    # depthwise kxk (taps flattened kh*k + kw).
    wd = 0.1 * jax.random.normal(keys[2], (kernel_size * kernel_size, hidden))
    sd, bd = _bn_fold(keys[3], hidden)
    t["wd"] = _pad2(wd, kernel_size * kernel_size, HIDP).astype(jnp.float32)
    t["sd"] = _pad_row(sd, HIDP).astype(jnp.float32)
    t["bd"] = _pad_row(bd, HIDP).astype(jnp.float32)

    # pw2 (1x1 projection).
    w2 = 0.1 * jax.random.normal(keys[4], (hidden, cout))
    s2, b2 = _bn_fold(keys[5], cout)
    t["w2"] = _pad2(w2, HIDP, COUTP).astype(jnp.bfloat16)
    t["s2"] = _pad_row(s2, COUTP).astype(jnp.float32)
    t["b2"] = _pad_row(b2, COUTP).astype(jnp.float32)

    # SE excitation: Linear(cout, cout//4) -> ReLU -> Linear(cout//4, cout) -> Sigmoid.
    wse1 = 0.1 * jax.random.normal(keys[6], (cout, se_hidden))
    bse1 = 0.05 * jax.random.normal(keys[7], (se_hidden,))
    wse2 = 0.1 * jax.random.normal(keys[8], (se_hidden, cout))
    bse2 = 0.05 * jax.random.normal(keys[9], (cout,))
    t["wse1"] = _pad2(wse1, COUTP, SEP).astype(jnp.bfloat16)
    t["bse1"] = _pad_row(bse1, SEP).astype(jnp.float32)
    t["wse2"] = _pad2(wse2, SEP, COUTP).astype(jnp.bfloat16)
    t["bse2"] = _pad_row(bse2, COUTP).astype(jnp.float32)

    return cfg, t


# ----------------------------------------------------------------------------
# Main
# ----------------------------------------------------------------------------
if __name__ == "__main__":
    key = jax.random.PRNGKey(0)
    kx, k1, k2, k3 = jax.random.split(key, 4)

    # NCHW input, matching the PyTorch module's layout.
    x = jax.random.normal(kx, (2, 4, 16, 16), dtype=jnp.float32)

    # Three representative InvertedResidualBlock configurations:
    #   1) expansion + residual + SE      2) stride-2, expand=1, no residual
    #   3) dilated (pad=2, dil=2) + residual
    cfg1, t1 = make_irb(k1, 4, 4, kernel_size=3, stride=1, padding=1,
                        dilation=1, expand_ratio=2, se=True)
    cfg2, t2 = make_irb(k2, 4, 8, kernel_size=3, stride=2, padding=1,
                        dilation=1, expand_ratio=1, se=True)
    cfg3, t3 = make_irb(k3, 8, 8, kernel_size=3, stride=1, padding=2,
                        dilation=2, expand_ratio=1, se=True)

    def forward(x, t1, t2, t3):
        y = inverted_residual_block(x, t1, cfg1)   # (2, 4, 16, 16)
        y = inverted_residual_block(y, t2, cfg2)   # (2, 8, 8, 8)
        y = inverted_residual_block(y, t3, cfg3)   # (2, 8, 8, 8)
        return y

    out = jax.block_until_ready(jax.jit(forward)(x, t1, t2, t3))

    assert out.shape == (2, 8, 8, 8), out.shape
    assert bool(jnp.all(jnp.isfinite(out)))
    print("KERNEL_OK")
</pallas_src>

<mosaic_0001>
module attributes {stable_mosaic.version = 11 : i64} {
  func.func @_irb_kernel(%arg0: i32, %arg1: memref<1x16x16x128xf32, #tpu.memory_space<vmem>>, %arg2: memref<128x128xbf16, #tpu.memory_space<vmem>>, %arg3: memref<1x128xf32, #tpu.memory_space<vmem>>, %arg4: memref<1x128xf32, #tpu.memory_space<vmem>>, %arg5: memref<9x128xf32, #tpu.memory_space<vmem>>, %arg6: memref<1x128xf32, #tpu.memory_space<vmem>>, %arg7: memref<1x128xf32, #tpu.memory_space<vmem>>, %arg8: memref<128x128xbf16, #tpu.memory_space<vmem>>, %arg9: memref<1x128xf32, #tpu.memory_space<vmem>>, %arg10: memref<1x128xf32, #tpu.memory_space<vmem>>, %arg11: memref<128x128xbf16, #tpu.memory_space<vmem>>, %arg12: memref<1x128xf32, #tpu.memory_space<vmem>>, %arg13: memref<128x128xbf16, #tpu.memory_space<vmem>>, %arg14: memref<1x128xf32, #tpu.memory_space<vmem>>, %arg15: memref<1x16x16x128xf32, #tpu.memory_space<vmem>>, %arg16: memref<18x18x128xf32, #tpu.memory_space<vmem>>) attributes {dimension_semantics = [#tpu.dimension_semantics<parallel>], iteration_bounds = array<i64: 2>, scalar_prefetch = 0 : i64, scratch_operands = 1 : i64, tpu.core_type = #tpu.core_type<tc>, window_params = [{transform_indices = @transform_0, window_bounds = array<i64: 1, 16, 16, 128>}, {pipeline_mode = #tpu.pipeline_mode<synchronous>, transform_indices = @transform_1, window_bounds = array<i64: 128, 128>}, {pipeline_mode = #tpu.pipeline_mode<synchronous>, transform_indices = @transform_2, window_bounds = array<i64: 1, 128>}, {pipeline_mode = #tpu.pipeline_mode<synchronous>, transform_indices = @transform_3, window_bounds = array<i64: 1, 128>}, {pipeline_mode = #tpu.pipeline_mode<synchronous>, transform_indices = @transform_4, window_bounds = array<i64: 9, 128>}, {pipeline_mode = #tpu.pipeline_mode<synchronous>, transform_indices = @transform_5, window_bounds = array<i64: 1, 128>}, {pipeline_mode = #tpu.pipeline_mode<synchronous>, transform_indices = @transform_6, window_bounds = array<i64: 1, 128>}, {pipeline_mode = #tpu.pipeline_mode<synchronous>, transform_indices = @transform_7, window_bounds = array<i64: 128, 128>}, {pipeline_mode = #tpu.pipeline_mode<synchronous>, transform_indices = @transform_8, window_bounds = array<i64: 1, 128>}, {pipeline_mode = #tpu.pipeline_mode<synchronous>, transform_indices = @transform_9, window_bounds = array<i64: 1, 128>}, {pipeline_mode = #tpu.pipeline_mode<synchronous>, transform_indices = @transform_10, window_bounds = array<i64: 128, 128>}, {pipeline_mode = #tpu.pipeline_mode<synchronous>, transform_indices = @transform_11, window_bounds = array<i64: 1, 128>}, {pipeline_mode = #tpu.pipeline_mode<synchronous>, transform_indices = @transform_12, window_bounds = array<i64: 128, 128>}, {pipeline_mode = #tpu.pipeline_mode<synchronous>, transform_indices = @transform_13, window_bounds = array<i64: 1, 128>}, {transform_indices = @transform_14, window_bounds = array<i64: 1, 16, 16, 128>}]} {
    %c0 = arith.constant 0 : index
    %c0_0 = arith.constant 0 : index
    %c0_1 = arith.constant 0 : index
    %c0_2 = arith.constant 0 : index
    %0 = vector.load %arg1[%c0, %c0_0, %c0_1, %c0_2] : memref<1x16x16x128xf32, #tpu.memory_space<vmem>>, vector<1x16x16x128xf32>
    %1 = vector.shape_cast %0 : vector<1x16x16x128xf32> to vector<16x16x128xf32>
    %2 = vector.shape_cast %1 : vector<16x16x128xf32> to vector<256x128xf32>
    %3 = arith.truncf %2 : vector<256x128xf32> to vector<256x128xbf16>
    %c0_3 = arith.constant 0 : index
    %c0_4 = arith.constant 0 : index
    %4 = vector.load %arg2[%c0_3, %c0_4] : memref<128x128xbf16, #tpu.memory_space<vmem>>, vector<128x128xbf16>
    %cst = arith.constant dense<0.000000e+00> : vector<256x128xf32>
    %5 = tpu.matmul %3, %4, %cst {dimension_numbers = #tpu.dot_dimension_numbers<[1], [0], [0], [1], [0, 0, 1, 1], [], []>} : vector<256x128xbf16>, vector<128x128xbf16>, vector<256x128xf32> -> vector<256x128xf32>
    %c0_5 = arith.constant 0 : index
    %c0_6 = arith.constant 0 : index
    %6 = vector.load %arg3[%c0_5, %c0_6] : memref<1x128xf32, #tpu.memory_space<vmem>>, vector<1x128xf32>
    %7 = vector.broadcast %6 : vector<1x128xf32> to vector<256x128xf32>
    %8 = arith.mulf %5, %7 : vector<256x128xf32>
    %c0_7 = arith.constant 0 : index
    %c0_8 = arith.constant 0 : index
    %9 = vector.load %arg4[%c0_7, %c0_8] : memref<1x128xf32, #tpu.memory_space<vmem>>, vector<1x128xf32>
    %10 = vector.broadcast %9 : vector<1x128xf32> to vector<256x128xf32>
    %11 = arith.addf %8, %10 : vector<256x128xf32>
    %cst_9 = arith.constant 0.000000e+00 : f32
    %cst_10 = arith.constant 6.000000e+00 : f32
    %12 = vector.broadcast %cst_9 : f32 to vector<256x128xf32>
    %13 = arith.maximumf %12, %11 : vector<256x128xf32>
    %14 = vector.broadcast %cst_10 : f32 to vector<256x128xf32>
    %15 = arith.minimumf %14, %13 : vector<256x128xf32>
    %16 = vector.shape_cast %15 : vector<256x128xf32> to vector<16x16x128xf32>
    %cst_11 = arith.constant 0.000000e+00 : f32
    %17 = vector.broadcast %cst_11 : f32 to vector<18x18x128xf32>
    %c0_12 = arith.constant 0 : index
    %c0_13 = arith.constant 0 : index
    %c0_14 = arith.constant 0 : index
    %18 = vector.load %arg16[%c0_12, %c0_13, %c0_14] : memref<18x18x128xf32, #tpu.memory_space<vmem>>, vector<18x18x128xf32>
    tpu.vector_store %arg16[%c0_12, %c0_13, %c0_14], %17 {strides = array<i32>} : memref<18x18x128xf32, #tpu.memory_space<vmem>>, vector<18x18x128xf32>,
    %c1 = arith.constant 1 : index
    %c1_15 = arith.constant 1 : index
    %c0_16 = arith.constant 0 : index
    %19 = vector.load %arg16[%c1, %c1_15, %c0_16] : memref<18x18x128xf32, #tpu.memory_space<vmem>>, vector<16x16x128xf32>
    tpu.vector_store %arg16[%c1, %c1_15, %c0_16], %16 {strides = array<i32>} : memref<18x18x128xf32, #tpu.memory_space<vmem>>, vector<16x16x128xf32>,
    %c0_17 = arith.constant 0 : index
    %c0_18 = arith.constant 0 : index
    %20 = vector.load %arg5[%c0_17, %c0_18] : memref<9x128xf32, #tpu.memory_space<vmem>>, vector<9x128xf32>
    %cst_19 = arith.constant 0.000000e+00 : f32
    %21 = vector.broadcast %cst_19 : f32 to vector<16x16x128xf32>
    %c0_20 = arith.constant 0 : index
    %c0_21 = arith.constant 0 : index
    %c0_22 = arith.constant 0 : index
    %22 = vector.load %arg16[%c0_20, %c0_21, %c0_22] : memref<18x18x128xf32, #tpu.memory_space<vmem>>, vector<16x16x128xf32>
    %23 = vector.extract_strided_slice %20 {offsets = [0, 0], sizes = [1, 128], strides = [1, 1]} : vector<9x128xf32> to vector<1x128xf32>
    %24 = vector.shape_cast %23 : vector<1x128xf32> to vector<128xf32>
    %25 = vector.shape_cast %24 : vector<128xf32> to vector<1x1x128xf32>
    %26 = vector.broadcast %25 : vector<1x1x128xf32> to vector<16x16x128xf32>
    %27 = arith.mulf %22, %26 : vector<16x16x128xf32>
    %28 = arith.addf %21, %27 : vector<16x16x128xf32>
    %c0_23 = arith.constant 0 : index
    %c1_24 = arith.constant 1 : index
    %c0_25 = arith.constant 0 : index
    %29 = vector.load %arg16[%c0_23, %c1_24, %c0_25] : memref<18x18x128xf32, #tpu.memory_space<vmem>>, vector<16x16x128xf32>
    %30 = vector.extract_strided_slice %20 {offsets = [1, 0], sizes = [1, 128], strides = [1, 1]} : vector<9x128xf32> to vector<1x128xf32>
    %31 = vector.shape_cast %30 : vector<1x128xf32> to vector<128xf32>
    %32 = vector.shape_cast %31 : vector<128xf32> to vector<1x1x128xf32>
    %33 = vector.broadcast %32 : vector<1x1x128xf32> to vector<16x16x128xf32>
    %34 = arith.mulf %29, %33 : vector<16x16x128xf32>
    %35 = arith.addf %28, %34 : vector<16x16x128xf32>
    %c0_26 = arith.constant 0 : index
    %c2 = arith.constant 2 : index
    %c0_27 = arith.constant 0 : index
    %36 = vector.load %arg16[%c0_26, %c2, %c0_27] : memref<18x18x128xf32, #tpu.memory_space<vmem>>, vector<16x16x128xf32>
    %37 = vector.extract_strided_slice %20 {offsets = [2, 0], sizes = [1, 128], strides = [1, 1]} : vector<9x128xf32> to vector<1x128xf32>
    %38 = vector.shape_cast %37 : vector<1x128xf32> to vector<128xf32>
    %39 = vector.shape_cast %38 : vector<128xf32> to vector<1x1x128xf32>
    %40 = vector.broadcast %39 : vector<1x1x128xf32> to vector<16x16x128xf32>
    %41 = arith.mulf %36, %40 : vector<16x16x128xf32>
    %42 = arith.addf %35, %41 : vector<16x16x128xf32>
    %c1_28 = arith.constant 1 : index
    %c0_29 = arith.constant 0 : index
    %c0_30 = arith.constant 0 : index
    %43 = vector.load %arg16[%c1_28, %c0_29, %c0_30] : memref<18x18x128xf32, #tpu.memory_space<vmem>>, vector<16x16x128xf32>
    %44 = vector.extract_strided_slice %20 {offsets = [3, 0], sizes = [1, 128], strides = [1, 1]} : vector<9x128xf32> to vector<1x128xf32>
    %45 = vector.shape_cast %44 : vector<1x128xf32> to vector<128xf32>
    %46 = vector.shape_cast %45 : vector<128xf32> to vector<1x1x128xf32>
    %47 = vector.broadcast %46 : vector<1x1x128xf32> to vector<16x16x128xf32>
    %48 = arith.mulf %43, %47 : vector<16x16x128xf32>
    %49 = arith.addf %42, %48 : vector<16x16x128xf32>
    %c1_31 = arith.constant 1 : index
    %c1_32 = arith.constant 1 : index
    %c0_33 = arith.constant 0 : index
    %50 = vector.load %arg16[%c1_31, %c1_32, %c0_33] : memref<18x18x128xf32, #tpu.memory_space<vmem>>, vector<16x16x128xf32>
    %51 = vector.extract_strided_slice %20 {offsets = [4, 0], sizes = [1, 128], strides = [1, 1]} : vector<9x128xf32> to vector<1x128xf32>
    %52 = vector.shape_cast %51 : vector<1x128xf32> to vector<128xf32>
    %53 = vector.shape_cast %52 : vector<128xf32> to vector<1x1x128xf32>
    %54 = vector.broadcast %53 : vector<1x1x128xf32> to vector<16x16x128xf32>
    %55 = arith.mulf %50, %54 : vector<16x16x128xf32>
    %56 = arith.addf %49, %55 : vector<16x16x128xf32>
    %c1_34 = arith.constant 1 : index
    %c2_35 = arith.constant 2 : index
    %c0_36 = arith.constant 0 : index
    %57 = vector.load %arg16[%c1_34, %c2_35, %c0_36] : memref<18x18x128xf32, #tpu.memory_space<vmem>>, vector<16x16x128xf32>
    %58 = vector.extract_strided_slice %20 {offsets = [5, 0], sizes = [1, 128], strides = [1, 1]} : vector<9x128xf32> to vector<1x128xf32>
    %59 = vector.shape_cast %58 : vector<1x128xf32> to vector<128xf32>
    %60 = vector.shape_cast %59 : vector<128xf32> to vector<1x1x128xf32>
    %61 = vector.broadcast %60 : vector<1x1x128xf32> to vector<16x16x128xf32>
    %62 = arith.mulf %57, %61 : vector<16x16x128xf32>
    %63 = arith.addf %56, %62 : vector<16x16x128xf32>
    %c2_37 = arith.constant 2 : index
    %c0_38 = arith.constant 0 : index
    %c0_39 = arith.constant 0 : index
    %64 = vector.load %arg16[%c2_37, %c0_38, %c0_39] : memref<18x18x128xf32, #tpu.memory_space<vmem>>, vector<16x16x128xf32>
    %65 = vector.extract_strided_slice %20 {offsets = [6, 0], sizes = [1, 128], strides = [1, 1]} : vector<9x128xf32> to vector<1x128xf32>
    %66 = vector.shape_cast %65 : vector<1x128xf32> to vector<128xf32>
    %67 = vector.shape_cast %66 : vector<128xf32> to vector<1x1x128xf32>
    %68 = vector.broadcast %67 : vector<1x1x128xf32> to vector<16x16x128xf32>
    %69 = arith.mulf %64, %68 : vector<16x16x128xf32>
    %70 = arith.addf %63, %69 : vector<16x16x128xf32>
    %c2_40 = arith.constant 2 : index
    %c1_41 = arith.constant 1 : index
    %c0_42 = arith.constant 0 : index
    %71 = vector.load %arg16[%c2_40, %c1_41, %c0_42] : memref<18x18x128xf32, #tpu.memory_space<vmem>>, vector<16x16x128xf32>
    %72 = vector.extract_strided_slice %20 {offsets = [7, 0], sizes = [1, 128], strides = [1, 1]} : vector<9x128xf32> to vector<1x128xf32>
    %73 = vector.shape_cast %72 : vector<1x128xf32> to vector<128xf32>
    %74 = vector.shape_cast %73 : vector<128xf32> to vector<1x1x128xf32>
    %75 = vector.broadcast %74 : vector<1x1x128xf32> to vector<16x16x128xf32>
    %76 = arith.mulf %71, %75 : vector<16x16x128xf32>
    %77 = arith.addf %70, %76 : vector<16x16x128xf32>
    %c2_43 = arith.constant 2 : index
    %c2_44 = arith.constant 2 : index
    %c0_45 = arith.constant 0 : index
    %78 = vector.load %arg16[%c2_43, %c2_44, %c0_45] : memref<18x18x128xf32, #tpu.memory_space<vmem>>, vector<16x16x128xf32>
    %79 = vector.extract_strided_slice %20 {offsets = [8, 0], sizes = [1, 128], strides = [1, 1]} : vector<9x128xf32> to vector<1x128xf32>
    %80 = vector.shape_cast %79 : vector<1x128xf32> to vector<128xf32>
    %81 = vector.shape_cast %80 : vector<128xf32> to vector<1x1x128xf32>
    %82 = vector.broadcast %81 : vector<1x1x128xf32> to vector<16x16x128xf32>
    %83 = arith.mulf %78, %82 : vector<16x16x128xf32>
    %84 = arith.addf %77, %83 : vector<16x16x128xf32>
    %c0_46 = arith.constant 0 : index
    %c0_47 = arith.constant 0 : index
    %85 = vector.load %arg6[%c0_46, %c0_47] : memref<1x128xf32, #tpu.memory_space<vmem>>, vector<1x128xf32>
    %86 = vector.shape_cast %85 : vector<1x128xf32> to vector<1x1x128xf32>
    %87 = vector.broadcast %86 : vector<1x1x128xf32> to vector<16x16x128xf32>
    %88 = arith.mulf %84, %87 : vector<16x16x128xf32>
    %c0_48 = arith.constant 0 : index
    %c0_49 = arith.constant 0 : index
    %89 = vector.load %arg7[%c0_48, %c0_49] : memref<1x128xf32, #tpu.memory_space<vmem>>, vector<1x128xf32>
    %90 = vector.shape_cast %89 : vector<1x128xf32> to vector<1x1x128xf32>
    %91 = vector.broadcast %90 : vector<1x1x128xf32> to vector<16x16x128xf32>
    %92 = arith.addf %88, %91 : vector<16x16x128xf32>
    %cst_50 = arith.constant 0.000000e+00 : f32
    %cst_51 = arith.constant 6.000000e+00 : f32
    %93 = vector.broadcast %cst_50 : f32 to vector<16x16x128xf32>
    %94 = arith.maximumf %93, %92 : vector<16x16x128xf32>
    %95 = vector.broadcast %cst_51 : f32 to vector<16x16x128xf32>
    %96 = arith.minimumf %95, %94 : vector<16x16x128xf32>
    %97 = vector.shape_cast %96 : vector<16x16x128xf32> to vector<256x128xf32>
    %98 = arith.truncf %97 : vector<256x128xf32> to vector<256x128xbf16>
    %c0_52 = arith.constant 0 : index
    %c0_53 = arith.constant 0 : index
    %99 = vector.load %arg8[%c0_52, %c0_53] : memref<128x128xbf16, #tpu.memory_space<vmem>>, vector<128x128xbf16>
    %cst_54 = arith.constant dense<0.000000e+00> : vector<256x128xf32>
    %100 = tpu.matmul %98, %99, %cst_54 {dimension_numbers = #tpu.dot_dimension_numbers<[1], [0], [0], [1], [0, 0, 1, 1], [], []>} : vector<256x128xbf16>, vector<128x128xbf16>, vector<256x128xf32> -> vector<256x128xf32>
    %c0_55 = arith.constant 0 : index
    %c0_56 = arith.constant 0 : index
    %101 = vector.load %arg9[%c0_55, %c0_56] : memref<1x128xf32, #tpu.memory_space<vmem>>, vector<1x128xf32>
    %102 = vector.broadcast %101 : vector<1x128xf32> to vector<256x128xf32>
    %103 = arith.mulf %100, %102 : vector<256x128xf32>
    %c0_57 = arith.constant 0 : index
    %c0_58 = arith.constant 0 : index
    %104 = vector.load %arg10[%c0_57, %c0_58] : memref<1x128xf32, #tpu.memory_space<vmem>>, vector<1x128xf32>
    %105 = vector.broadcast %104 : vector<1x128xf32> to vector<256x128xf32>
    %106 = arith.addf %103, %105 : vector<256x128xf32>
    %cst_59 = arith.constant 0.000000e+00 : f32
    %cst_60 = arith.constant 6.000000e+00 : f32
    %107 = vector.broadcast %cst_59 : f32 to vector<256x128xf32>
    %108 = arith.maximumf %107, %106 : vector<256x128xf32>
    %109 = vector.broadcast %cst_60 : f32 to vector<256x128xf32>
    %110 = arith.minimumf %109, %108 : vector<256x128xf32>
    %111 = vector.shape_cast %1 : vector<16x16x128xf32> to vector<256x128xf32>
    %112 = arith.addf %110, %111 : vector<256x128xf32>
    %cst_61 = arith.constant dense<0.000000e+00> : vector<128xf32>
    %113 = vector.multi_reduction <add>, %112, %cst_61 [0] : vector<256x128xf32> to vector<128xf32>
    %114 = vector.shape_cast %113 : vector<128xf32> to vector<1x128xf32>
    %cst_62 = arith.constant 2.560000e+02 : f32
    %115 = vector.broadcast %cst_62 : f32 to vector<1x128xf32>
    %116 = arith.divf %114, %115 : vector<1x128xf32>
    %117 = arith.truncf %116 : vector<1x128xf32> to vector<1x128xbf16>
    %c0_63 = arith.constant 0 : index
    %c0_64 = arith.constant 0 : index
    %118 = vector.load %arg11[%c0_63, %c0_64] : memref<128x128xbf16, #tpu.memory_space<vmem>>, vector<128x128xbf16>
    %cst_65 = arith.constant dense<0.000000e+00> : vector<1x128xf32>
    %119 = tpu.matmul %117, %118, %cst_65 {dimension_numbers = #tpu.dot_dimension_numbers<[1], [0], [0], [1], [0, 0, 1, 1], [], []>} : vector<1x128xbf16>, vector<128x128xbf16>, vector<1x128xf32> -> vector<1x128xf32>
    %c0_66 = arith.constant 0 : index
    %c0_67 = arith.constant 0 : index
    %120 = vector.load %arg12[%c0_66, %c0_67] : memref<1x128xf32, #tpu.memory_space<vmem>>, vector<1x128xf32>
    %121 = arith.addf %119, %120 : vector<1x128xf32>
    %cst_68 = arith.constant 0.000000e+00 : f32
    %122 = vector.broadcast %cst_68 : f32 to vector<1x128xf32>
    %123 = arith.maximumf %121, %122 : vector<1x128xf32>
    %124 = arith.truncf %123 : vector<1x128xf32> to vector<1x128xbf16>
    %c0_69 = arith.constant 0 : index
    %c0_70 = arith.constant 0 : index
    %125 = vector.load %arg13[%c0_69, %c0_70] : memref<128x128xbf16, #tpu.memory_space<vmem>>, vector<128x128xbf16>
    %cst_71 = arith.constant dense<0.000000e+00> : vector<1x128xf32>
    %126 = tpu.matmul %124, %125, %cst_71 {dimension_numbers = #tpu.dot_dimension_numbers<[1], [0], [0], [1], [0, 0, 1, 1], [], []>} : vector<1x128xbf16>, vector<128x128xbf16>, vector<1x128xf32> -> vector<1x128xf32>
    %c0_72 = arith.constant 0 : index
    %c0_73 = arith.constant 0 : index
    %127 = vector.load %arg14[%c0_72, %c0_73] : memref<1x128xf32, #tpu.memory_space<vmem>>, vector<1x128xf32>
    %128 = arith.addf %126, %127 : vector<1x128xf32>
    %129 = arith.negf %128 : vector<1x128xf32>
    %130 = math.exp %129 : vector<1x128xf32>
    %cst_74 = arith.constant 1.000000e+00 : f32
    %131 = vector.broadcast %cst_74 : f32 to vector<1x128xf32>
    %132 = arith.addf %131, %130 : vector<1x128xf32>
    %133 = arith.divf %131, %132 : vector<1x128xf32>
    %134 = vector.broadcast %133 : vector<1x128xf32> to vector<256x128xf32>
    %135 = arith.mulf %112, %134 : vector<256x128xf32>
    %136 = vector.shape_cast %135 : vector<256x128xf32> to vector<16x16x128xf32>
    %c0_75 = arith.constant 0 : index
    %c0_76 = arith.constant 0 : index
    %c0_77 = arith.constant 0 : index
    %c0_78 = arith.constant 0 : index
    %137 = vector.load %arg15[%c0_75, %c0_76, %c0_77, %c0_78] : memref<1x16x16x128xf32, #tpu.memory_space<vmem>>, vector<1x16x16x128xf32>
    %138 = vector.shape_cast %137 : vector<1x16x16x128xf32> to vector<16x16x128xf32>
    %139 = vector.shape_cast %136 : vector<16x16x128xf32> to vector<1x16x16x128xf32>
    tpu.vector_store %arg15[%c0_75, %c0_76, %c0_77, %c0_78], %139 {strides = array<i32>} : memref<1x16x16x128xf32, #tpu.memory_space<vmem>>, vector<1x16x16x128xf32>,
    return
  }
  func.func @transform_0(%arg0: i32) -> (i32, i32, i32, i32) {
    %c0_i32 = arith.constant 0 : i32
    %c0_i32_0 = arith.constant 0 : i32
    %c0_i32_1 = arith.constant 0 : i32
    %c0_i32_2 = arith.constant 0 : i32
    return %arg0, %c0_i32, %c0_i32_0, %c0_i32_1 : i32, i32, i32, i32
  }
  func.func @transform_1(%arg0: i32) -> (i32, i32) {
    %c0_i32 = arith.constant 0 : i32
    %c0_i32_0 = arith.constant 0 : i32
    %c0_i32_1 = arith.constant 0 : i32
    return %c0_i32, %c0_i32_0 : i32, i32
  }
  func.func @transform_2(%arg0: i32) -> (i32, i32) {
    %c0_i32 = arith.constant 0 : i32
    %c0_i32_0 = arith.constant 0 : i32
    %c0_i32_1 = arith.constant 0 : i32
    return %c0_i32, %c0_i32_0 : i32, i32
  }
  func.func @transform_3(%arg0: i32) -> (i32, i32) {
    %c0_i32 = arith.constant 0 : i32
    %c0_i32_0 = arith.constant 0 : i32
    %c0_i32_1 = arith.constant 0 : i32
    return %c0_i32, %c0_i32_0 : i32, i32
  }
  func.func @transform_4(%arg0: i32) -> (i32, i32) {
    %c0_i32 = arith.constant 0 : i32
    %c0_i32_0 = arith.constant 0 : i32
    %c0_i32_1 = arith.constant 0 : i32
    return %c0_i32, %c0_i32_0 : i32, i32
  }
  func.func @transform_5(%arg0: i32) -> (i32, i32) {
    %c0_i32 = arith.constant 0 : i32
    %c0_i32_0 = arith.constant 0 : i32
    %c0_i32_1 = arith.constant 0 : i32
    return %c0_i32, %c0_i32_0 : i32, i32
  }
  func.func @transform_6(%arg0: i32) -> (i32, i32) {
    %c0_i32 = arith.constant 0 : i32
    %c0_i32_0 = arith.constant 0 : i32
    %c0_i32_1 = arith.constant 0 : i32
    return %c0_i32, %c0_i32_0 : i32, i32
  }
  func.func @transform_7(%arg0: i32) -> (i32, i32) {
    %c0_i32 = arith.constant 0 : i32
    %c0_i32_0 = arith.constant 0 : i32
    %c0_i32_1 = arith.constant 0 : i32
    return %c0_i32, %c0_i32_0 : i32, i32
  }
  func.func @transform_8(%arg0: i32) -> (i32, i32) {
    %c0_i32 = arith.constant 0 : i32
    %c0_i32_0 = arith.constant 0 : i32
    %c0_i32_1 = arith.constant 0 : i32
    return %c0_i32, %c0_i32_0 : i32, i32
  }
  func.func @transform_9(%arg0: i32) -> (i32, i32) {
    %c0_i32 = arith.constant 0 : i32
    %c0_i32_0 = arith.constant 0 : i32
    %c0_i32_1 = arith.constant 0 : i32
    return %c0_i32, %c0_i32_0 : i32, i32
  }
  func.func @transform_10(%arg0: i32) -> (i32, i32) {
    %c0_i32 = arith.constant 0 : i32
    %c0_i32_0 = arith.constant 0 : i32
    %c0_i32_1 = arith.constant 0 : i32
    return %c0_i32, %c0_i32_0 : i32, i32
  }
  func.func @transform_11(%arg0: i32) -> (i32, i32) {
    %c0_i32 = arith.constant 0 : i32
    %c0_i32_0 = arith.constant 0 : i32
    %c0_i32_1 = arith.constant 0 : i32
    return %c0_i32, %c0_i32_0 : i32, i32
  }
  func.func @transform_12(%arg0: i32) -> (i32, i32) {
    %c0_i32 = arith.constant 0 : i32
    %c0_i32_0 = arith.constant 0 : i32
    %c0_i32_1 = arith.constant 0 : i32
    return %c0_i32, %c0_i32_0 : i32, i32
  }
  func.func @transform_13(%arg0: i32) -> (i32, i32) {
    %c0_i32 = arith.constant 0 : i32
    %c0_i32_0 = arith.constant 0 : i32
    %c0_i32_1 = arith.constant 0 : i32
    return %c0_i32, %c0_i32_0 : i32, i32
  }
  func.func @transform_14(%arg0: i32) -> (i32, i32, i32, i32) {
    %c0_i32 = arith.constant 0 : i32
    %c0_i32_0 = arith.constant 0 : i32
    %c0_i32_1 = arith.constant 0 : i32
    %c0_i32_2 = arith.constant 0 : i32
    return %arg0, %c0_i32, %c0_i32_0, %c0_i32_1 : i32, i32, i32, i32
  }
}

module attributes {stable_mosaic.version = 11 : i64} {
  func.func @_irb_kernel(%arg0: i32, %arg1: memref<1x16x16x128xf32, #tpu.memory_space<vmem>>, %arg2: memref<128x128xbf16, #tpu.memory_space<vmem>>, %arg3: memref<1x128xf32, #tpu.memory_space<vmem>>, %arg4: memref<1x128xf32, #tpu.memory_space<vmem>>, %arg5: memref<9x128xf32, #tpu.memory_space<vmem>>, %arg6: memref<1x128xf32, #tpu.memory_space<vmem>>, %arg7: memref<1x128xf32, #tpu.memory_space<vmem>>, %arg8: memref<128x128xbf16, #tpu.memory_space<vmem>>, %arg9: memref<1x128xf32, #tpu.memory_space<vmem>>, %arg10: memref<1x128xf32, #tpu.memory_space<vmem>>, %arg11: memref<128x128xbf16, #tpu.memory_space<vmem>>, %arg12: memref<1x128xf32, #tpu.memory_space<vmem>>, %arg13: memref<128x128xbf16, #tpu.memory_space<vmem>>, %arg14: memref<1x128xf32, #tpu.memory_space<vmem>>, %arg15: memref<1x8x8x128xf32, #tpu.memory_space<vmem>>, %arg16: memref<18x18x128xf32, #tpu.memory_space<vmem>>) attributes {dimension_semantics = [#tpu.dimension_semantics<parallel>], iteration_bounds = array<i64: 2>, scalar_prefetch = 0 : i64, scratch_operands = 1 : i64, tpu.core_type = #tpu.core_type<tc>, window_params = [{transform_indices = @transform_0, window_bounds = array<i64: 1, 16, 16, 128>}, {pipeline_mode = #tpu.pipeline_mode<synchronous>, transform_indices = @transform_1, window_bounds = array<i64: 128, 128>}, {pipeline_mode = #tpu.pipeline_mode<synchronous>, transform_indices = @transform_2, window_bounds = array<i64: 1, 128>}, {pipeline_mode = #tpu.pipeline_mode<synchronous>, transform_indices = @transform_3, window_bounds = array<i64: 1, 128>}, {pipeline_mode = #tpu.pipeline_mode<synchronous>, transform_indices = @transform_4, window_bounds = array<i64: 9, 128>}, {pipeline_mode = #tpu.pipeline_mode<synchronous>, transform_indices = @transform_5, window_bounds = array<i64: 1, 128>}, {pipeline_mode = #tpu.pipeline_mode<synchronous>, transform_indices = @transform_6, window_bounds = array<i64: 1, 128>}, {pipeline_mode = #tpu.pipeline_mode<synchronous>, transform_indices = @transform_7, window_bounds = array<i64: 128, 128>}, {pipeline_mode = #tpu.pipeline_mode<synchronous>, transform_indices = @transform_8, window_bounds = array<i64: 1, 128>}, {pipeline_mode = #tpu.pipeline_mode<synchronous>, transform_indices = @transform_9, window_bounds = array<i64: 1, 128>}, {pipeline_mode = #tpu.pipeline_mode<synchronous>, transform_indices = @transform_10, window_bounds = array<i64: 128, 128>}, {pipeline_mode = #tpu.pipeline_mode<synchronous>, transform_indices = @transform_11, window_bounds = array<i64: 1, 128>}, {pipeline_mode = #tpu.pipeline_mode<synchronous>, transform_indices = @transform_12, window_bounds = array<i64: 128, 128>}, {pipeline_mode = #tpu.pipeline_mode<synchronous>, transform_indices = @transform_13, window_bounds = array<i64: 1, 128>}, {transform_indices = @transform_14, window_bounds = array<i64: 1, 8, 8, 128>}]} {
    %c0 = arith.constant 0 : index
    %c0_0 = arith.constant 0 : index
    %c0_1 = arith.constant 0 : index
    %c0_2 = arith.constant 0 : index
    %0 = vector.load %arg1[%c0, %c0_0, %c0_1, %c0_2] : memref<1x16x16x128xf32, #tpu.memory_space<vmem>>, vector<1x16x16x128xf32>
    %1 = vector.shape_cast %0 : vector<1x16x16x128xf32> to vector<16x16x128xf32>
    %cst = arith.constant 0.000000e+00 : f32
    %2 = vector.broadcast %cst : f32 to vector<18x18x128xf32>
    %c0_3 = arith.constant 0 : index
    %c0_4 = arith.constant 0 : index
    %c0_5 = arith.constant 0 : index
    %3 = vector.load %arg16[%c0_3, %c0_4, %c0_5] : memref<18x18x128xf32, #tpu.memory_space<vmem>>, vector<18x18x128xf32>
    tpu.vector_store %arg16[%c0_3, %c0_4, %c0_5], %2 {strides = array<i32>} : memref<18x18x128xf32, #tpu.memory_space<vmem>>, vector<18x18x128xf32>,
    %c1 = arith.constant 1 : index
    %c1_6 = arith.constant 1 : index
    %c0_7 = arith.constant 0 : index
    %4 = vector.load %arg16[%c1, %c1_6, %c0_7] : memref<18x18x128xf32, #tpu.memory_space<vmem>>, vector<16x16x128xf32>
    tpu.vector_store %arg16[%c1, %c1_6, %c0_7], %1 {strides = array<i32>} : memref<18x18x128xf32, #tpu.memory_space<vmem>>, vector<16x16x128xf32>,
    %c0_8 = arith.constant 0 : index
    %c0_9 = arith.constant 0 : index
    %5 = vector.load %arg5[%c0_8, %c0_9] : memref<9x128xf32, #tpu.memory_space<vmem>>, vector<9x128xf32>
    %cst_10 = arith.constant 0.000000e+00 : f32
    %6 = vector.broadcast %cst_10 : f32 to vector<8x8x128xf32>
    %c0_11 = arith.constant 0 : index
    %c0_12 = arith.constant 0 : index
    %c0_13 = arith.constant 0 : index
    %7 = tpu.strided_load %arg16[%c0_11, %c0_12, %c0_13] {strides = array<i32: 2, 2, 1>} : memref<18x18x128xf32, #tpu.memory_space<vmem>>, vector<8x8x128xf32>
    %8 = vector.extract_strided_slice %5 {offsets = [0, 0], sizes = [1, 128], strides = [1, 1]} : vector<9x128xf32> to vector<1x128xf32>
    %9 = vector.shape_cast %8 : vector<1x128xf32> to vector<128xf32>
    %10 = vector.shape_cast %9 : vector<128xf32> to vector<1x1x128xf32>
    %11 = vector.broadcast %10 : vector<1x1x128xf32> to vector<8x8x128xf32>
    %12 = arith.mulf %7, %11 : vector<8x8x128xf32>
    %13 = arith.addf %6, %12 : vector<8x8x128xf32>
    %c0_14 = arith.constant 0 : index
    %c1_15 = arith.constant 1 : index
    %c0_16 = arith.constant 0 : index
    %14 = tpu.strided_load %arg16[%c0_14, %c1_15, %c0_16] {strides = array<i32: 2, 2, 1>} : memref<18x18x128xf32, #tpu.memory_space<vmem>>, vector<8x8x128xf32>
    %15 = vector.extract_strided_slice %5 {offsets = [1, 0], sizes = [1, 128], strides = [1, 1]} : vector<9x128xf32> to vector<1x128xf32>
    %16 = vector.shape_cast %15 : vector<1x128xf32> to vector<128xf32>
    %17 = vector.shape_cast %16 : vector<128xf32> to vector<1x1x128xf32>
    %18 = vector.broadcast %17 : vector<1x1x128xf32> to vector<8x8x128xf32>
    %19 = arith.mulf %14, %18 : vector<8x8x128xf32>
    %20 = arith.addf %13, %19 : vector<8x8x128xf32>
    %c0_17 = arith.constant 0 : index
    %c2 = arith.constant 2 : index
    %c0_18 = arith.constant 0 : index
    %21 = tpu.strided_load %arg16[%c0_17, %c2, %c0_18] {strides = array<i32: 2, 2, 1>} : memref<18x18x128xf32, #tpu.memory_space<vmem>>, vector<8x8x128xf32>
    %22 = vector.extract_strided_slice %5 {offsets = [2, 0], sizes = [1, 128], strides = [1, 1]} : vector<9x128xf32> to vector<1x128xf32>
    %23 = vector.shape_cast %22 : vector<1x128xf32> to vector<128xf32>
    %24 = vector.shape_cast %23 : vector<128xf32> to vector<1x1x128xf32>
    %25 = vector.broadcast %24 : vector<1x1x128xf32> to vector<8x8x128xf32>
    %26 = arith.mulf %21, %25 : vector<8x8x128xf32>
    %27 = arith.addf %20, %26 : vector<8x8x128xf32>
    %c1_19 = arith.constant 1 : index
    %c0_20 = arith.constant 0 : index
    %c0_21 = arith.constant 0 : index
    %28 = tpu.strided_load %arg16[%c1_19, %c0_20, %c0_21] {strides = array<i32: 2, 2, 1>} : memref<18x18x128xf32, #tpu.memory_space<vmem>>, vector<8x8x128xf32>
    %29 = vector.extract_strided_slice %5 {offsets = [3, 0], sizes = [1, 128], strides = [1, 1]} : vector<9x128xf32> to vector<1x128xf32>
    %30 = vector.shape_cast %29 : vector<1x128xf32> to vector<128xf32>
    %31 = vector.shape_cast %30 : vector<128xf32> to vector<1x1x128xf32>
    %32 = vector.broadcast %31 : vector<1x1x128xf32> to vector<8x8x128xf32>
    %33 = arith.mulf %28, %32 : vector<8x8x128xf32>
    %34 = arith.addf %27, %33 : vector<8x8x128xf32>
    %c1_22 = arith.constant 1 : index
    %c1_23 = arith.constant 1 : index
    %c0_24 = arith.constant 0 : index
    %35 = tpu.strided_load %arg16[%c1_22, %c1_23, %c0_24] {strides = array<i32: 2, 2, 1>} : memref<18x18x128xf32, #tpu.memory_space<vmem>>, vector<8x8x128xf32>
    %36 = vector.extract_strided_slice %5 {offsets = [4, 0], sizes = [1, 128], strides = [1, 1]} : vector<9x128xf32> to vector<1x128xf32>
    %37 = vector.shape_cast %36 : vector<1x128xf32> to vector<128xf32>
    %38 = vector.shape_cast %37 : vector<128xf32> to vector<1x1x128xf32>
    %39 = vector.broadcast %38 : vector<1x1x128xf32> to vector<8x8x128xf32>
    %40 = arith.mulf %35, %39 : vector<8x8x128xf32>
    %41 = arith.addf %34, %40 : vector<8x8x128xf32>
    %c1_25 = arith.constant 1 : index
    %c2_26 = arith.constant 2 : index
    %c0_27 = arith.constant 0 : index
    %42 = tpu.strided_load %arg16[%c1_25, %c2_26, %c0_27] {strides = array<i32: 2, 2, 1>} : memref<18x18x128xf32, #tpu.memory_space<vmem>>, vector<8x8x128xf32>
    %43 = vector.extract_strided_slice %5 {offsets = [5, 0], sizes = [1, 128], strides = [1, 1]} : vector<9x128xf32> to vector<1x128xf32>
    %44 = vector.shape_cast %43 : vector<1x128xf32> to vector<128xf32>
    %45 = vector.shape_cast %44 : vector<128xf32> to vector<1x1x128xf32>
    %46 = vector.broadcast %45 : vector<1x1x128xf32> to vector<8x8x128xf32>
    %47 = arith.mulf %42, %46 : vector<8x8x128xf32>
    %48 = arith.addf %41, %47 : vector<8x8x128xf32>
    %c2_28 = arith.constant 2 : index
    %c0_29 = arith.constant 0 : index
    %c0_30 = arith.constant 0 : index
    %49 = tpu.strided_load %arg16[%c2_28, %c0_29, %c0_30] {strides = array<i32: 2, 2, 1>} : memref<18x18x128xf32, #tpu.memory_space<vmem>>, vector<8x8x128xf32>
    %50 = vector.extract_strided_slice %5 {offsets = [6, 0], sizes = [1, 128], strides = [1, 1]} : vector<9x128xf32> to vector<1x128xf32>
    %51 = vector.shape_cast %50 : vector<1x128xf32> to vector<128xf32>
    %52 = vector.shape_cast %51 : vector<128xf32> to vector<1x1x128xf32>
    %53 = vector.broadcast %52 : vector<1x1x128xf32> to vector<8x8x128xf32>
    %54 = arith.mulf %49, %53 : vector<8x8x128xf32>
    %55 = arith.addf %48, %54 : vector<8x8x128xf32>
    %c2_31 = arith.constant 2 : index
    %c1_32 = arith.constant 1 : index
    %c0_33 = arith.constant 0 : index
    %56 = tpu.strided_load %arg16[%c2_31, %c1_32, %c0_33] {strides = array<i32: 2, 2, 1>} : memref<18x18x128xf32, #tpu.memory_space<vmem>>, vector<8x8x128xf32>
    %57 = vector.extract_strided_slice %5 {offsets = [7, 0], sizes = [1, 128], strides = [1, 1]} : vector<9x128xf32> to vector<1x128xf32>
    %58 = vector.shape_cast %57 : vector<1x128xf32> to vector<128xf32>
    %59 = vector.shape_cast %58 : vector<128xf32> to vector<1x1x128xf32>
    %60 = vector.broadcast %59 : vector<1x1x128xf32> to vector<8x8x128xf32>
    %61 = arith.mulf %56, %60 : vector<8x8x128xf32>
    %62 = arith.addf %55, %61 : vector<8x8x128xf32>
    %c2_34 = arith.constant 2 : index
    %c2_35 = arith.constant 2 : index
    %c0_36 = arith.constant 0 : index
    %63 = tpu.strided_load %arg16[%c2_34, %c2_35, %c0_36] {strides = array<i32: 2, 2, 1>} : memref<18x18x128xf32, #tpu.memory_space<vmem>>, vector<8x8x128xf32>
    %64 = vector.extract_strided_slice %5 {offsets = [8, 0], sizes = [1, 128], strides = [1, 1]} : vector<9x128xf32> to vector<1x128xf32>
    %65 = vector.shape_cast %64 : vector<1x128xf32> to vector<128xf32>
    %66 = vector.shape_cast %65 : vector<128xf32> to vector<1x1x128xf32>
    %67 = vector.broadcast %66 : vector<1x1x128xf32> to vector<8x8x128xf32>
    %68 = arith.mulf %63, %67 : vector<8x8x128xf32>
    %69 = arith.addf %62, %68 : vector<8x8x128xf32>
    %c0_37 = arith.constant 0 : index
    %c0_38 = arith.constant 0 : index
    %70 = vector.load %arg6[%c0_37, %c0_38] : memref<1x128xf32, #tpu.memory_space<vmem>>, vector<1x128xf32>
    %71 = vector.shape_cast %70 : vector<1x128xf32> to vector<1x1x128xf32>
    %72 = vector.broadcast %71 : vector<1x1x128xf32> to vector<8x8x128xf32>
    %73 = arith.mulf %69, %72 : vector<8x8x128xf32>
    %c0_39 = arith.constant 0 : index
    %c0_40 = arith.constant 0 : index
    %74 = vector.load %arg7[%c0_39, %c0_40] : memref<1x128xf32, #tpu.memory_space<vmem>>, vector<1x128xf32>
    %75 = vector.shape_cast %74 : vector<1x128xf32> to vector<1x1x128xf32>
    %76 = vector.broadcast %75 : vector<1x1x128xf32> to vector<8x8x128xf32>
    %77 = arith.addf %73, %76 : vector<8x8x128xf32>
    %cst_41 = arith.constant 0.000000e+00 : f32
    %cst_42 = arith.constant 6.000000e+00 : f32
    %78 = vector.broadcast %cst_41 : f32 to vector<8x8x128xf32>
    %79 = arith.maximumf %78, %77 : vector<8x8x128xf32>
    %80 = vector.broadcast %cst_42 : f32 to vector<8x8x128xf32>
    %81 = arith.minimumf %80, %79 : vector<8x8x128xf32>
    %82 = vector.shape_cast %81 : vector<8x8x128xf32> to vector<64x128xf32>
    %83 = arith.truncf %82 : vector<64x128xf32> to vector<64x128xbf16>
    %c0_43 = arith.constant 0 : index
    %c0_44 = arith.constant 0 : index
    %84 = vector.load %arg8[%c0_43, %c0_44] : memref<128x128xbf16, #tpu.memory_space<vmem>>, vector<128x128xbf16>
    %cst_45 = arith.constant dense<0.000000e+00> : vector<64x128xf32>
    %85 = tpu.matmul %83, %84, %cst_45 {dimension_numbers = #tpu.dot_dimension_numbers<[1], [0], [0], [1], [0, 0, 1, 1], [], []>} : vector<64x128xbf16>, vector<128x128xbf16>, vector<64x128xf32> -> vector<64x128xf32>
    %c0_46 = arith.constant 0 : index
    %c0_47 = arith.constant 0 : index
    %86 = vector.load %arg9[%c0_46, %c0_47] : memref<1x128xf32, #tpu.memory_space<vmem>>, vector<1x128xf32>
    %87 = vector.broadcast %86 : vector<1x128xf32> to vector<64x128xf32>
    %88 = arith.mulf %85, %87 : vector<64x128xf32>
    %c0_48 = arith.constant 0 : index
    %c0_49 = arith.constant 0 : index
    %89 = vector.load %arg10[%c0_48, %c0_49] : memref<1x128xf32, #tpu.memory_space<vmem>>, vector<1x128xf32>
    %90 = vector.broadcast %89 : vector<1x128xf32> to vector<64x128xf32>
    %91 = arith.addf %88, %90 : vector<64x128xf32>
    %cst_50 = arith.constant 0.000000e+00 : f32
    %cst_51 = arith.constant 6.000000e+00 : f32
    %92 = vector.broadcast %cst_50 : f32 to vector<64x128xf32>
    %93 = arith.maximumf %92, %91 : vector<64x128xf32>
    %94 = vector.broadcast %cst_51 : f32 to vector<64x128xf32>
    %95 = arith.minimumf %94, %93 : vector<64x128xf32>
    %cst_52 = arith.constant dense<0.000000e+00> : vector<128xf32>
    %96 = vector.multi_reduction <add>, %95, %cst_52 [0] : vector<64x128xf32> to vector<128xf32>
    %97 = vector.shape_cast %96 : vector<128xf32> to vector<1x128xf32>
    %cst_53 = arith.constant 6.400000e+01 : f32
    %98 = vector.broadcast %cst_53 : f32 to vector<1x128xf32>
    %99 = arith.divf %97, %98 : vector<1x128xf32>
    %100 = arith.truncf %99 : vector<1x128xf32> to vector<1x128xbf16>
    %c0_54 = arith.constant 0 : index
    %c0_55 = arith.constant 0 : index
    %101 = vector.load %arg11[%c0_54, %c0_55] : memref<128x128xbf16, #tpu.memory_space<vmem>>, vector<128x128xbf16>
    %cst_56 = arith.constant dense<0.000000e+00> : vector<1x128xf32>
    %102 = tpu.matmul %100, %101, %cst_56 {dimension_numbers = #tpu.dot_dimension_numbers<[1], [0], [0], [1], [0, 0, 1, 1], [], []>} : vector<1x128xbf16>, vector<128x128xbf16>, vector<1x128xf32> -> vector<1x128xf32>
    %c0_57 = arith.constant 0 : index
    %c0_58 = arith.constant 0 : index
    %103 = vector.load %arg12[%c0_57, %c0_58] : memref<1x128xf32, #tpu.memory_space<vmem>>, vector<1x128xf32>
    %104 = arith.addf %102, %103 : vector<1x128xf32>
    %cst_59 = arith.constant 0.000000e+00 : f32
    %105 = vector.broadcast %cst_59 : f32 to vector<1x128xf32>
    %106 = arith.maximumf %104, %105 : vector<1x128xf32>
    %107 = arith.truncf %106 : vector<1x128xf32> to vector<1x128xbf16>
    %c0_60 = arith.constant 0 : index
    %c0_61 = arith.constant 0 : index
    %108 = vector.load %arg13[%c0_60, %c0_61] : memref<128x128xbf16, #tpu.memory_space<vmem>>, vector<128x128xbf16>
    %cst_62 = arith.constant dense<0.000000e+00> : vector<1x128xf32>
    %109 = tpu.matmul %107, %108, %cst_62 {dimension_numbers = #tpu.dot_dimension_numbers<[1], [0], [0], [1], [0, 0, 1, 1], [], []>} : vector<1x128xbf16>, vector<128x128xbf16>, vector<1x128xf32> -> vector<1x128xf32>
    %c0_63 = arith.constant 0 : index
    %c0_64 = arith.constant 0 : index
    %110 = vector.load %arg14[%c0_63, %c0_64] : memref<1x128xf32, #tpu.memory_space<vmem>>, vector<1x128xf32>
    %111 = arith.addf %109, %110 : vector<1x128xf32>
    %112 = arith.negf %111 : vector<1x128xf32>
    %113 = math.exp %112 : vector<1x128xf32>
    %cst_65 = arith.constant 1.000000e+00 : f32
    %114 = vector.broadcast %cst_65 : f32 to vector<1x128xf32>
    %115 = arith.addf %114, %113 : vector<1x128xf32>
    %116 = arith.divf %114, %115 : vector<1x128xf32>
    %117 = vector.broadcast %116 : vector<1x128xf32> to vector<64x128xf32>
    %118 = arith.mulf %95, %117 : vector<64x128xf32>
    %119 = vector.shape_cast %118 : vector<64x128xf32> to vector<8x8x128xf32>
    %c0_66 = arith.constant 0 : index
    %c0_67 = arith.constant 0 : index
    %c0_68 = arith.constant 0 : index
    %c0_69 = arith.constant 0 : index
    %120 = vector.load %arg15[%c0_66, %c0_67, %c0_68, %c0_69] : memref<1x8x8x128xf32, #tpu.memory_space<vmem>>, vector<1x8x8x128xf32>
    %121 = vector.shape_cast %120 : vector<1x8x8x128xf32> to vector<8x8x128xf32>
    %122 = vector.shape_cast %119 : vector<8x8x128xf32> to vector<1x8x8x128xf32>
    tpu.vector_store %arg15[%c0_66, %c0_67, %c0_68, %c0_69], %122 {strides = array<i32>} : memref<1x8x8x128xf32, #tpu.memory_space<vmem>>, vector<1x8x8x128xf32>,
    return
  }
  func.func @transform_0(%arg0: i32) -> (i32, i32, i32, i32) {
    %c0_i32 = arith.constant 0 : i32
    %c0_i32_0 = arith.constant 0 : i32
    %c0_i32_1 = arith.constant 0 : i32
    %c0_i32_2 = arith.constant 0 : i32
    return %arg0, %c0_i32, %c0_i32_0, %c0_i32_1 : i32, i32, i32, i32
  }
  func.func @transform_1(%arg0: i32) -> (i32, i32) {
    %c0_i32 = arith.constant 0 : i32
    %c0_i32_0 = arith.constant 0 : i32
    %c0_i32_1 = arith.constant 0 : i32
    return %c0_i32, %c0_i32_0 : i32, i32
  }
  func.func @transform_2(%arg0: i32) -> (i32, i32) {
    %c0_i32 = arith.constant 0 : i32
    %c0_i32_0 = arith.constant 0 : i32
    %c0_i32_1 = arith.constant 0 : i32
    return %c0_i32, %c0_i32_0 : i32, i32
  }
  func.func @transform_3(%arg0: i32) -> (i32, i32) {
    %c0_i32 = arith.constant 0 : i32
    %c0_i32_0 = arith.constant 0 : i32
    %c0_i32_1 = arith.constant 0 : i32
    return %c0_i32, %c0_i32_0 : i32, i32
  }
  func.func @transform_4(%arg0: i32) -> (i32, i32) {
    %c0_i32 = arith.constant 0 : i32
    %c0_i32_0 = arith.constant 0 : i32
    %c0_i32_1 = arith.constant 0 : i32
    return %c0_i32, %c0_i32_0 : i32, i32
  }
  func.func @transform_5(%arg0: i32) -> (i32, i32) {
    %c0_i32 = arith.constant 0 : i32
    %c0_i32_0 = arith.constant 0 : i32
    %c0_i32_1 = arith.constant 0 : i32
    return %c0_i32, %c0_i32_0 : i32, i32
  }
  func.func @transform_6(%arg0: i32) -> (i32, i32) {
    %c0_i32 = arith.constant 0 : i32
    %c0_i32_0 = arith.constant 0 : i32
    %c0_i32_1 = arith.constant 0 : i32
    return %c0_i32, %c0_i32_0 : i32, i32
  }
  func.func @transform_7(%arg0: i32) -> (i32, i32) {
    %c0_i32 = arith.constant 0 : i32
    %c0_i32_0 = arith.constant 0 : i32
    %c0_i32_1 = arith.constant 0 : i32
    return %c0_i32, %c0_i32_0 : i32, i32
  }
  func.func @transform_8(%arg0: i32) -> (i32, i32) {
    %c0_i32 = arith.constant 0 : i32
    %c0_i32_0 = arith.constant 0 : i32
    %c0_i32_1 = arith.constant 0 : i32
    return %c0_i32, %c0_i32_0 : i32, i32
  }
  func.func @transform_9(%arg0: i32) -> (i32, i32) {
    %c0_i32 = arith.constant 0 : i32
    %c0_i32_0 = arith.constant 0 : i32
    %c0_i32_1 = arith.constant 0 : i32
    return %c0_i32, %c0_i32_0 : i32, i32
  }
  func.func @transform_10(%arg0: i32) -> (i32, i32) {
    %c0_i32 = arith.constant 0 : i32
    %c0_i32_0 = arith.constant 0 : i32
    %c0_i32_1 = arith.constant 0 : i32
    return %c0_i32, %c0_i32_0 : i32, i32
  }
  func.func @transform_11(%arg0: i32) -> (i32, i32) {
    %c0_i32 = arith.constant 0 : i32
    %c0_i32_0 = arith.constant 0 : i32
    %c0_i32_1 = arith.constant 0 : i32
    return %c0_i32, %c0_i32_0 : i32, i32
  }
  func.func @transform_12(%arg0: i32) -> (i32, i32) {
    %c0_i32 = arith.constant 0 : i32
    %c0_i32_0 = arith.constant 0 : i32
    %c0_i32_1 = arith.constant 0 : i32
    return %c0_i32, %c0_i32_0 : i32, i32
  }
  func.func @transform_13(%arg0: i32) -> (i32, i32) {
    %c0_i32 = arith.constant 0 : i32
    %c0_i32_0 = arith.constant 0 : i32
    %c0_i32_1 = arith.constant 0 : i32
    return %c0_i32, %c0_i32_0 : i32, i32
  }
  func.func @transform_14(%arg0: i32) -> (i32, i32, i32, i32) {
    %c0_i32 = arith.constant 0 : i32
    %c0_i32_0 = arith.constant 0 : i32
    %c0_i32_1 = arith.constant 0 : i32
    %c0_i32_2 = arith.constant 0 : i32
    return %arg0, %c0_i32, %c0_i32_0, %c0_i32_1 : i32, i32, i32, i32
  }
}

module attributes {stable_mosaic.version = 11 : i64} {
  func.func @_irb_kernel(%arg0: i32, %arg1: memref<1x8x8x128xf32, #tpu.memory_space<vmem>>, %arg2: memref<128x128xbf16, #tpu.memory_space<vmem>>, %arg3: memref<1x128xf32, #tpu.memory_space<vmem>>, %arg4: memref<1x128xf32, #tpu.memory_space<vmem>>, %arg5: memref<9x128xf32, #tpu.memory_space<vmem>>, %arg6: memref<1x128xf32, #tpu.memory_space<vmem>>, %arg7: memref<1x128xf32, #tpu.memory_space<vmem>>, %arg8: memref<128x128xbf16, #tpu.memory_space<vmem>>, %arg9: memref<1x128xf32, #tpu.memory_space<vmem>>, %arg10: memref<1x128xf32, #tpu.memory_space<vmem>>, %arg11: memref<128x128xbf16, #tpu.memory_space<vmem>>, %arg12: memref<1x128xf32, #tpu.memory_space<vmem>>, %arg13: memref<128x128xbf16, #tpu.memory_space<vmem>>, %arg14: memref<1x128xf32, #tpu.memory_space<vmem>>, %arg15: memref<1x8x8x128xf32, #tpu.memory_space<vmem>>, %arg16: memref<12x12x128xf32, #tpu.memory_space<vmem>>) attributes {dimension_semantics = [#tpu.dimension_semantics<parallel>], iteration_bounds = array<i64: 2>, scalar_prefetch = 0 : i64, scratch_operands = 1 : i64, tpu.core_type = #tpu.core_type<tc>, window_params = [{transform_indices = @transform_0, window_bounds = array<i64: 1, 8, 8, 128>}, {pipeline_mode = #tpu.pipeline_mode<synchronous>, transform_indices = @transform_1, window_bounds = array<i64: 128, 128>}, {pipeline_mode = #tpu.pipeline_mode<synchronous>, transform_indices = @transform_2, window_bounds = array<i64: 1, 128>}, {pipeline_mode = #tpu.pipeline_mode<synchronous>, transform_indices = @transform_3, window_bounds = array<i64: 1, 128>}, {pipeline_mode = #tpu.pipeline_mode<synchronous>, transform_indices = @transform_4, window_bounds = array<i64: 9, 128>}, {pipeline_mode = #tpu.pipeline_mode<synchronous>, transform_indices = @transform_5, window_bounds = array<i64: 1, 128>}, {pipeline_mode = #tpu.pipeline_mode<synchronous>, transform_indices = @transform_6, window_bounds = array<i64: 1, 128>}, {pipeline_mode = #tpu.pipeline_mode<synchronous>, transform_indices = @transform_7, window_bounds = array<i64: 128, 128>}, {pipeline_mode = #tpu.pipeline_mode<synchronous>, transform_indices = @transform_8, window_bounds = array<i64: 1, 128>}, {pipeline_mode = #tpu.pipeline_mode<synchronous>, transform_indices = @transform_9, window_bounds = array<i64: 1, 128>}, {pipeline_mode = #tpu.pipeline_mode<synchronous>, transform_indices = @transform_10, window_bounds = array<i64: 128, 128>}, {pipeline_mode = #tpu.pipeline_mode<synchronous>, transform_indices = @transform_11, window_bounds = array<i64: 1, 128>}, {pipeline_mode = #tpu.pipeline_mode<synchronous>, transform_indices = @transform_12, window_bounds = array<i64: 128, 128>}, {pipeline_mode = #tpu.pipeline_mode<synchronous>, transform_indices = @transform_13, window_bounds = array<i64: 1, 128>}, {transform_indices = @transform_14, window_bounds = array<i64: 1, 8, 8, 128>}]} {
    %c0 = arith.constant 0 : index
    %c0_0 = arith.constant 0 : index
    %c0_1 = arith.constant 0 : index
    %c0_2 = arith.constant 0 : index
    %0 = vector.load %arg1[%c0, %c0_0, %c0_1, %c0_2] : memref<1x8x8x128xf32, #tpu.memory_space<vmem>>, vector<1x8x8x128xf32>
    %1 = vector.shape_cast %0 : vector<1x8x8x128xf32> to vector<8x8x128xf32>
    %cst = arith.constant 0.000000e+00 : f32
    %2 = vector.broadcast %cst : f32 to vector<12x12x128xf32>
    %c0_3 = arith.constant 0 : index
    %c0_4 = arith.constant 0 : index
    %c0_5 = arith.constant 0 : index
    %3 = vector.load %arg16[%c0_3, %c0_4, %c0_5] : memref<12x12x128xf32, #tpu.memory_space<vmem>>, vector<12x12x128xf32>
    tpu.vector_store %arg16[%c0_3, %c0_4, %c0_5], %2 {strides = array<i32>} : memref<12x12x128xf32, #tpu.memory_space<vmem>>, vector<12x12x128xf32>,
    %c2 = arith.constant 2 : index
    %c2_6 = arith.constant 2 : index
    %c0_7 = arith.constant 0 : index
    %4 = vector.load %arg16[%c2, %c2_6, %c0_7] : memref<12x12x128xf32, #tpu.memory_space<vmem>>, vector<8x8x128xf32>
    tpu.vector_store %arg16[%c2, %c2_6, %c0_7], %1 {strides = array<i32>} : memref<12x12x128xf32, #tpu.memory_space<vmem>>, vector<8x8x128xf32>,
    %c0_8 = arith.constant 0 : index
    %c0_9 = arith.constant 0 : index
    %5 = vector.load %arg5[%c0_8, %c0_9] : memref<9x128xf32, #tpu.memory_space<vmem>>, vector<9x128xf32>
    %cst_10 = arith.constant 0.000000e+00 : f32
    %6 = vector.broadcast %cst_10 : f32 to vector<8x8x128xf32>
    %c0_11 = arith.constant 0 : index
    %c0_12 = arith.constant 0 : index
    %c0_13 = arith.constant 0 : index
    %7 = vector.load %arg16[%c0_11, %c0_12, %c0_13] : memref<12x12x128xf32, #tpu.memory_space<vmem>>, vector<8x8x128xf32>
    %8 = vector.extract_strided_slice %5 {offsets = [0, 0], sizes = [1, 128], strides = [1, 1]} : vector<9x128xf32> to vector<1x128xf32>
    %9 = vector.shape_cast %8 : vector<1x128xf32> to vector<128xf32>
    %10 = vector.shape_cast %9 : vector<128xf32> to vector<1x1x128xf32>
    %11 = vector.broadcast %10 : vector<1x1x128xf32> to vector<8x8x128xf32>
    %12 = arith.mulf %7, %11 : vector<8x8x128xf32>
    %13 = arith.addf %6, %12 : vector<8x8x128xf32>
    %c0_14 = arith.constant 0 : index
    %c2_15 = arith.constant 2 : index
    %c0_16 = arith.constant 0 : index
    %14 = vector.load %arg16[%c0_14, %c2_15, %c0_16] : memref<12x12x128xf32, #tpu.memory_space<vmem>>, vector<8x8x128xf32>
    %15 = vector.extract_strided_slice %5 {offsets = [1, 0], sizes = [1, 128], strides = [1, 1]} : vector<9x128xf32> to vector<1x128xf32>
    %16 = vector.shape_cast %15 : vector<1x128xf32> to vector<128xf32>
    %17 = vector.shape_cast %16 : vector<128xf32> to vector<1x1x128xf32>
    %18 = vector.broadcast %17 : vector<1x1x128xf32> to vector<8x8x128xf32>
    %19 = arith.mulf %14, %18 : vector<8x8x128xf32>
    %20 = arith.addf %13, %19 : vector<8x8x128xf32>
    %c0_17 = arith.constant 0 : index
    %c4 = arith.constant 4 : index
    %c0_18 = arith.constant 0 : index
    %21 = vector.load %arg16[%c0_17, %c4, %c0_18] : memref<12x12x128xf32, #tpu.memory_space<vmem>>, vector<8x8x128xf32>
    %22 = vector.extract_strided_slice %5 {offsets = [2, 0], sizes = [1, 128], strides = [1, 1]} : vector<9x128xf32> to vector<1x128xf32>
    %23 = vector.shape_cast %22 : vector<1x128xf32> to vector<128xf32>
    %24 = vector.shape_cast %23 : vector<128xf32> to vector<1x1x128xf32>
    %25 = vector.broadcast %24 : vector<1x1x128xf32> to vector<8x8x128xf32>
    %26 = arith.mulf %21, %25 : vector<8x8x128xf32>
    %27 = arith.addf %20, %26 : vector<8x8x128xf32>
    %c2_19 = arith.constant 2 : index
    %c0_20 = arith.constant 0 : index
    %c0_21 = arith.constant 0 : index
    %28 = vector.load %arg16[%c2_19, %c0_20, %c0_21] : memref<12x12x128xf32, #tpu.memory_space<vmem>>, vector<8x8x128xf32>
    %29 = vector.extract_strided_slice %5 {offsets = [3, 0], sizes = [1, 128], strides = [1, 1]} : vector<9x128xf32> to vector<1x128xf32>
    %30 = vector.shape_cast %29 : vector<1x128xf32> to vector<128xf32>
    %31 = vector.shape_cast %30 : vector<128xf32> to vector<1x1x128xf32>
    %32 = vector.broadcast %31 : vector<1x1x128xf32> to vector<8x8x128xf32>
    %33 = arith.mulf %28, %32 : vector<8x8x128xf32>
    %34 = arith.addf %27, %33 : vector<8x8x128xf32>
    %c2_22 = arith.constant 2 : index
    %c2_23 = arith.constant 2 : index
    %c0_24 = arith.constant 0 : index
    %35 = vector.load %arg16[%c2_22, %c2_23, %c0_24] : memref<12x12x128xf32, #tpu.memory_space<vmem>>, vector<8x8x128xf32>
    %36 = vector.extract_strided_slice %5 {offsets = [4, 0], sizes = [1, 128], strides = [1, 1]} : vector<9x128xf32> to vector<1x128xf32>
    %37 = vector.shape_cast %36 : vector<1x128xf32> to vector<128xf32>
    %38 = vector.shape_cast %37 : vector<128xf32> to vector<1x1x128xf32>
    %39 = vector.broadcast %38 : vector<1x1x128xf32> to vector<8x8x128xf32>
    %40 = arith.mulf %35, %39 : vector<8x8x128xf32>
    %41 = arith.addf %34, %40 : vector<8x8x128xf32>
    %c2_25 = arith.constant 2 : index
    %c4_26 = arith.constant 4 : index
    %c0_27 = arith.constant 0 : index
    %42 = vector.load %arg16[%c2_25, %c4_26, %c0_27] : memref<12x12x128xf32, #tpu.memory_space<vmem>>, vector<8x8x128xf32>
    %43 = vector.extract_strided_slice %5 {offsets = [5, 0], sizes = [1, 128], strides = [1, 1]} : vector<9x128xf32> to vector<1x128xf32>
    %44 = vector.shape_cast %43 : vector<1x128xf32> to vector<128xf32>
    %45 = vector.shape_cast %44 : vector<128xf32> to vector<1x1x128xf32>
    %46 = vector.broadcast %45 : vector<1x1x128xf32> to vector<8x8x128xf32>
    %47 = arith.mulf %42, %46 : vector<8x8x128xf32>
    %48 = arith.addf %41, %47 : vector<8x8x128xf32>
    %c4_28 = arith.constant 4 : index
    %c0_29 = arith.constant 0 : index
    %c0_30 = arith.constant 0 : index
    %49 = vector.load %arg16[%c4_28, %c0_29, %c0_30] : memref<12x12x128xf32, #tpu.memory_space<vmem>>, vector<8x8x128xf32>
    %50 = vector.extract_strided_slice %5 {offsets = [6, 0], sizes = [1, 128], strides = [1, 1]} : vector<9x128xf32> to vector<1x128xf32>
    %51 = vector.shape_cast %50 : vector<1x128xf32> to vector<128xf32>
    %52 = vector.shape_cast %51 : vector<128xf32> to vector<1x1x128xf32>
    %53 = vector.broadcast %52 : vector<1x1x128xf32> to vector<8x8x128xf32>
    %54 = arith.mulf %49, %53 : vector<8x8x128xf32>
    %55 = arith.addf %48, %54 : vector<8x8x128xf32>
    %c4_31 = arith.constant 4 : index
    %c2_32 = arith.constant 2 : index
    %c0_33 = arith.constant 0 : index
    %56 = vector.load %arg16[%c4_31, %c2_32, %c0_33] : memref<12x12x128xf32, #tpu.memory_space<vmem>>, vector<8x8x128xf32>
    %57 = vector.extract_strided_slice %5 {offsets = [7, 0], sizes = [1, 128], strides = [1, 1]} : vector<9x128xf32> to vector<1x128xf32>
    %58 = vector.shape_cast %57 : vector<1x128xf32> to vector<128xf32>
    %59 = vector.shape_cast %58 : vector<128xf32> to vector<1x1x128xf32>
    %60 = vector.broadcast %59 : vector<1x1x128xf32> to vector<8x8x128xf32>
    %61 = arith.mulf %56, %60 : vector<8x8x128xf32>
    %62 = arith.addf %55, %61 : vector<8x8x128xf32>
    %c4_34 = arith.constant 4 : index
    %c4_35 = arith.constant 4 : index
    %c0_36 = arith.constant 0 : index
    %63 = vector.load %arg16[%c4_34, %c4_35, %c0_36] : memref<12x12x128xf32, #tpu.memory_space<vmem>>, vector<8x8x128xf32>
    %64 = vector.extract_strided_slice %5 {offsets = [8, 0], sizes = [1, 128], strides = [1, 1]} : vector<9x128xf32> to vector<1x128xf32>
    %65 = vector.shape_cast %64 : vector<1x128xf32> to vector<128xf32>
    %66 = vector.shape_cast %65 : vector<128xf32> to vector<1x1x128xf32>
    %67 = vector.broadcast %66 : vector<1x1x128xf32> to vector<8x8x128xf32>
    %68 = arith.mulf %63, %67 : vector<8x8x128xf32>
    %69 = arith.addf %62, %68 : vector<8x8x128xf32>
    %c0_37 = arith.constant 0 : index
    %c0_38 = arith.constant 0 : index
    %70 = vector.load %arg6[%c0_37, %c0_38] : memref<1x128xf32, #tpu.memory_space<vmem>>, vector<1x128xf32>
    %71 = vector.shape_cast %70 : vector<1x128xf32> to vector<1x1x128xf32>
    %72 = vector.broadcast %71 : vector<1x1x128xf32> to vector<8x8x128xf32>
    %73 = arith.mulf %69, %72 : vector<8x8x128xf32>
    %c0_39 = arith.constant 0 : index
    %c0_40 = arith.constant 0 : index
    %74 = vector.load %arg7[%c0_39, %c0_40] : memref<1x128xf32, #tpu.memory_space<vmem>>, vector<1x128xf32>
    %75 = vector.shape_cast %74 : vector<1x128xf32> to vector<1x1x128xf32>
    %76 = vector.broadcast %75 : vector<1x1x128xf32> to vector<8x8x128xf32>
    %77 = arith.addf %73, %76 : vector<8x8x128xf32>
    %cst_41 = arith.constant 0.000000e+00 : f32
    %cst_42 = arith.constant 6.000000e+00 : f32
    %78 = vector.broadcast %cst_41 : f32 to vector<8x8x128xf32>
    %79 = arith.maximumf %78, %77 : vector<8x8x128xf32>
    %80 = vector.broadcast %cst_42 : f32 to vector<8x8x128xf32>
    %81 = arith.minimumf %80, %79 : vector<8x8x128xf32>
    %82 = vector.shape_cast %81 : vector<8x8x128xf32> to vector<64x128xf32>
    %83 = arith.truncf %82 : vector<64x128xf32> to vector<64x128xbf16>
    %c0_43 = arith.constant 0 : index
    %c0_44 = arith.constant 0 : index
    %84 = vector.load %arg8[%c0_43, %c0_44] : memref<128x128xbf16, #tpu.memory_space<vmem>>, vector<128x128xbf16>
    %cst_45 = arith.constant dense<0.000000e+00> : vector<64x128xf32>
    %85 = tpu.matmul %83, %84, %cst_45 {dimension_numbers = #tpu.dot_dimension_numbers<[1], [0], [0], [1], [0, 0, 1, 1], [], []>} : vector<64x128xbf16>, vector<128x128xbf16>, vector<64x128xf32> -> vector<64x128xf32>
    %c0_46 = arith.constant 0 : index
    %c0_47 = arith.constant 0 : index
    %86 = vector.load %arg9[%c0_46, %c0_47] : memref<1x128xf32, #tpu.memory_space<vmem>>, vector<1x128xf32>
    %87 = vector.broadcast %86 : vector<1x128xf32> to vector<64x128xf32>
    %88 = arith.mulf %85, %87 : vector<64x128xf32>
    %c0_48 = arith.constant 0 : index
    %c0_49 = arith.constant 0 : index
    %89 = vector.load %arg10[%c0_48, %c0_49] : memref<1x128xf32, #tpu.memory_space<vmem>>, vector<1x128xf32>
    %90 = vector.broadcast %89 : vector<1x128xf32> to vector<64x128xf32>
    %91 = arith.addf %88, %90 : vector<64x128xf32>
    %cst_50 = arith.constant 0.000000e+00 : f32
    %cst_51 = arith.constant 6.000000e+00 : f32
    %92 = vector.broadcast %cst_50 : f32 to vector<64x128xf32>
    %93 = arith.maximumf %92, %91 : vector<64x128xf32>
    %94 = vector.broadcast %cst_51 : f32 to vector<64x128xf32>
    %95 = arith.minimumf %94, %93 : vector<64x128xf32>
    %96 = vector.shape_cast %1 : vector<8x8x128xf32> to vector<64x128xf32>
    %97 = arith.addf %95, %96 : vector<64x128xf32>
    %cst_52 = arith.constant dense<0.000000e+00> : vector<128xf32>
    %98 = vector.multi_reduction <add>, %97, %cst_52 [0] : vector<64x128xf32> to vector<128xf32>
    %99 = vector.shape_cast %98 : vector<128xf32> to vector<1x128xf32>
    %cst_53 = arith.constant 6.400000e+01 : f32
    %100 = vector.broadcast %cst_53 : f32 to vector<1x128xf32>
    %101 = arith.divf %99, %100 : vector<1x128xf32>
    %102 = arith.truncf %101 : vector<1x128xf32> to vector<1x128xbf16>
    %c0_54 = arith.constant 0 : index
    %c0_55 = arith.constant 0 : index
    %103 = vector.load %arg11[%c0_54, %c0_55] : memref<128x128xbf16, #tpu.memory_space<vmem>>, vector<128x128xbf16>
    %cst_56 = arith.constant dense<0.000000e+00> : vector<1x128xf32>
    %104 = tpu.matmul %102, %103, %cst_56 {dimension_numbers = #tpu.dot_dimension_numbers<[1], [0], [0], [1], [0, 0, 1, 1], [], []>} : vector<1x128xbf16>, vector<128x128xbf16>, vector<1x128xf32> -> vector<1x128xf32>
    %c0_57 = arith.constant 0 : index
    %c0_58 = arith.constant 0 : index
    %105 = vector.load %arg12[%c0_57, %c0_58] : memref<1x128xf32, #tpu.memory_space<vmem>>, vector<1x128xf32>
    %106 = arith.addf %104, %105 : vector<1x128xf32>
    %cst_59 = arith.constant 0.000000e+00 : f32
    %107 = vector.broadcast %cst_59 : f32 to vector<1x128xf32>
    %108 = arith.maximumf %106, %107 : vector<1x128xf32>
    %109 = arith.truncf %108 : vector<1x128xf32> to vector<1x128xbf16>
    %c0_60 = arith.constant 0 : index
    %c0_61 = arith.constant 0 : index
    %110 = vector.load %arg13[%c0_60, %c0_61] : memref<128x128xbf16, #tpu.memory_space<vmem>>, vector<128x128xbf16>
    %cst_62 = arith.constant dense<0.000000e+00> : vector<1x128xf32>
    %111 = tpu.matmul %109, %110, %cst_62 {dimension_numbers = #tpu.dot_dimension_numbers<[1], [0], [0], [1], [0, 0, 1, 1], [], []>} : vector<1x128xbf16>, vector<128x128xbf16>, vector<1x128xf32> -> vector<1x128xf32>
    %c0_63 = arith.constant 0 : index
    %c0_64 = arith.constant 0 : index
    %112 = vector.load %arg14[%c0_63, %c0_64] : memref<1x128xf32, #tpu.memory_space<vmem>>, vector<1x128xf32>
    %113 = arith.addf %111, %112 : vector<1x128xf32>
    %114 = arith.negf %113 : vector<1x128xf32>
    %115 = math.exp %114 : vector<1x128xf32>
    %cst_65 = arith.constant 1.000000e+00 : f32
    %116 = vector.broadcast %cst_65 : f32 to vector<1x128xf32>
    %117 = arith.addf %116, %115 : vector<1x128xf32>
    %118 = arith.divf %116, %117 : vector<1x128xf32>
    %119 = vector.broadcast %118 : vector<1x128xf32> to vector<64x128xf32>
    %120 = arith.mulf %97, %119 : vector<64x128xf32>
    %121 = vector.shape_cast %120 : vector<64x128xf32> to vector<8x8x128xf32>
    %c0_66 = arith.constant 0 : index
    %c0_67 = arith.constant 0 : index
    %c0_68 = arith.constant 0 : index
    %c0_69 = arith.constant 0 : index
    %122 = vector.load %arg15[%c0_66, %c0_67, %c0_68, %c0_69] : memref<1x8x8x128xf32, #tpu.memory_space<vmem>>, vector<1x8x8x128xf32>
    %123 = vector.shape_cast %122 : vector<1x8x8x128xf32> to vector<8x8x128xf32>
    %124 = vector.shape_cast %121 : vector<8x8x128xf32> to vector<1x8x8x128xf32>
    tpu.vector_store %arg15[%c0_66, %c0_67, %c0_68, %c0_69], %124 {strides = array<i32>} : memref<1x8x8x128xf32, #tpu.memory_space<vmem>>, vector<1x8x8x128xf32>,
    return
  }
  func.func @transform_0(%arg0: i32) -> (i32, i32, i32, i32) {
    %c0_i32 = arith.constant 0 : i32
    %c0_i32_0 = arith.constant 0 : i32
    %c0_i32_1 = arith.constant 0 : i32
    %c0_i32_2 = arith.constant 0 : i32
    return %arg0, %c0_i32, %c0_i32_0, %c0_i32_1 : i32, i32, i32, i32
  }
  func.func @transform_1(%arg0: i32) -> (i32, i32) {
    %c0_i32 = arith.constant 0 : i32
    %c0_i32_0 = arith.constant 0 : i32
    %c0_i32_1 = arith.constant 0 : i32
    return %c0_i32, %c0_i32_0 : i32, i32
  }
  func.func @transform_2(%arg0: i32) -> (i32, i32) {
    %c0_i32 = arith.constant 0 : i32
    %c0_i32_0 = arith.constant 0 : i32
    %c0_i32_1 = arith.constant 0 : i32
    return %c0_i32, %c0_i32_0 : i32, i32
  }
  func.func @transform_3(%arg0: i32) -> (i32, i32) {
    %c0_i32 = arith.constant 0 : i32
    %c0_i32_0 = arith.constant 0 : i32
    %c0_i32_1 = arith.constant 0 : i32
    return %c0_i32, %c0_i32_0 : i32, i32
  }
  func.func @transform_4(%arg0: i32) -> (i32, i32) {
    %c0_i32 = arith.constant 0 : i32
    %c0_i32_0 = arith.constant 0 : i32
    %c0_i32_1 = arith.constant 0 : i32
    return %c0_i32, %c0_i32_0 : i32, i32
  }
  func.func @transform_5(%arg0: i32) -> (i32, i32) {
    %c0_i32 = arith.constant 0 : i32
    %c0_i32_0 = arith.constant 0 : i32
    %c0_i32_1 = arith.constant 0 : i32
    return %c0_i32, %c0_i32_0 : i32, i32
  }
  func.func @transform_6(%arg0: i32) -> (i32, i32) {
    %c0_i32 = arith.constant 0 : i32
    %c0_i32_0 = arith.constant 0 : i32
    %c0_i32_1 = arith.constant 0 : i32
    return %c0_i32, %c0_i32_0 : i32, i32
  }
  func.func @transform_7(%arg0: i32) -> (i32, i32) {
    %c0_i32 = arith.constant 0 : i32
    %c0_i32_0 = arith.constant 0 : i32
    %c0_i32_1 = arith.constant 0 : i32
    return %c0_i32, %c0_i32_0 : i32, i32
  }
  func.func @transform_8(%arg0: i32) -> (i32, i32) {
    %c0_i32 = arith.constant 0 : i32
    %c0_i32_0 = arith.constant 0 : i32
    %c0_i32_1 = arith.constant 0 : i32
    return %c0_i32, %c0_i32_0 : i32, i32
  }
  func.func @transform_9(%arg0: i32) -> (i32, i32) {
    %c0_i32 = arith.constant 0 : i32
    %c0_i32_0 = arith.constant 0 : i32
    %c0_i32_1 = arith.constant 0 : i32
    return %c0_i32, %c0_i32_0 : i32, i32
  }
  func.func @transform_10(%arg0: i32) -> (i32, i32) {
    %c0_i32 = arith.constant 0 : i32
    %c0_i32_0 = arith.constant 0 : i32
    %c0_i32_1 = arith.constant 0 : i32
    return %c0_i32, %c0_i32_0 : i32, i32
  }
  func.func @transform_11(%arg0: i32) -> (i32, i32) {
    %c0_i32 = arith.constant 0 : i32
    %c0_i32_0 = arith.constant 0 : i32
    %c0_i32_1 = arith.constant 0 : i32
    return %c0_i32, %c0_i32_0 : i32, i32
  }
  func.func @transform_12(%arg0: i32) -> (i32, i32) {
    %c0_i32 = arith.constant 0 : i32
    %c0_i32_0 = arith.constant 0 : i32
    %c0_i32_1 = arith.constant 0 : i32
    return %c0_i32, %c0_i32_0 : i32, i32
  }
  func.func @transform_13(%arg0: i32) -> (i32, i32) {
    %c0_i32 = arith.constant 0 : i32
    %c0_i32_0 = arith.constant 0 : i32
    %c0_i32_1 = arith.constant 0 : i32
    return %c0_i32, %c0_i32_0 : i32, i32
  }
  func.func @transform_14(%arg0: i32) -> (i32, i32, i32, i32) {
    %c0_i32 = arith.constant 0 : i32
    %c0_i32_0 = arith.constant 0 : i32
    %c0_i32_1 = arith.constant 0 : i32
    %c0_i32_2 = arith.constant 0 : i32
    return %arg0, %c0_i32, %c0_i32_0, %c0_i32_1 : i32, i32, i32, i32
  }
}

</mosaic_0001>

<llo_original>
// kernel: forward.5
$region0: #{forward.5}
  #allocation0 [shape = 'u32[]', space=smem, size = 0x4, offset = 0x4, fixed_abs, tag = 'smem constant byte address 0x4 - core index']
  #allocation1 [shape = 'u32[144,128]{1,0:T(1,128)}', space=vmem, size = 0x12000, scoped, tag = 'internal scratch']
  #allocation2 [shape = 'f32[12,12,128]{2,1,0:T(8,128)}', space=vmem, size = 0x18000, scoped, tag = 'scratch operand']
  %s0 = inlined_call_operand.vmem [shape: f32[2,8,8,128], index: 0, kind: input, shape index: {}]
  %s1 = inlined_call_operand.vmem [shape: bf16[128,128], index: 1, kind: input, shape index: {}]
  %s2 = inlined_call_operand.vmem [shape: f32[1,128], index: 2, kind: input, shape index: {}]
  %s3 = inlined_call_operand.vmem [shape: f32[1,128], index: 3, kind: input, shape index: {}]
  %s4 = inlined_call_operand.vmem [shape: f32[9,128], index: 4, kind: input, shape index: {}]
  %s5 = inlined_call_operand.vmem [shape: f32[1,128], index: 5, kind: input, shape index: {}]
  %s6 = inlined_call_operand.vmem [shape: f32[1,128], index: 6, kind: input, shape index: {}]
  %s7 = inlined_call_operand.vmem [shape: bf16[128,128], index: 7, kind: input, shape index: {}]
  %s8 = inlined_call_operand.vmem [shape: f32[1,128], index: 8, kind: input, shape index: {}]
  %s9 = inlined_call_operand.vmem [shape: f32[1,128], index: 9, kind: input, shape index: {}]
  %s10 = inlined_call_operand.vmem [shape: bf16[128,128], index: 10, kind: input, shape index: {}]
  %s11 = inlined_call_operand.vmem [shape: f32[1,128], index: 11, kind: input, shape index: {}]
  %s12 = inlined_call_operand.vmem [shape: bf16[128,128], index: 12, kind: input, shape index: {}]
  %s13 = inlined_call_operand.vmem [shape: f32[1,128], index: 13, kind: input, shape index: {}]
  %s14 = inlined_call_operand.vmem [shape: f32[2,8,8,128], index: 14, kind: output, shape index: {}]
  %s15 = sld [smem:[#allocation0]]
  $region89: #{forward.5} parent=0
    _
  %s17 = ssub.s32 1, %s15
  %s18 = scalar_select 0, %s17, %s15
  loop: start=0, step=1, limit=4
  $region2: #{forward.5} parent=0 // loop_pre_header
    _
  $region3: #{forward.5} parent=0 // loop_header
    %s20 = sphi 0, %s24
    %p21 = scmp.ge.s32.totalorder %s20, 4
    %s30 = sphi 0, %s32
    %s33 = sphi 0, %s30
    %s34 = sphi 0, %s33
    %s50 = sphi 0, %s34
    %s54 = sphi 0, %s54
    %s56 = sphi 0, %s54
    %s57 = sphi 0, %s56
    %s71 = sphi 0, %s57
    %s75 = sphi 0, %s75
    %s77 = sphi 0, %s75
    %s78 = sphi 0, %s77
    %s92 = sphi 0, %s78
    %s96 = sphi 0, %s96
    %s98 = sphi 0, %s96
    %s99 = sphi 0, %s98
    %s113 = sphi 0, %s99
    %s117 = sphi 0, %s117
    %s119 = sphi 0, %s117
    %s120 = sphi 0, %s119
    %s134 = sphi 0, %s120
    %s138 = sphi 0, %s138
    %s140 = sphi 0, %s138
    %s141 = sphi 0, %s140
    %s155 = sphi 0, %s141
    %s159 = sphi 0, %s159
    %s161 = sphi 0, %s159
    %s162 = sphi 0, %s161
    %s176 = sphi 0, %s162
    %s180 = sphi 0, %s180
    %s182 = sphi 0, %s180
    %s183 = sphi 0, %s182
    %s197 = sphi 0, %s183
    %s201 = sphi 0, %s201
    %s203 = sphi 0, %s201
    %s204 = sphi 0, %s203
    %s218 = sphi 0, %s204
    %s222 = sphi 0, %s222
    %s224 = sphi 0, %s222
    %s225 = sphi 0, %s224
    %s239 = sphi 0, %s225
    %s243 = sphi 0, %s243
    %s245 = sphi 0, %s243
    %s246 = sphi 0, %s245
    %s260 = sphi 0, %s246
    %s264 = sphi 0, %s264
    %s266 = sphi 0, %s264
    %s267 = sphi 0, %s266
    %s281 = sphi 0, %s267
    %s285 = sphi 0, %s285
    %s287 = sphi 0, %s285
    %s288 = sphi 0, %s287
    %s302 = sphi 0, %s288
    %s306 = sphi 0, %s306
    %s308 = sphi 0, %s306
    %s309 = sphi 0, %s308
    %s323 = sphi 0, %s309
    %s329 = sphi 0, %s331
    %s332 = sphi 0, %s329
    %s333 = sphi 0, %s332
    %s349 = sphi 0, %s333
  $region4: #{forward.5} parent=0 // loop_header_branch
    %23 = sbr.rel (%p21) target = $region8
  $region5: #{forward.5} parent=0 // loop_body
    %s25 = ssub.s32 %s20, 1
    %s26 = ssub.s32 %s20, 2
    %s27 = sadd.s32 %s20, 1
    %s28 = ssub.s32 %s20, %s27
    %p29 = scmp.eq.s32.totalorder %s28, 0
    %s31 = sadd.s32 %s30, 1
    %s32 = scalar_select %p29, %s30, %s31
    %p35 = pneg %p29
    %p36 = scmp.eq.s32.totalorder %s20, 1
    %p37 = por %p35, %p36
    %p38 = scmp.ne.s32.totalorder %s30, %s33
    %p39 = scmp.eq.s32.totalorder %s20, 0
    %p40 = por %p38, %p39
    %p41 = scmp.ne.s32.totalorder %s30, %s33
    %p42 = scmp.eq.s32.totalorder %s25, 1
    %p43 = por %p41, %p42
    %p44 = scmp.ne.s32.totalorder %s33, %s34
    %p45 = scmp.eq.s32.totalorder %s25, 0
    %p46 = por %p44, %p45
    %p47 = scmp.ne.s32.totalorder %s33, %s34
    %p48 = scmp.eq.s32.totalorder %s26, 1
    %p49 = por %p47, %p48
    %p51 = scmp.ne.s32.totalorder %s34, %s50
    %p52 = scmp.eq.s32.totalorder %s26, 0
    %p53 = por %p51, %p52
    %s55 = sadd.s32 %s54, 1
    %p58 = scmp.eq.s32.totalorder %s20, 1
    %p59 = scmp.ne.s32.totalorder %s54, %s56
    %p60 = scmp.eq.s32.totalorder %s20, 0
    %p61 = por %p59, %p60
    %p62 = scmp.ne.s32.totalorder %s54, %s56
    %p63 = scmp.eq.s32.totalorder %s25, 1
    %p64 = por %p62, %p63
    %p65 = scmp.ne.s32.totalorder %s56, %s57
    %p66 = scmp.eq.s32.totalorder %s25, 0
    %p67 = por %p65, %p66
    %p68 = scmp.ne.s32.totalorder %s56, %s57
    %p69 = scmp.eq.s32.totalorder %s26, 1
    %p70 = por %p68, %p69
    %p72 = scmp.ne.s32.totalorder %s57, %s71
    %p73 = scmp.eq.s32.totalorder %s26, 0
    %p74 = por %p72, %p73
    %s76 = sadd.s32 %s75, 1
    %p79 = scmp.eq.s32.totalorder %s20, 1
    %p80 = scmp.ne.s32.totalorder %s75, %s77
    %p81 = scmp.eq.s32.totalorder %s20, 0
    %p82 = por %p80, %p81
    %p83 = scmp.ne.s32.totalorder %s75, %s77
    %p84 = scmp.eq.s32.totalorder %s25, 1
    %p85 = por %p83, %p84
    %p86 = scmp.ne.s32.totalorder %s77, %s78
    %p87 = scmp.eq.s32.totalorder %s25, 0
    %p88 = por %p86, %p87
    %p89 = scmp.ne.s32.totalorder %s77, %s78
    %p90 = scmp.eq.s32.totalorder %s26, 1
    %p91 = por %p89, %p90
    %p93 = scmp.ne.s32.totalorder %s78, %s92
    %p94 = scmp.eq.s32.totalorder %s26, 0
    %p95 = por %p93, %p94
    %s97 = sadd.s32 %s96, 1
    %p100 = scmp.eq.s32.totalorder %s20, 1
    %p101 = scmp.ne.s32.totalorder %s96, %s98
    %p102 = scmp.eq.s32.totalorder %s20, 0
    %p103 = por %p101, %p102
    %p104 = scmp.ne.s32.totalorder %s96, %s98
    %p105 = scmp.eq.s32.totalorder %s25, 1
    %p106 = por %p104, %p105
    %p107 = scmp.ne.s32.totalorder %s98, %s99
    %p108 = scmp.eq.s32.totalorder %s25, 0
    %p109 = por %p107, %p108
    %p110 = scmp.ne.s32.totalorder %s98, %s99
    %p111 = scmp.eq.s32.totalorder %s26, 1
    %p112 = por %p110, %p111
    %p114 = scmp.ne.s32.totalorder %s99, %s113
    %p115 = scmp.eq.s32.totalorder %s26, 0
    %p116 = por %p114, %p115
    %s118 = sadd.s32 %s117, 1
    %p121 = scmp.eq.s32.totalorder %s20, 1
    %p122 = scmp.ne.s32.totalorder %s117, %s119
    %p123 = scmp.eq.s32.totalorder %s20, 0
    %p124 = por %p122, %p123
    %p125 = scmp.ne.s32.totalorder %s117, %s119
    %p126 = scmp.eq.s32.totalorder %s25, 1
    %p127 = por %p125, %p126
    %p128 = scmp.ne.s32.totalorder %s119, %s120
    %p129 = scmp.eq.s32.totalorder %s25, 0
    %p130 = por %p128, %p129
    %p131 = scmp.ne.s32.totalorder %s119, %s120
    %p132 = scmp.eq.s32.totalorder %s26, 1
    %p133 = por %p131, %p132
    %p135 = scmp.ne.s32.totalorder %s120, %s134
    %p136 = scmp.eq.s32.totalorder %s26, 0
    %p137 = por %p135, %p136
    %s139 = sadd.s32 %s138, 1
    %p142 = scmp.eq.s32.totalorder %s20, 1
    %p143 = scmp.ne.s32.totalorder %s138, %s140
    %p144 = scmp.eq.s32.totalorder %s20, 0
    %p145 = por %p143, %p144
    %p146 = scmp.ne.s32.totalorder %s138, %s140
    %p147 = scmp.eq.s32.totalorder %s25, 1
    %p148 = por %p146, %p147
    %p149 = scmp.ne.s32.totalorder %s140, %s141
    %p150 = scmp.eq.s32.totalorder %s25, 0
    %p151 = por %p149, %p150
    %p152 = scmp.ne.s32.totalorder %s140, %s141
    %p153 = scmp.eq.s32.totalorder %s26, 1
    %p154 = por %p152, %p153
    %p156 = scmp.ne.s32.totalorder %s141, %s155
    %p157 = scmp.eq.s32.totalorder %s26, 0
    %p158 = por %p156, %p157
    %s160 = sadd.s32 %s159, 1
    %p163 = scmp.eq.s32.totalorder %s20, 1
    %p164 = scmp.ne.s32.totalorder %s159, %s161
    %p165 = scmp.eq.s32.totalorder %s20, 0
    %p166 = por %p164, %p165
    %p167 = scmp.ne.s32.totalorder %s159, %s161
    %p168 = scmp.eq.s32.totalorder %s25, 1
    %p169 = por %p167, %p168
    %p170 = scmp.ne.s32.totalorder %s161, %s162
    %p171 = scmp.eq.s32.totalorder %s25, 0
    %p172 = por %p170, %p171
    %p173 = scmp.ne.s32.totalorder %s161, %s162
    %p174 = scmp.eq.s32.totalorder %s26, 1
    %p175 = por %p173, %p174
    %p177 = scmp.ne.s32.totalorder %s162, %s176
    %p178 = scmp.eq.s32.totalorder %s26, 0
    %p179 = por %p177, %p178
    %s181 = sadd.s32 %s180, 1
    %p184 = scmp.eq.s32.totalorder %s20, 1
    %p185 = scmp.ne.s32.totalorder %s180, %s182
    %p186 = scmp.eq.s32.totalorder %s20, 0
    %p187 = por %p185, %p186
    %p188 = scmp.ne.s32.totalorder %s180, %s182
    %p189 = scmp.eq.s32.totalorder %s25, 1
    %p190 = por %p188, %p189
    %p191 = scmp.ne.s32.totalorder %s182, %s183
    %p192 = scmp.eq.s32.totalorder %s25, 0
    %p193 = por %p191, %p192
    %p194 = scmp.ne.s32.totalorder %s182, %s183
    %p195 = scmp.eq.s32.totalorder %s26, 1
    %p196 = por %p194, %p195
    %p198 = scmp.ne.s32.totalorder %s183, %s197
    %p199 = scmp.eq.s32.totalorder %s26, 0
    %p200 = por %p198, %p199
    %s202 = sadd.s32 %s201, 1
    %p205 = scmp.eq.s32.totalorder %s20, 1
    %p206 = scmp.ne.s32.totalorder %s201, %s203
    %p207 = scmp.eq.s32.totalorder %s20, 0
    %p208 = por %p206, %p207
    %p209 = scmp.ne.s32.totalorder %s201, %s203
    %p210 = scmp.eq.s32.totalorder %s25, 1
    %p211 = por %p209, %p210
    %p212 = scmp.ne.s32.totalorder %s203, %s204
    %p213 = scmp.eq.s32.totalorder %s25, 0
    %p214 = por %p212, %p213
    %p215 = scmp.ne.s32.totalorder %s203, %s204
    %p216 = scmp.eq.s32.totalorder %s26, 1
    %p217 = por %p215, %p216
    %p219 = scmp.ne.s32.totalorder %s204, %s218
    %p220 = scmp.eq.s32.totalorder %s26, 0
    %p221 = por %p219, %p220
    %s223 = sadd.s32 %s222, 1
    %p226 = scmp.eq.s32.totalorder %s20, 1
    %p227 = scmp.ne.s32.totalorder %s222, %s224
    %p228 = scmp.eq.s32.totalorder %s20, 0
    %p229 = por %p227, %p228
    %p230 = scmp.ne.s32.totalorder %s222, %s224
    %p231 = scmp.eq.s32.totalorder %s25, 1
    %p232 = por %p230, %p231
    %p233 = scmp.ne.s32.totalorder %s224, %s225
    %p234 = scmp.eq.s32.totalorder %s25, 0
    %p235 = por %p233, %p234
    %p236 = scmp.ne.s32.totalorder %s224, %s225
    %p237 = scmp.eq.s32.totalorder %s26, 1
    %p238 = por %p236, %p237
    %p240 = scmp.ne.s32.totalorder %s225, %s239
    %p241 = scmp.eq.s32.totalorder %s26, 0
    %p242 = por %p240, %p241
    %s244 = sadd.s32 %s243, 1
    %p247 = scmp.eq.s32.totalorder %s20, 1
    %p248 = scmp.ne.s32.totalorder %s243, %s245
    %p249 = scmp.eq.s32.totalorder %s20, 0
    %p250 = por %p248, %p249
    %p251 = scmp.ne.s32.totalorder %s243, %s245
    %p252 = scmp.eq.s32.totalorder %s25, 1
    %p253 = por %p251, %p252
    %p254 = scmp.ne.s32.totalorder %s245, %s246
    %p255 = scmp.eq.s32.totalorder %s25, 0
    %p256 = por %p254, %p255
    %p257 = scmp.ne.s32.totalorder %s245, %s246
    %p258 = scmp.eq.s32.totalorder %s26, 1
    %p259 = por %p257, %p258
    %p261 = scmp.ne.s32.totalorder %s246, %s260
    %p262 = scmp.eq.s32.totalorder %s26, 0
    %p263 = por %p261, %p262
    %s265 = sadd.s32 %s264, 1
    %p268 = scmp.eq.s32.totalorder %s20, 1
    %p269 = scmp.ne.s32.totalorder %s264, %s266
    %p270 = scmp.eq.s32.totalorder %s20, 0
    %p271 = por %p269, %p270
    %p272 = scmp.ne.s32.totalorder %s264, %s266
    %p273 = scmp.eq.s32.totalorder %s25, 1
    %p274 = por %p272, %p273
    %p275 = scmp.ne.s32.totalorder %s266, %s267
    %p276 = scmp.eq.s32.totalorder %s25, 0
    %p277 = por %p275, %p276
    %p278 = scmp.ne.s32.totalorder %s266, %s267
    %p279 = scmp.eq.s32.totalorder %s26, 1
    %p280 = por %p278, %p279
    %p282 = scmp.ne.s32.totalorder %s267, %s281
    %p283 = scmp.eq.s32.totalorder %s26, 0
    %p284 = por %p282, %p283
    %s286 = sadd.s32 %s285, 1
    %p289 = scmp.eq.s32.totalorder %s20, 1
    %p290 = scmp.ne.s32.totalorder %s285, %s287
    %p291 = scmp.eq.s32.totalorder %s20, 0
    %p292 = por %p290, %p291
    %p293 = scmp.ne.s32.totalorder %s285, %s287
    %p294 = scmp.eq.s32.totalorder %s25, 1
    %p295 = por %p293, %p294
    %p296 = scmp.ne.s32.totalorder %s287, %s288
    %p297 = scmp.eq.s32.totalorder %s25, 0
    %p298 = por %p296, %p297
    %p299 = scmp.ne.s32.totalorder %s287, %s288
    %p300 = scmp.eq.s32.totalorder %s26, 1
    %p301 = por %p299, %p300
    %p303 = scmp.ne.s32.totalorder %s288, %s302
    %p304 = scmp.eq.s32.totalorder %s26, 0
    %p305 = por %p303, %p304
    %s307 = sadd.s32 %s306, 1
    %p310 = scmp.eq.s32.totalorder %s20, 1
    %p311 = scmp.ne.s32.totalorder %s306, %s308
    %p312 = scmp.eq.s32.totalorder %s20, 0
    %p313 = por %p311, %p312
    %p314 = scmp.ne.s32.totalorder %s306, %s308
    %p315 = scmp.eq.s32.totalorder %s25, 1
    %p316 = por %p314, %p315
    %p317 = scmp.ne.s32.totalorder %s308, %s309
    %p318 = scmp.eq.s32.totalorder %s25, 0
    %p319 = por %p317, %p318
    %p320 = scmp.ne.s32.totalorder %s308, %s309
    %p321 = scmp.eq.s32.totalorder %s26, 1
    %p322 = por %p320, %p321
    %p324 = scmp.ne.s32.totalorder %s309, %s323
    %p325 = scmp.eq.s32.totalorder %s26, 0
    %p326 = por %p324, %p325
    %s327 = ssub.s32 %s20, %s27
    %p328 = scmp.eq.s32.totalorder %s327, 0
    %s330 = sadd.s32 %s329, 1
    %s331 = scalar_select %p328, %s329, %s330
    %p334 = pneg %p328
    %p335 = scmp.eq.s32.totalorder %s20, 1
    %p336 = por %p334, %p335
    %p337 = scmp.ne.s32.totalorder %s329, %s332
    %p338 = scmp.eq.s32.totalorder %s20, 0
    %p339 = por %p337, %p338
    %p340 = scmp.ne.s32.totalorder %s329, %s332
    %p341 = scmp.eq.s32.totalorder %s25, 1
    %p342 = por %p340, %p341
    %p343 = scmp.ne.s32.totalorder %s332, %s333
    %p344 = scmp.eq.s32.totalorder %s25, 0
    %p345 = por %p343, %p344
    %p346 = scmp.ne.s32.totalorder %s332, %s333
    %p347 = scmp.eq.s32.totalorder %s26, 1
    %p348 = por %p346, %p347
    %p350 = scmp.ne.s32.totalorder %s333, %s349
    %p351 = scmp.eq.s32.totalorder %s26, 0
    %p352 = por %p350, %p351
    %p353 = scmp.le.s32.totalorder 1, %s20
    %p354 = scmp.lt.s32.totalorder %s20, 3
    %p355 = pnand %p353, %p354
    %p356 = pneg %p355
    // Predicated region
    $region9: #{forward.5} parent=5 // pred_check
      _
    $region10: #{forward.5} parent=5 // pred_check_branch
      %358 = sbr.rel (%p355) target = $region12
    $region11: #{forward.5} parent=5 // pred_region
      %s359 = ssub.s32 %s20, 1
      // Predicated region
      $region13: #{forward.5} parent=11 // pred_check
        %p360 = pneg %p67
      $region14: #{forward.5} parent=11 // pred_check_branch
        %362 = sbr.rel (%p360) target = $region16
      $region15: #{forward.5} parent=11 // pred_region
        _
      $region16: #{forward.5} parent=11 // pred_fallthru
        _
      // Predicated region
      $region17: #{forward.5} parent=11 // pred_check
        %p363 = pneg %p88
      $region18: #{forward.5} parent=11 // pred_check_branch
        %365 = sbr.rel (%p363) target = $region20
      $region19: #{forward.5} parent=11 // pred_region
        _
      $region20: #{forward.5} parent=11 // pred_fallthru
        _
      // Predicated region
      $region21: #{forward.5} parent=11 // pred_check
        %p366 = pneg %p109
      $region22: #{forward.5} parent=11 // pred_check_branch
        %368 = sbr.rel (%p366) target = $region24
      $region23: #{forward.5} parent=11 // pred_region
        _
      $region24: #{forward.5} parent=11 // pred_fallthru
        _
      // Predicated region
      $region25: #{forward.5} parent=11 // pred_check
        %p369 = pneg %p130
      $region26: #{forward.5} parent=11 // pred_check_branch
        %371 = sbr.rel (%p369) target = $region28
      $region27: #{forward.5} parent=11 // pred_region
        _
      $region28: #{forward.5} parent=11 // pred_fallthru
        _
      // Predicated region
      $region29: #{forward.5} parent=11 // pred_check
        %p372 = pneg %p151
      $region30: #{forward.5} parent=11 // pred_check_branch
        %374 = sbr.rel (%p372) target = $region32
      $region31: #{forward.5} parent=11 // pred_region
        _
      $region32: #{forward.5} parent=11 // pred_fallthru
        _
      // Predicated region
      $region33: #{forward.5} parent=11 // pred_check
        %p375 = pneg %p172
      $region34: #{forward.5} parent=11 // pred_check_branch
        %377 = sbr.rel (%p375) target = $region36
      $region35: #{forward.5} parent=11 // pred_region
        _
      $region36: #{forward.5} parent=11 // pred_fallthru
        _
      // Predicated region
      $region37: #{forward.5} parent=11 // pred_check
        %p378 = pneg %p193
      $region38: #{forward.5} parent=11 // pred_check_branch
        %380 = sbr.rel (%p378) target = $region40
      $region39: #{forward.5} parent=11 // pred_region
        _
      $region40: #{forward.5} parent=11 // pred_fallthru
        _
      // Predicated region
      $region41: #{forward.5} parent=11 // pred_check
        %p381 = pneg %p214
      $region42: #{forward.5} parent=11 // pred_check_branch
        %383 = sbr.rel (%p381) target = $region44
      $region43: #{forward.5} parent=11 // pred_region
        _
      $region44: #{forward.5} parent=11 // pred_fallthru
        _
      // Predicated region
      $region45: #{forward.5} parent=11 // pred_check
        %p384 = pneg %p235
      $region46: #{forward.5} parent=11 // pred_check_branch
        %386 = sbr.rel (%p384) target = $region48
      $region47: #{forward.5} parent=11 // pred_region
        _
      $region48: #{forward.5} parent=11 // pred_fallthru
        _
      // Predicated region
      $region49: #{forward.5} parent=11 // pred_check
        %p387 = pneg %p256
      $region50: #{forward.5} parent=11 // pred_check_branch
        %389 = sbr.rel (%p387) target = $region52
      $region51: #{forward.5} parent=11 // pred_region
        _
      $region52: #{forward.5} parent=11 // pred_fallthru
        _
      // Predicated region
      $region53: #{forward.5} parent=11 // pred_check
        %p390 = pneg %p277
      $region54: #{forward.5} parent=11 // pred_check_branch
        %392 = sbr.rel (%p390) target = $region56
      $region55: #{forward.5} parent=11 // pred_region
        _
      $region56: #{forward.5} parent=11 // pred_fallthru
        _
      // Predicated region
      $region57: #{forward.5} parent=11 // pred_check
        %p393 = pneg %p298
      $region58: #{forward.5} parent=11 // pred_check_branch
        %395 = sbr.rel (%p393) target = $region60
      $region59: #{forward.5} parent=11 // pred_region
        _
      $region60: #{forward.5} parent=11 // pred_fallthru
        _
      // Predicated region
      $region61: #{forward.5} parent=11 // pred_check
        %p396 = pneg %p319
      $region62: #{forward.5} parent=11 // pred_check_branch
        %398 = sbr.rel (%p396) target = $region64
      $region63: #{forward.5} parent=11 // pred_region
        _
      $region64: #{forward.5} parent=11 // pred_fallthru
        _
    $region12: #{forward.5} parent=5 // pred_fallthru
      _
    %p399 = scmp.lt.s32.totalorder %s20, 2
    // Predicated region
    $region65: #{forward.5} parent=5 // pred_check
      %p400 = pneg %p399
    $region66: #{forward.5} parent=5 // pred_check_branch
      %402 = sbr.rel (%p400) target = $region68
    $region67: #{forward.5} parent=5 // pred_region
      // Predicated region
      $region69: #{forward.5} parent=67 // pred_check
        %p403 = pneg %p40
      $region70: #{forward.5} parent=67 // pred_check_branch
        %405 = sbr.rel (%p403) target = $region72
      $region71: #{forward.5} parent=67 // pred_region
        %p406 = scmp.lt.s32.totalorder %s20, 1
        %s407 = scalar_select %p406, %s20, 1
        %s408 = smul.addr %s407, 8
        %s409 = smul.addr %s408, 8
        %s410 = scalar_lea.vmem %s0, %s409
      $region72: #{forward.5} parent=67 // pred_fallthru
        _
    $region68: #{forward.5} parent=5 // pred_fallthru
      _
    %p411 = scmp.le.s32.totalorder 1, %s20
    %p412 = scmp.lt.s32.totalorder %s20, 3
    %p413 = pnand %p411, %p412
    %p414 = pneg %p413
    // Predicated region
    $region73: #{forward.5} parent=5 // pred_check
      _
    $region74: #{forward.5} parent=5 // pred_check_branch
      %416 = sbr.rel (%p413) target = $region76
    $region75: #{forward.5} parent=5 // pred_region
      %s417 = ssub.s32 %s20, 1
      %p418 = scmp.lt.s32.totalorder %s25, 1
      %s419 = scalar_select %p418, %s25, 1
      %s420 = smul.addr %s419, 8
      %s421 = smul.addr %s420, 8
      %s422 = scalar_lea.vmem %s0, %s421
      %p423 = pneg %p46
      %p424 = pneg %p43
      %p425 = pneg %p67
      %p426 = pneg %p64
      %p427 = pneg %p88
      %p428 = pneg %p85
      %p429 = pneg %p109
      %p430 = pneg %p106
      %p431 = pneg %p130
      %p432 = pneg %p127
      %p433 = pneg %p151
      %p434 = pneg %p148
      %p435 = pneg %p172
      %p436 = pneg %p169
      %p437 = pneg %p193
      %p438 = pneg %p190
      %p439 = pneg %p214
      %p440 = pneg %p211
      %p441 = pneg %p235
      %p442 = pneg %p232
      %p443 = pneg %p256
      %p444 = pneg %p253
      %p445 = pneg %p277
      %p446 = pneg %p274
      %p447 = pneg %p298
      %p448 = pneg %p295
      %p449 = pneg %p319
      %p450 = pneg %p316
      %p451 = pneg %p345
      %p452 = pneg %p342
      %p453 = scmp.lt.s32.totalorder %s25, 1
      %s454 = scalar_select %p453, %s25, 1
      %s455 = smul.addr %s454, 8
      %s456 = smul.addr %s455, 8
      %s457 = scalar_lea.vmem %s14, %s456
      %p458 = scmp.lt.s32.totalorder %s25, 1
      %s459 = scalar_select %p458, %s25, 1
      %s460 = smul.addr %s459, 8
      %s461 = smul.addr %s460, 8
      %s462 = scalar_lea.vmem %s0, %s461
      %p463 = scmp.lt.s32.totalorder %s25, 1
      %s464 = scalar_select %p463, %s25, 1
      %s465 = smul.addr %s464, 8
      %s466 = smul.addr %s465, 8
      %s467 = scalar_lea.vmem %s14, %s466
      %v469 = vld [vmem:[%s462] sm:$0xff]
      %v470 = vld [vmem:[%s462 + $0x8] sm:$0xff]
      %v471 = vld [vmem:[%s462 + $0x10] sm:$0xff]
      %v472 = vld [vmem:[%s462 + $0x18] sm:$0xff]
      %v473 = vld [vmem:[%s462 + $0x20] sm:$0xff]
      %v474 = vld [vmem:[%s462 + $0x28] sm:$0xff]
      %v475 = vld [vmem:[%s462 + $0x30] sm:$0xff]
      %v476 = vld [vmem:[%s462 + $0x38] sm:$0xff]
      %477 = vst [vmem:[#allocation2] sm:$0xff] 0.0
      %478 = vst [vmem:[#allocation2 + $0x8] sm:$0xf] 0.0
      %479 = vst [vmem:[#allocation2 + $0x10] sm:$0xff] 0.0
      %480 = vst [vmem:[#allocation2 + $0x18] sm:$0xf] 0.0
      %481 = vst [vmem:[#allocation2 + $0x20] sm:$0xff] 0.0
      %482 = vst [vmem:[#allocation2 + $0x28] sm:$0xf] 0.0
      %483 = vst [vmem:[#allocation2 + $0x30] sm:$0xff] 0.0
      %484 = vst [vmem:[#allocation2 + $0x38] sm:$0xf] 0.0
      %485 = vst [vmem:[#allocation2 + $0x40] sm:$0xff] 0.0
      %486 = vst [vmem:[#allocation2 + $0x48] sm:$0xf] 0.0
      %487 = vst [vmem:[#allocation2 + $0x50] sm:$0xff] 0.0
      %488 = vst [vmem:[#allocation2 + $0x58] sm:$0xf] 0.0
      %489 = vst [vmem:[#allocation2 + $0x60] sm:$0xff] 0.0
      %490 = vst [vmem:[#allocation2 + $0x68] sm:$0xf] 0.0
      %491 = vst [vmem:[#allocation2 + $0x70] sm:$0xff] 0.0
      %492 = vst [vmem:[#allocation2 + $0x78] sm:$0xf] 0.0
      %493 = vst [vmem:[#allocation2 + $0x80] sm:$0xff] 0.0
      %494 = vst [vmem:[#allocation2 + $0x88] sm:$0xf] 0.0
      %495 = vst [vmem:[#allocation2 + $0x90] sm:$0xff] 0.0
      %496 = vst [vmem:[#allocation2 + $0x98] sm:$0xf] 0.0
      %497 = vst [vmem:[#allocation2 + $0xa0] sm:$0xff] 0.0
      %498 = vst [vmem:[#allocation2 + $0xa8] sm:$0xf] 0.0
      %499 = vst [vmem:[#allocation2 + $0xb0] sm:$0xff] 0.0
      %500 = vst [vmem:[#allocation2 + $0xb8] sm:$0xf] 0.0
      %s501 = scalar_lea.vmem [#allocation2], 32
      %502 = vst [vmem:[%s501 + $0x2] sm:$0xff] %v469
      %503 = vst [vmem:[%s501 + $0x12] sm:$0xff] %v470
      %504 = vst [vmem:[%s501 + $0x22] sm:$0xff] %v471
      %505 = vst [vmem:[%s501 + $0x32] sm:$0xff] %v472
      %506 = vst [vmem:[%s501 + $0x42] sm:$0xff] %v473
      %507 = vst [vmem:[%s501 + $0x52] sm:$0xff] %v474
      %508 = vst [vmem:[%s501 + $0x62] sm:$0xff] %v475
      %509 = vst [vmem:[%s501 + $0x72] sm:$0xff] %v476
      %v510 = vld [vmem:[%s4] sm:$0xff]
      %v511 = vld [vmem:[%s4 + $0x8] sm:$0x1]
      %v512 = vld [vmem:[#allocation2] sm:$0xff]
      %v513 = vld [vmem:[#allocation2 + $0x10] sm:$0xff]
      %v514 = vld [vmem:[#allocation2 + $0x20] sm:$0xff]
      %v515 = vld [vmem:[#allocation2 + $0x30] sm:$0xff]
      %v516 = vld [vmem:[#allocation2 + $0x40] sm:$0xff]
      %v517 = vld [vmem:[#allocation2 + $0x50] sm:$0xff]
      %v518 = vld [vmem:[#allocation2 + $0x60] sm:$0xff]
      %v519 = vld [vmem:[#allocation2 + $0x70] sm:$0xff]
      %v520 = vlaneseq
      %v521 = vshrl.u32 %v520, 7
      %v522 = vsub.s32 0, %v521
      %v523 = vrot.slane %v510, %v522
      %v524 = vmul.f32 %v512, %v523
      %v525 = vmul.f32 %v513, %v523
      %v526 = vmul.f32 %v514, %v523
      %v527 = vmul.f32 %v515, %v523
      %v528 = vmul.f32 %v516, %v523
      %v529 = vmul.f32 %v517, %v523
      %v530 = vmul.f32 %v518, %v523
      %v531 = vmul.f32 %v519, %v523
      %v532 = vadd.f32 %v524, 0.0
      %v533 = vadd.f32 %v525, 0.0
      %v534 = vadd.f32 %v526, 0.0
      %v535 = vadd.f32 %v527, 0.0
      %v536 = vadd.f32 %v528, 0.0
      %v537 = vadd.f32 %v529, 0.0
      %v538 = vadd.f32 %v530, 0.0
      %v539 = vadd.f32 %v531, 0.0
      %v540 = vld [vmem:[#allocation2 + $0x2] sm:$0xff]
      %v541 = vld [vmem:[#allocation2 + $0x12] sm:$0xff]
      %v542 = vld [vmem:[#allocation2 + $0x22] sm:$0xff]
      %v543 = vld [vmem:[#allocation2 + $0x32] sm:$0xff]
      %v544 = vld [vmem:[#allocation2 + $0x42] sm:$0xff]
      %v545 = vld [vmem:[#allocation2 + $0x52] sm:$0xff]
      %v546 = vld [vmem:[#allocation2 + $0x62] sm:$0xff]
      %v547 = vld [vmem:[#allocation2 + $0x72] sm:$0xff]
      %v548 = vlaneseq
      %v549 = vshrl.u32 %v548, 7
      %v550 = vsub.s32 1, %v549
      %v551 = vrot.slane %v510, %v550
      %v552 = vmul.f32 %v540, %v551
      %v553 = vmul.f32 %v541, %v551
      %v554 = vmul.f32 %v542, %v551
      %v555 = vmul.f32 %v543, %v551
      %v556 = vmul.f32 %v544, %v551
      %v557 = vmul.f32 %v545, %v551
      %v558 = vmul.f32 %v546, %v551
      %v559 = vmul.f32 %v547, %v551
      %v560 = vadd.f32 %v532, %v552
      %v561 = vadd.f32 %v533, %v553
      %v562 = vadd.f32 %v534, %v554
      %v563 = vadd.f32 %v535, %v555
      %v564 = vadd.f32 %v536, %v556
      %v565 = vadd.f32 %v537, %v557
      %v566 = vadd.f32 %v538, %v558
      %v567 = vadd.f32 %v539, %v559
      %v568 = vld [vmem:[#allocation2 + $0x4] sm:$0xff]
      %v569 = vld [vmem:[#allocation2 + $0x14] sm:$0xff]
      %v570 = vld [vmem:[#allocation2 + $0x24] sm:$0xff]
      %v571 = vld [vmem:[#allocation2 + $0x34] sm:$0xff]
      %v572 = vld [vmem:[#allocation2 + $0x44] sm:$0xff]
      %v573 = vld [vmem:[#allocation2 + $0x54] sm:$0xff]
      %v574 = vld [vmem:[#allocation2 + $0x64] sm:$0xff]
      %v575 = vld [vmem:[#allocation2 + $0x74] sm:$0xff]
      %v576 = vlaneseq
      %v577 = vshrl.u32 %v576, 7
      %v578 = vsub.s32 2, %v577
      %v579 = vrot.slane %v510, %v578
      %v580 = vmul.f32 %v568, %v579
      %v581 = vmul.f32 %v569, %v579
      %v582 = vmul.f32 %v570, %v579
      %v583 = vmul.f32 %v571, %v579
      %v584 = vmul.f32 %v572, %v579
      %v585 = vmul.f32 %v573, %v579
      %v586 = vmul.f32 %v574, %v579
      %v587 = vmul.f32 %v575, %v579
      %v588 = vadd.f32 %v560, %v580
      %v589 = vadd.f32 %v561, %v581
      %v590 = vadd.f32 %v562, %v582
      %v591 = vadd.f32 %v563, %v583
      %v592 = vadd.f32 %v564, %v584
      %v593 = vadd.f32 %v565, %v585
      %v594 = vadd.f32 %v566, %v586
      %v595 = vadd.f32 %v567, %v587
      %v596 = vld [vmem:[%s501] sm:$0xff]
      %v597 = vld [vmem:[%s501 + $0x10] sm:$0xff]
      %v598 = vld [vmem:[%s501 + $0x20] sm:$0xff]
      %v599 = vld [vmem:[%s501 + $0x30] sm:$0xff]
      %v600 = vld [vmem:[%s501 + $0x40] sm:$0xff]
      %v601 = vld [vmem:[%s501 + $0x50] sm:$0xff]
      %v602 = vld [vmem:[%s501 + $0x60] sm:$0xff]
      %v603 = vld [vmem:[%s501 + $0x70] sm:$0xff]
      %v604 = vlaneseq
      %v605 = vshrl.u32 %v604, 7
      %v606 = vsub.s32 3, %v605
      %v607 = vrot.slane %v510, %v606
      %v608 = vmul.f32 %v596, %v607
      %v609 = vmul.f32 %v597, %v607
      %v610 = vmul.f32 %v598, %v607
      %v611 = vmul.f32 %v599, %v607
      %v612 = vmul.f32 %v600, %v607
      %v613 = vmul.f32 %v601, %v607
      %v614 = vmul.f32 %v602, %v607
      %v615 = vmul.f32 %v603, %v607
      %v616 = vadd.f32 %v588, %v608
      %v617 = vadd.f32 %v589, %v609
      %v618 = vadd.f32 %v590, %v610
      %v619 = vadd.f32 %v591, %v611
      %v620 = vadd.f32 %v592, %v612
      %v621 = vadd.f32 %v593, %v613
      %v622 = vadd.f32 %v594, %v614
      %v623 = vadd.f32 %v595, %v615
      %v624 = vld [vmem:[%s501 + $0x2] sm:$0xff]
      %v625 = vld [vmem:[%s501 + $0x12] sm:$0xff]
      %v626 = vld [vmem:[%s501 + $0x22] sm:$0xff]
      %v627 = vld [vmem:[%s501 + $0x32] sm:$0xff]
      %v628 = vld [vmem:[%s501 + $0x42] sm:$0xff]
      %v629 = vld [vmem:[%s501 + $0x52] sm:$0xff]
      %v630 = vld [vmem:[%s501 + $0x62] sm:$0xff]
      %v631 = vld [vmem:[%s501 + $0x72] sm:$0xff]
      %v632 = vlaneseq
      %v633 = vshrl.u32 %v632, 7
      %v634 = vsub.s32 4, %v633
      %v635 = vrot.slane %v510, %v634
      %v636 = vmul.f32 %v624, %v635
      %v637 = vmul.f32 %v625, %v635
      %v638 = vmul.f32 %v626, %v635
      %v639 = vmul.f32 %v627, %v635
      %v640 = vmul.f32 %v628, %v635
      %v641 = vmul.f32 %v629, %v635
      %v642 = vmul.f32 %v630, %v635
      %v643 = vmul.f32 %v631, %v635
      %v644 = vadd.f32 %v616, %v636
      %v645 = vadd.f32 %v617, %v637
      %v646 = vadd.f32 %v618, %v638
      %v647 = vadd.f32 %v619, %v639
      %v648 = vadd.f32 %v620, %v640
      %v649 = vadd.f32 %v621, %v641
      %v650 = vadd.f32 %v622, %v642
      %v651 = vadd.f32 %v623, %v643
      %v652 = vld [vmem:[%s501 + $0x4] sm:$0xff]
      %v653 = vld [vmem:[%s501 + $0x14] sm:$0xff]
      %v654 = vld [vmem:[%s501 + $0x24] sm:$0xff]
      %v655 = vld [vmem:[%s501 + $0x34] sm:$0xff]
      %v656 = vld [vmem:[%s501 + $0x44] sm:$0xff]
      %v657 = vld [vmem:[%s501 + $0x54] sm:$0xff]
      %v658 = vld [vmem:[%s501 + $0x64] sm:$0xff]
      %v659 = vld [vmem:[%s501 + $0x74] sm:$0xff]
      %v660 = vlaneseq
      %v661 = vshrl.u32 %v660, 7
      %v662 = vsub.s32 5, %v661
      %v663 = vrot.slane %v510, %v662
      %v664 = vmul.f32 %v652, %v663
      %v665 = vmul.f32 %v653, %v663
      %v666 = vmul.f32 %v654, %v663
      %v667 = vmul.f32 %v655, %v663
      %v668 = vmul.f32 %v656, %v663
      %v669 = vmul.f32 %v657, %v663
      %v670 = vmul.f32 %v658, %v663
      %v671 = vmul.f32 %v659, %v663
      %v672 = vadd.f32 %v644, %v664
      %v673 = vadd.f32 %v645, %v665
      %v674 = vadd.f32 %v646, %v666
      %v675 = vadd.f32 %v647, %v667
      %v676 = vadd.f32 %v648, %v668
      %v677 = vadd.f32 %v649, %v669
      %v678 = vadd.f32 %v650, %v670
      %v679 = vadd.f32 %v651, %v671
      %s680 = scalar_lea.vmem [#allocation2], 64
      %v681 = vld [vmem:[%s680] sm:$0xff]
      %v682 = vld [vmem:[%s680 + $0x10] sm:$0xff]
      %v683 = vld [vmem:[%s680 + $0x20] sm:$0xff]
      %v684 = vld [vmem:[%s680 + $0x30] sm:$0xff]
      %v685 = vld [vmem:[%s680 + $0x40] sm:$0xff]
      %v686 = vld [vmem:[%s680 + $0x50] sm:$0xff]
      %v687 = vld [vmem:[%s680 + $0x60] sm:$0xff]
      %v688 = vld [vmem:[%s680 + $0x70] sm:$0xff]
      %v689 = vlaneseq
      %v690 = vshrl.u32 %v689, 7
      %v691 = vsub.s32 6, %v690
      %v692 = vrot.slane %v510, %v691
      %v693 = vmul.f32 %v681, %v692
      %v694 = vmul.f32 %v682, %v692
      %v695 = vmul.f32 %v683, %v692
      %v696 = vmul.f32 %v684, %v692
      %v697 = vmul.f32 %v685, %v692
      %v698 = vmul.f32 %v686, %v692
      %v699 = vmul.f32 %v687, %v692
      %v700 = vmul.f32 %v688, %v692
      %v701 = vadd.f32 %v672, %v693
      %v702 = vadd.f32 %v673, %v694
      %v703 = vadd.f32 %v674, %v695
      %v704 = vadd.f32 %v675, %v696
      %v705 = vadd.f32 %v676, %v697
      %v706 = vadd.f32 %v677, %v698
      %v707 = vadd.f32 %v678, %v699
      %v708 = vadd.f32 %v679, %v700
      %v709 = vld [vmem:[%s680 + $0x2] sm:$0xff]
      %v710 = vld [vmem:[%s680 + $0x12] sm:$0xff]
      %v711 = vld [vmem:[%s680 + $0x22] sm:$0xff]
      %v712 = vld [vmem:[%s680 + $0x32] sm:$0xff]
      %v713 = vld [vmem:[%s680 + $0x42] sm:$0xff]
      %v714 = vld [vmem:[%s680 + $0x52] sm:$0xff]
      %v715 = vld [vmem:[%s680 + $0x62] sm:$0xff]
      %v716 = vld [vmem:[%s680 + $0x72] sm:$0xff]
      %v717 = vlaneseq
      %v718 = vshrl.u32 %v717, 7
      %v719 = vsub.s32 7, %v718
      %v720 = vrot.slane %v510, %v719
      %v721 = vmul.f32 %v709, %v720
      %v722 = vmul.f32 %v710, %v720
      %v723 = vmul.f32 %v711, %v720
      %v724 = vmul.f32 %v712, %v720
      %v725 = vmul.f32 %v713, %v720
      %v726 = vmul.f32 %v714, %v720
      %v727 = vmul.f32 %v715, %v720
      %v728 = vmul.f32 %v716, %v720
      %v729 = vadd.f32 %v701, %v721
      %v730 = vadd.f32 %v702, %v722
      %v731 = vadd.f32 %v703, %v723
      %v732 = vadd.f32 %v704, %v724
      %v733 = vadd.f32 %v705, %v725
      %v734 = vadd.f32 %v706, %v726
      %v735 = vadd.f32 %v707, %v727
      %v736 = vadd.f32 %v708, %v728
      %v737 = vld [vmem:[%s680 + $0x4] sm:$0xff]
      %v738 = vld [vmem:[%s680 + $0x14] sm:$0xff]
      %v739 = vld [vmem:[%s680 + $0x24] sm:$0xff]
      %v740 = vld [vmem:[%s680 + $0x34] sm:$0xff]
      %v741 = vld [vmem:[%s680 + $0x44] sm:$0xff]
      %v742 = vld [vmem:[%s680 + $0x54] sm:$0xff]
      %v743 = vld [vmem:[%s680 + $0x64] sm:$0xff]
      %v744 = vld [vmem:[%s680 + $0x74] sm:$0xff]
      %v745 = vlaneseq
      %v746 = vshrl.u32 %v745, 7
      %v747 = vsub.s32 0, %v746
      %v748 = vrot.slane %v511, %v747
      %v749 = vmul.f32 %v737, %v748
      %v750 = vmul.f32 %v738, %v748
      %v751 = vmul.f32 %v739, %v748
      %v752 = vmul.f32 %v740, %v748
      %v753 = vmul.f32 %v741, %v748
      %v754 = vmul.f32 %v742, %v748
      %v755 = vmul.f32 %v743, %v748
      %v756 = vmul.f32 %v744, %v748
      %v757 = vadd.f32 %v729, %v749
      %v758 = vadd.f32 %v730, %v750
      %v759 = vadd.f32 %v731, %v751
      %v760 = vadd.f32 %v732, %v752
      %v761 = vadd.f32 %v733, %v753
      %v762 = vadd.f32 %v734, %v754
      %v763 = vadd.f32 %v735, %v755
      %v764 = vadd.f32 %v736, %v756
      %v765 = vld [vmem:[%s5] sm:$0x1]
      %v767 = vlaneseq
      %v768 = vshrl.u32 %v767, 7
      %v769 = vsub.s32 0, %v768
      %v770 = vrot.slane %v765, %v769
      %v772 = vmul.f32 %v757, %v770
      %v773 = vmul.f32 %v758, %v770
      %v774 = vmul.f32 %v759, %v770
      %v775 = vmul.f32 %v760, %v770
      %v776 = vmul.f32 %v761, %v770
      %v777 = vmul.f32 %v762, %v770
      %v778 = vmul.f32 %v763, %v770
      %v779 = vmul.f32 %v764, %v770
      %v780 = vld [vmem:[%s6] sm:$0x1]
      %v782 = vlaneseq
      %v783 = vshrl.u32 %v782, 7
      %v784 = vsub.s32 0, %v783
      %v785 = vrot.slane %v780, %v784
      %v787 = vadd.f32 %v772, %v785
      %v788 = vadd.f32 %v773, %v785
      %v789 = vadd.f32 %v774, %v785
      %v790 = vadd.f32 %v775, %v785
      %v791 = vadd.f32 %v776, %v785
      %v792 = vadd.f32 %v777, %v785
      %v793 = vadd.f32 %v778, %v785
      %v794 = vadd.f32 %v779, %v785
      %v795 = vmax.f32 %v787, 0.0
      %v796 = vmax.f32 %v788, 0.0
      %v797 = vmax.f32 %v789, 0.0
      %v798 = vmax.f32 %v790, 0.0
      %v799 = vmax.f32 %v791, 0.0
      %v800 = vmax.f32 %v792, 0.0
      %v801 = vmax.f32 %v793, 0.0
      %v802 = vmax.f32 %v794, 0.0
      %v803 = vmin.f32 %v795, 6.0
      %v804 = vmin.f32 %v796, 6.0
      %v805 = vmin.f32 %v797, 6.0
      %v806 = vmin.f32 %v798, 6.0
      %v807 = vmin.f32 %v799, 6.0
      %v808 = vmin.f32 %v800, 6.0
      %v809 = vmin.f32 %v801, 6.0
      %v810 = vmin.f32 %v802, 6.0
      %v811 = vpack.c.bf16 %v804, %v803
      %v812 = vpack.c.bf16 %v806, %v805
      %v813 = vpack.c.bf16 %v808, %v807
      %v814 = vpack.c.bf16 %v810, %v809
      %v815 = vld [vmem:[%s7] sm:$0xf]
      %v816 = vld [vmem:[%s7 + $0x4] sm:$0xf]
      %v817 = vld [vmem:[%s7 + $0x8] sm:$0xf]
      %v818 = vld [vmem:[%s7 + $0xc] sm:$0xf]
      %v819 = vld [vmem:[%s7 + $0x10] sm:$0xf]
      %v820 = vld [vmem:[%s7 + $0x14] sm:$0xf]
      %v821 = vld [vmem:[%s7 + $0x18] sm:$0xf]
      %v822 = vld [vmem:[%s7 + $0x1c] sm:$0xf]
      %v823 = vld [vmem:[%s7 + $0x20] sm:$0xf]
      %v824 = vld [vmem:[%s7 + $0x24] sm:$0xf]
      %v825 = vld [vmem:[%s7 + $0x28] sm:$0xf]
      %v826 = vld [vmem:[%s7 + $0x2c] sm:$0xf]
      %v827 = vld [vmem:[%s7 + $0x30] sm:$0xf]
      %v828 = vld [vmem:[%s7 + $0x34] sm:$0xf]
      %v829 = vld [vmem:[%s7 + $0x38] sm:$0xf]
      %v830 = vld [vmem:[%s7 + $0x3c] sm:$0xf]
      %v847 = vunpack.c.l.b16 %v815
      %v848 = vunpack.c.l.b16 %v816
      %v849 = vunpack.c.l.b16 %v817
      %v850 = vunpack.c.l.b16 %v818
      %v851 = vunpack.c.l.b16 %v819
      %v852 = vunpack.c.l.b16 %v820
      %v853 = vunpack.c.l.b16 %v821
      %v854 = vunpack.c.l.b16 %v822
      %v855 = vunpack.c.l.b16 %v823
      %v856 = vunpack.c.l.b16 %v824
      %v857 = vunpack.c.l.b16 %v825
      %v858 = vunpack.c.l.b16 %v826
      %v859 = vunpack.c.l.b16 %v827
      %v860 = vunpack.c.l.b16 %v828
      %v861 = vunpack.c.l.b16 %v829
      %v862 = vunpack.c.l.b16 %v830
      %v863 = vpack.c.b16 %v848, %v847
      %v864 = vpack.c.b16 %v850, %v849
      %v865 = vpack.c.b16 %v852, %v851
      %v866 = vpack.c.b16 %v854, %v853
      %v867 = vpack.c.b16 %v856, %v855
      %v868 = vpack.c.b16 %v858, %v857
      %v869 = vpack.c.b16 %v860, %v859
      %v870 = vpack.c.b16 %v862, %v861
      %879 = vmatprep.subr.bf16.mxu0 0
      %880 = vmatpush1.bf16.msra.mxu0 %v870
      %881 = vmatprep.subr.bf16.mxu0 0
      %882 = vmatpush1.bf16.msra.mxu0 %v869
      %883 = vmatprep.subr.bf16.mxu0 0
      %884 = vmatpush1.bf16.msra.mxu0 %v868
      %885 = vmatprep.subr.bf16.mxu0 0
      %886 = vmatpush1.bf16.msra.mxu0 %v867
      %887 = vmatprep.subr.bf16.mxu0 0
      %888 = vmatpush1.bf16.msra.mxu0 %v866
      %889 = vmatprep.subr.bf16.mxu0 0
      %890 = vmatpush1.bf16.msra.mxu0 %v865
      %891 = vmatprep.subr.bf16.mxu0 0
      %892 = vmatpush1.bf16.msra.mxu0 %v864
      %893 = vmatprep.subr.bf16.mxu0 0
      %894 = vmatpush1.bf16.msra.mxu0 %v863
      %895 = vmatprep.subr.bf16.mxu0 0
      %896 = vmatpush2.bf16.msra.mxu0 0
      %897 = vmatprep.subr.bf16.mxu0 0
      %898 = vmatpush2.bf16.msra.mxu0 0
      %899 = vmatprep.subr.bf16.mxu0 0
      %900 = vmatpush2.bf16.msra.mxu0 0
      %901 = vmatprep.subr.bf16.mxu0 0
      %902 = vmatpush2.bf16.msra.mxu0 0
      %903 = vmatprep.subr.bf16.mxu0 0
      %904 = vmatpush2.bf16.msra.mxu0 0
      %905 = vmatprep.subr.bf16.mxu0 0
      %906 = vmatpush2.bf16.msra.mxu0 0
      %907 = vmatprep.subr.bf16.mxu0 0
      %908 = vmatpush2.bf16.msra.mxu0 0
      %909 = vmatprep.subr.bf16.mxu0 0
      %910 = vmatpush2.bf16.msra.mxu0 0
      %911 = vmatprep.mubr.bf16.mxu0 0
      %912 = vmatmul.mubr.bf16.gmra.mxu0 %v811
      %v913 = vpop.f32.mrf.mxu0
      %v914 = vadd.f32 0.0, %v913
      %v915 = vpop.f32.mrf.mxu0
      %v916 = vpop.f32.mrf.mxu0
      %v917 = vadd.f32 0.0, %v916
      %v918 = vpop.f32.mrf.mxu0
      %919 = vmatprep.mubr.bf16.mxu0 0
      %920 = vmatmul.mubr.bf16.gmra.mxu0 %v812
      %v921 = vpop.f32.mrf.mxu0
      %v922 = vadd.f32 0.0, %v921
      %v923 = vpop.f32.mrf.mxu0
      %v924 = vpop.f32.mrf.mxu0
      %v925 = vadd.f32 0.0, %v924
      %v926 = vpop.f32.mrf.mxu0
      %927 = vmatprep.mubr.bf16.mxu0 0
      %928 = vmatmul.mubr.bf16.gmra.mxu0 %v813
      %v929 = vpop.f32.mrf.mxu0
      %v930 = vadd.f32 0.0, %v929
      %v931 = vpop.f32.mrf.mxu0
      %v932 = vpop.f32.mrf.mxu0
      %v933 = vadd.f32 0.0, %v932
      %v934 = vpop.f32.mrf.mxu0
      %935 = vmatprep.mubr.bf16.mxu0 0
      %936 = vmatmul.mubr.bf16.gmra.mxu0 %v814
      %v937 = vpop.f32.mrf.mxu0
      %v938 = vadd.f32 0.0, %v937
      %v939 = vpop.f32.mrf.mxu0
      %v940 = vpop.f32.mrf.mxu0
      %v941 = vadd.f32 0.0, %v940
      %v942 = vpop.f32.mrf.mxu0
      %943 = vdwg.mxu0
      %v944 = vld [vmem:[%s8] sm:$0x1]
      %v946 = vlaneseq
      %v947 = vshrl.u32 %v946, 7
      %v948 = vsub.s32 0, %v947
      %v949 = vrot.slane %v944, %v948
      %v951 = vmul.f32 %v914, %v949
      %v952 = vmul.f32 %v917, %v949
      %v953 = vmul.f32 %v922, %v949
      %v954 = vmul.f32 %v925, %v949
      %v955 = vmul.f32 %v930, %v949
      %v956 = vmul.f32 %v933, %v949
      %v957 = vmul.f32 %v938, %v949
      %v958 = vmul.f32 %v941, %v949
      %v959 = vld [vmem:[%s9] sm:$0x1]
      %v961 = vlaneseq
      %v962 = vshrl.u32 %v961, 7
      %v963 = vsub.s32 0, %v962
      %v964 = vrot.slane %v959, %v963
      %v966 = vadd.f32 %v951, %v964
      %v967 = vadd.f32 %v952, %v964
      %v968 = vadd.f32 %v953, %v964
      %v969 = vadd.f32 %v954, %v964
      %v970 = vadd.f32 %v955, %v964
      %v971 = vadd.f32 %v956, %v964
      %v972 = vadd.f32 %v957, %v964
      %v973 = vadd.f32 %v958, %v964
      %v974 = vmax.f32 %v966, 0.0
      %v975 = vmax.f32 %v967, 0.0
      %v976 = vmax.f32 %v968, 0.0
      %v977 = vmax.f32 %v969, 0.0
      %v978 = vmax.f32 %v970, 0.0
      %v979 = vmax.f32 %v971, 0.0
      %v980 = vmax.f32 %v972, 0.0
      %v981 = vmax.f32 %v973, 0.0
      %v982 = vmin.f32 %v974, 6.0
      %v983 = vmin.f32 %v975, 6.0
      %v984 = vmin.f32 %v976, 6.0
      %v985 = vmin.f32 %v977, 6.0
      %v986 = vmin.f32 %v978, 6.0
      %v987 = vmin.f32 %v979, 6.0
      %v988 = vmin.f32 %v980, 6.0
      %v989 = vmin.f32 %v981, 6.0
      %v990 = vadd.f32 %v982, %v469
      %v991 = vadd.f32 %v983, %v470
      %v992 = vadd.f32 %v984, %v471
      %v993 = vadd.f32 %v985, %v472
      %v994 = vadd.f32 %v986, %v473
      %v995 = vadd.f32 %v987, %v474
      %v996 = vadd.f32 %v988, %v475
      %v997 = vadd.f32 %v989, %v476
      %v998 = vadd.f32 %v990, %v991
      %v999 = vadd.f32 %v998, %v992
      %v1000 = vadd.f32 %v999, %v993
      %v1001 = vadd.f32 %v1000, %v994
      %v1002 = vadd.f32 %v1001, %v995
      %v1003 = vadd.f32 %v1002, %v996
      %v1004 = vadd.f32 %v1003, %v997
      %v1005 = vrot.slane %v1004, 4
      %v1006 = vadd.f32 %v1004, %v1005
      %v1007 = vrot.slane %v1006, 2
      %v1008 = vadd.f32 %v1006, %v1007
      %v1009 = vrot.slane %v1008, 1
      %v1010 = vadd.f32 %v1008, %v1009
      %v1011 = vrcp.pop 64.0
      %v1012 = vmul.f32 %v1010, %v1011
      %v1013 = vpack.c.bf16 %v1012, %v1012
      %v1014 = vld [vmem:[%s10] sm:$0xf]
      %v1015 = vld [vmem:[%s10 + $0x4] sm:$0xf]
      %v1016 = vld [vmem:[%s10 + $0x8] sm:$0xf]
      %v1017 = vld [vmem:[%s10 + $0xc] sm:$0xf]
      %v1018 = vld [vmem:[%s10 + $0x10] sm:$0xf]
      %v1019 = vld [vmem:[%s10 + $0x14] sm:$0xf]
      %v1020 = vld [vmem:[%s10 + $0x18] sm:$0xf]
      %v1021 = vld [vmem:[%s10 + $0x1c] sm:$0xf]
      %v1022 = vld [vmem:[%s10 + $0x20] sm:$0xf]
      %v1023 = vld [vmem:[%s10 + $0x24] sm:$0xf]
      %v1024 = vld [vmem:[%s10 + $0x28] sm:$0xf]
      %v1025 = vld [vmem:[%s10 + $0x2c] sm:$0xf]
      %v1026 = vld [vmem:[%s10 + $0x30] sm:$0xf]
      %v1027 = vld [vmem:[%s10 + $0x34] sm:$0xf]
      %v1028 = vld [vmem:[%s10 + $0x38] sm:$0xf]
      %v1029 = vld [vmem:[%s10 + $0x3c] sm:$0xf]
      %v1030 = vld [vmem:[%s11] sm:$0x1]
      %v1047 = vunpack.c.l.b16 %v1014
      %v1048 = vunpack.c.l.b16 %v1015
      %v1049 = vunpack.c.l.b16 %v1016
      %v1050 = vunpack.c.l.b16 %v1017
      %v1051 = vunpack.c.l.b16 %v1018
      %v1052 = vunpack.c.l.b16 %v1019
      %v1053 = vunpack.c.l.b16 %v1020
      %v1054 = vunpack.c.l.b16 %v1021
      %v1055 = vunpack.c.l.b16 %v1022
      %v1056 = vunpack.c.l.b16 %v1023
      %v1057 = vunpack.c.l.b16 %v1024
      %v1058 = vunpack.c.l.b16 %v1025
      %v1059 = vunpack.c.l.b16 %v1026
      %v1060 = vunpack.c.l.b16 %v1027
      %v1061 = vunpack.c.l.b16 %v1028
      %v1062 = vunpack.c.l.b16 %v1029
      %v1063 = vpack.c.b16 %v1048, %v1047
      %v1064 = vpack.c.b16 %v1050, %v1049
      %v1065 = vpack.c.b16 %v1052, %v1051
      %v1066 = vpack.c.b16 %v1054, %v1053
      %v1067 = vpack.c.b16 %v1056, %v1055
      %v1068 = vpack.c.b16 %v1058, %v1057
      %v1069 = vpack.c.b16 %v1060, %v1059
      %v1070 = vpack.c.b16 %v1062, %v1061
      %1079 = vmatprep.subr.bf16.mxu0 0
      %1080 = vmatpush1.bf16.msra.mxu0 %v1070
      %1081 = vmatprep.subr.bf16.mxu0 0
      %1082 = vmatpush1.bf16.msra.mxu0 %v1069
      %1083 = vmatprep.subr.bf16.mxu0 0
      %1084 = vmatpush1.bf16.msra.mxu0 %v1068
      %1085 = vmatprep.subr.bf16.mxu0 0
      %1086 = vmatpush1.bf16.msra.mxu0 %v1067
      %1087 = vmatprep.subr.bf16.mxu0 0
      %1088 = vmatpush1.bf16.msra.mxu0 %v1066
      %1089 = vmatprep.subr.bf16.mxu0 0
      %1090 = vmatpush1.bf16.msra.mxu0 %v1065
      %1091 = vmatprep.subr.bf16.mxu0 0
      %1092 = vmatpush1.bf16.msra.mxu0 %v1064
      %1093 = vmatprep.subr.bf16.mxu0 0
      %1094 = vmatpush1.bf16.msra.mxu0 %v1063
      %1095 = vmatprep.subr.bf16.mxu0 0
      %1096 = vmatpush2.bf16.msra.mxu0 0
      %1097 = vmatprep.subr.bf16.mxu0 0
      %1098 = vmatpush2.bf16.msra.mxu0 0
      %1099 = vmatprep.subr.bf16.mxu0 0
      %1100 = vmatpush2.bf16.msra.mxu0 0
      %1101 = vmatprep.subr.bf16.mxu0 0
      %1102 = vmatpush2.bf16.msra.mxu0 0
      %1103 = vmatprep.subr.bf16.mxu0 0
      %1104 = vmatpush2.bf16.msra.mxu0 0
      %1105 = vmatprep.subr.bf16.mxu0 0
      %1106 = vmatpush2.bf16.msra.mxu0 0
      %1107 = vmatprep.subr.bf16.mxu0 0
      %1108 = vmatpush2.bf16.msra.mxu0 0
      %1109 = vmatprep.subr.bf16.mxu0 0
      %1110 = vmatpush2.bf16.msra.mxu0 0
      %1111 = vmatprep.mubr.bf16.mxu0 0
      %1112 = vmatmul.mubr.bf16.gmra.mxu0 %v1013
      %v1113 = vpop.f32.mrf.mxu0
      %v1114 = vadd.f32 %v1030, %v1113
      %v1115 = vpop.f32.mrf.mxu0
      %v1116 = vpop.f32.mrf.mxu0
      %v1117 = vpop.f32.mrf.mxu0
      %1118 = vdwg.mxu0
      %v1119 = vmax.f32 %v1114, 0.0
      %v1120 = vpack.c.bf16 %v1119, %v1119
      %v1121 = vld [vmem:[%s12] sm:$0xf]
      %v1122 = vld [vmem:[%s12 + $0x4] sm:$0xf]
      %v1123 = vld [vmem:[%s12 + $0x8] sm:$0xf]
      %v1124 = vld [vmem:[%s12 + $0xc] sm:$0xf]
      %v1125 = vld [vmem:[%s12 + $0x10] sm:$0xf]
      %v1126 = vld [vmem:[%s12 + $0x14] sm:$0xf]
      %v1127 = vld [vmem:[%s12 + $0x18] sm:$0xf]
      %v1128 = vld [vmem:[%s12 + $0x1c] sm:$0xf]
      %v1129 = vld [vmem:[%s12 + $0x20] sm:$0xf]
      %v1130 = vld [vmem:[%s12 + $0x24] sm:$0xf]
      %v1131 = vld [vmem:[%s12 + $0x28] sm:$0xf]
      %v1132 = vld [vmem:[%s12 + $0x2c] sm:$0xf]
      %v1133 = vld [vmem:[%s12 + $0x30] sm:$0xf]
      %v1134 = vld [vmem:[%s12 + $0x34] sm:$0xf]
      %v1135 = vld [vmem:[%s12 + $0x38] sm:$0xf]
      %v1136 = vld [vmem:[%s12 + $0x3c] sm:$0xf]
      %v1137 = vld [vmem:[%s13] sm:$0x1]
      %v1154 = vunpack.c.l.b16 %v1121
      %v1155 = vunpack.c.l.b16 %v1122
      %v1156 = vunpack.c.l.b16 %v1123
      %v1157 = vunpack.c.l.b16 %v1124
      %v1158 = vunpack.c.l.b16 %v1125
      %v1159 = vunpack.c.l.b16 %v1126
      %v1160 = vunpack.c.l.b16 %v1127
      %v1161 = vunpack.c.l.b16 %v1128
      %v1162 = vunpack.c.l.b16 %v1129
      %v1163 = vunpack.c.l.b16 %v1130
      %v1164 = vunpack.c.l.b16 %v1131
      %v1165 = vunpack.c.l.b16 %v1132
      %v1166 = vunpack.c.l.b16 %v1133
      %v1167 = vunpack.c.l.b16 %v1134
      %v1168 = vunpack.c.l.b16 %v1135
      %v1169 = vunpack.c.l.b16 %v1136
      %v1170 = vpack.c.b16 %v1155, %v1154
      %v1171 = vpack.c.b16 %v1157, %v1156
      %v1172 = vpack.c.b16 %v1159, %v1158
      %v1173 = vpack.c.b16 %v1161, %v1160
      %v1174 = vpack.c.b16 %v1163, %v1162
      %v1175 = vpack.c.b16 %v1165, %v1164
      %v1176 = vpack.c.b16 %v1167, %v1166
      %v1177 = vpack.c.b16 %v1169, %v1168
      %1186 = vmatprep.subr.bf16.mxu0 0
      %1187 = vmatpush1.bf16.msra.mxu0 %v1177
      %1188 = vmatprep.subr.bf16.mxu0 0
      %1189 = vmatpush1.bf16.msra.mxu0 %v1176
      %1190 = vmatprep.subr.bf16.mxu0 0
      %1191 = vmatpush1.bf16.msra.mxu0 %v1175
      %1192 = vmatprep.subr.bf16.mxu0 0
      %1193 = vmatpush1.bf16.msra.mxu0 %v1174
      %1194 = vmatprep.subr.bf16.mxu0 0
      %1195 = vmatpush1.bf16.msra.mxu0 %v1173
      %1196 = vmatprep.subr.bf16.mxu0 0
      %1197 = vmatpush1.bf16.msra.mxu0 %v1172
      %1198 = vmatprep.subr.bf16.mxu0 0
      %1199 = vmatpush1.bf16.msra.mxu0 %v1171
      %1200 = vmatprep.subr.bf16.mxu0 0
      %1201 = vmatpush1.bf16.msra.mxu0 %v1170
      %1202 = vmatprep.subr.bf16.mxu0 0
      %1203 = vmatpush2.bf16.msra.mxu0 0
      %1204 = vmatprep.subr.bf16.mxu0 0
      %1205 = vmatpush2.bf16.msra.mxu0 0
      %1206 = vmatprep.subr.bf16.mxu0 0
      %1207 = vmatpush2.bf16.msra.mxu0 0
      %1208 = vmatprep.subr.bf16.mxu0 0
      %1209 = vmatpush2.bf16.msra.mxu0 0
      %1210 = vmatprep.subr.bf16.mxu0 0
      %1211 = vmatpush2.bf16.msra.mxu0 0
      %1212 = vmatprep.subr.bf16.mxu0 0
      %1213 = vmatpush2.bf16.msra.mxu0 0
      %1214 = vmatprep.subr.bf16.mxu0 0
      %1215 = vmatpush2.bf16.msra.mxu0 0
      %1216 = vmatprep.subr.bf16.mxu0 0
      %1217 = vmatpush2.bf16.msra.mxu0 0
      %1218 = vmatprep.mubr.bf16.mxu0 0
      %1219 = vmatmul.mubr.bf16.gmra.mxu0 %v1120
      %v1220 = vpop.f32.mrf.mxu0
      %v1221 = vadd.f32 %v1137, %v1220
      %v1222 = vpop.f32.mrf.mxu0
      %v1223 = vpop.f32.mrf.mxu0
      %v1224 = vpop.f32.mrf.mxu0
      %1225 = vdwg.mxu0
      %v1226 = vxor.u32 %v1221, 2147483648
      %v1227 = vmul.f32 %v1226, 1.442695
      %v1228 = vpow.pop %v1227
      %v1229 = vadd.f32 %v1228, 1.0
      %v1230 = vrcp.pop %v1229
      %v1231 = vmul.f32 1.0, %v1230
      %v1232 = vlaneseq
      %v1233 = vshrl.u32 %v1232, 7
      %v1234 = vsub.s32 0, %v1233
      %v1235 = vrot.slane %v1231, %v1234
      %v1236 = vmul.f32 %v990, %v1235
      %v1237 = vmul.f32 %v991, %v1235
      %v1238 = vmul.f32 %v992, %v1235
      %v1239 = vmul.f32 %v993, %v1235
      %v1240 = vmul.f32 %v994, %v1235
      %v1241 = vmul.f32 %v995, %v1235
      %v1242 = vmul.f32 %v996, %v1235
      %v1243 = vmul.f32 %v997, %v1235
      %1244 = vst [vmem:[%s467] sm:$0xff] %v1236
      %1245 = vst [vmem:[%s467 + $0x8] sm:$0xff] %v1237
      %1246 = vst [vmem:[%s467 + $0x10] sm:$0xff] %v1238
      %1247 = vst [vmem:[%s467 + $0x18] sm:$0xff] %v1239
      %1248 = vst [vmem:[%s467 + $0x20] sm:$0xff] %v1240
      %1249 = vst [vmem:[%s467 + $0x28] sm:$0xff] %v1241
      %1250 = vst [vmem:[%s467 + $0x30] sm:$0xff] %v1242
      %1251 = vst [vmem:[%s467 + $0x38] sm:$0xff] %v1243
      %p1252 = scmp.lt.s32.totalorder %s25, 1
      %s1253 = scalar_select %p1252, %s25, 1
      %s1254 = smul.addr %s1253, 8
      %s1255 = smul.addr %s1254, 8
      %s1256 = scalar_lea.vmem %s14, %s1255
      // Predicated region
      $region77: #{forward.5} parent=75 // pred_check
        %p1257 = pneg %p342
      $region78: #{forward.5} parent=75 // pred_check_branch
        %1259 = sbr.rel (%p1257) target = $region80
      $region79: #{forward.5} parent=75 // pred_region
        _
      $region80: #{forward.5} parent=75 // pred_fallthru
        _
    $region76: #{forward.5} parent=5 // pred_fallthru
      _
    %p1260 = scmp.le.s32.totalorder 2, %s20
    // Predicated region
    $region81: #{forward.5} parent=5 // pred_check
      %p1261 = pneg %p1260
    $region82: #{forward.5} parent=5 // pred_check_branch
      %1263 = sbr.rel (%p1261) target = $region84
    $region83: #{forward.5} parent=5 // pred_region
      %s1264 = ssub.s32 %s20, 2
      // Predicated region
      $region85: #{forward.5} parent=83 // pred_check
        %p1265 = pneg %p348
      $region86: #{forward.5} parent=83 // pred_check_branch
        %1267 = sbr.rel (%p1265) target = $region88
      $region87: #{forward.5} parent=83 // pred_region
        %p1268 = scmp.lt.s32.totalorder %s26, 1
        %s1269 = scalar_select %p1268, %s26, 1
        %s1270 = smul.addr %s1269, 8
        %s1271 = smul.addr %s1270, 8
        %s1272 = scalar_lea.vmem %s14, %s1271
      $region88: #{forward.5} parent=83 // pred_fallthru
        _
    $region84: #{forward.5} parent=5 // pred_fallthru
      _
  $region6: #{forward.5} parent=0 // loop_footer
    %s24 = sadd.s32 1, %s20
  $region7: #{forward.5} parent=0 // loop_footer_branch
    %19 = sbr.rel target = $region3
  $region8: #{forward.5} parent=0 // loop_exit
    _

// kernel: forward.4
$region0: #{forward.4}
  #allocation0 [shape = 'u32[]', space=smem, size = 0x4, offset = 0x4, fixed_abs, tag = 'smem constant byte address 0x4 - core index']
  #allocation1 [shape = 'u32[144,128]{1,0:T(1,128)}', space=vmem, size = 0x12000, scoped, tag = 'internal scratch']
  #allocation2 [shape = 'f32[18,18,128]{2,1,0:T(8,128)}', space=vmem, size = 0x36000, scoped, tag = 'scratch operand']
  %s0 = inlined_call_operand.vmem [shape: f32[2,16,16,128], index: 0, kind: input, shape index: {}]
  %s1 = inlined_call_operand.vmem [shape: bf16[128,128], index: 1, kind: input, shape index: {}]
  %s2 = inlined_call_operand.vmem [shape: f32[1,128], index: 2, kind: input, shape index: {}]
  %s3 = inlined_call_operand.vmem [shape: f32[1,128], index: 3, kind: input, shape index: {}]
  %s4 = inlined_call_operand.vmem [shape: f32[9,128], index: 4, kind: input, shape index: {}]
  %s5 = inlined_call_operand.vmem [shape: f32[1,128], index: 5, kind: input, shape index: {}]
  %s6 = inlined_call_operand.vmem [shape: f32[1,128], index: 6, kind: input, shape index: {}]
  %s7 = inlined_call_operand.vmem [shape: bf16[128,128], index: 7, kind: input, shape index: {}]
  %s8 = inlined_call_operand.vmem [shape: f32[1,128], index: 8, kind: input, shape index: {}]
  %s9 = inlined_call_operand.vmem [shape: f32[1,128], index: 9, kind: input, shape index: {}]
  %s10 = inlined_call_operand.vmem [shape: bf16[128,128], index: 10, kind: input, shape index: {}]
  %s11 = inlined_call_operand.vmem [shape: f32[1,128], index: 11, kind: input, shape index: {}]
  %s12 = inlined_call_operand.vmem [shape: bf16[128,128], index: 12, kind: input, shape index: {}]
  %s13 = inlined_call_operand.vmem [shape: f32[1,128], index: 13, kind: input, shape index: {}]
  %s14 = inlined_call_operand.vmem [shape: f32[2,8,8,128], index: 14, kind: output, shape index: {}]
  %s15 = sld [smem:[#allocation0]]
  $region89: #{forward.4} parent=0
    _
  %s17 = ssub.s32 1, %s15
  %s18 = scalar_select 0, %s17, %s15
  loop: start=0, step=1, limit=4
  $region2: #{forward.4} parent=0 // loop_pre_header
    _
  $region3: #{forward.4} parent=0 // loop_header
    %s20 = sphi 0, %s24
    %p21 = scmp.ge.s32.totalorder %s20, 4
    %s30 = sphi 0, %s32
    %s33 = sphi 0, %s30
    %s34 = sphi 0, %s33
    %s50 = sphi 0, %s34
    %s54 = sphi 0, %s54
    %s56 = sphi 0, %s54
    %s57 = sphi 0, %s56
    %s71 = sphi 0, %s57
    %s75 = sphi 0, %s75
    %s77 = sphi 0, %s75
    %s78 = sphi 0, %s77
    %s92 = sphi 0, %s78
    %s96 = sphi 0, %s96
    %s98 = sphi 0, %s96
    %s99 = sphi 0, %s98
    %s113 = sphi 0, %s99
    %s117 = sphi 0, %s117
    %s119 = sphi 0, %s117
    %s120 = sphi 0, %s119
    %s134 = sphi 0, %s120
    %s138 = sphi 0, %s138
    %s140 = sphi 0, %s138
    %s141 = sphi 0, %s140
    %s155 = sphi 0, %s141
    %s159 = sphi 0, %s159
    %s161 = sphi 0, %s159
    %s162 = sphi 0, %s161
    %s176 = sphi 0, %s162
    %s180 = sphi 0, %s180
    %s182 = sphi 0, %s180
    %s183 = sphi 0, %s182
    %s197 = sphi 0, %s183
    %s201 = sphi 0, %s201
    %s203 = sphi 0, %s201
    %s204 = sphi 0, %s203
    %s218 = sphi 0, %s204
    %s222 = sphi 0, %s222
    %s224 = sphi 0, %s222
    %s225 = sphi 0, %s224
    %s239 = sphi 0, %s225
    %s243 = sphi 0, %s243
    %s245 = sphi 0, %s243
    %s246 = sphi 0, %s245
    %s260 = sphi 0, %s246
    %s264 = sphi 0, %s264
    %s266 = sphi 0, %s264
    %s267 = sphi 0, %s266
    %s281 = sphi 0, %s267
    %s285 = sphi 0, %s285
    %s287 = sphi 0, %s285
    %s288 = sphi 0, %s287
    %s302 = sphi 0, %s288
    %s306 = sphi 0, %s306
    %s308 = sphi 0, %s306
    %s309 = sphi 0, %s308
    %s323 = sphi 0, %s309
    %s329 = sphi 0, %s331
    %s332 = sphi 0, %s329
    %s333 = sphi 0, %s332
    %s349 = sphi 0, %s333
  $region4: #{forward.4} parent=0 // loop_header_branch
    %23 = sbr.rel (%p21) target = $region8
  $region5: #{forward.4} parent=0 // loop_body
    %s25 = ssub.s32 %s20, 1
    %s26 = ssub.s32 %s20, 2
    %s27 = sadd.s32 %s20, 1
    %s28 = ssub.s32 %s20, %s27
    %p29 = scmp.eq.s32.totalorder %s28, 0
    %s31 = sadd.s32 %s30, 1
    %s32 = scalar_select %p29, %s30, %s31
    %p35 = pneg %p29
    %p36 = scmp.eq.s32.totalorder %s20, 1
    %p37 = por %p35, %p36
    %p38 = scmp.ne.s32.totalorder %s30, %s33
    %p39 = scmp.eq.s32.totalorder %s20, 0
    %p40 = por %p38, %p39
    %p41 = scmp.ne.s32.totalorder %s30, %s33
    %p42 = scmp.eq.s32.totalorder %s25, 1
    %p43 = por %p41, %p42
    %p44 = scmp.ne.s32.totalorder %s33, %s34
    %p45 = scmp.eq.s32.totalorder %s25, 0
    %p46 = por %p44, %p45
    %p47 = scmp.ne.s32.totalorder %s33, %s34
    %p48 = scmp.eq.s32.totalorder %s26, 1
    %p49 = por %p47, %p48
    %p51 = scmp.ne.s32.totalorder %s34, %s50
    %p52 = scmp.eq.s32.totalorder %s26, 0
    %p53 = por %p51, %p52
    %s55 = sadd.s32 %s54, 1
    %p58 = scmp.eq.s32.totalorder %s20, 1
    %p59 = scmp.ne.s32.totalorder %s54, %s56
    %p60 = scmp.eq.s32.totalorder %s20, 0
    %p61 = por %p59, %p60
    %p62 = scmp.ne.s32.totalorder %s54, %s56
    %p63 = scmp.eq.s32.totalorder %s25, 1
    %p64 = por %p62, %p63
    %p65 = scmp.ne.s32.totalorder %s56, %s57
    %p66 = scmp.eq.s32.totalorder %s25, 0
    %p67 = por %p65, %p66
    %p68 = scmp.ne.s32.totalorder %s56, %s57
    %p69 = scmp.eq.s32.totalorder %s26, 1
    %p70 = por %p68, %p69
    %p72 = scmp.ne.s32.totalorder %s57, %s71
    %p73 = scmp.eq.s32.totalorder %s26, 0
    %p74 = por %p72, %p73
    %s76 = sadd.s32 %s75, 1
    %p79 = scmp.eq.s32.totalorder %s20, 1
    %p80 = scmp.ne.s32.totalorder %s75, %s77
    %p81 = scmp.eq.s32.totalorder %s20, 0
    %p82 = por %p80, %p81
    %p83 = scmp.ne.s32.totalorder %s75, %s77
    %p84 = scmp.eq.s32.totalorder %s25, 1
    %p85 = por %p83, %p84
    %p86 = scmp.ne.s32.totalorder %s77, %s78
    %p87 = scmp.eq.s32.totalorder %s25, 0
    %p88 = por %p86, %p87
    %p89 = scmp.ne.s32.totalorder %s77, %s78
    %p90 = scmp.eq.s32.totalorder %s26, 1
    %p91 = por %p89, %p90
    %p93 = scmp.ne.s32.totalorder %s78, %s92
    %p94 = scmp.eq.s32.totalorder %s26, 0
    %p95 = por %p93, %p94
    %s97 = sadd.s32 %s96, 1
    %p100 = scmp.eq.s32.totalorder %s20, 1
    %p101 = scmp.ne.s32.totalorder %s96, %s98
    %p102 = scmp.eq.s32.totalorder %s20, 0
    %p103 = por %p101, %p102
    %p104 = scmp.ne.s32.totalorder %s96, %s98
    %p105 = scmp.eq.s32.totalorder %s25, 1
    %p106 = por %p104, %p105
    %p107 = scmp.ne.s32.totalorder %s98, %s99
    %p108 = scmp.eq.s32.totalorder %s25, 0
    %p109 = por %p107, %p108
    %p110 = scmp.ne.s32.totalorder %s98, %s99
    %p111 = scmp.eq.s32.totalorder %s26, 1
    %p112 = por %p110, %p111
    %p114 = scmp.ne.s32.totalorder %s99, %s113
    %p115 = scmp.eq.s32.totalorder %s26, 0
    %p116 = por %p114, %p115
    %s118 = sadd.s32 %s117, 1
    %p121 = scmp.eq.s32.totalorder %s20, 1
    %p122 = scmp.ne.s32.totalorder %s117, %s119
    %p123 = scmp.eq.s32.totalorder %s20, 0
    %p124 = por %p122, %p123
    %p125 = scmp.ne.s32.totalorder %s117, %s119
    %p126 = scmp.eq.s32.totalorder %s25, 1
    %p127 = por %p125, %p126
    %p128 = scmp.ne.s32.totalorder %s119, %s120
    %p129 = scmp.eq.s32.totalorder %s25, 0
    %p130 = por %p128, %p129
    %p131 = scmp.ne.s32.totalorder %s119, %s120
    %p132 = scmp.eq.s32.totalorder %s26, 1
    %p133 = por %p131, %p132
    %p135 = scmp.ne.s32.totalorder %s120, %s134
    %p136 = scmp.eq.s32.totalorder %s26, 0
    %p137 = por %p135, %p136
    %s139 = sadd.s32 %s138, 1
    %p142 = scmp.eq.s32.totalorder %s20, 1
    %p143 = scmp.ne.s32.totalorder %s138, %s140
    %p144 = scmp.eq.s32.totalorder %s20, 0
    %p145 = por %p143, %p144
    %p146 = scmp.ne.s32.totalorder %s138, %s140
    %p147 = scmp.eq.s32.totalorder %s25, 1
    %p148 = por %p146, %p147
    %p149 = scmp.ne.s32.totalorder %s140, %s141
    %p150 = scmp.eq.s32.totalorder %s25, 0
    %p151 = por %p149, %p150
    %p152 = scmp.ne.s32.totalorder %s140, %s141
    %p153 = scmp.eq.s32.totalorder %s26, 1
    %p154 = por %p152, %p153
    %p156 = scmp.ne.s32.totalorder %s141, %s155
    %p157 = scmp.eq.s32.totalorder %s26, 0
    %p158 = por %p156, %p157
    %s160 = sadd.s32 %s159, 1
    %p163 = scmp.eq.s32.totalorder %s20, 1
    %p164 = scmp.ne.s32.totalorder %s159, %s161
    %p165 = scmp.eq.s32.totalorder %s20, 0
    %p166 = por %p164, %p165
    %p167 = scmp.ne.s32.totalorder %s159, %s161
    %p168 = scmp.eq.s32.totalorder %s25, 1
    %p169 = por %p167, %p168
    %p170 = scmp.ne.s32.totalorder %s161, %s162
    %p171 = scmp.eq.s32.totalorder %s25, 0
    %p172 = por %p170, %p171
    %p173 = scmp.ne.s32.totalorder %s161, %s162
    %p174 = scmp.eq.s32.totalorder %s26, 1
    %p175 = por %p173, %p174
    %p177 = scmp.ne.s32.totalorder %s162, %s176
    %p178 = scmp.eq.s32.totalorder %s26, 0
    %p179 = por %p177, %p178
    %s181 = sadd.s32 %s180, 1
    %p184 = scmp.eq.s32.totalorder %s20, 1
    %p185 = scmp.ne.s32.totalorder %s180, %s182
    %p186 = scmp.eq.s32.totalorder %s20, 0
    %p187 = por %p185, %p186
    %p188 = scmp.ne.s32.totalorder %s180, %s182
    %p189 = scmp.eq.s32.totalorder %s25, 1
    %p190 = por %p188, %p189
    %p191 = scmp.ne.s32.totalorder %s182, %s183
    %p192 = scmp.eq.s32.totalorder %s25, 0
    %p193 = por %p191, %p192
    %p194 = scmp.ne.s32.totalorder %s182, %s183
    %p195 = scmp.eq.s32.totalorder %s26, 1
    %p196 = por %p194, %p195
    %p198 = scmp.ne.s32.totalorder %s183, %s197
    %p199 = scmp.eq.s32.totalorder %s26, 0
    %p200 = por %p198, %p199
    %s202 = sadd.s32 %s201, 1
    %p205 = scmp.eq.s32.totalorder %s20, 1
    %p206 = scmp.ne.s32.totalorder %s201, %s203
    %p207 = scmp.eq.s32.totalorder %s20, 0
    %p208 = por %p206, %p207
    %p209 = scmp.ne.s32.totalorder %s201, %s203
    %p210 = scmp.eq.s32.totalorder %s25, 1
    %p211 = por %p209, %p210
    %p212 = scmp.ne.s32.totalorder %s203, %s204
    %p213 = scmp.eq.s32.totalorder %s25, 0
    %p214 = por %p212, %p213
    %p215 = scmp.ne.s32.totalorder %s203, %s204
    %p216 = scmp.eq.s32.totalorder %s26, 1
    %p217 = por %p215, %p216
    %p219 = scmp.ne.s32.totalorder %s204, %s218
    %p220 = scmp.eq.s32.totalorder %s26, 0
    %p221 = por %p219, %p220
    %s223 = sadd.s32 %s222, 1
    %p226 = scmp.eq.s32.totalorder %s20, 1
    %p227 = scmp.ne.s32.totalorder %s222, %s224
    %p228 = scmp.eq.s32.totalorder %s20, 0
    %p229 = por %p227, %p228
    %p230 = scmp.ne.s32.totalorder %s222, %s224
    %p231 = scmp.eq.s32.totalorder %s25, 1
    %p232 = por %p230, %p231
    %p233 = scmp.ne.s32.totalorder %s224, %s225
    %p234 = scmp.eq.s32.totalorder %s25, 0
    %p235 = por %p233, %p234
    %p236 = scmp.ne.s32.totalorder %s224, %s225
    %p237 = scmp.eq.s32.totalorder %s26, 1
    %p238 = por %p236, %p237
    %p240 = scmp.ne.s32.totalorder %s225, %s239
    %p241 = scmp.eq.s32.totalorder %s26, 0
    %p242 = por %p240, %p241
    %s244 = sadd.s32 %s243, 1
    %p247 = scmp.eq.s32.totalorder %s20, 1
    %p248 = scmp.ne.s32.totalorder %s243, %s245
    %p249 = scmp.eq.s32.totalorder %s20, 0
    %p250 = por %p248, %p249
    %p251 = scmp.ne.s32.totalorder %s243, %s245
    %p252 = scmp.eq.s32.totalorder %s25, 1
    %p253 = por %p251, %p252
    %p254 = scmp.ne.s32.totalorder %s245, %s246
    %p255 = scmp.eq.s32.totalorder %s25, 0
    %p256 = por %p254, %p255
    %p257 = scmp.ne.s32.totalorder %s245, %s246
    %p258 = scmp.eq.s32.totalorder %s26, 1
    %p259 = por %p257, %p258
    %p261 = scmp.ne.s32.totalorder %s246, %s260
    %p262 = scmp.eq.s32.totalorder %s26, 0
    %p263 = por %p261, %p262
    %s265 = sadd.s32 %s264, 1
    %p268 = scmp.eq.s32.totalorder %s20, 1
    %p269 = scmp.ne.s32.totalorder %s264, %s266
    %p270 = scmp.eq.s32.totalorder %s20, 0
    %p271 = por %p269, %p270
    %p272 = scmp.ne.s32.totalorder %s264, %s266
    %p273 = scmp.eq.s32.totalorder %s25, 1
    %p274 = por %p272, %p273
    %p275 = scmp.ne.s32.totalorder %s266, %s267
    %p276 = scmp.eq.s32.totalorder %s25, 0
    %p277 = por %p275, %p276
    %p278 = scmp.ne.s32.totalorder %s266, %s267
    %p279 = scmp.eq.s32.totalorder %s26, 1
    %p280 = por %p278, %p279
    %p282 = scmp.ne.s32.totalorder %s267, %s281
    %p283 = scmp.eq.s32.totalorder %s26, 0
    %p284 = por %p282, %p283
    %s286 = sadd.s32 %s285, 1
    %p289 = scmp.eq.s32.totalorder %s20, 1
    %p290 = scmp.ne.s32.totalorder %s285, %s287
    %p291 = scmp.eq.s32.totalorder %s20, 0
    %p292 = por %p290, %p291
    %p293 = scmp.ne.s32.totalorder %s285, %s287
    %p294 = scmp.eq.s32.totalorder %s25, 1
    %p295 = por %p293, %p294
    %p296 = scmp.ne.s32.totalorder %s287, %s288
    %p297 = scmp.eq.s32.totalorder %s25, 0
    %p298 = por %p296, %p297
    %p299 = scmp.ne.s32.totalorder %s287, %s288
    %p300 = scmp.eq.s32.totalorder %s26, 1
    %p301 = por %p299, %p300
    %p303 = scmp.ne.s32.totalorder %s288, %s302
    %p304 = scmp.eq.s32.totalorder %s26, 0
    %p305 = por %p303, %p304
    %s307 = sadd.s32 %s306, 1
    %p310 = scmp.eq.s32.totalorder %s20, 1
    %p311 = scmp.ne.s32.totalorder %s306, %s308
    %p312 = scmp.eq.s32.totalorder %s20, 0
    %p313 = por %p311, %p312
    %p314 = scmp.ne.s32.totalorder %s306, %s308
    %p315 = scmp.eq.s32.totalorder %s25, 1
    %p316 = por %p314, %p315
    %p317 = scmp.ne.s32.totalorder %s308, %s309
    %p318 = scmp.eq.s32.totalorder %s25, 0
    %p319 = por %p317, %p318
    %p320 = scmp.ne.s32.totalorder %s308, %s309
    %p321 = scmp.eq.s32.totalorder %s26, 1
    %p322 = por %p320, %p321
    %p324 = scmp.ne.s32.totalorder %s309, %s323
    %p325 = scmp.eq.s32.totalorder %s26, 0
    %p326 = por %p324, %p325
    %s327 = ssub.s32 %s20, %s27
    %p328 = scmp.eq.s32.totalorder %s327, 0
    %s330 = sadd.s32 %s329, 1
    %s331 = scalar_select %p328, %s329, %s330
    %p334 = pneg %p328
    %p335 = scmp.eq.s32.totalorder %s20, 1
    %p336 = por %p334, %p335
    %p337 = scmp.ne.s32.totalorder %s329, %s332
    %p338 = scmp.eq.s32.totalorder %s20, 0
    %p339 = por %p337, %p338
    %p340 = scmp.ne.s32.totalorder %s329, %s332
    %p341 = scmp.eq.s32.totalorder %s25, 1
    %p342 = por %p340, %p341
    %p343 = scmp.ne.s32.totalorder %s332, %s333
    %p344 = scmp.eq.s32.totalorder %s25, 0
    %p345 = por %p343, %p344
    %p346 = scmp.ne.s32.totalorder %s332, %s333
    %p347 = scmp.eq.s32.totalorder %s26, 1
    %p348 = por %p346, %p347
    %p350 = scmp.ne.s32.totalorder %s333, %s349
    %p351 = scmp.eq.s32.totalorder %s26, 0
    %p352 = por %p350, %p351
    %p353 = scmp.le.s32.totalorder 1, %s20
    %p354 = scmp.lt.s32.totalorder %s20, 3
    %p355 = pnand %p353, %p354
    %p356 = pneg %p355
    // Predicated region
    $region9: #{forward.4} parent=5 // pred_check
      _
    $region10: #{forward.4} parent=5 // pred_check_branch
      %358 = sbr.rel (%p355) target = $region12
    $region11: #{forward.4} parent=5 // pred_region
      %s359 = ssub.s32 %s20, 1
      // Predicated region
      $region13: #{forward.4} parent=11 // pred_check
        %p360 = pneg %p67
      $region14: #{forward.4} parent=11 // pred_check_branch
        %362 = sbr.rel (%p360) target = $region16
      $region15: #{forward.4} parent=11 // pred_region
        _
      $region16: #{forward.4} parent=11 // pred_fallthru
        _
      // Predicated region
      $region17: #{forward.4} parent=11 // pred_check
        %p363 = pneg %p88
      $region18: #{forward.4} parent=11 // pred_check_branch
        %365 = sbr.rel (%p363) target = $region20
      $region19: #{forward.4} parent=11 // pred_region
        _
      $region20: #{forward.4} parent=11 // pred_fallthru
        _
      // Predicated region
      $region21: #{forward.4} parent=11 // pred_check
        %p366 = pneg %p109
      $region22: #{forward.4} parent=11 // pred_check_branch
        %368 = sbr.rel (%p366) target = $region24
      $region23: #{forward.4} parent=11 // pred_region
        _
      $region24: #{forward.4} parent=11 // pred_fallthru
        _
      // Predicated region
      $region25: #{forward.4} parent=11 // pred_check
        %p369 = pneg %p130
      $region26: #{forward.4} parent=11 // pred_check_branch
        %371 = sbr.rel (%p369) target = $region28
      $region27: #{forward.4} parent=11 // pred_region
        _
      $region28: #{forward.4} parent=11 // pred_fallthru
        _
      // Predicated region
      $region29: #{forward.4} parent=11 // pred_check
        %p372 = pneg %p151
      $region30: #{forward.4} parent=11 // pred_check_branch
        %374 = sbr.rel (%p372) target = $region32
      $region31: #{forward.4} parent=11 // pred_region
        _
      $region32: #{forward.4} parent=11 // pred_fallthru
        _
      // Predicated region
      $region33: #{forward.4} parent=11 // pred_check
        %p375 = pneg %p172
      $region34: #{forward.4} parent=11 // pred_check_branch
        %377 = sbr.rel (%p375) target = $region36
      $region35: #{forward.4} parent=11 // pred_region
        _
      $region36: #{forward.4} parent=11 // pred_fallthru
        _
      // Predicated region
      $region37: #{forward.4} parent=11 // pred_check
        %p378 = pneg %p193
      $region38: #{forward.4} parent=11 // pred_check_branch
        %380 = sbr.rel (%p378) target = $region40
      $region39: #{forward.4} parent=11 // pred_region
        _
      $region40: #{forward.4} parent=11 // pred_fallthru
        _
      // Predicated region
      $region41: #{forward.4} parent=11 // pred_check
        %p381 = pneg %p214
      $region42: #{forward.4} parent=11 // pred_check_branch
        %383 = sbr.rel (%p381) target = $region44
      $region43: #{forward.4} parent=11 // pred_region
        _
      $region44: #{forward.4} parent=11 // pred_fallthru
        _
      // Predicated region
      $region45: #{forward.4} parent=11 // pred_check
        %p384 = pneg %p235
      $region46: #{forward.4} parent=11 // pred_check_branch
        %386 = sbr.rel (%p384) target = $region48
      $region47: #{forward.4} parent=11 // pred_region
        _
      $region48: #{forward.4} parent=11 // pred_fallthru
        _
      // Predicated region
      $region49: #{forward.4} parent=11 // pred_check
        %p387 = pneg %p256
      $region50: #{forward.4} parent=11 // pred_check_branch
        %389 = sbr.rel (%p387) target = $region52
      $region51: #{forward.4} parent=11 // pred_region
        _
      $region52: #{forward.4} parent=11 // pred_fallthru
        _
      // Predicated region
      $region53: #{forward.4} parent=11 // pred_check
        %p390 = pneg %p277
      $region54: #{forward.4} parent=11 // pred_check_branch
        %392 = sbr.rel (%p390) target = $region56
      $region55: #{forward.4} parent=11 // pred_region
        _
      $region56: #{forward.4} parent=11 // pred_fallthru
        _
      // Predicated region
      $region57: #{forward.4} parent=11 // pred_check
        %p393 = pneg %p298
      $region58: #{forward.4} parent=11 // pred_check_branch
        %395 = sbr.rel (%p393) target = $region60
      $region59: #{forward.4} parent=11 // pred_region
        _
      $region60: #{forward.4} parent=11 // pred_fallthru
        _
      // Predicated region
      $region61: #{forward.4} parent=11 // pred_check
        %p396 = pneg %p319
      $region62: #{forward.4} parent=11 // pred_check_branch
        %398 = sbr.rel (%p396) target = $region64
      $region63: #{forward.4} parent=11 // pred_region
        _
      $region64: #{forward.4} parent=11 // pred_fallthru
        _
    $region12: #{forward.4} parent=5 // pred_fallthru
      _
    %p399 = scmp.lt.s32.totalorder %s20, 2
    // Predicated region
    $region65: #{forward.4} parent=5 // pred_check
      %p400 = pneg %p399
    $region66: #{forward.4} parent=5 // pred_check_branch
      %402 = sbr.rel (%p400) target = $region68
    $region67: #{forward.4} parent=5 // pred_region
      // Predicated region
      $region69: #{forward.4} parent=67 // pred_check
        %p403 = pneg %p40
      $region70: #{forward.4} parent=67 // pred_check_branch
        %405 = sbr.rel (%p403) target = $region72
      $region71: #{forward.4} parent=67 // pred_region
        %p406 = scmp.lt.s32.totalorder %s20, 1
        %s407 = scalar_select %p406, %s20, 1
        %s408 = smul.addr %s407, 32
        %s409 = smul.addr %s408, 8
        %s410 = scalar_lea.vmem %s0, %s409
      $region72: #{forward.4} parent=67 // pred_fallthru
        _
    $region68: #{forward.4} parent=5 // pred_fallthru
      _
    %p411 = scmp.le.s32.totalorder 1, %s20
    %p412 = scmp.lt.s32.totalorder %s20, 3
    %p413 = pnand %p411, %p412
    %p414 = pneg %p413
    // Predicated region
    $region73: #{forward.4} parent=5 // pred_check
      _
    $region74: #{forward.4} parent=5 // pred_check_branch
      %416 = sbr.rel (%p413) target = $region76
    $region75: #{forward.4} parent=5 // pred_region
      %s417 = ssub.s32 %s20, 1
      %p418 = scmp.lt.s32.totalorder %s25, 1
      %s419 = scalar_select %p418, %s25, 1
      %s420 = smul.addr %s419, 32
      %s421 = smul.addr %s420, 8
      %s422 = scalar_lea.vmem %s0, %s421
      %p423 = pneg %p46
      %p424 = pneg %p43
      %p425 = pneg %p67
      %p426 = pneg %p64
      %p427 = pneg %p88
      %p428 = pneg %p85
      %p429 = pneg %p109
      %p430 = pneg %p106
      %p431 = pneg %p130
      %p432 = pneg %p127
      %p433 = pneg %p151
      %p434 = pneg %p148
      %p435 = pneg %p172
      %p436 = pneg %p169
      %p437 = pneg %p193
      %p438 = pneg %p190
      %p439 = pneg %p214
      %p440 = pneg %p211
      %p441 = pneg %p235
      %p442 = pneg %p232
      %p443 = pneg %p256
      %p444 = pneg %p253
      %p445 = pneg %p277
      %p446 = pneg %p274
      %p447 = pneg %p298
      %p448 = pneg %p295
      %p449 = pneg %p319
      %p450 = pneg %p316
      %p451 = pneg %p345
      %p452 = pneg %p342
      %p453 = scmp.lt.s32.totalorder %s25, 1
      %s454 = scalar_select %p453, %s25, 1
      %s455 = smul.addr %s454, 8
      %s456 = smul.addr %s455, 8
      %s457 = scalar_lea.vmem %s14, %s456
      %p458 = scmp.lt.s32.totalorder %s25, 1
      %s459 = scalar_select %p458, %s25, 1
      %s460 = smul.addr %s459, 32
      %s461 = smul.addr %s460, 8
      %s462 = scalar_lea.vmem %s0, %s461
      %p463 = scmp.lt.s32.totalorder %s25, 1
      %s464 = scalar_select %p463, %s25, 1
      %s465 = smul.addr %s464, 8
      %s466 = smul.addr %s465, 8
      %s467 = scalar_lea.vmem %s14, %s466
      %v469 = vld [vmem:[%s462] sm:$0xff]
      %v470 = vld [vmem:[%s462 + $0x8] sm:$0xff]
      %v471 = vld [vmem:[%s462 + $0x10] sm:$0xff]
      %v472 = vld [vmem:[%s462 + $0x18] sm:$0xff]
      %v473 = vld [vmem:[%s462 + $0x20] sm:$0xff]
      %v474 = vld [vmem:[%s462 + $0x28] sm:$0xff]
      %v475 = vld [vmem:[%s462 + $0x30] sm:$0xff]
      %v476 = vld [vmem:[%s462 + $0x38] sm:$0xff]
      %v477 = vld [vmem:[%s462 + $0x40] sm:$0xff]
      %v478 = vld [vmem:[%s462 + $0x48] sm:$0xff]
      %v479 = vld [vmem:[%s462 + $0x50] sm:$0xff]
      %v480 = vld [vmem:[%s462 + $0x58] sm:$0xff]
      %v481 = vld [vmem:[%s462 + $0x60] sm:$0xff]
      %v482 = vld [vmem:[%s462 + $0x68] sm:$0xff]
      %v483 = vld [vmem:[%s462 + $0x70] sm:$0xff]
      %v484 = vld [vmem:[%s462 + $0x78] sm:$0xff]
      %v485 = vld [vmem:[%s462 + $0x80] sm:$0xff]
      %v486 = vld [vmem:[%s462 + $0x88] sm:$0xff]
      %v487 = vld [vmem:[%s462 + $0x90] sm:$0xff]
      %v488 = vld [vmem:[%s462 + $0x98] sm:$0xff]
      %v489 = vld [vmem:[%s462 + $0xa0] sm:$0xff]
      %v490 = vld [vmem:[%s462 + $0xa8] sm:$0xff]
      %v491 = vld [vmem:[%s462 + $0xb0] sm:$0xff]
      %v492 = vld [vmem:[%s462 + $0xb8] sm:$0xff]
      %v493 = vld [vmem:[%s462 + $0xc0] sm:$0xff]
      %v494 = vld [vmem:[%s462 + $0xc8] sm:$0xff]
      %v495 = vld [vmem:[%s462 + $0xd0] sm:$0xff]
      %v496 = vld [vmem:[%s462 + $0xd8] sm:$0xff]
      %v497 = vld [vmem:[%s462 + $0xe0] sm:$0xff]
      %v498 = vld [vmem:[%s462 + $0xe8] sm:$0xff]
      %v499 = vld [vmem:[%s462 + $0xf0] sm:$0xff]
      %v500 = vld [vmem:[%s462 + $0xf8] sm:$0xff]
      %501 = vst [vmem:[#allocation2] sm:$0xff] 0.0
      %502 = vst [vmem:[#allocation2 + $0x8] sm:$0xff] 0.0
      %503 = vst [vmem:[#allocation2 + $0x10] sm:$0x3] 0.0
      %504 = vst [vmem:[#allocation2 + $0x18] sm:$0xff] 0.0
      %505 = vst [vmem:[#allocation2 + $0x20] sm:$0xff] 0.0
      %506 = vst [vmem:[#allocation2 + $0x28] sm:$0x3] 0.0
      %507 = vst [vmem:[#allocation2 + $0x30] sm:$0xff] 0.0
      %508 = vst [vmem:[#allocation2 + $0x38] sm:$0xff] 0.0
      %509 = vst [vmem:[#allocation2 + $0x40] sm:$0x3] 0.0
      %510 = vst [vmem:[#allocation2 + $0x48] sm:$0xff] 0.0
      %511 = vst [vmem:[#allocation2 + $0x50] sm:$0xff] 0.0
      %512 = vst [vmem:[#allocation2 + $0x58] sm:$0x3] 0.0
      %513 = vst [vmem:[#allocation2 + $0x60] sm:$0xff] 0.0
      %514 = vst [vmem:[#allocation2 + $0x68] sm:$0xff] 0.0
      %515 = vst [vmem:[#allocation2 + $0x70] sm:$0x3] 0.0
      %516 = vst [vmem:[#allocation2 + $0x78] sm:$0xff] 0.0
      %517 = vst [vmem:[#allocation2 + $0x80] sm:$0xff] 0.0
      %518 = vst [vmem:[#allocation2 + $0x88] sm:$0x3] 0.0
      %519 = vst [vmem:[#allocation2 + $0x90] sm:$0xff] 0.0
      %520 = vst [vmem:[#allocation2 + $0x98] sm:$0xff] 0.0
      %521 = vst [vmem:[#allocation2 + $0xa0] sm:$0x3] 0.0
      %522 = vst [vmem:[#allocation2 + $0xa8] sm:$0xff] 0.0
      %523 = vst [vmem:[#allocation2 + $0xb0] sm:$0xff] 0.0
      %524 = vst [vmem:[#allocation2 + $0xb8] sm:$0x3] 0.0
      %525 = vst [vmem:[#allocation2 + $0xc0] sm:$0xff] 0.0
      %526 = vst [vmem:[#allocation2 + $0xc8] sm:$0xff] 0.0
      %527 = vst [vmem:[#allocation2 + $0xd0] sm:$0x3] 0.0
      %528 = vst [vmem:[#allocation2 + $0xd8] sm:$0xff] 0.0
      %529 = vst [vmem:[#allocation2 + $0xe0] sm:$0xff] 0.0
      %530 = vst [vmem:[#allocation2 + $0xe8] sm:$0x3] 0.0
      %531 = vst [vmem:[#allocation2 + $0xf0] sm:$0xff] 0.0
      %532 = vst [vmem:[#allocation2 + $0xf8] sm:$0xff] 0.0
      %533 = vst [vmem:[#allocation2 + $0x100] sm:$0x3] 0.0
      %534 = vst [vmem:[#allocation2 + $0x108] sm:$0xff] 0.0
      %535 = vst [vmem:[#allocation2 + $0x110] sm:$0xff] 0.0
      %536 = vst [vmem:[#allocation2 + $0x118] sm:$0x3] 0.0
      %537 = vst [vmem:[#allocation2 + $0x120] sm:$0xff] 0.0
      %538 = vst [vmem:[#allocation2 + $0x128] sm:$0xff] 0.0
      %539 = vst [vmem:[#allocation2 + $0x130] sm:$0x3] 0.0
      %540 = vst [vmem:[#allocation2 + $0x138] sm:$0xff] 0.0
      %541 = vst [vmem:[#allocation2 + $0x140] sm:$0xff] 0.0
      %542 = vst [vmem:[#allocation2 + $0x148] sm:$0x3] 0.0
      %543 = vst [vmem:[#allocation2 + $0x150] sm:$0xff] 0.0
      %544 = vst [vmem:[#allocation2 + $0x158] sm:$0xff] 0.0
      %545 = vst [vmem:[#allocation2 + $0x160] sm:$0x3] 0.0
      %546 = vst [vmem:[#allocation2 + $0x168] sm:$0xff] 0.0
      %547 = vst [vmem:[#allocation2 + $0x170] sm:$0xff] 0.0
      %548 = vst [vmem:[#allocation2 + $0x178] sm:$0x3] 0.0
      %549 = vst [vmem:[#allocation2 + $0x180] sm:$0xff] 0.0
      %550 = vst [vmem:[#allocation2 + $0x188] sm:$0xff] 0.0
      %551 = vst [vmem:[#allocation2 + $0x190] sm:$0x3] 0.0
      %552 = vst [vmem:[#allocation2 + $0x198] sm:$0xff] 0.0
      %553 = vst [vmem:[#allocation2 + $0x1a0] sm:$0xff] 0.0
      %554 = vst [vmem:[#allocation2 + $0x1a8] sm:$0x3] 0.0
      %s555 = scalar_lea.vmem [#allocation2], 24
      %556 = vst [vmem:[%s555 + $0x1] sm:$0xff] %v469
      %557 = vst [vmem:[%s555 + $0x9] sm:$0xff] %v470
      %558 = vst [vmem:[%s555 + $0x19] sm:$0xff] %v471
      %559 = vst [vmem:[%s555 + $0x21] sm:$0xff] %v472
      %560 = vst [vmem:[%s555 + $0x31] sm:$0xff] %v473
      %561 = vst [vmem:[%s555 + $0x39] sm:$0xff] %v474
      %562 = vst [vmem:[%s555 + $0x49] sm:$0xff] %v475
      %563 = vst [vmem:[%s555 + $0x51] sm:$0xff] %v476
      %564 = vst [vmem:[%s555 + $0x61] sm:$0xff] %v477
      %565 = vst [vmem:[%s555 + $0x69] sm:$0xff] %v478
      %566 = vst [vmem:[%s555 + $0x79] sm:$0xff] %v479
      %567 = vst [vmem:[%s555 + $0x81] sm:$0xff] %v480
      %568 = vst [vmem:[%s555 + $0x91] sm:$0xff] %v481
      %569 = vst [vmem:[%s555 + $0x99] sm:$0xff] %v482
      %570 = vst [vmem:[%s555 + $0xa9] sm:$0xff] %v483
      %571 = vst [vmem:[%s555 + $0xb1] sm:$0xff] %v484
      %572 = vst [vmem:[%s555 + $0xc1] sm:$0xff] %v485
      %573 = vst [vmem:[%s555 + $0xc9] sm:$0xff] %v486
      %574 = vst [vmem:[%s555 + $0xd9] sm:$0xff] %v487
      %575 = vst [vmem:[%s555 + $0xe1] sm:$0xff] %v488
      %576 = vst [vmem:[%s555 + $0xf1] sm:$0xff] %v489
      %577 = vst [vmem:[%s555 + $0xf9] sm:$0xff] %v490
      %578 = vst [vmem:[%s555 + $0x109] sm:$0xff] %v491
      %579 = vst [vmem:[%s555 + $0x111] sm:$0xff] %v492
      %580 = vst [vmem:[%s555 + $0x121] sm:$0xff] %v493
      %581 = vst [vmem:[%s555 + $0x129] sm:$0xff] %v494
      %582 = vst [vmem:[%s555 + $0x139] sm:$0xff] %v495
      %583 = vst [vmem:[%s555 + $0x141] sm:$0xff] %v496
      %584 = vst [vmem:[%s555 + $0x151] sm:$0xff] %v497
      %585 = vst [vmem:[%s555 + $0x159] sm:$0xff] %v498
      %586 = vst [vmem:[%s555 + $0x169] sm:$0xff] %v499
      %587 = vst [vmem:[%s555 + $0x171] sm:$0xff] %v500
      %v588 = vld [vmem:[%s4] sm:$0xff]
      %v589 = vld [vmem:[%s4 + $0x8] sm:$0x1]
      %v590 = vld [vmem:[#allocation2] ss:$2 sm:$0xff]
      %s591 = scalar_lea.vmem [#allocation2], 48
      %v592 = vld [vmem:[%s591] ss:$2 sm:$0xff]
      %s593 = scalar_lea.vmem [#allocation2], 96
      %v594 = vld [vmem:[%s593] ss:$2 sm:$0xff]
      %s595 = scalar_lea.vmem [#allocation2], 144
      %v596 = vld [vmem:[%s595] ss:$2 sm:$0xff]
      %s597 = scalar_lea.vmem [#allocation2], 192
      %v598 = vld [vmem:[%s597] ss:$2 sm:$0xff]
      %s599 = scalar_lea.vmem [#allocation2], 240
      %v600 = vld [vmem:[%s599] ss:$2 sm:$0xff]
      %s601 = scalar_lea.vmem [#allocation2], 288
      %v602 = vld [vmem:[%s601] ss:$2 sm:$0xff]
      %s603 = scalar_lea.vmem [#allocation2], 336
      %v604 = vld [vmem:[%s603] ss:$2 sm:$0xff]
      %v605 = vlaneseq
      %v606 = vshrl.u32 %v605, 7
      %v607 = vsub.s32 0, %v606
      %v608 = vrot.slane %v588, %v607
      %v609 = vmul.f32 %v590, %v608
      %v610 = vmul.f32 %v592, %v608
      %v611 = vmul.f32 %v594, %v608
      %v612 = vmul.f32 %v596, %v608
      %v613 = vmul.f32 %v598, %v608
      %v614 = vmul.f32 %v600, %v608
      %v615 = vmul.f32 %v602, %v608
      %v616 = vmul.f32 %v604, %v608
      %v617 = vadd.f32 %v609, 0.0
      %v618 = vadd.f32 %v610, 0.0
      %v619 = vadd.f32 %v611, 0.0
      %v620 = vadd.f32 %v612, 0.0
      %v621 = vadd.f32 %v613, 0.0
      %v622 = vadd.f32 %v614, 0.0
      %v623 = vadd.f32 %v615, 0.0
      %v624 = vadd.f32 %v616, 0.0
      %s625 = scalar_lea.vmem [#allocation2], 1
      %v626 = vld [vmem:[%s625] ss:$2 sm:$0xff]
      %s627 = scalar_lea.vmem [#allocation2], 49
      %v628 = vld [vmem:[%s627] ss:$2 sm:$0xff]
      %s629 = scalar_lea.vmem [#allocation2], 97
      %v630 = vld [vmem:[%s629] ss:$2 sm:$0xff]
      %s631 = scalar_lea.vmem [#allocation2], 145
      %v632 = vld [vmem:[%s631] ss:$2 sm:$0xff]
      %s633 = scalar_lea.vmem [#allocation2], 193
      %v634 = vld [vmem:[%s633] ss:$2 sm:$0xff]
      %s635 = scalar_lea.vmem [#allocation2], 241
      %v636 = vld [vmem:[%s635] ss:$2 sm:$0xff]
      %s637 = scalar_lea.vmem [#allocation2], 289
      %v638 = vld [vmem:[%s637] ss:$2 sm:$0xff]
      %s639 = scalar_lea.vmem [#allocation2], 337
      %v640 = vld [vmem:[%s639] ss:$2 sm:$0xff]
      %v641 = vlaneseq
      %v642 = vshrl.u32 %v641, 7
      %v643 = vsub.s32 1, %v642
      %v644 = vrot.slane %v588, %v643
      %v645 = vmul.f32 %v626, %v644
      %v646 = vmul.f32 %v628, %v644
      %v647 = vmul.f32 %v630, %v644
      %v648 = vmul.f32 %v632, %v644
      %v649 = vmul.f32 %v634, %v644
      %v650 = vmul.f32 %v636, %v644
      %v651 = vmul.f32 %v638, %v644
      %v652 = vmul.f32 %v640, %v644
      %v653 = vadd.f32 %v617, %v645
      %v654 = vadd.f32 %v618, %v646
      %v655 = vadd.f32 %v619, %v647
      %v656 = vadd.f32 %v620, %v648
      %v657 = vadd.f32 %v621, %v649
      %v658 = vadd.f32 %v622, %v650
      %v659 = vadd.f32 %v623, %v651
      %v660 = vadd.f32 %v624, %v652
      %s661 = scalar_lea.vmem [#allocation2], 2
      %v662 = vld [vmem:[%s661] ss:$2 sm:$0xff]
      %s663 = scalar_lea.vmem [#allocation2], 50
      %v664 = vld [vmem:[%s663] ss:$2 sm:$0xff]
      %s665 = scalar_lea.vmem [#allocation2], 98
      %v666 = vld [vmem:[%s665] ss:$2 sm:$0xff]
      %s667 = scalar_lea.vmem [#allocation2], 146
      %v668 = vld [vmem:[%s667] ss:$2 sm:$0xff]
      %s669 = scalar_lea.vmem [#allocation2], 194
      %v670 = vld [vmem:[%s669] ss:$2 sm:$0xff]
      %s671 = scalar_lea.vmem [#allocation2], 242
      %v672 = vld [vmem:[%s671] ss:$2 sm:$0xff]
      %s673 = scalar_lea.vmem [#allocation2], 290
      %v674 = vld [vmem:[%s673] ss:$2 sm:$0xff]
      %s675 = scalar_lea.vmem [#allocation2], 338
      %v676 = vld [vmem:[%s675] ss:$2 sm:$0xff]
      %v677 = vlaneseq
      %v678 = vshrl.u32 %v677, 7
      %v679 = vsub.s32 2, %v678
      %v680 = vrot.slane %v588, %v679
      %v681 = vmul.f32 %v662, %v680
      %v682 = vmul.f32 %v664, %v680
      %v683 = vmul.f32 %v666, %v680
      %v684 = vmul.f32 %v668, %v680
      %v685 = vmul.f32 %v670, %v680
      %v686 = vmul.f32 %v672, %v680
      %v687 = vmul.f32 %v674, %v680
      %v688 = vmul.f32 %v676, %v680
      %v689 = vadd.f32 %v653, %v681
      %v690 = vadd.f32 %v654, %v682
      %v691 = vadd.f32 %v655, %v683
      %v692 = vadd.f32 %v656, %v684
      %v693 = vadd.f32 %v657, %v685
      %v694 = vadd.f32 %v658, %v686
      %v695 = vadd.f32 %v659, %v687
      %v696 = vadd.f32 %v660, %v688
      %v697 = vld [vmem:[%s555] ss:$2 sm:$0xff]
      %s698 = scalar_lea.vmem %s555, 48 [#allocation2]
      %v699 = vld [vmem:[%s698] ss:$2 sm:$0xff]
      %s700 = scalar_lea.vmem %s555, 96 [#allocation2]
      %v701 = vld [vmem:[%s700] ss:$2 sm:$0xff]
      %s702 = scalar_lea.vmem %s555, 144 [#allocation2]
      %v703 = vld [vmem:[%s702] ss:$2 sm:$0xff]
      %s704 = scalar_lea.vmem %s555, 192 [#allocation2]
      %v705 = vld [vmem:[%s704] ss:$2 sm:$0xff]
      %s706 = scalar_lea.vmem %s555, 240 [#allocation2]
      %v707 = vld [vmem:[%s706] ss:$2 sm:$0xff]
      %s708 = scalar_lea.vmem %s555, 288 [#allocation2]
      %v709 = vld [vmem:[%s708] ss:$2 sm:$0xff]
      %s710 = scalar_lea.vmem %s555, 336 [#allocation2]
      %v711 = vld [vmem:[%s710] ss:$2 sm:$0xff]
      %v712 = vlaneseq
      %v713 = vshrl.u32 %v712, 7
      %v714 = vsub.s32 3, %v713
      %v715 = vrot.slane %v588, %v714
      %v716 = vmul.f32 %v697, %v715
      %v717 = vmul.f32 %v699, %v715
      %v718 = vmul.f32 %v701, %v715
      %v719 = vmul.f32 %v703, %v715
      %v720 = vmul.f32 %v705, %v715
      %v721 = vmul.f32 %v707, %v715
      %v722 = vmul.f32 %v709, %v715
      %v723 = vmul.f32 %v711, %v715
      %v724 = vadd.f32 %v689, %v716
      %v725 = vadd.f32 %v690, %v717
      %v726 = vadd.f32 %v691, %v718
      %v727 = vadd.f32 %v692, %v719
      %v728 = vadd.f32 %v693, %v720
      %v729 = vadd.f32 %v694, %v721
      %v730 = vadd.f32 %v695, %v722
      %v731 = vadd.f32 %v696, %v723
      %s732 = scalar_lea.vmem %s555, 1 [#allocation2]
      %v733 = vld [vmem:[%s732] ss:$2 sm:$0xff]
      %s734 = scalar_lea.vmem %s555, 49 [#allocation2]
      %v735 = vld [vmem:[%s734] ss:$2 sm:$0xff]
      %s736 = scalar_lea.vmem %s555, 97 [#allocation2]
      %v737 = vld [vmem:[%s736] ss:$2 sm:$0xff]
      %s738 = scalar_lea.vmem %s555, 145 [#allocation2]
      %v739 = vld [vmem:[%s738] ss:$2 sm:$0xff]
      %s740 = scalar_lea.vmem %s555, 193 [#allocation2]
      %v741 = vld [vmem:[%s740] ss:$2 sm:$0xff]
      %s742 = scalar_lea.vmem %s555, 241 [#allocation2]
      %v743 = vld [vmem:[%s742] ss:$2 sm:$0xff]
      %s744 = scalar_lea.vmem %s555, 289 [#allocation2]
      %v745 = vld [vmem:[%s744] ss:$2 sm:$0xff]
      %s746 = scalar_lea.vmem %s555, 337 [#allocation2]
      %v747 = vld [vmem:[%s746] ss:$2 sm:$0xff]
      %v748 = vlaneseq
      %v749 = vshrl.u32 %v748, 7
      %v750 = vsub.s32 4, %v749
      %v751 = vrot.slane %v588, %v750
      %v752 = vmul.f32 %v733, %v751
      %v753 = vmul.f32 %v735, %v751
      %v754 = vmul.f32 %v737, %v751
      %v755 = vmul.f32 %v739, %v751
      %v756 = vmul.f32 %v741, %v751
      %v757 = vmul.f32 %v743, %v751
      %v758 = vmul.f32 %v745, %v751
      %v759 = vmul.f32 %v747, %v751
      %v760 = vadd.f32 %v724, %v752
      %v761 = vadd.f32 %v725, %v753
      %v762 = vadd.f32 %v726, %v754
      %v763 = vadd.f32 %v727, %v755
      %v764 = vadd.f32 %v728, %v756
      %v765 = vadd.f32 %v729, %v757
      %v766 = vadd.f32 %v730, %v758
      %v767 = vadd.f32 %v731, %v759
      %s768 = scalar_lea.vmem %s555, 2 [#allocation2]
      %v769 = vld [vmem:[%s768] ss:$2 sm:$0xff]
      %s770 = scalar_lea.vmem %s555, 50 [#allocation2]
      %v771 = vld [vmem:[%s770] ss:$2 sm:$0xff]
      %s772 = scalar_lea.vmem %s555, 98 [#allocation2]
      %v773 = vld [vmem:[%s772] ss:$2 sm:$0xff]
      %s774 = scalar_lea.vmem %s555, 146 [#allocation2]
      %v775 = vld [vmem:[%s774] ss:$2 sm:$0xff]
      %s776 = scalar_lea.vmem %s555, 194 [#allocation2]
      %v777 = vld [vmem:[%s776] ss:$2 sm:$0xff]
      %s778 = scalar_lea.vmem %s555, 242 [#allocation2]
      %v779 = vld [vmem:[%s778] ss:$2 sm:$0xff]
      %s780 = scalar_lea.vmem %s555, 290 [#allocation2]
      %v781 = vld [vmem:[%s780] ss:$2 sm:$0xff]
      %s782 = scalar_lea.vmem %s555, 338 [#allocation2]
      %v783 = vld [vmem:[%s782] ss:$2 sm:$0xff]
      %v784 = vlaneseq
      %v785 = vshrl.u32 %v784, 7
      %v786 = vsub.s32 5, %v785
      %v787 = vrot.slane %v588, %v786
      %v788 = vmul.f32 %v769, %v787
      %v789 = vmul.f32 %v771, %v787
      %v790 = vmul.f32 %v773, %v787
      %v791 = vmul.f32 %v775, %v787
      %v792 = vmul.f32 %v777, %v787
      %v793 = vmul.f32 %v779, %v787
      %v794 = vmul.f32 %v781, %v787
      %v795 = vmul.f32 %v783, %v787
      %v796 = vadd.f32 %v760, %v788
      %v797 = vadd.f32 %v761, %v789
      %v798 = vadd.f32 %v762, %v790
      %v799 = vadd.f32 %v763, %v791
      %v800 = vadd.f32 %v764, %v792
      %v801 = vadd.f32 %v765, %v793
      %v802 = vadd.f32 %v766, %v794
      %v803 = vadd.f32 %v767, %v795
      %s804 = scalar_lea.vmem [#allocation2], 48
      %v805 = vld [vmem:[%s804] ss:$2 sm:$0xff]
      %s806 = scalar_lea.vmem %s804, 48 [#allocation2]
      %v807 = vld [vmem:[%s806] ss:$2 sm:$0xff]
      %s808 = scalar_lea.vmem %s804, 96 [#allocation2]
      %v809 = vld [vmem:[%s808] ss:$2 sm:$0xff]
      %s810 = scalar_lea.vmem %s804, 144 [#allocation2]
      %v811 = vld [vmem:[%s810] ss:$2 sm:$0xff]
      %s812 = scalar_lea.vmem %s804, 192 [#allocation2]
      %v813 = vld [vmem:[%s812] ss:$2 sm:$0xff]
      %s814 = scalar_lea.vmem %s804, 240 [#allocation2]
      %v815 = vld [vmem:[%s814] ss:$2 sm:$0xff]
      %s816 = scalar_lea.vmem %s804, 288 [#allocation2]
      %v817 = vld [vmem:[%s816] ss:$2 sm:$0xff]
      %s818 = scalar_lea.vmem %s804, 336 [#allocation2]
      %v819 = vld [vmem:[%s818] ss:$2 sm:$0xff]
      %v820 = vlaneseq
      %v821 = vshrl.u32 %v820, 7
      %v822 = vsub.s32 6, %v821
      %v823 = vrot.slane %v588, %v822
      %v824 = vmul.f32 %v805, %v823
      %v825 = vmul.f32 %v807, %v823
      %v826 = vmul.f32 %v809, %v823
      %v827 = vmul.f32 %v811, %v823
      %v828 = vmul.f32 %v813, %v823
      %v829 = vmul.f32 %v815, %v823
      %v830 = vmul.f32 %v817, %v823
      %v831 = vmul.f32 %v819, %v823
      %v832 = vadd.f32 %v796, %v824
      %v833 = vadd.f32 %v797, %v825
      %v834 = vadd.f32 %v798, %v826
      %v835 = vadd.f32 %v799, %v827
      %v836 = vadd.f32 %v800, %v828
      %v837 = vadd.f32 %v801, %v829
      %v838 = vadd.f32 %v802, %v830
      %v839 = vadd.f32 %v803, %v831
      %s840 = scalar_lea.vmem %s804, 1 [#allocation2]
      %v841 = vld [vmem:[%s840] ss:$2 sm:$0xff]
      %s842 = scalar_lea.vmem %s804, 49 [#allocation2]
      %v843 = vld [vmem:[%s842] ss:$2 sm:$0xff]
      %s844 = scalar_lea.vmem %s804, 97 [#allocation2]
      %v845 = vld [vmem:[%s844] ss:$2 sm:$0xff]
      %s846 = scalar_lea.vmem %s804, 145 [#allocation2]
      %v847 = vld [vmem:[%s846] ss:$2 sm:$0xff]
      %s848 = scalar_lea.vmem %s804, 193 [#allocation2]
      %v849 = vld [vmem:[%s848] ss:$2 sm:$0xff]
      %s850 = scalar_lea.vmem %s804, 241 [#allocation2]
      %v851 = vld [vmem:[%s850] ss:$2 sm:$0xff]
      %s852 = scalar_lea.vmem %s804, 289 [#allocation2]
      %v853 = vld [vmem:[%s852] ss:$2 sm:$0xff]
      %s854 = scalar_lea.vmem %s804, 337 [#allocation2]
      %v855 = vld [vmem:[%s854] ss:$2 sm:$0xff]
      %v856 = vlaneseq
      %v857 = vshrl.u32 %v856, 7
      %v858 = vsub.s32 7, %v857
      %v859 = vrot.slane %v588, %v858
      %v860 = vmul.f32 %v841, %v859
      %v861 = vmul.f32 %v843, %v859
      %v862 = vmul.f32 %v845, %v859
      %v863 = vmul.f32 %v847, %v859
      %v864 = vmul.f32 %v849, %v859
      %v865 = vmul.f32 %v851, %v859
      %v866 = vmul.f32 %v853, %v859
      %v867 = vmul.f32 %v855, %v859
      %v868 = vadd.f32 %v832, %v860
      %v869 = vadd.f32 %v833, %v861
      %v870 = vadd.f32 %v834, %v862
      %v871 = vadd.f32 %v835, %v863
      %v872 = vadd.f32 %v836, %v864
      %v873 = vadd.f32 %v837, %v865
      %v874 = vadd.f32 %v838, %v866
      %v875 = vadd.f32 %v839, %v867
      %s876 = scalar_lea.vmem %s804, 2 [#allocation2]
      %v877 = vld [vmem:[%s876] ss:$2 sm:$0xff]
      %s878 = scalar_lea.vmem %s804, 50 [#allocation2]
      %v879 = vld [vmem:[%s878] ss:$2 sm:$0xff]
      %s880 = scalar_lea.vmem %s804, 98 [#allocation2]
      %v881 = vld [vmem:[%s880] ss:$2 sm:$0xff]
      %s882 = scalar_lea.vmem %s804, 146 [#allocation2]
      %v883 = vld [vmem:[%s882] ss:$2 sm:$0xff]
      %s884 = scalar_lea.vmem %s804, 194 [#allocation2]
      %v885 = vld [vmem:[%s884] ss:$2 sm:$0xff]
      %s886 = scalar_lea.vmem %s804, 242 [#allocation2]
      %v887 = vld [vmem:[%s886] ss:$2 sm:$0xff]
      %s888 = scalar_lea.vmem %s804, 290 [#allocation2]
      %v889 = vld [vmem:[%s888] ss:$2 sm:$0xff]
      %s890 = scalar_lea.vmem %s804, 338 [#allocation2]
      %v891 = vld [vmem:[%s890] ss:$2 sm:$0xff]
      %v892 = vlaneseq
      %v893 = vshrl.u32 %v892, 7
      %v894 = vsub.s32 0, %v893
      %v895 = vrot.slane %v589, %v894
      %v896 = vmul.f32 %v877, %v895
      %v897 = vmul.f32 %v879, %v895
      %v898 = vmul.f32 %v881, %v895
      %v899 = vmul.f32 %v883, %v895
      %v900 = vmul.f32 %v885, %v895
      %v901 = vmul.f32 %v887, %v895
      %v902 = vmul.f32 %v889, %v895
      %v903 = vmul.f32 %v891, %v895
      %v904 = vadd.f32 %v868, %v896
      %v905 = vadd.f32 %v869, %v897
      %v906 = vadd.f32 %v870, %v898
      %v907 = vadd.f32 %v871, %v899
      %v908 = vadd.f32 %v872, %v900
      %v909 = vadd.f32 %v873, %v901
      %v910 = vadd.f32 %v874, %v902
      %v911 = vadd.f32 %v875, %v903
      %v912 = vld [vmem:[%s5] sm:$0x1]
      %v914 = vlaneseq
      %v915 = vshrl.u32 %v914, 7
      %v916 = vsub.s32 0, %v915
      %v917 = vrot.slane %v912, %v916
      %v919 = vmul.f32 %v904, %v917
      %v920 = vmul.f32 %v905, %v917
      %v921 = vmul.f32 %v906, %v917
      %v922 = vmul.f32 %v907, %v917
      %v923 = vmul.f32 %v908, %v917
      %v924 = vmul.f32 %v909, %v917
      %v925 = vmul.f32 %v910, %v917
      %v926 = vmul.f32 %v911, %v917
      %v927 = vld [vmem:[%s6] sm:$0x1]
      %v929 = vlaneseq
      %v930 = vshrl.u32 %v929, 7
      %v931 = vsub.s32 0, %v930
      %v932 = vrot.slane %v927, %v931
      %v934 = vadd.f32 %v919, %v932
      %v935 = vadd.f32 %v920, %v932
      %v936 = vadd.f32 %v921, %v932
      %v937 = vadd.f32 %v922, %v932
      %v938 = vadd.f32 %v923, %v932
      %v939 = vadd.f32 %v924, %v932
      %v940 = vadd.f32 %v925, %v932
      %v941 = vadd.f32 %v926, %v932
      %v942 = vmax.f32 %v934, 0.0
      %v943 = vmax.f32 %v935, 0.0
      %v944 = vmax.f32 %v936, 0.0
      %v945 = vmax.f32 %v937, 0.0
      %v946 = vmax.f32 %v938, 0.0
      %v947 = vmax.f32 %v939, 0.0
      %v948 = vmax.f32 %v940, 0.0
      %v949 = vmax.f32 %v941, 0.0
      %v950 = vmin.f32 %v942, 6.0
      %v951 = vmin.f32 %v943, 6.0
      %v952 = vmin.f32 %v944, 6.0
      %v953 = vmin.f32 %v945, 6.0
      %v954 = vmin.f32 %v946, 6.0
      %v955 = vmin.f32 %v947, 6.0
      %v956 = vmin.f32 %v948, 6.0
      %v957 = vmin.f32 %v949, 6.0
      %v958 = vpack.c.bf16 %v951, %v950
      %v959 = vpack.c.bf16 %v953, %v952
      %v960 = vpack.c.bf16 %v955, %v954
      %v961 = vpack.c.bf16 %v957, %v956
      %v962 = vld [vmem:[%s7] sm:$0xf]
      %v963 = vld [vmem:[%s7 + $0x4] sm:$0xf]
      %v964 = vld [vmem:[%s7 + $0x8] sm:$0xf]
      %v965 = vld [vmem:[%s7 + $0xc] sm:$0xf]
      %v966 = vld [vmem:[%s7 + $0x10] sm:$0xf]
      %v967 = vld [vmem:[%s7 + $0x14] sm:$0xf]
      %v968 = vld [vmem:[%s7 + $0x18] sm:$0xf]
      %v969 = vld [vmem:[%s7 + $0x1c] sm:$0xf]
      %v970 = vld [vmem:[%s7 + $0x20] sm:$0xf]
      %v971 = vld [vmem:[%s7 + $0x24] sm:$0xf]
      %v972 = vld [vmem:[%s7 + $0x28] sm:$0xf]
      %v973 = vld [vmem:[%s7 + $0x2c] sm:$0xf]
      %v974 = vld [vmem:[%s7 + $0x30] sm:$0xf]
      %v975 = vld [vmem:[%s7 + $0x34] sm:$0xf]
      %v976 = vld [vmem:[%s7 + $0x38] sm:$0xf]
      %v977 = vld [vmem:[%s7 + $0x3c] sm:$0xf]
      %v994 = vunpack.c.l.b16 %v962
      %v995 = vunpack.c.l.b16 %v963
      %v996 = vunpack.c.l.b16 %v964
      %v997 = vunpack.c.l.b16 %v965
      %v998 = vunpack.c.l.b16 %v966
      %v999 = vunpack.c.l.b16 %v967
      %v1000 = vunpack.c.l.b16 %v968
      %v1001 = vunpack.c.l.b16 %v969
      %v1002 = vunpack.c.l.b16 %v970
      %v1003 = vunpack.c.l.b16 %v971
      %v1004 = vunpack.c.l.b16 %v972
      %v1005 = vunpack.c.l.b16 %v973
      %v1006 = vunpack.c.l.b16 %v974
      %v1007 = vunpack.c.l.b16 %v975
      %v1008 = vunpack.c.l.b16 %v976
      %v1009 = vunpack.c.l.b16 %v977
      %v1010 = vpack.c.b16 %v995, %v994
      %v1011 = vpack.c.b16 %v997, %v996
      %v1012 = vpack.c.b16 %v999, %v998
      %v1013 = vpack.c.b16 %v1001, %v1000
      %v1014 = vpack.c.b16 %v1003, %v1002
      %v1015 = vpack.c.b16 %v1005, %v1004
      %v1016 = vpack.c.b16 %v1007, %v1006
      %v1017 = vpack.c.b16 %v1009, %v1008
      %1026 = vmatprep.subr.bf16.mxu0 0
      %1027 = vmatpush1.bf16.msra.mxu0 %v1017
      %1028 = vmatprep.subr.bf16.mxu0 0
      %1029 = vmatpush1.bf16.msra.mxu0 %v1016
      %1030 = vmatprep.subr.bf16.mxu0 0
      %1031 = vmatpush1.bf16.msra.mxu0 %v1015
      %1032 = vmatprep.subr.bf16.mxu0 0
      %1033 = vmatpush1.bf16.msra.mxu0 %v1014
      %1034 = vmatprep.subr.bf16.mxu0 0
      %1035 = vmatpush1.bf16.msra.mxu0 %v1013
      %1036 = vmatprep.subr.bf16.mxu0 0
      %1037 = vmatpush1.bf16.msra.mxu0 %v1012
      %1038 = vmatprep.subr.bf16.mxu0 0
      %1039 = vmatpush1.bf16.msra.mxu0 %v1011
      %1040 = vmatprep.subr.bf16.mxu0 0
      %1041 = vmatpush1.bf16.msra.mxu0 %v1010
      %1042 = vmatprep.subr.bf16.mxu0 0
      %1043 = vmatpush2.bf16.msra.mxu0 0
      %1044 = vmatprep.subr.bf16.mxu0 0
      %1045 = vmatpush2.bf16.msra.mxu0 0
      %1046 = vmatprep.subr.bf16.mxu0 0
      %1047 = vmatpush2.bf16.msra.mxu0 0
      %1048 = vmatprep.subr.bf16.mxu0 0
      %1049 = vmatpush2.bf16.msra.mxu0 0
      %1050 = vmatprep.subr.bf16.mxu0 0
      %1051 = vmatpush2.bf16.msra.mxu0 0
      %1052 = vmatprep.subr.bf16.mxu0 0
      %1053 = vmatpush2.bf16.msra.mxu0 0
      %1054 = vmatprep.subr.bf16.mxu0 0
      %1055 = vmatpush2.bf16.msra.mxu0 0
      %1056 = vmatprep.subr.bf16.mxu0 0
      %1057 = vmatpush2.bf16.msra.mxu0 0
      %1058 = vmatprep.mubr.bf16.mxu0 0
      %1059 = vmatmul.mubr.bf16.gmra.mxu0 %v958
      %v1060 = vpop.f32.mrf.mxu0
      %v1061 = vadd.f32 0.0, %v1060
      %v1062 = vpop.f32.mrf.mxu0
      %v1063 = vpop.f32.mrf.mxu0
      %v1064 = vadd.f32 0.0, %v1063
      %v1065 = vpop.f32.mrf.mxu0
      %1066 = vmatprep.mubr.bf16.mxu0 0
      %1067 = vmatmul.mubr.bf16.gmra.mxu0 %v959
      %v1068 = vpop.f32.mrf.mxu0
      %v1069 = vadd.f32 0.0, %v1068
      %v1070 = vpop.f32.mrf.mxu0
      %v1071 = vpop.f32.mrf.mxu0
      %v1072 = vadd.f32 0.0, %v1071
      %v1073 = vpop.f32.mrf.mxu0
      %1074 = vmatprep.mubr.bf16.mxu0 0
      %1075 = vmatmul.mubr.bf16.gmra.mxu0 %v960
      %v1076 = vpop.f32.mrf.mxu0
      %v1077 = vadd.f32 0.0, %v1076
      %v1078 = vpop.f32.mrf.mxu0
      %v1079 = vpop.f32.mrf.mxu0
      %v1080 = vadd.f32 0.0, %v1079
      %v1081 = vpop.f32.mrf.mxu0
      %1082 = vmatprep.mubr.bf16.mxu0 0
      %1083 = vmatmul.mubr.bf16.gmra.mxu0 %v961
      %v1084 = vpop.f32.mrf.mxu0
      %v1085 = vadd.f32 0.0, %v1084
      %v1086 = vpop.f32.mrf.mxu0
      %v1087 = vpop.f32.mrf.mxu0
      %v1088 = vadd.f32 0.0, %v1087
      %v1089 = vpop.f32.mrf.mxu0
      %1090 = vdwg.mxu0
      %v1091 = vld [vmem:[%s8] sm:$0x1]
      %v1093 = vlaneseq
      %v1094 = vshrl.u32 %v1093, 7
      %v1095 = vsub.s32 0, %v1094
      %v1096 = vrot.slane %v1091, %v1095
      %v1098 = vmul.f32 %v1061, %v1096
      %v1099 = vmul.f32 %v1064, %v1096
      %v1100 = vmul.f32 %v1069, %v1096
      %v1101 = vmul.f32 %v1072, %v1096
      %v1102 = vmul.f32 %v1077, %v1096
      %v1103 = vmul.f32 %v1080, %v1096
      %v1104 = vmul.f32 %v1085, %v1096
      %v1105 = vmul.f32 %v1088, %v1096
      %v1106 = vld [vmem:[%s9] sm:$0x1]
      %v1108 = vlaneseq
      %v1109 = vshrl.u32 %v1108, 7
      %v1110 = vsub.s32 0, %v1109
      %v1111 = vrot.slane %v1106, %v1110
      %v1113 = vadd.f32 %v1098, %v1111
      %v1114 = vadd.f32 %v1099, %v1111
      %v1115 = vadd.f32 %v1100, %v1111
      %v1116 = vadd.f32 %v1101, %v1111
      %v1117 = vadd.f32 %v1102, %v1111
      %v1118 = vadd.f32 %v1103, %v1111
      %v1119 = vadd.f32 %v1104, %v1111
      %v1120 = vadd.f32 %v1105, %v1111
      %v1121 = vmax.f32 %v1113, 0.0
      %v1122 = vmax.f32 %v1114, 0.0
      %v1123 = vmax.f32 %v1115, 0.0
      %v1124 = vmax.f32 %v1116, 0.0
      %v1125 = vmax.f32 %v1117, 0.0
      %v1126 = vmax.f32 %v1118, 0.0
      %v1127 = vmax.f32 %v1119, 0.0
      %v1128 = vmax.f32 %v1120, 0.0
      %v1129 = vmin.f32 %v1121, 6.0
      %v1130 = vmin.f32 %v1122, 6.0
      %v1131 = vmin.f32 %v1123, 6.0
      %v1132 = vmin.f32 %v1124, 6.0
      %v1133 = vmin.f32 %v1125, 6.0
      %v1134 = vmin.f32 %v1126, 6.0
      %v1135 = vmin.f32 %v1127, 6.0
      %v1136 = vmin.f32 %v1128, 6.0
      %v1137 = vadd.f32 %v1129, %v1130
      %v1138 = vadd.f32 %v1137, %v1131
      %v1139 = vadd.f32 %v1138, %v1132
      %v1140 = vadd.f32 %v1139, %v1133
      %v1141 = vadd.f32 %v1140, %v1134
      %v1142 = vadd.f32 %v1141, %v1135
      %v1143 = vadd.f32 %v1142, %v1136
      %v1144 = vrot.slane %v1143, 4
      %v1145 = vadd.f32 %v1143, %v1144
      %v1146 = vrot.slane %v1145, 2
      %v1147 = vadd.f32 %v1145, %v1146
      %v1148 = vrot.slane %v1147, 1
      %v1149 = vadd.f32 %v1147, %v1148
      %v1150 = vrcp.pop 64.0
      %v1151 = vmul.f32 %v1149, %v1150
      %v1152 = vpack.c.bf16 %v1151, %v1151
      %v1153 = vld [vmem:[%s10] sm:$0xf]
      %v1154 = vld [vmem:[%s10 + $0x4] sm:$0xf]
      %v1155 = vld [vmem:[%s10 + $0x8] sm:$0xf]
      %v1156 = vld [vmem:[%s10 + $0xc] sm:$0xf]
      %v1157 = vld [vmem:[%s10 + $0x10] sm:$0xf]
      %v1158 = vld [vmem:[%s10 + $0x14] sm:$0xf]
      %v1159 = vld [vmem:[%s10 + $0x18] sm:$0xf]
      %v1160 = vld [vmem:[%s10 + $0x1c] sm:$0xf]
      %v1161 = vld [vmem:[%s10 + $0x20] sm:$0xf]
      %v1162 = vld [vmem:[%s10 + $0x24] sm:$0xf]
      %v1163 = vld [vmem:[%s10 + $0x28] sm:$0xf]
      %v1164 = vld [vmem:[%s10 + $0x2c] sm:$0xf]
      %v1165 = vld [vmem:[%s10 + $0x30] sm:$0xf]
      %v1166 = vld [vmem:[%s10 + $0x34] sm:$0xf]
      %v1167 = vld [vmem:[%s10 + $0x38] sm:$0xf]
      %v1168 = vld [vmem:[%s10 + $0x3c] sm:$0xf]
      %v1169 = vld [vmem:[%s11] sm:$0x1]
      %v1186 = vunpack.c.l.b16 %v1153
      %v1187 = vunpack.c.l.b16 %v1154
      %v1188 = vunpack.c.l.b16 %v1155
      %v1189 = vunpack.c.l.b16 %v1156
      %v1190 = vunpack.c.l.b16 %v1157
      %v1191 = vunpack.c.l.b16 %v1158
      %v1192 = vunpack.c.l.b16 %v1159
      %v1193 = vunpack.c.l.b16 %v1160
      %v1194 = vunpack.c.l.b16 %v1161
      %v1195 = vunpack.c.l.b16 %v1162
      %v1196 = vunpack.c.l.b16 %v1163
      %v1197 = vunpack.c.l.b16 %v1164
      %v1198 = vunpack.c.l.b16 %v1165
      %v1199 = vunpack.c.l.b16 %v1166
      %v1200 = vunpack.c.l.b16 %v1167
      %v1201 = vunpack.c.l.b16 %v1168
      %v1202 = vpack.c.b16 %v1187, %v1186
      %v1203 = vpack.c.b16 %v1189, %v1188
      %v1204 = vpack.c.b16 %v1191, %v1190
      %v1205 = vpack.c.b16 %v1193, %v1192
      %v1206 = vpack.c.b16 %v1195, %v1194
      %v1207 = vpack.c.b16 %v1197, %v1196
      %v1208 = vpack.c.b16 %v1199, %v1198
      %v1209 = vpack.c.b16 %v1201, %v1200
      %1218 = vmatprep.subr.bf16.mxu0 0
      %1219 = vmatpush1.bf16.msra.mxu0 %v1209
      %1220 = vmatprep.subr.bf16.mxu0 0
      %1221 = vmatpush1.bf16.msra.mxu0 %v1208
      %1222 = vmatprep.subr.bf16.mxu0 0
      %1223 = vmatpush1.bf16.msra.mxu0 %v1207
      %1224 = vmatprep.subr.bf16.mxu0 0
      %1225 = vmatpush1.bf16.msra.mxu0 %v1206
      %1226 = vmatprep.subr.bf16.mxu0 0
      %1227 = vmatpush1.bf16.msra.mxu0 %v1205
      %1228 = vmatprep.subr.bf16.mxu0 0
      %1229 = vmatpush1.bf16.msra.mxu0 %v1204
      %1230 = vmatprep.subr.bf16.mxu0 0
      %1231 = vmatpush1.bf16.msra.mxu0 %v1203
      %1232 = vmatprep.subr.bf16.mxu0 0
      %1233 = vmatpush1.bf16.msra.mxu0 %v1202
      %1234 = vmatprep.subr.bf16.mxu0 0
      %1235 = vmatpush2.bf16.msra.mxu0 0
      %1236 = vmatprep.subr.bf16.mxu0 0
      %1237 = vmatpush2.bf16.msra.mxu0 0
      %1238 = vmatprep.subr.bf16.mxu0 0
      %1239 = vmatpush2.bf16.msra.mxu0 0
      %1240 = vmatprep.subr.bf16.mxu0 0
      %1241 = vmatpush2.bf16.msra.mxu0 0
      %1242 = vmatprep.subr.bf16.mxu0 0
      %1243 = vmatpush2.bf16.msra.mxu0 0
      %1244 = vmatprep.subr.bf16.mxu0 0
      %1245 = vmatpush2.bf16.msra.mxu0 0
      %1246 = vmatprep.subr.bf16.mxu0 0
      %1247 = vmatpush2.bf16.msra.mxu0 0
      %1248 = vmatprep.subr.bf16.mxu0 0
      %1249 = vmatpush2.bf16.msra.mxu0 0
      %1250 = vmatprep.mubr.bf16.mxu0 0
      %1251 = vmatmul.mubr.bf16.gmra.mxu0 %v1152
      %v1252 = vpop.f32.mrf.mxu0
      %v1253 = vadd.f32 %v1169, %v1252
      %v1254 = vpop.f32.mrf.mxu0
      %v1255 = vpop.f32.mrf.mxu0
      %v1256 = vpop.f32.mrf.mxu0
      %1257 = vdwg.mxu0
      %v1258 = vmax.f32 %v1253, 0.0
      %v1259 = vpack.c.bf16 %v1258, %v1258
      %v1260 = vld [vmem:[%s12] sm:$0xf]
      %v1261 = vld [vmem:[%s12 + $0x4] sm:$0xf]
      %v1262 = vld [vmem:[%s12 + $0x8] sm:$0xf]
      %v1263 = vld [vmem:[%s12 + $0xc] sm:$0xf]
      %v1264 = vld [vmem:[%s12 + $0x10] sm:$0xf]
      %v1265 = vld [vmem:[%s12 + $0x14] sm:$0xf]
      %v1266 = vld [vmem:[%s12 + $0x18] sm:$0xf]
      %v1267 = vld [vmem:[%s12 + $0x1c] sm:$0xf]
      %v1268 = vld [vmem:[%s12 + $0x20] sm:$0xf]
      %v1269 = vld [vmem:[%s12 + $0x24] sm:$0xf]
      %v1270 = vld [vmem:[%s12 + $0x28] sm:$0xf]
      %v1271 = vld [vmem:[%s12 + $0x2c] sm:$0xf]
      %v1272 = vld [vmem:[%s12 + $0x30] sm:$0xf]
      %v1273 = vld [vmem:[%s12 + $0x34] sm:$0xf]
      %v1274 = vld [vmem:[%s12 + $0x38] sm:$0xf]
      %v1275 = vld [vmem:[%s12 + $0x3c] sm:$0xf]
      %v1276 = vld [vmem:[%s13] sm:$0x1]
      %v1293 = vunpack.c.l.b16 %v1260
      %v1294 = vunpack.c.l.b16 %v1261
      %v1295 = vunpack.c.l.b16 %v1262
      %v1296 = vunpack.c.l.b16 %v1263
      %v1297 = vunpack.c.l.b16 %v1264
      %v1298 = vunpack.c.l.b16 %v1265
      %v1299 = vunpack.c.l.b16 %v1266
      %v1300 = vunpack.c.l.b16 %v1267
      %v1301 = vunpack.c.l.b16 %v1268
      %v1302 = vunpack.c.l.b16 %v1269
      %v1303 = vunpack.c.l.b16 %v1270
      %v1304 = vunpack.c.l.b16 %v1271
      %v1305 = vunpack.c.l.b16 %v1272
      %v1306 = vunpack.c.l.b16 %v1273
      %v1307 = vunpack.c.l.b16 %v1274
      %v1308 = vunpack.c.l.b16 %v1275
      %v1309 = vpack.c.b16 %v1294, %v1293
      %v1310 = vpack.c.b16 %v1296, %v1295
      %v1311 = vpack.c.b16 %v1298, %v1297
      %v1312 = vpack.c.b16 %v1300, %v1299
      %v1313 = vpack.c.b16 %v1302, %v1301
      %v1314 = vpack.c.b16 %v1304, %v1303
      %v1315 = vpack.c.b16 %v1306, %v1305
      %v1316 = vpack.c.b16 %v1308, %v1307
      %1325 = vmatprep.subr.bf16.mxu0 0
      %1326 = vmatpush1.bf16.msra.mxu0 %v1316
      %1327 = vmatprep.subr.bf16.mxu0 0
      %1328 = vmatpush1.bf16.msra.mxu0 %v1315
      %1329 = vmatprep.subr.bf16.mxu0 0
      %1330 = vmatpush1.bf16.msra.mxu0 %v1314
      %1331 = vmatprep.subr.bf16.mxu0 0
      %1332 = vmatpush1.bf16.msra.mxu0 %v1313
      %1333 = vmatprep.subr.bf16.mxu0 0
      %1334 = vmatpush1.bf16.msra.mxu0 %v1312
      %1335 = vmatprep.subr.bf16.mxu0 0
      %1336 = vmatpush1.bf16.msra.mxu0 %v1311
      %1337 = vmatprep.subr.bf16.mxu0 0
      %1338 = vmatpush1.bf16.msra.mxu0 %v1310
      %1339 = vmatprep.subr.bf16.mxu0 0
      %1340 = vmatpush1.bf16.msra.mxu0 %v1309
      %1341 = vmatprep.subr.bf16.mxu0 0
      %1342 = vmatpush2.bf16.msra.mxu0 0
      %1343 = vmatprep.subr.bf16.mxu0 0
      %1344 = vmatpush2.bf16.msra.mxu0 0
      %1345 = vmatprep.subr.bf16.mxu0 0
      %1346 = vmatpush2.bf16.msra.mxu0 0
      %1347 = vmatprep.subr.bf16.mxu0 0
      %1348 = vmatpush2.bf16.msra.mxu0 0
      %1349 = vmatprep.subr.bf16.mxu0 0
      %1350 = vmatpush2.bf16.msra.mxu0 0
      %1351 = vmatprep.subr.bf16.mxu0 0
      %1352 = vmatpush2.bf16.msra.mxu0 0
      %1353 = vmatprep.subr.bf16.mxu0 0
      %1354 = vmatpush2.bf16.msra.mxu0 0
      %1355 = vmatprep.subr.bf16.mxu0 0
      %1356 = vmatpush2.bf16.msra.mxu0 0
      %1357 = vmatprep.mubr.bf16.mxu0 0
      %1358 = vmatmul.mubr.bf16.gmra.mxu0 %v1259
      %v1359 = vpop.f32.mrf.mxu0
      %v1360 = vadd.f32 %v1276, %v1359
      %v1361 = vpop.f32.mrf.mxu0
      %v1362 = vpop.f32.mrf.mxu0
      %v1363 = vpop.f32.mrf.mxu0
      %1364 = vdwg.mxu0
      %v1365 = vxor.u32 %v1360, 2147483648
      %v1366 = vmul.f32 %v1365, 1.442695
      %v1367 = vpow.pop %v1366
      %v1368 = vadd.f32 %v1367, 1.0
      %v1369 = vrcp.pop %v1368
      %v1370 = vmul.f32 1.0, %v1369
      %v1371 = vlaneseq
      %v1372 = vshrl.u32 %v1371, 7
      %v1373 = vsub.s32 0, %v1372
      %v1374 = vrot.slane %v1370, %v1373
      %v1375 = vmul.f32 %v1129, %v1374
      %v1376 = vmul.f32 %v1130, %v1374
      %v1377 = vmul.f32 %v1131, %v1374
      %v1378 = vmul.f32 %v1132, %v1374
      %v1379 = vmul.f32 %v1133, %v1374
      %v1380 = vmul.f32 %v1134, %v1374
      %v1381 = vmul.f32 %v1135, %v1374
      %v1382 = vmul.f32 %v1136, %v1374
      %1383 = vst [vmem:[%s467] sm:$0xff] %v1375
      %1384 = vst [vmem:[%s467 + $0x8] sm:$0xff] %v1376
      %1385 = vst [vmem:[%s467 + $0x10] sm:$0xff] %v1377
      %1386 = vst [vmem:[%s467 + $0x18] sm:$0xff] %v1378
      %1387 = vst [vmem:[%s467 + $0x20] sm:$0xff] %v1379
      %1388 = vst [vmem:[%s467 + $0x28] sm:$0xff] %v1380
      %1389 = vst [vmem:[%s467 + $0x30] sm:$0xff] %v1381
      %1390 = vst [vmem:[%s467 + $0x38] sm:$0xff] %v1382
      %p1391 = scmp.lt.s32.totalorder %s25, 1
      %s1392 = scalar_select %p1391, %s25, 1
      %s1393 = smul.addr %s1392, 8
      %s1394 = smul.addr %s1393, 8
      %s1395 = scalar_lea.vmem %s14, %s1394
      // Predicated region
      $region77: #{forward.4} parent=75 // pred_check
        %p1396 = pneg %p342
      $region78: #{forward.4} parent=75 // pred_check_branch
        %1398 = sbr.rel (%p1396) target = $region80
      $region79: #{forward.4} parent=75 // pred_region
        _
      $region80: #{forward.4} parent=75 // pred_fallthru
        _
    $region76: #{forward.4} parent=5 // pred_fallthru
      _
    %p1399 = scmp.le.s32.totalorder 2, %s20
    // Predicated region
    $region81: #{forward.4} parent=5 // pred_check
      %p1400 = pneg %p1399
    $region82: #{forward.4} parent=5 // pred_check_branch
      %1402 = sbr.rel (%p1400) target = $region84
    $region83: #{forward.4} parent=5 // pred_region
      %s1403 = ssub.s32 %s20, 2
      // Predicated region
      $region85: #{forward.4} parent=83 // pred_check
        %p1404 = pneg %p348
      $region86: #{forward.4} parent=83 // pred_check_branch
        %1406 = sbr.rel (%p1404) target = $region88
      $region87: #{forward.4} parent=83 // pred_region
        %p1407 = scmp.lt.s32.totalorder %s26, 1
        %s1408 = scalar_select %p1407, %s26, 1
        %s1409 = smul.addr %s1408, 8
        %s1410 = smul.addr %s1409, 8
        %s1411 = scalar_lea.vmem %s14, %s1410
      $region88: #{forward.4} parent=83 // pred_fallthru
        _
    $region84: #{forward.4} parent=5 // pred_fallthru
      _
  $region6: #{forward.4} parent=0 // loop_footer
    %s24 = sadd.s32 1, %s20
  $region7: #{forward.4} parent=0 // loop_footer_branch
    %19 = sbr.rel target = $region3
  $region8: #{forward.4} parent=0 // loop_exit
    _

// kernel: forward.3
$region0: #{forward.3}
  #allocation0 [shape = 'u32[]', space=smem, size = 0x4, offset = 0x4, fixed_abs, tag = 'smem constant byte address 0x4 - core index']
  #allocation1 [shape = 'u32[144,128]{1,0:T(1,128)}', space=vmem, size = 0x12000, scoped, tag = 'internal scratch']
  #allocation2 [shape = 'f32[18,18,128]{2,1,0:T(8,128)}', space=vmem, size = 0x36000, scoped, tag = 'scratch operand']
  %s0 = inlined_call_operand.vmem [shape: f32[2,16,16,128], index: 0, kind: input, shape index: {}]
  %s1 = inlined_call_operand.vmem [shape: bf16[128,128], index: 1, kind: input, shape index: {}]
  %s2 = inlined_call_operand.vmem [shape: f32[1,128], index: 2, kind: input, shape index: {}]
  %s3 = inlined_call_operand.vmem [shape: f32[1,128], index: 3, kind: input, shape index: {}]
  %s4 = inlined_call_operand.vmem [shape: f32[9,128], index: 4, kind: input, shape index: {}]
  %s5 = inlined_call_operand.vmem [shape: f32[1,128], index: 5, kind: input, shape index: {}]
  %s6 = inlined_call_operand.vmem [shape: f32[1,128], index: 6, kind: input, shape index: {}]
  %s7 = inlined_call_operand.vmem [shape: bf16[128,128], index: 7, kind: input, shape index: {}]
  %s8 = inlined_call_operand.vmem [shape: f32[1,128], index: 8, kind: input, shape index: {}]
  %s9 = inlined_call_operand.vmem [shape: f32[1,128], index: 9, kind: input, shape index: {}]
  %s10 = inlined_call_operand.vmem [shape: bf16[128,128], index: 10, kind: input, shape index: {}]
  %s11 = inlined_call_operand.vmem [shape: f32[1,128], index: 11, kind: input, shape index: {}]
  %s12 = inlined_call_operand.vmem [shape: bf16[128,128], index: 12, kind: input, shape index: {}]
  %s13 = inlined_call_operand.vmem [shape: f32[1,128], index: 13, kind: input, shape index: {}]
  %s14 = inlined_call_operand.vmem [shape: f32[2,16,16,128], index: 14, kind: output, shape index: {}]
  %s15 = sld [smem:[#allocation0]]
  $region89: #{forward.3} parent=0
    _
  %s17 = ssub.s32 1, %s15
  %s18 = scalar_select 0, %s17, %s15
  loop: start=0, step=1, limit=4
  $region2: #{forward.3} parent=0 // loop_pre_header
    _
  $region3: #{forward.3} parent=0 // loop_header
    %s20 = sphi 0, %s24
    %p21 = scmp.ge.s32.totalorder %s20, 4
    %s30 = sphi 0, %s32
    %s33 = sphi 0, %s30
    %s34 = sphi 0, %s33
    %s50 = sphi 0, %s34
    %s54 = sphi 0, %s54
    %s56 = sphi 0, %s54
    %s57 = sphi 0, %s56
    %s71 = sphi 0, %s57
    %s75 = sphi 0, %s75
    %s77 = sphi 0, %s75
    %s78 = sphi 0, %s77
    %s92 = sphi 0, %s78
    %s96 = sphi 0, %s96
    %s98 = sphi 0, %s96
    %s99 = sphi 0, %s98
    %s113 = sphi 0, %s99
    %s117 = sphi 0, %s117
    %s119 = sphi 0, %s117
    %s120 = sphi 0, %s119
    %s134 = sphi 0, %s120
    %s138 = sphi 0, %s138
    %s140 = sphi 0, %s138
    %s141 = sphi 0, %s140
    %s155 = sphi 0, %s141
    %s159 = sphi 0, %s159
    %s161 = sphi 0, %s159
    %s162 = sphi 0, %s161
    %s176 = sphi 0, %s162
    %s180 = sphi 0, %s180
    %s182 = sphi 0, %s180
    %s183 = sphi 0, %s182
    %s197 = sphi 0, %s183
    %s201 = sphi 0, %s201
    %s203 = sphi 0, %s201
    %s204 = sphi 0, %s203
    %s218 = sphi 0, %s204
    %s222 = sphi 0, %s222
    %s224 = sphi 0, %s222
    %s225 = sphi 0, %s224
    %s239 = sphi 0, %s225
    %s243 = sphi 0, %s243
    %s245 = sphi 0, %s243
    %s246 = sphi 0, %s245
    %s260 = sphi 0, %s246
    %s264 = sphi 0, %s264
    %s266 = sphi 0, %s264
    %s267 = sphi 0, %s266
    %s281 = sphi 0, %s267
    %s285 = sphi 0, %s285
    %s287 = sphi 0, %s285
    %s288 = sphi 0, %s287
    %s302 = sphi 0, %s288
    %s306 = sphi 0, %s306
    %s308 = sphi 0, %s306
    %s309 = sphi 0, %s308
    %s323 = sphi 0, %s309
    %s329 = sphi 0, %s331
    %s332 = sphi 0, %s329
    %s333 = sphi 0, %s332
    %s349 = sphi 0, %s333
  $region4: #{forward.3} parent=0 // loop_header_branch
    %23 = sbr.rel (%p21) target = $region8
  $region5: #{forward.3} parent=0 // loop_body
    %s25 = ssub.s32 %s20, 1
    %s26 = ssub.s32 %s20, 2
    %s27 = sadd.s32 %s20, 1
    %s28 = ssub.s32 %s20, %s27
    %p29 = scmp.eq.s32.totalorder %s28, 0
    %s31 = sadd.s32 %s30, 1
    %s32 = scalar_select %p29, %s30, %s31
    %p35 = pneg %p29
    %p36 = scmp.eq.s32.totalorder %s20, 1
    %p37 = por %p35, %p36
    %p38 = scmp.ne.s32.totalorder %s30, %s33
    %p39 = scmp.eq.s32.totalorder %s20, 0
    %p40 = por %p38, %p39
    %p41 = scmp.ne.s32.totalorder %s30, %s33
    %p42 = scmp.eq.s32.totalorder %s25, 1
    %p43 = por %p41, %p42
    %p44 = scmp.ne.s32.totalorder %s33, %s34
    %p45 = scmp.eq.s32.totalorder %s25, 0
    %p46 = por %p44, %p45
    %p47 = scmp.ne.s32.totalorder %s33, %s34
    %p48 = scmp.eq.s32.totalorder %s26, 1
    %p49 = por %p47, %p48
    %p51 = scmp.ne.s32.totalorder %s34, %s50
    %p52 = scmp.eq.s32.totalorder %s26, 0
    %p53 = por %p51, %p52
    %s55 = sadd.s32 %s54, 1
    %p58 = scmp.eq.s32.totalorder %s20, 1
    %p59 = scmp.ne.s32.totalorder %s54, %s56
    %p60 = scmp.eq.s32.totalorder %s20, 0
    %p61 = por %p59, %p60
    %p62 = scmp.ne.s32.totalorder %s54, %s56
    %p63 = scmp.eq.s32.totalorder %s25, 1
    %p64 = por %p62, %p63
    %p65 = scmp.ne.s32.totalorder %s56, %s57
    %p66 = scmp.eq.s32.totalorder %s25, 0
    %p67 = por %p65, %p66
    %p68 = scmp.ne.s32.totalorder %s56, %s57
    %p69 = scmp.eq.s32.totalorder %s26, 1
    %p70 = por %p68, %p69
    %p72 = scmp.ne.s32.totalorder %s57, %s71
    %p73 = scmp.eq.s32.totalorder %s26, 0
    %p74 = por %p72, %p73
    %s76 = sadd.s32 %s75, 1
    %p79 = scmp.eq.s32.totalorder %s20, 1
    %p80 = scmp.ne.s32.totalorder %s75, %s77
    %p81 = scmp.eq.s32.totalorder %s20, 0
    %p82 = por %p80, %p81
    %p83 = scmp.ne.s32.totalorder %s75, %s77
    %p84 = scmp.eq.s32.totalorder %s25, 1
    %p85 = por %p83, %p84
    %p86 = scmp.ne.s32.totalorder %s77, %s78
    %p87 = scmp.eq.s32.totalorder %s25, 0
    %p88 = por %p86, %p87
    %p89 = scmp.ne.s32.totalorder %s77, %s78
    %p90 = scmp.eq.s32.totalorder %s26, 1
    %p91 = por %p89, %p90
    %p93 = scmp.ne.s32.totalorder %s78, %s92
    %p94 = scmp.eq.s32.totalorder %s26, 0
    %p95 = por %p93, %p94
    %s97 = sadd.s32 %s96, 1
    %p100 = scmp.eq.s32.totalorder %s20, 1
    %p101 = scmp.ne.s32.totalorder %s96, %s98
    %p102 = scmp.eq.s32.totalorder %s20, 0
    %p103 = por %p101, %p102
    %p104 = scmp.ne.s32.totalorder %s96, %s98
    %p105 = scmp.eq.s32.totalorder %s25, 1
    %p106 = por %p104, %p105
    %p107 = scmp.ne.s32.totalorder %s98, %s99
    %p108 = scmp.eq.s32.totalorder %s25, 0
    %p109 = por %p107, %p108
    %p110 = scmp.ne.s32.totalorder %s98, %s99
    %p111 = scmp.eq.s32.totalorder %s26, 1
    %p112 = por %p110, %p111
    %p114 = scmp.ne.s32.totalorder %s99, %s113
    %p115 = scmp.eq.s32.totalorder %s26, 0
    %p116 = por %p114, %p115
    %s118 = sadd.s32 %s117, 1
    %p121 = scmp.eq.s32.totalorder %s20, 1
    %p122 = scmp.ne.s32.totalorder %s117, %s119
    %p123 = scmp.eq.s32.totalorder %s20, 0
    %p124 = por %p122, %p123
    %p125 = scmp.ne.s32.totalorder %s117, %s119
    %p126 = scmp.eq.s32.totalorder %s25, 1
    %p127 = por %p125, %p126
    %p128 = scmp.ne.s32.totalorder %s119, %s120
    %p129 = scmp.eq.s32.totalorder %s25, 0
    %p130 = por %p128, %p129
    %p131 = scmp.ne.s32.totalorder %s119, %s120
    %p132 = scmp.eq.s32.totalorder %s26, 1
    %p133 = por %p131, %p132
    %p135 = scmp.ne.s32.totalorder %s120, %s134
    %p136 = scmp.eq.s32.totalorder %s26, 0
    %p137 = por %p135, %p136
    %s139 = sadd.s32 %s138, 1
    %p142 = scmp.eq.s32.totalorder %s20, 1
    %p143 = scmp.ne.s32.totalorder %s138, %s140
    %p144 = scmp.eq.s32.totalorder %s20, 0
    %p145 = por %p143, %p144
    %p146 = scmp.ne.s32.totalorder %s138, %s140
    %p147 = scmp.eq.s32.totalorder %s25, 1
    %p148 = por %p146, %p147
    %p149 = scmp.ne.s32.totalorder %s140, %s141
    %p150 = scmp.eq.s32.totalorder %s25, 0
    %p151 = por %p149, %p150
    %p152 = scmp.ne.s32.totalorder %s140, %s141
    %p153 = scmp.eq.s32.totalorder %s26, 1
    %p154 = por %p152, %p153
    %p156 = scmp.ne.s32.totalorder %s141, %s155
    %p157 = scmp.eq.s32.totalorder %s26, 0
    %p158 = por %p156, %p157
    %s160 = sadd.s32 %s159, 1
    %p163 = scmp.eq.s32.totalorder %s20, 1
    %p164 = scmp.ne.s32.totalorder %s159, %s161
    %p165 = scmp.eq.s32.totalorder %s20, 0
    %p166 = por %p164, %p165
    %p167 = scmp.ne.s32.totalorder %s159, %s161
    %p168 = scmp.eq.s32.totalorder %s25, 1
    %p169 = por %p167, %p168
    %p170 = scmp.ne.s32.totalorder %s161, %s162
    %p171 = scmp.eq.s32.totalorder %s25, 0
    %p172 = por %p170, %p171
    %p173 = scmp.ne.s32.totalorder %s161, %s162
    %p174 = scmp.eq.s32.totalorder %s26, 1
    %p175 = por %p173, %p174
    %p177 = scmp.ne.s32.totalorder %s162, %s176
    %p178 = scmp.eq.s32.totalorder %s26, 0
    %p179 = por %p177, %p178
    %s181 = sadd.s32 %s180, 1
    %p184 = scmp.eq.s32.totalorder %s20, 1
    %p185 = scmp.ne.s32.totalorder %s180, %s182
    %p186 = scmp.eq.s32.totalorder %s20, 0
    %p187 = por %p185, %p186
    %p188 = scmp.ne.s32.totalorder %s180, %s182
    %p189 = scmp.eq.s32.totalorder %s25, 1
    %p190 = por %p188, %p189
    %p191 = scmp.ne.s32.totalorder %s182, %s183
    %p192 = scmp.eq.s32.totalorder %s25, 0
    %p193 = por %p191, %p192
    %p194 = scmp.ne.s32.totalorder %s182, %s183
    %p195 = scmp.eq.s32.totalorder %s26, 1
    %p196 = por %p194, %p195
    %p198 = scmp.ne.s32.totalorder %s183, %s197
    %p199 = scmp.eq.s32.totalorder %s26, 0
    %p200 = por %p198, %p199
    %s202 = sadd.s32 %s201, 1
    %p205 = scmp.eq.s32.totalorder %s20, 1
    %p206 = scmp.ne.s32.totalorder %s201, %s203
    %p207 = scmp.eq.s32.totalorder %s20, 0
    %p208 = por %p206, %p207
    %p209 = scmp.ne.s32.totalorder %s201, %s203
    %p210 = scmp.eq.s32.totalorder %s25, 1
    %p211 = por %p209, %p210
    %p212 = scmp.ne.s32.totalorder %s203, %s204
    %p213 = scmp.eq.s32.totalorder %s25, 0
    %p214 = por %p212, %p213
    %p215 = scmp.ne.s32.totalorder %s203, %s204
    %p216 = scmp.eq.s32.totalorder %s26, 1
    %p217 = por %p215, %p216
    %p219 = scmp.ne.s32.totalorder %s204, %s218
    %p220 = scmp.eq.s32.totalorder %s26, 0
    %p221 = por %p219, %p220
    %s223 = sadd.s32 %s222, 1
    %p226 = scmp.eq.s32.totalorder %s20, 1
    %p227 = scmp.ne.s32.totalorder %s222, %s224
    %p228 = scmp.eq.s32.totalorder %s20, 0
    %p229 = por %p227, %p228
    %p230 = scmp.ne.s32.totalorder %s222, %s224
    %p231 = scmp.eq.s32.totalorder %s25, 1
    %p232 = por %p230, %p231
    %p233 = scmp.ne.s32.totalorder %s224, %s225
    %p234 = scmp.eq.s32.totalorder %s25, 0
    %p235 = por %p233, %p234
    %p236 = scmp.ne.s32.totalorder %s224, %s225
    %p237 = scmp.eq.s32.totalorder %s26, 1
    %p238 = por %p236, %p237
    %p240 = scmp.ne.s32.totalorder %s225, %s239
    %p241 = scmp.eq.s32.totalorder %s26, 0
    %p242 = por %p240, %p241
    %s244 = sadd.s32 %s243, 1
    %p247 = scmp.eq.s32.totalorder %s20, 1
    %p248 = scmp.ne.s32.totalorder %s243, %s245
    %p249 = scmp.eq.s32.totalorder %s20, 0
    %p250 = por %p248, %p249
    %p251 = scmp.ne.s32.totalorder %s243, %s245
    %p252 = scmp.eq.s32.totalorder %s25, 1
    %p253 = por %p251, %p252
    %p254 = scmp.ne.s32.totalorder %s245, %s246
    %p255 = scmp.eq.s32.totalorder %s25, 0
    %p256 = por %p254, %p255
    %p257 = scmp.ne.s32.totalorder %s245, %s246
    %p258 = scmp.eq.s32.totalorder %s26, 1
    %p259 = por %p257, %p258
    %p261 = scmp.ne.s32.totalorder %s246, %s260
    %p262 = scmp.eq.s32.totalorder %s26, 0
    %p263 = por %p261, %p262
    %s265 = sadd.s32 %s264, 1
    %p268 = scmp.eq.s32.totalorder %s20, 1
    %p269 = scmp.ne.s32.totalorder %s264, %s266
    %p270 = scmp.eq.s32.totalorder %s20, 0
    %p271 = por %p269, %p270
    %p272 = scmp.ne.s32.totalorder %s264, %s266
    %p273 = scmp.eq.s32.totalorder %s25, 1
    %p274 = por %p272, %p273
    %p275 = scmp.ne.s32.totalorder %s266, %s267
    %p276 = scmp.eq.s32.totalorder %s25, 0
    %p277 = por %p275, %p276
    %p278 = scmp.ne.s32.totalorder %s266, %s267
    %p279 = scmp.eq.s32.totalorder %s26, 1
    %p280 = por %p278, %p279
    %p282 = scmp.ne.s32.totalorder %s267, %s281
    %p283 = scmp.eq.s32.totalorder %s26, 0
    %p284 = por %p282, %p283
    %s286 = sadd.s32 %s285, 1
    %p289 = scmp.eq.s32.totalorder %s20, 1
    %p290 = scmp.ne.s32.totalorder %s285, %s287
    %p291 = scmp.eq.s32.totalorder %s20, 0
    %p292 = por %p290, %p291
    %p293 = scmp.ne.s32.totalorder %s285, %s287
    %p294 = scmp.eq.s32.totalorder %s25, 1
    %p295 = por %p293, %p294
    %p296 = scmp.ne.s32.totalorder %s287, %s288
    %p297 = scmp.eq.s32.totalorder %s25, 0
    %p298 = por %p296, %p297
    %p299 = scmp.ne.s32.totalorder %s287, %s288
    %p300 = scmp.eq.s32.totalorder %s26, 1
    %p301 = por %p299, %p300
    %p303 = scmp.ne.s32.totalorder %s288, %s302
    %p304 = scmp.eq.s32.totalorder %s26, 0
    %p305 = por %p303, %p304
    %s307 = sadd.s32 %s306, 1
    %p310 = scmp.eq.s32.totalorder %s20, 1
    %p311 = scmp.ne.s32.totalorder %s306, %s308
    %p312 = scmp.eq.s32.totalorder %s20, 0
    %p313 = por %p311, %p312
    %p314 = scmp.ne.s32.totalorder %s306, %s308
    %p315 = scmp.eq.s32.totalorder %s25, 1
    %p316 = por %p314, %p315
    %p317 = scmp.ne.s32.totalorder %s308, %s309
    %p318 = scmp.eq.s32.totalorder %s25, 0
    %p319 = por %p317, %p318
    %p320 = scmp.ne.s32.totalorder %s308, %s309
    %p321 = scmp.eq.s32.totalorder %s26, 1
    %p322 = por %p320, %p321
    %p324 = scmp.ne.s32.totalorder %s309, %s323
    %p325 = scmp.eq.s32.totalorder %s26, 0
    %p326 = por %p324, %p325
    %s327 = ssub.s32 %s20, %s27
    %p328 = scmp.eq.s32.totalorder %s327, 0
    %s330 = sadd.s32 %s329, 1
    %s331 = scalar_select %p328, %s329, %s330
    %p334 = pneg %p328
    %p335 = scmp.eq.s32.totalorder %s20, 1
    %p336 = por %p334, %p335
    %p337 = scmp.ne.s32.totalorder %s329, %s332
    %p338 = scmp.eq.s32.totalorder %s20, 0
    %p339 = por %p337, %p338
    %p340 = scmp.ne.s32.totalorder %s329, %s332
    %p341 = scmp.eq.s32.totalorder %s25, 1
    %p342 = por %p340, %p341
    %p343 = scmp.ne.s32.totalorder %s332, %s333
    %p344 = scmp.eq.s32.totalorder %s25, 0
    %p345 = por %p343, %p344
    %p346 = scmp.ne.s32.totalorder %s332, %s333
    %p347 = scmp.eq.s32.totalorder %s26, 1
    %p348 = por %p346, %p347
    %p350 = scmp.ne.s32.totalorder %s333, %s349
    %p351 = scmp.eq.s32.totalorder %s26, 0
    %p352 = por %p350, %p351
    %p353 = scmp.le.s32.totalorder 1, %s20
    %p354 = scmp.lt.s32.totalorder %s20, 3
    %p355 = pnand %p353, %p354
    %p356 = pneg %p355
    // Predicated region
    $region9: #{forward.3} parent=5 // pred_check
      _
    $region10: #{forward.3} parent=5 // pred_check_branch
      %358 = sbr.rel (%p355) target = $region12
    $region11: #{forward.3} parent=5 // pred_region
      %s359 = ssub.s32 %s20, 1
      // Predicated region
      $region13: #{forward.3} parent=11 // pred_check
        %p360 = pneg %p67
      $region14: #{forward.3} parent=11 // pred_check_branch
        %362 = sbr.rel (%p360) target = $region16
      $region15: #{forward.3} parent=11 // pred_region
        _
      $region16: #{forward.3} parent=11 // pred_fallthru
        _
      // Predicated region
      $region17: #{forward.3} parent=11 // pred_check
        %p363 = pneg %p88
      $region18: #{forward.3} parent=11 // pred_check_branch
        %365 = sbr.rel (%p363) target = $region20
      $region19: #{forward.3} parent=11 // pred_region
        _
      $region20: #{forward.3} parent=11 // pred_fallthru
        _
      // Predicated region
      $region21: #{forward.3} parent=11 // pred_check
        %p366 = pneg %p109
      $region22: #{forward.3} parent=11 // pred_check_branch
        %368 = sbr.rel (%p366) target = $region24
      $region23: #{forward.3} parent=11 // pred_region
        _
      $region24: #{forward.3} parent=11 // pred_fallthru
        _
      // Predicated region
      $region25: #{forward.3} parent=11 // pred_check
        %p369 = pneg %p130
      $region26: #{forward.3} parent=11 // pred_check_branch
        %371 = sbr.rel (%p369) target = $region28
      $region27: #{forward.3} parent=11 // pred_region
        _
      $region28: #{forward.3} parent=11 // pred_fallthru
        _
      // Predicated region
      $region29: #{forward.3} parent=11 // pred_check
        %p372 = pneg %p151
      $region30: #{forward.3} parent=11 // pred_check_branch
        %374 = sbr.rel (%p372) target = $region32
      $region31: #{forward.3} parent=11 // pred_region
        _
      $region32: #{forward.3} parent=11 // pred_fallthru
        _
      // Predicated region
      $region33: #{forward.3} parent=11 // pred_check
        %p375 = pneg %p172
      $region34: #{forward.3} parent=11 // pred_check_branch
        %377 = sbr.rel (%p375) target = $region36
      $region35: #{forward.3} parent=11 // pred_region
        _
      $region36: #{forward.3} parent=11 // pred_fallthru
        _
      // Predicated region
      $region37: #{forward.3} parent=11 // pred_check
        %p378 = pneg %p193
      $region38: #{forward.3} parent=11 // pred_check_branch
        %380 = sbr.rel (%p378) target = $region40
      $region39: #{forward.3} parent=11 // pred_region
        _
      $region40: #{forward.3} parent=11 // pred_fallthru
        _
      // Predicated region
      $region41: #{forward.3} parent=11 // pred_check
        %p381 = pneg %p214
      $region42: #{forward.3} parent=11 // pred_check_branch
        %383 = sbr.rel (%p381) target = $region44
      $region43: #{forward.3} parent=11 // pred_region
        _
      $region44: #{forward.3} parent=11 // pred_fallthru
        _
      // Predicated region
      $region45: #{forward.3} parent=11 // pred_check
        %p384 = pneg %p235
      $region46: #{forward.3} parent=11 // pred_check_branch
        %386 = sbr.rel (%p384) target = $region48
      $region47: #{forward.3} parent=11 // pred_region
        _
      $region48: #{forward.3} parent=11 // pred_fallthru
        _
      // Predicated region
      $region49: #{forward.3} parent=11 // pred_check
        %p387 = pneg %p256
      $region50: #{forward.3} parent=11 // pred_check_branch
        %389 = sbr.rel (%p387) target = $region52
      $region51: #{forward.3} parent=11 // pred_region
        _
      $region52: #{forward.3} parent=11 // pred_fallthru
        _
      // Predicated region
      $region53: #{forward.3} parent=11 // pred_check
        %p390 = pneg %p277
      $region54: #{forward.3} parent=11 // pred_check_branch
        %392 = sbr.rel (%p390) target = $region56
      $region55: #{forward.3} parent=11 // pred_region
        _
      $region56: #{forward.3} parent=11 // pred_fallthru
        _
      // Predicated region
      $region57: #{forward.3} parent=11 // pred_check
        %p393 = pneg %p298
      $region58: #{forward.3} parent=11 // pred_check_branch
        %395 = sbr.rel (%p393) target = $region60
      $region59: #{forward.3} parent=11 // pred_region
        _
      $region60: #{forward.3} parent=11 // pred_fallthru
        _
      // Predicated region
      $region61: #{forward.3} parent=11 // pred_check
        %p396 = pneg %p319
      $region62: #{forward.3} parent=11 // pred_check_branch
        %398 = sbr.rel (%p396) target = $region64
      $region63: #{forward.3} parent=11 // pred_region
        _
      $region64: #{forward.3} parent=11 // pred_fallthru
        _
    $region12: #{forward.3} parent=5 // pred_fallthru
      _
    %p399 = scmp.lt.s32.totalorder %s20, 2
    // Predicated region
    $region65: #{forward.3} parent=5 // pred_check
      %p400 = pneg %p399
    $region66: #{forward.3} parent=5 // pred_check_branch
      %402 = sbr.rel (%p400) target = $region68
    $region67: #{forward.3} parent=5 // pred_region
      // Predicated region
      $region69: #{forward.3} parent=67 // pred_check
        %p403 = pneg %p40
      $region70: #{forward.3} parent=67 // pred_check_branch
        %405 = sbr.rel (%p403) target = $region72
      $region71: #{forward.3} parent=67 // pred_region
        %p406 = scmp.lt.s32.totalorder %s20, 1
        %s407 = scalar_select %p406, %s20, 1
        %s408 = smul.addr %s407, 32
        %s409 = smul.addr %s408, 8
        %s410 = scalar_lea.vmem %s0, %s409
      $region72: #{forward.3} parent=67 // pred_fallthru
        _
    $region68: #{forward.3} parent=5 // pred_fallthru
      _
    %p411 = scmp.le.s32.totalorder 1, %s20
    %p412 = scmp.lt.s32.totalorder %s20, 3
    %p413 = pnand %p411, %p412
    %p414 = pneg %p413
    // Predicated region
    $region73: #{forward.3} parent=5 // pred_check
      _
    $region74: #{forward.3} parent=5 // pred_check_branch
      %416 = sbr.rel (%p413) target = $region76
    $region75: #{forward.3} parent=5 // pred_region
      %s417 = ssub.s32 %s20, 1
      %p418 = scmp.lt.s32.totalorder %s25, 1
      %s419 = scalar_select %p418, %s25, 1
      %s420 = smul.addr %s419, 32
      %s421 = smul.addr %s420, 8
      %s422 = scalar_lea.vmem %s0, %s421
      %p423 = pneg %p46
      %p424 = pneg %p43
      %p425 = pneg %p67
      %p426 = pneg %p64
      %p427 = pneg %p88
      %p428 = pneg %p85
      %p429 = pneg %p109
      %p430 = pneg %p106
      %p431 = pneg %p130
      %p432 = pneg %p127
      %p433 = pneg %p151
      %p434 = pneg %p148
      %p435 = pneg %p172
      %p436 = pneg %p169
      %p437 = pneg %p193
      %p438 = pneg %p190
      %p439 = pneg %p214
      %p440 = pneg %p211
      %p441 = pneg %p235
      %p442 = pneg %p232
      %p443 = pneg %p256
      %p444 = pneg %p253
      %p445 = pneg %p277
      %p446 = pneg %p274
      %p447 = pneg %p298
      %p448 = pneg %p295
      %p449 = pneg %p319
      %p450 = pneg %p316
      %p451 = pneg %p345
      %p452 = pneg %p342
      %p453 = scmp.lt.s32.totalorder %s25, 1
      %s454 = scalar_select %p453, %s25, 1
      %s455 = smul.addr %s454, 32
      %s456 = smul.addr %s455, 8
      %s457 = scalar_lea.vmem %s14, %s456
      %p458 = scmp.lt.s32.totalorder %s25, 1
      %s459 = scalar_select %p458, %s25, 1
      %s460 = smul.addr %s459, 32
      %s461 = smul.addr %s460, 8
      %s462 = scalar_lea.vmem %s0, %s461
      %p463 = scmp.lt.s32.totalorder %s25, 1
      %s464 = scalar_select %p463, %s25, 1
      %s465 = smul.addr %s464, 32
      %s466 = smul.addr %s465, 8
      %s467 = scalar_lea.vmem %s14, %s466
      %v469 = vld [vmem:[%s462] sm:$0xff]
      %v470 = vld [vmem:[%s462 + $0x8] sm:$0xff]
      %v471 = vld [vmem:[%s462 + $0x10] sm:$0xff]
      %v472 = vld [vmem:[%s462 + $0x18] sm:$0xff]
      %v473 = vld [vmem:[%s462 + $0x20] sm:$0xff]
      %v474 = vld [vmem:[%s462 + $0x28] sm:$0xff]
      %v475 = vld [vmem:[%s462 + $0x30] sm:$0xff]
      %v476 = vld [vmem:[%s462 + $0x38] sm:$0xff]
      %v477 = vld [vmem:[%s462 + $0x40] sm:$0xff]
      %v478 = vld [vmem:[%s462 + $0x48] sm:$0xff]
      %v479 = vld [vmem:[%s462 + $0x50] sm:$0xff]
      %v480 = vld [vmem:[%s462 + $0x58] sm:$0xff]
      %v481 = vld [vmem:[%s462 + $0x60] sm:$0xff]
      %v482 = vld [vmem:[%s462 + $0x68] sm:$0xff]
      %v483 = vld [vmem:[%s462 + $0x70] sm:$0xff]
      %v484 = vld [vmem:[%s462 + $0x78] sm:$0xff]
      %v485 = vld [vmem:[%s462 + $0x80] sm:$0xff]
      %v486 = vld [vmem:[%s462 + $0x88] sm:$0xff]
      %v487 = vld [vmem:[%s462 + $0x90] sm:$0xff]
      %v488 = vld [vmem:[%s462 + $0x98] sm:$0xff]
      %v489 = vld [vmem:[%s462 + $0xa0] sm:$0xff]
      %v490 = vld [vmem:[%s462 + $0xa8] sm:$0xff]
      %v491 = vld [vmem:[%s462 + $0xb0] sm:$0xff]
      %v492 = vld [vmem:[%s462 + $0xb8] sm:$0xff]
      %v493 = vld [vmem:[%s462 + $0xc0] sm:$0xff]
      %v494 = vld [vmem:[%s462 + $0xc8] sm:$0xff]
      %v495 = vld [vmem:[%s462 + $0xd0] sm:$0xff]
      %v496 = vld [vmem:[%s462 + $0xd8] sm:$0xff]
      %v497 = vld [vmem:[%s462 + $0xe0] sm:$0xff]
      %v498 = vld [vmem:[%s462 + $0xe8] sm:$0xff]
      %v499 = vld [vmem:[%s462 + $0xf0] sm:$0xff]
      %v500 = vld [vmem:[%s462 + $0xf8] sm:$0xff]
      %v501 = vpack.c.bf16 %v470, %v469
      %v502 = vpack.c.bf16 %v472, %v471
      %v503 = vpack.c.bf16 %v474, %v473
      %v504 = vpack.c.bf16 %v476, %v475
      %v505 = vpack.c.bf16 %v478, %v477
      %v506 = vpack.c.bf16 %v480, %v479
      %v507 = vpack.c.bf16 %v482, %v481
      %v508 = vpack.c.bf16 %v484, %v483
      %v509 = vpack.c.bf16 %v486, %v485
      %v510 = vpack.c.bf16 %v488, %v487
      %v511 = vpack.c.bf16 %v490, %v489
      %v512 = vpack.c.bf16 %v492, %v491
      %v513 = vpack.c.bf16 %v494, %v493
      %v514 = vpack.c.bf16 %v496, %v495
      %v515 = vpack.c.bf16 %v498, %v497
      %v516 = vpack.c.bf16 %v500, %v499
      %v517 = vld [vmem:[%s1] sm:$0xf]
      %v518 = vld [vmem:[%s1 + $0x4] sm:$0xf]
      %v519 = vld [vmem:[%s1 + $0x8] sm:$0xf]
      %v520 = vld [vmem:[%s1 + $0xc] sm:$0xf]
      %v521 = vld [vmem:[%s1 + $0x10] sm:$0xf]
      %v522 = vld [vmem:[%s1 + $0x14] sm:$0xf]
      %v523 = vld [vmem:[%s1 + $0x18] sm:$0xf]
      %v524 = vld [vmem:[%s1 + $0x1c] sm:$0xf]
      %v525 = vld [vmem:[%s1 + $0x20] sm:$0xf]
      %v526 = vld [vmem:[%s1 + $0x24] sm:$0xf]
      %v527 = vld [vmem:[%s1 + $0x28] sm:$0xf]
      %v528 = vld [vmem:[%s1 + $0x2c] sm:$0xf]
      %v529 = vld [vmem:[%s1 + $0x30] sm:$0xf]
      %v530 = vld [vmem:[%s1 + $0x34] sm:$0xf]
      %v531 = vld [vmem:[%s1 + $0x38] sm:$0xf]
      %v532 = vld [vmem:[%s1 + $0x3c] sm:$0xf]
      %v549 = vunpack.c.l.b16 %v517
      %v550 = vunpack.c.l.b16 %v518
      %v551 = vunpack.c.l.b16 %v519
      %v552 = vunpack.c.l.b16 %v520
      %v553 = vunpack.c.l.b16 %v521
      %v554 = vunpack.c.l.b16 %v522
      %v555 = vunpack.c.l.b16 %v523
      %v556 = vunpack.c.l.b16 %v524
      %v557 = vunpack.c.l.b16 %v525
      %v558 = vunpack.c.l.b16 %v526
      %v559 = vunpack.c.l.b16 %v527
      %v560 = vunpack.c.l.b16 %v528
      %v561 = vunpack.c.l.b16 %v529
      %v562 = vunpack.c.l.b16 %v530
      %v563 = vunpack.c.l.b16 %v531
      %v564 = vunpack.c.l.b16 %v532
      %v565 = vpack.c.b16 %v550, %v549
      %v566 = vpack.c.b16 %v552, %v551
      %v567 = vpack.c.b16 %v554, %v553
      %v568 = vpack.c.b16 %v556, %v555
      %v569 = vpack.c.b16 %v558, %v557
      %v570 = vpack.c.b16 %v560, %v559
      %v571 = vpack.c.b16 %v562, %v561
      %v572 = vpack.c.b16 %v564, %v563
      %581 = vmatprep.subr.bf16.mxu0 0
      %582 = vmatpush1.bf16.msra.mxu0 %v572
      %583 = vmatprep.subr.bf16.mxu0 0
      %584 = vmatpush1.bf16.msra.mxu0 %v571
      %585 = vmatprep.subr.bf16.mxu0 0
      %586 = vmatpush1.bf16.msra.mxu0 %v570
      %587 = vmatprep.subr.bf16.mxu0 0
      %588 = vmatpush1.bf16.msra.mxu0 %v569
      %589 = vmatprep.subr.bf16.mxu0 0
      %590 = vmatpush1.bf16.msra.mxu0 %v568
      %591 = vmatprep.subr.bf16.mxu0 0
      %592 = vmatpush1.bf16.msra.mxu0 %v567
      %593 = vmatprep.subr.bf16.mxu0 0
      %594 = vmatpush1.bf16.msra.mxu0 %v566
      %595 = vmatprep.subr.bf16.mxu0 0
      %596 = vmatpush1.bf16.msra.mxu0 %v565
      %597 = vmatprep.subr.bf16.mxu0 0
      %598 = vmatpush2.bf16.msra.mxu0 0
      %599 = vmatprep.subr.bf16.mxu0 0
      %600 = vmatpush2.bf16.msra.mxu0 0
      %601 = vmatprep.subr.bf16.mxu0 0
      %602 = vmatpush2.bf16.msra.mxu0 0
      %603 = vmatprep.subr.bf16.mxu0 0
      %604 = vmatpush2.bf16.msra.mxu0 0
      %605 = vmatprep.subr.bf16.mxu0 0
      %606 = vmatpush2.bf16.msra.mxu0 0
      %607 = vmatprep.subr.bf16.mxu0 0
      %608 = vmatpush2.bf16.msra.mxu0 0
      %609 = vmatprep.subr.bf16.mxu0 0
      %610 = vmatpush2.bf16.msra.mxu0 0
      %611 = vmatprep.subr.bf16.mxu0 0
      %612 = vmatpush2.bf16.msra.mxu0 0
      %613 = vmatprep.mubr.bf16.mxu0 0
      %614 = vmatmul.mubr.bf16.gmra.mxu0 %v501
      %v615 = vpop.f32.mrf.mxu0
      %v616 = vadd.f32 0.0, %v615
      %v617 = vpop.f32.mrf.mxu0
      %v618 = vpop.f32.mrf.mxu0
      %v619 = vadd.f32 0.0, %v618
      %v620 = vpop.f32.mrf.mxu0
      %621 = vmatprep.mubr.bf16.mxu0 0
      %622 = vmatmul.mubr.bf16.gmra.mxu0 %v502
      %v623 = vpop.f32.mrf.mxu0
      %v624 = vadd.f32 0.0, %v623
      %v625 = vpop.f32.mrf.mxu0
      %v626 = vpop.f32.mrf.mxu0
      %v627 = vadd.f32 0.0, %v626
      %v628 = vpop.f32.mrf.mxu0
      %629 = vmatprep.mubr.bf16.mxu0 0
      %630 = vmatmul.mubr.bf16.gmra.mxu0 %v503
      %v631 = vpop.f32.mrf.mxu0
      %v632 = vadd.f32 0.0, %v631
      %v633 = vpop.f32.mrf.mxu0
      %v634 = vpop.f32.mrf.mxu0
      %v635 = vadd.f32 0.0, %v634
      %v636 = vpop.f32.mrf.mxu0
      %637 = vmatprep.mubr.bf16.mxu0 0
      %638 = vmatmul.mubr.bf16.gmra.mxu0 %v504
      %v639 = vpop.f32.mrf.mxu0
      %v640 = vadd.f32 0.0, %v639
      %v641 = vpop.f32.mrf.mxu0
      %v642 = vpop.f32.mrf.mxu0
      %v643 = vadd.f32 0.0, %v642
      %v644 = vpop.f32.mrf.mxu0
      %645 = vmatprep.mubr.bf16.mxu0 0
      %646 = vmatmul.mubr.bf16.gmra.mxu0 %v505
      %v647 = vpop.f32.mrf.mxu0
      %v648 = vadd.f32 0.0, %v647
      %v649 = vpop.f32.mrf.mxu0
      %v650 = vpop.f32.mrf.mxu0
      %v651 = vadd.f32 0.0, %v650
      %v652 = vpop.f32.mrf.mxu0
      %653 = vmatprep.mubr.bf16.mxu0 0
      %654 = vmatmul.mubr.bf16.gmra.mxu0 %v506
      %v655 = vpop.f32.mrf.mxu0
      %v656 = vadd.f32 0.0, %v655
      %v657 = vpop.f32.mrf.mxu0
      %v658 = vpop.f32.mrf.mxu0
      %v659 = vadd.f32 0.0, %v658
      %v660 = vpop.f32.mrf.mxu0
      %661 = vmatprep.mubr.bf16.mxu0 0
      %662 = vmatmul.mubr.bf16.gmra.mxu0 %v507
      %v663 = vpop.f32.mrf.mxu0
      %v664 = vadd.f32 0.0, %v663
      %v665 = vpop.f32.mrf.mxu0
      %v666 = vpop.f32.mrf.mxu0
      %v667 = vadd.f32 0.0, %v666
      %v668 = vpop.f32.mrf.mxu0
      %669 = vmatprep.mubr.bf16.mxu0 0
      %670 = vmatmul.mubr.bf16.gmra.mxu0 %v508
      %v671 = vpop.f32.mrf.mxu0
      %v672 = vadd.f32 0.0, %v671
      %v673 = vpop.f32.mrf.mxu0
      %v674 = vpop.f32.mrf.mxu0
      %v675 = vadd.f32 0.0, %v674
      %v676 = vpop.f32.mrf.mxu0
      %677 = vmatprep.mubr.bf16.mxu0 0
      %678 = vmatmul.mubr.bf16.gmra.mxu0 %v509
      %v679 = vpop.f32.mrf.mxu0
      %v680 = vadd.f32 0.0, %v679
      %v681 = vpop.f32.mrf.mxu0
      %v682 = vpop.f32.mrf.mxu0
      %v683 = vadd.f32 0.0, %v682
      %v684 = vpop.f32.mrf.mxu0
      %685 = vmatprep.mubr.bf16.mxu0 0
      %686 = vmatmul.mubr.bf16.gmra.mxu0 %v510
      %v687 = vpop.f32.mrf.mxu0
      %v688 = vadd.f32 0.0, %v687
      %v689 = vpop.f32.mrf.mxu0
      %v690 = vpop.f32.mrf.mxu0
      %v691 = vadd.f32 0.0, %v690
      %v692 = vpop.f32.mrf.mxu0
      %693 = vmatprep.mubr.bf16.mxu0 0
      %694 = vmatmul.mubr.bf16.gmra.mxu0 %v511
      %v695 = vpop.f32.mrf.mxu0
      %v696 = vadd.f32 0.0, %v695
      %v697 = vpop.f32.mrf.mxu0
      %v698 = vpop.f32.mrf.mxu0
      %v699 = vadd.f32 0.0, %v698
      %v700 = vpop.f32.mrf.mxu0
      %701 = vmatprep.mubr.bf16.mxu0 0
      %702 = vmatmul.mubr.bf16.gmra.mxu0 %v512
      %v703 = vpop.f32.mrf.mxu0
      %v704 = vadd.f32 0.0, %v703
      %v705 = vpop.f32.mrf.mxu0
      %v706 = vpop.f32.mrf.mxu0
      %v707 = vadd.f32 0.0, %v706
      %v708 = vpop.f32.mrf.mxu0
      %709 = vmatprep.mubr.bf16.mxu0 0
      %710 = vmatmul.mubr.bf16.gmra.mxu0 %v513
      %v711 = vpop.f32.mrf.mxu0
      %v712 = vadd.f32 0.0, %v711
      %v713 = vpop.f32.mrf.mxu0
      %v714 = vpop.f32.mrf.mxu0
      %v715 = vadd.f32 0.0, %v714
      %v716 = vpop.f32.mrf.mxu0
      %717 = vmatprep.mubr.bf16.mxu0 0
      %718 = vmatmul.mubr.bf16.gmra.mxu0 %v514
      %v719 = vpop.f32.mrf.mxu0
      %v720 = vadd.f32 0.0, %v719
      %v721 = vpop.f32.mrf.mxu0
      %v722 = vpop.f32.mrf.mxu0
      %v723 = vadd.f32 0.0, %v722
      %v724 = vpop.f32.mrf.mxu0
      %725 = vmatprep.mubr.bf16.mxu0 0
      %726 = vmatmul.mubr.bf16.gmra.mxu0 %v515
      %v727 = vpop.f32.mrf.mxu0
      %v728 = vadd.f32 0.0, %v727
      %v729 = vpop.f32.mrf.mxu0
      %v730 = vpop.f32.mrf.mxu0
      %v731 = vadd.f32 0.0, %v730
      %v732 = vpop.f32.mrf.mxu0
      %733 = vmatprep.mubr.bf16.mxu0 0
      %734 = vmatmul.mubr.bf16.gmra.mxu0 %v516
      %v735 = vpop.f32.mrf.mxu0
      %v736 = vadd.f32 0.0, %v735
      %v737 = vpop.f32.mrf.mxu0
      %v738 = vpop.f32.mrf.mxu0
      %v739 = vadd.f32 0.0, %v738
      %v740 = vpop.f32.mrf.mxu0
      %741 = vdwg.mxu0
      %v742 = vld [vmem:[%s2] sm:$0x1]
      %v744 = vlaneseq
      %v745 = vshrl.u32 %v744, 7
      %v746 = vsub.s32 0, %v745
      %v747 = vrot.slane %v742, %v746
      %v749 = vmul.f32 %v616, %v747
      %v750 = vmul.f32 %v619, %v747
      %v751 = vmul.f32 %v624, %v747
      %v752 = vmul.f32 %v627, %v747
      %v753 = vmul.f32 %v632, %v747
      %v754 = vmul.f32 %v635, %v747
      %v755 = vmul.f32 %v640, %v747
      %v756 = vmul.f32 %v643, %v747
      %v757 = vmul.f32 %v648, %v747
      %v758 = vmul.f32 %v651, %v747
      %v759 = vmul.f32 %v656, %v747
      %v760 = vmul.f32 %v659, %v747
      %v761 = vmul.f32 %v664, %v747
      %v762 = vmul.f32 %v667, %v747
      %v763 = vmul.f32 %v672, %v747
      %v764 = vmul.f32 %v675, %v747
      %v765 = vmul.f32 %v680, %v747
      %v766 = vmul.f32 %v683, %v747
      %v767 = vmul.f32 %v688, %v747
      %v768 = vmul.f32 %v691, %v747
      %v769 = vmul.f32 %v696, %v747
      %v770 = vmul.f32 %v699, %v747
      %v771 = vmul.f32 %v704, %v747
      %v772 = vmul.f32 %v707, %v747
      %v773 = vmul.f32 %v712, %v747
      %v774 = vmul.f32 %v715, %v747
      %v775 = vmul.f32 %v720, %v747
      %v776 = vmul.f32 %v723, %v747
      %v777 = vmul.f32 %v728, %v747
      %v778 = vmul.f32 %v731, %v747
      %v779 = vmul.f32 %v736, %v747
      %v780 = vmul.f32 %v739, %v747
      %v781 = vld [vmem:[%s3] sm:$0x1]
      %v783 = vlaneseq
      %v784 = vshrl.u32 %v783, 7
      %v785 = vsub.s32 0, %v784
      %v786 = vrot.slane %v781, %v785
      %v788 = vadd.f32 %v749, %v786
      %v789 = vadd.f32 %v750, %v786
      %v790 = vadd.f32 %v751, %v786
      %v791 = vadd.f32 %v752, %v786
      %v792 = vadd.f32 %v753, %v786
      %v793 = vadd.f32 %v754, %v786
      %v794 = vadd.f32 %v755, %v786
      %v795 = vadd.f32 %v756, %v786
      %v796 = vadd.f32 %v757, %v786
      %v797 = vadd.f32 %v758, %v786
      %v798 = vadd.f32 %v759, %v786
      %v799 = vadd.f32 %v760, %v786
      %v800 = vadd.f32 %v761, %v786
      %v801 = vadd.f32 %v762, %v786
      %v802 = vadd.f32 %v763, %v786
      %v803 = vadd.f32 %v764, %v786
      %v804 = vadd.f32 %v765, %v786
      %v805 = vadd.f32 %v766, %v786
      %v806 = vadd.f32 %v767, %v786
      %v807 = vadd.f32 %v768, %v786
      %v808 = vadd.f32 %v769, %v786
      %v809 = vadd.f32 %v770, %v786
      %v810 = vadd.f32 %v771, %v786
      %v811 = vadd.f32 %v772, %v786
      %v812 = vadd.f32 %v773, %v786
      %v813 = vadd.f32 %v774, %v786
      %v814 = vadd.f32 %v775, %v786
      %v815 = vadd.f32 %v776, %v786
      %v816 = vadd.f32 %v777, %v786
      %v817 = vadd.f32 %v778, %v786
      %v818 = vadd.f32 %v779, %v786
      %v819 = vadd.f32 %v780, %v786
      %v820 = vmax.f32 %v788, 0.0
      %v821 = vmax.f32 %v789, 0.0
      %v822 = vmax.f32 %v790, 0.0
      %v823 = vmax.f32 %v791, 0.0
      %v824 = vmax.f32 %v792, 0.0
      %v825 = vmax.f32 %v793, 0.0
      %v826 = vmax.f32 %v794, 0.0
      %v827 = vmax.f32 %v795, 0.0
      %v828 = vmax.f32 %v796, 0.0
      %v829 = vmax.f32 %v797, 0.0
      %v830 = vmax.f32 %v798, 0.0
      %v831 = vmax.f32 %v799, 0.0
      %v832 = vmax.f32 %v800, 0.0
      %v833 = vmax.f32 %v801, 0.0
      %v834 = vmax.f32 %v802, 0.0
      %v835 = vmax.f32 %v803, 0.0
      %v836 = vmax.f32 %v804, 0.0
      %v837 = vmax.f32 %v805, 0.0
      %v838 = vmax.f32 %v806, 0.0
      %v839 = vmax.f32 %v807, 0.0
      %v840 = vmax.f32 %v808, 0.0
      %v841 = vmax.f32 %v809, 0.0
      %v842 = vmax.f32 %v810, 0.0
      %v843 = vmax.f32 %v811, 0.0
      %v844 = vmax.f32 %v812, 0.0
      %v845 = vmax.f32 %v813, 0.0
      %v846 = vmax.f32 %v814, 0.0
      %v847 = vmax.f32 %v815, 0.0
      %v848 = vmax.f32 %v816, 0.0
      %v849 = vmax.f32 %v817, 0.0
      %v850 = vmax.f32 %v818, 0.0
      %v851 = vmax.f32 %v819, 0.0
      %v852 = vmin.f32 %v820, 6.0
      %v853 = vmin.f32 %v821, 6.0
      %v854 = vmin.f32 %v822, 6.0
      %v855 = vmin.f32 %v823, 6.0
      %v856 = vmin.f32 %v824, 6.0
      %v857 = vmin.f32 %v825, 6.0
      %v858 = vmin.f32 %v826, 6.0
      %v859 = vmin.f32 %v827, 6.0
      %v860 = vmin.f32 %v828, 6.0
      %v861 = vmin.f32 %v829, 6.0
      %v862 = vmin.f32 %v830, 6.0
      %v863 = vmin.f32 %v831, 6.0
      %v864 = vmin.f32 %v832, 6.0
      %v865 = vmin.f32 %v833, 6.0
      %v866 = vmin.f32 %v834, 6.0
      %v867 = vmin.f32 %v835, 6.0
      %v868 = vmin.f32 %v836, 6.0
      %v869 = vmin.f32 %v837, 6.0
      %v870 = vmin.f32 %v838, 6.0
      %v871 = vmin.f32 %v839, 6.0
      %v872 = vmin.f32 %v840, 6.0
      %v873 = vmin.f32 %v841, 6.0
      %v874 = vmin.f32 %v842, 6.0
      %v875 = vmin.f32 %v843, 6.0
      %v876 = vmin.f32 %v844, 6.0
      %v877 = vmin.f32 %v845, 6.0
      %v878 = vmin.f32 %v846, 6.0
      %v879 = vmin.f32 %v847, 6.0
      %v880 = vmin.f32 %v848, 6.0
      %v881 = vmin.f32 %v849, 6.0
      %v882 = vmin.f32 %v850, 6.0
      %v883 = vmin.f32 %v851, 6.0
      %884 = vst [vmem:[#allocation2] sm:$0xff] 0.0
      %885 = vst [vmem:[#allocation2 + $0x8] sm:$0xff] 0.0
      %886 = vst [vmem:[#allocation2 + $0x10] sm:$0x3] 0.0
      %887 = vst [vmem:[#allocation2 + $0x18] sm:$0xff] 0.0
      %888 = vst [vmem:[#allocation2 + $0x20] sm:$0xff] 0.0
      %889 = vst [vmem:[#allocation2 + $0x28] sm:$0x3] 0.0
      %890 = vst [vmem:[#allocation2 + $0x30] sm:$0xff] 0.0
      %891 = vst [vmem:[#allocation2 + $0x38] sm:$0xff] 0.0
      %892 = vst [vmem:[#allocation2 + $0x40] sm:$0x3] 0.0
      %893 = vst [vmem:[#allocation2 + $0x48] sm:$0xff] 0.0
      %894 = vst [vmem:[#allocation2 + $0x50] sm:$0xff] 0.0
      %895 = vst [vmem:[#allocation2 + $0x58] sm:$0x3] 0.0
      %896 = vst [vmem:[#allocation2 + $0x60] sm:$0xff] 0.0
      %897 = vst [vmem:[#allocation2 + $0x68] sm:$0xff] 0.0
      %898 = vst [vmem:[#allocation2 + $0x70] sm:$0x3] 0.0
      %899 = vst [vmem:[#allocation2 + $0x78] sm:$0xff] 0.0
      %900 = vst [vmem:[#allocation2 + $0x80] sm:$0xff] 0.0
      %901 = vst [vmem:[#allocation2 + $0x88] sm:$0x3] 0.0
      %902 = vst [vmem:[#allocation2 + $0x90] sm:$0xff] 0.0
      %903 = vst [vmem:[#allocation2 + $0x98] sm:$0xff] 0.0
      %904 = vst [vmem:[#allocation2 + $0xa0] sm:$0x3] 0.0
      %905 = vst [vmem:[#allocation2 + $0xa8] sm:$0xff] 0.0
      %906 = vst [vmem:[#allocation2 + $0xb0] sm:$0xff] 0.0
      %907 = vst [vmem:[#allocation2 + $0xb8] sm:$0x3] 0.0
      %908 = vst [vmem:[#allocation2 + $0xc0] sm:$0xff] 0.0
      %909 = vst [vmem:[#allocation2 + $0xc8] sm:$0xff] 0.0
      %910 = vst [vmem:[#allocation2 + $0xd0] sm:$0x3] 0.0
      %911 = vst [vmem:[#allocation2 + $0xd8] sm:$0xff] 0.0
      %912 = vst [vmem:[#allocation2 + $0xe0] sm:$0xff] 0.0
      %913 = vst [vmem:[#allocation2 + $0xe8] sm:$0x3] 0.0
      %914 = vst [vmem:[#allocation2 + $0xf0] sm:$0xff] 0.0
      %915 = vst [vmem:[#allocation2 + $0xf8] sm:$0xff] 0.0
      %916 = vst [vmem:[#allocation2 + $0x100] sm:$0x3] 0.0
      %917 = vst [vmem:[#allocation2 + $0x108] sm:$0xff] 0.0
      %918 = vst [vmem:[#allocation2 + $0x110] sm:$0xff] 0.0
      %919 = vst [vmem:[#allocation2 + $0x118] sm:$0x3] 0.0
      %920 = vst [vmem:[#allocation2 + $0x120] sm:$0xff] 0.0
      %921 = vst [vmem:[#allocation2 + $0x128] sm:$0xff] 0.0
      %922 = vst [vmem:[#allocation2 + $0x130] sm:$0x3] 0.0
      %923 = vst [vmem:[#allocation2 + $0x138] sm:$0xff] 0.0
      %924 = vst [vmem:[#allocation2 + $0x140] sm:$0xff] 0.0
      %925 = vst [vmem:[#allocation2 + $0x148] sm:$0x3] 0.0
      %926 = vst [vmem:[#allocation2 + $0x150] sm:$0xff] 0.0
      %927 = vst [vmem:[#allocation2 + $0x158] sm:$0xff] 0.0
      %928 = vst [vmem:[#allocation2 + $0x160] sm:$0x3] 0.0
      %929 = vst [vmem:[#allocation2 + $0x168] sm:$0xff] 0.0
      %930 = vst [vmem:[#allocation2 + $0x170] sm:$0xff] 0.0
      %931 = vst [vmem:[#allocation2 + $0x178] sm:$0x3] 0.0
      %932 = vst [vmem:[#allocation2 + $0x180] sm:$0xff] 0.0
      %933 = vst [vmem:[#allocation2 + $0x188] sm:$0xff] 0.0
      %934 = vst [vmem:[#allocation2 + $0x190] sm:$0x3] 0.0
      %935 = vst [vmem:[#allocation2 + $0x198] sm:$0xff] 0.0
      %936 = vst [vmem:[#allocation2 + $0x1a0] sm:$0xff] 0.0
      %937 = vst [vmem:[#allocation2 + $0x1a8] sm:$0x3] 0.0
      %s938 = scalar_lea.vmem [#allocation2], 24
      %939 = vst [vmem:[%s938 + $0x1] sm:$0xff] %v852
      %940 = vst [vmem:[%s938 + $0x9] sm:$0xff] %v853
      %941 = vst [vmem:[%s938 + $0x19] sm:$0xff] %v854
      %942 = vst [vmem:[%s938 + $0x21] sm:$0xff] %v855
      %943 = vst [vmem:[%s938 + $0x31] sm:$0xff] %v856
      %944 = vst [vmem:[%s938 + $0x39] sm:$0xff] %v857
      %945 = vst [vmem:[%s938 + $0x49] sm:$0xff] %v858
      %946 = vst [vmem:[%s938 + $0x51] sm:$0xff] %v859
      %947 = vst [vmem:[%s938 + $0x61] sm:$0xff] %v860
      %948 = vst [vmem:[%s938 + $0x69] sm:$0xff] %v861
      %949 = vst [vmem:[%s938 + $0x79] sm:$0xff] %v862
      %950 = vst [vmem:[%s938 + $0x81] sm:$0xff] %v863
      %951 = vst [vmem:[%s938 + $0x91] sm:$0xff] %v864
      %952 = vst [vmem:[%s938 + $0x99] sm:$0xff] %v865
      %953 = vst [vmem:[%s938 + $0xa9] sm:$0xff] %v866
      %954 = vst [vmem:[%s938 + $0xb1] sm:$0xff] %v867
      %955 = vst [vmem:[%s938 + $0xc1] sm:$0xff] %v868
      %956 = vst [vmem:[%s938 + $0xc9] sm:$0xff] %v869
      %957 = vst [vmem:[%s938 + $0xd9] sm:$0xff] %v870
      %958 = vst [vmem:[%s938 + $0xe1] sm:$0xff] %v871
      %959 = vst [vmem:[%s938 + $0xf1] sm:$0xff] %v872
      %960 = vst [vmem:[%s938 + $0xf9] sm:$0xff] %v873
      %961 = vst [vmem:[%s938 + $0x109] sm:$0xff] %v874
      %962 = vst [vmem:[%s938 + $0x111] sm:$0xff] %v875
      %963 = vst [vmem:[%s938 + $0x121] sm:$0xff] %v876
      %964 = vst [vmem:[%s938 + $0x129] sm:$0xff] %v877
      %965 = vst [vmem:[%s938 + $0x139] sm:$0xff] %v878
      %966 = vst [vmem:[%s938 + $0x141] sm:$0xff] %v879
      %967 = vst [vmem:[%s938 + $0x151] sm:$0xff] %v880
      %968 = vst [vmem:[%s938 + $0x159] sm:$0xff] %v881
      %969 = vst [vmem:[%s938 + $0x169] sm:$0xff] %v882
      %970 = vst [vmem:[%s938 + $0x171] sm:$0xff] %v883
      %v971 = vld [vmem:[%s4] sm:$0xff]
      %v972 = vld [vmem:[%s4 + $0x8] sm:$0x1]
      %v973 = vld [vmem:[#allocation2] sm:$0xff]
      %v974 = vld [vmem:[#allocation2 + $0x8] sm:$0xff]
      %v975 = vld [vmem:[#allocation2 + $0x18] sm:$0xff]
      %v976 = vld [vmem:[#allocation2 + $0x20] sm:$0xff]
      %v977 = vld [vmem:[#allocation2 + $0x30] sm:$0xff]
      %v978 = vld [vmem:[#allocation2 + $0x38] sm:$0xff]
      %v979 = vld [vmem:[#allocation2 + $0x48] sm:$0xff]
      %v980 = vld [vmem:[#allocation2 + $0x50] sm:$0xff]
      %v981 = vld [vmem:[#allocation2 + $0x60] sm:$0xff]
      %v982 = vld [vmem:[#allocation2 + $0x68] sm:$0xff]
      %v983 = vld [vmem:[#allocation2 + $0x78] sm:$0xff]
      %v984 = vld [vmem:[#allocation2 + $0x80] sm:$0xff]
      %v985 = vld [vmem:[#allocation2 + $0x90] sm:$0xff]
      %v986 = vld [vmem:[#allocation2 + $0x98] sm:$0xff]
      %v987 = vld [vmem:[#allocation2 + $0xa8] sm:$0xff]
      %v988 = vld [vmem:[#allocation2 + $0xb0] sm:$0xff]
      %v989 = vld [vmem:[#allocation2 + $0xc0] sm:$0xff]
      %v990 = vld [vmem:[#allocation2 + $0xc8] sm:$0xff]
      %v991 = vld [vmem:[#allocation2 + $0xd8] sm:$0xff]
      %v992 = vld [vmem:[#allocation2 + $0xe0] sm:$0xff]
      %v993 = vld [vmem:[#allocation2 + $0xf0] sm:$0xff]
      %v994 = vld [vmem:[#allocation2 + $0xf8] sm:$0xff]
      %v995 = vld [vmem:[#allocation2 + $0x108] sm:$0xff]
      %v996 = vld [vmem:[#allocation2 + $0x110] sm:$0xff]
      %v997 = vld [vmem:[#allocation2 + $0x120] sm:$0xff]
      %v998 = vld [vmem:[#allocation2 + $0x128] sm:$0xff]
      %v999 = vld [vmem:[#allocation2 + $0x138] sm:$0xff]
      %v1000 = vld [vmem:[#allocation2 + $0x140] sm:$0xff]
      %v1001 = vld [vmem:[#allocation2 + $0x150] sm:$0xff]
      %v1002 = vld [vmem:[#allocation2 + $0x158] sm:$0xff]
      %v1003 = vld [vmem:[#allocation2 + $0x168] sm:$0xff]
      %v1004 = vld [vmem:[#allocation2 + $0x170] sm:$0xff]
      %v1005 = vlaneseq
      %v1006 = vshrl.u32 %v1005, 7
      %v1007 = vsub.s32 0, %v1006
      %v1008 = vrot.slane %v971, %v1007
      %v1009 = vmul.f32 %v973, %v1008
      %v1010 = vmul.f32 %v974, %v1008
      %v1011 = vmul.f32 %v975, %v1008
      %v1012 = vmul.f32 %v976, %v1008
      %v1013 = vmul.f32 %v977, %v1008
      %v1014 = vmul.f32 %v978, %v1008
      %v1015 = vmul.f32 %v979, %v1008
      %v1016 = vmul.f32 %v980, %v1008
      %v1017 = vmul.f32 %v981, %v1008
      %v1018 = vmul.f32 %v982, %v1008
      %v1019 = vmul.f32 %v983, %v1008
      %v1020 = vmul.f32 %v984, %v1008
      %v1021 = vmul.f32 %v985, %v1008
      %v1022 = vmul.f32 %v986, %v1008
      %v1023 = vmul.f32 %v987, %v1008
      %v1024 = vmul.f32 %v988, %v1008
      %v1025 = vmul.f32 %v989, %v1008
      %v1026 = vmul.f32 %v990, %v1008
      %v1027 = vmul.f32 %v991, %v1008
      %v1028 = vmul.f32 %v992, %v1008
      %v1029 = vmul.f32 %v993, %v1008
      %v1030 = vmul.f32 %v994, %v1008
      %v1031 = vmul.f32 %v995, %v1008
      %v1032 = vmul.f32 %v996, %v1008
      %v1033 = vmul.f32 %v997, %v1008
      %v1034 = vmul.f32 %v998, %v1008
      %v1035 = vmul.f32 %v999, %v1008
      %v1036 = vmul.f32 %v1000, %v1008
      %v1037 = vmul.f32 %v1001, %v1008
      %v1038 = vmul.f32 %v1002, %v1008
      %v1039 = vmul.f32 %v1003, %v1008
      %v1040 = vmul.f32 %v1004, %v1008
      %v1041 = vadd.f32 %v1009, 0.0
      %v1042 = vadd.f32 %v1010, 0.0
      %v1043 = vadd.f32 %v1011, 0.0
      %v1044 = vadd.f32 %v1012, 0.0
      %v1045 = vadd.f32 %v1013, 0.0
      %v1046 = vadd.f32 %v1014, 0.0
      %v1047 = vadd.f32 %v1015, 0.0
      %v1048 = vadd.f32 %v1016, 0.0
      %v1049 = vadd.f32 %v1017, 0.0
      %v1050 = vadd.f32 %v1018, 0.0
      %v1051 = vadd.f32 %v1019, 0.0
      %v1052 = vadd.f32 %v1020, 0.0
      %v1053 = vadd.f32 %v1021, 0.0
      %v1054 = vadd.f32 %v1022, 0.0
      %v1055 = vadd.f32 %v1023, 0.0
      %v1056 = vadd.f32 %v1024, 0.0
      %v1057 = vadd.f32 %v1025, 0.0
      %v1058 = vadd.f32 %v1026, 0.0
      %v1059 = vadd.f32 %v1027, 0.0
      %v1060 = vadd.f32 %v1028, 0.0
      %v1061 = vadd.f32 %v1029, 0.0
      %v1062 = vadd.f32 %v1030, 0.0
      %v1063 = vadd.f32 %v1031, 0.0
      %v1064 = vadd.f32 %v1032, 0.0
      %v1065 = vadd.f32 %v1033, 0.0
      %v1066 = vadd.f32 %v1034, 0.0
      %v1067 = vadd.f32 %v1035, 0.0
      %v1068 = vadd.f32 %v1036, 0.0
      %v1069 = vadd.f32 %v1037, 0.0
      %v1070 = vadd.f32 %v1038, 0.0
      %v1071 = vadd.f32 %v1039, 0.0
      %v1072 = vadd.f32 %v1040, 0.0
      %v1073 = vld [vmem:[#allocation2 + $0x1] sm:$0xff]
      %v1074 = vld [vmem:[#allocation2 + $0x9] sm:$0xff]
      %v1075 = vld [vmem:[#allocation2 + $0x19] sm:$0xff]
      %v1076 = vld [vmem:[#allocation2 + $0x21] sm:$0xff]
      %v1077 = vld [vmem:[#allocation2 + $0x31] sm:$0xff]
      %v1078 = vld [vmem:[#allocation2 + $0x39] sm:$0xff]
      %v1079 = vld [vmem:[#allocation2 + $0x49] sm:$0xff]
      %v1080 = vld [vmem:[#allocation2 + $0x51] sm:$0xff]
      %v1081 = vld [vmem:[#allocation2 + $0x61] sm:$0xff]
      %v1082 = vld [vmem:[#allocation2 + $0x69] sm:$0xff]
      %v1083 = vld [vmem:[#allocation2 + $0x79] sm:$0xff]
      %v1084 = vld [vmem:[#allocation2 + $0x81] sm:$0xff]
      %v1085 = vld [vmem:[#allocation2 + $0x91] sm:$0xff]
      %v1086 = vld [vmem:[#allocation2 + $0x99] sm:$0xff]
      %v1087 = vld [vmem:[#allocation2 + $0xa9] sm:$0xff]
      %v1088 = vld [vmem:[#allocation2 + $0xb1] sm:$0xff]
      %v1089 = vld [vmem:[#allocation2 + $0xc1] sm:$0xff]
      %v1090 = vld [vmem:[#allocation2 + $0xc9] sm:$0xff]
      %v1091 = vld [vmem:[#allocation2 + $0xd9] sm:$0xff]
      %v1092 = vld [vmem:[#allocation2 + $0xe1] sm:$0xff]
      %v1093 = vld [vmem:[#allocation2 + $0xf1] sm:$0xff]
      %v1094 = vld [vmem:[#allocation2 + $0xf9] sm:$0xff]
      %v1095 = vld [vmem:[#allocation2 + $0x109] sm:$0xff]
      %v1096 = vld [vmem:[#allocation2 + $0x111] sm:$0xff]
      %v1097 = vld [vmem:[#allocation2 + $0x121] sm:$0xff]
      %v1098 = vld [vmem:[#allocation2 + $0x129] sm:$0xff]
      %v1099 = vld [vmem:[#allocation2 + $0x139] sm:$0xff]
      %v1100 = vld [vmem:[#allocation2 + $0x141] sm:$0xff]
      %v1101 = vld [vmem:[#allocation2 + $0x151] sm:$0xff]
      %v1102 = vld [vmem:[#allocation2 + $0x159] sm:$0xff]
      %v1103 = vld [vmem:[#allocation2 + $0x169] sm:$0xff]
      %v1104 = vld [vmem:[#allocation2 + $0x171] sm:$0xff]
      %v1105 = vlaneseq
      %v1106 = vshrl.u32 %v1105, 7
      %v1107 = vsub.s32 1, %v1106
      %v1108 = vrot.slane %v971, %v1107
      %v1109 = vmul.f32 %v1073, %v1108
      %v1110 = vmul.f32 %v1074, %v1108
      %v1111 = vmul.f32 %v1075, %v1108
      %v1112 = vmul.f32 %v1076, %v1108
      %v1113 = vmul.f32 %v1077, %v1108
      %v1114 = vmul.f32 %v1078, %v1108
      %v1115 = vmul.f32 %v1079, %v1108
      %v1116 = vmul.f32 %v1080, %v1108
      %v1117 = vmul.f32 %v1081, %v1108
      %v1118 = vmul.f32 %v1082, %v1108
      %v1119 = vmul.f32 %v1083, %v1108
      %v1120 = vmul.f32 %v1084, %v1108
      %v1121 = vmul.f32 %v1085, %v1108
      %v1122 = vmul.f32 %v1086, %v1108
      %v1123 = vmul.f32 %v1087, %v1108
      %v1124 = vmul.f32 %v1088, %v1108
      %v1125 = vmul.f32 %v1089, %v1108
      %v1126 = vmul.f32 %v1090, %v1108
      %v1127 = vmul.f32 %v1091, %v1108
      %v1128 = vmul.f32 %v1092, %v1108
      %v1129 = vmul.f32 %v1093, %v1108
      %v1130 = vmul.f32 %v1094, %v1108
      %v1131 = vmul.f32 %v1095, %v1108
      %v1132 = vmul.f32 %v1096, %v1108
      %v1133 = vmul.f32 %v1097, %v1108
      %v1134 = vmul.f32 %v1098, %v1108
      %v1135 = vmul.f32 %v1099, %v1108
      %v1136 = vmul.f32 %v1100, %v1108
      %v1137 = vmul.f32 %v1101, %v1108
      %v1138 = vmul.f32 %v1102, %v1108
      %v1139 = vmul.f32 %v1103, %v1108
      %v1140 = vmul.f32 %v1104, %v1108
      %v1141 = vadd.f32 %v1041, %v1109
      %v1142 = vadd.f32 %v1042, %v1110
      %v1143 = vadd.f32 %v1043, %v1111
      %v1144 = vadd.f32 %v1044, %v1112
      %v1145 = vadd.f32 %v1045, %v1113
      %v1146 = vadd.f32 %v1046, %v1114
      %v1147 = vadd.f32 %v1047, %v1115
      %v1148 = vadd.f32 %v1048, %v1116
      %v1149 = vadd.f32 %v1049, %v1117
      %v1150 = vadd.f32 %v1050, %v1118
      %v1151 = vadd.f32 %v1051, %v1119
      %v1152 = vadd.f32 %v1052, %v1120
      %v1153 = vadd.f32 %v1053, %v1121
      %v1154 = vadd.f32 %v1054, %v1122
      %v1155 = vadd.f32 %v1055, %v1123
      %v1156 = vadd.f32 %v1056, %v1124
      %v1157 = vadd.f32 %v1057, %v1125
      %v1158 = vadd.f32 %v1058, %v1126
      %v1159 = vadd.f32 %v1059, %v1127
      %v1160 = vadd.f32 %v1060, %v1128
      %v1161 = vadd.f32 %v1061, %v1129
      %v1162 = vadd.f32 %v1062, %v1130
      %v1163 = vadd.f32 %v1063, %v1131
      %v1164 = vadd.f32 %v1064, %v1132
      %v1165 = vadd.f32 %v1065, %v1133
      %v1166 = vadd.f32 %v1066, %v1134
      %v1167 = vadd.f32 %v1067, %v1135
      %v1168 = vadd.f32 %v1068, %v1136
      %v1169 = vadd.f32 %v1069, %v1137
      %v1170 = vadd.f32 %v1070, %v1138
      %v1171 = vadd.f32 %v1071, %v1139
      %v1172 = vadd.f32 %v1072, %v1140
      %v1173 = vld [vmem:[#allocation2 + $0x2] sm:$0xff]
      %v1174 = vld [vmem:[#allocation2 + $0xa] sm:$0xff]
      %v1175 = vld [vmem:[#allocation2 + $0x1a] sm:$0xff]
      %v1176 = vld [vmem:[#allocation2 + $0x22] sm:$0xff]
      %v1177 = vld [vmem:[#allocation2 + $0x32] sm:$0xff]
      %v1178 = vld [vmem:[#allocation2 + $0x3a] sm:$0xff]
      %v1179 = vld [vmem:[#allocation2 + $0x4a] sm:$0xff]
      %v1180 = vld [vmem:[#allocation2 + $0x52] sm:$0xff]
      %v1181 = vld [vmem:[#allocation2 + $0x62] sm:$0xff]
      %v1182 = vld [vmem:[#allocation2 + $0x6a] sm:$0xff]
      %v1183 = vld [vmem:[#allocation2 + $0x7a] sm:$0xff]
      %v1184 = vld [vmem:[#allocation2 + $0x82] sm:$0xff]
      %v1185 = vld [vmem:[#allocation2 + $0x92] sm:$0xff]
      %v1186 = vld [vmem:[#allocation2 + $0x9a] sm:$0xff]
      %v1187 = vld [vmem:[#allocation2 + $0xaa] sm:$0xff]
      %v1188 = vld [vmem:[#allocation2 + $0xb2] sm:$0xff]
      %v1189 = vld [vmem:[#allocation2 + $0xc2] sm:$0xff]
      %v1190 = vld [vmem:[#allocation2 + $0xca] sm:$0xff]
      %v1191 = vld [vmem:[#allocation2 + $0xda] sm:$0xff]
      %v1192 = vld [vmem:[#allocation2 + $0xe2] sm:$0xff]
      %v1193 = vld [vmem:[#allocation2 + $0xf2] sm:$0xff]
      %v1194 = vld [vmem:[#allocation2 + $0xfa] sm:$0xff]
      %v1195 = vld [vmem:[#allocation2 + $0x10a] sm:$0xff]
      %v1196 = vld [vmem:[#allocation2 + $0x112] sm:$0xff]
      %v1197 = vld [vmem:[#allocation2 + $0x122] sm:$0xff]
      %v1198 = vld [vmem:[#allocation2 + $0x12a] sm:$0xff]
      %v1199 = vld [vmem:[#allocation2 + $0x13a] sm:$0xff]
      %v1200 = vld [vmem:[#allocation2 + $0x142] sm:$0xff]
      %v1201 = vld [vmem:[#allocation2 + $0x152] sm:$0xff]
      %v1202 = vld [vmem:[#allocation2 + $0x15a] sm:$0xff]
      %v1203 = vld [vmem:[#allocation2 + $0x16a] sm:$0xff]
      %v1204 = vld [vmem:[#allocation2 + $0x172] sm:$0xff]
      %v1205 = vlaneseq
      %v1206 = vshrl.u32 %v1205, 7
      %v1207 = vsub.s32 2, %v1206
      %v1208 = vrot.slane %v971, %v1207
      %v1209 = vmul.f32 %v1173, %v1208
      %v1210 = vmul.f32 %v1174, %v1208
      %v1211 = vmul.f32 %v1175, %v1208
      %v1212 = vmul.f32 %v1176, %v1208
      %v1213 = vmul.f32 %v1177, %v1208
      %v1214 = vmul.f32 %v1178, %v1208
      %v1215 = vmul.f32 %v1179, %v1208
      %v1216 = vmul.f32 %v1180, %v1208
      %v1217 = vmul.f32 %v1181, %v1208
      %v1218 = vmul.f32 %v1182, %v1208
      %v1219 = vmul.f32 %v1183, %v1208
      %v1220 = vmul.f32 %v1184, %v1208
      %v1221 = vmul.f32 %v1185, %v1208
      %v1222 = vmul.f32 %v1186, %v1208
      %v1223 = vmul.f32 %v1187, %v1208
      %v1224 = vmul.f32 %v1188, %v1208
      %v1225 = vmul.f32 %v1189, %v1208
      %v1226 = vmul.f32 %v1190, %v1208
      %v1227 = vmul.f32 %v1191, %v1208
      %v1228 = vmul.f32 %v1192, %v1208
      %v1229 = vmul.f32 %v1193, %v1208
      %v1230 = vmul.f32 %v1194, %v1208
      %v1231 = vmul.f32 %v1195, %v1208
      %v1232 = vmul.f32 %v1196, %v1208
      %v1233 = vmul.f32 %v1197, %v1208
      %v1234 = vmul.f32 %v1198, %v1208
      %v1235 = vmul.f32 %v1199, %v1208
      %v1236 = vmul.f32 %v1200, %v1208
      %v1237 = vmul.f32 %v1201, %v1208
      %v1238 = vmul.f32 %v1202, %v1208
      %v1239 = vmul.f32 %v1203, %v1208
      %v1240 = vmul.f32 %v1204, %v1208
      %v1241 = vadd.f32 %v1141, %v1209
      %v1242 = vadd.f32 %v1142, %v1210
      %v1243 = vadd.f32 %v1143, %v1211
      %v1244 = vadd.f32 %v1144, %v1212
      %v1245 = vadd.f32 %v1145, %v1213
      %v1246 = vadd.f32 %v1146, %v1214
      %v1247 = vadd.f32 %v1147, %v1215
      %v1248 = vadd.f32 %v1148, %v1216
      %v1249 = vadd.f32 %v1149, %v1217
      %v1250 = vadd.f32 %v1150, %v1218
      %v1251 = vadd.f32 %v1151, %v1219
      %v1252 = vadd.f32 %v1152, %v1220
      %v1253 = vadd.f32 %v1153, %v1221
      %v1254 = vadd.f32 %v1154, %v1222
      %v1255 = vadd.f32 %v1155, %v1223
      %v1256 = vadd.f32 %v1156, %v1224
      %v1257 = vadd.f32 %v1157, %v1225
      %v1258 = vadd.f32 %v1158, %v1226
      %v1259 = vadd.f32 %v1159, %v1227
      %v1260 = vadd.f32 %v1160, %v1228
      %v1261 = vadd.f32 %v1161, %v1229
      %v1262 = vadd.f32 %v1162, %v1230
      %v1263 = vadd.f32 %v1163, %v1231
      %v1264 = vadd.f32 %v1164, %v1232
      %v1265 = vadd.f32 %v1165, %v1233
      %v1266 = vadd.f32 %v1166, %v1234
      %v1267 = vadd.f32 %v1167, %v1235
      %v1268 = vadd.f32 %v1168, %v1236
      %v1269 = vadd.f32 %v1169, %v1237
      %v1270 = vadd.f32 %v1170, %v1238
      %v1271 = vadd.f32 %v1171, %v1239
      %v1272 = vadd.f32 %v1172, %v1240
      %v1273 = vld [vmem:[%s938] sm:$0xff]
      %v1274 = vld [vmem:[%s938 + $0x8] sm:$0xff]
      %v1275 = vld [vmem:[%s938 + $0x18] sm:$0xff]
      %v1276 = vld [vmem:[%s938 + $0x20] sm:$0xff]
      %v1277 = vld [vmem:[%s938 + $0x30] sm:$0xff]
      %v1278 = vld [vmem:[%s938 + $0x38] sm:$0xff]
      %v1279 = vld [vmem:[%s938 + $0x48] sm:$0xff]
      %v1280 = vld [vmem:[%s938 + $0x50] sm:$0xff]
      %v1281 = vld [vmem:[%s938 + $0x60] sm:$0xff]
      %v1282 = vld [vmem:[%s938 + $0x68] sm:$0xff]
      %v1283 = vld [vmem:[%s938 + $0x78] sm:$0xff]
      %v1284 = vld [vmem:[%s938 + $0x80] sm:$0xff]
      %v1285 = vld [vmem:[%s938 + $0x90] sm:$0xff]
      %v1286 = vld [vmem:[%s938 + $0x98] sm:$0xff]
      %v1287 = vld [vmem:[%s938 + $0xa8] sm:$0xff]
      %v1288 = vld [vmem:[%s938 + $0xb0] sm:$0xff]
      %v1289 = vld [vmem:[%s938 + $0xc0] sm:$0xff]
      %v1290 = vld [vmem:[%s938 + $0xc8] sm:$0xff]
      %v1291 = vld [vmem:[%s938 + $0xd8] sm:$0xff]
      %v1292 = vld [vmem:[%s938 + $0xe0] sm:$0xff]
      %v1293 = vld [vmem:[%s938 + $0xf0] sm:$0xff]
      %v1294 = vld [vmem:[%s938 + $0xf8] sm:$0xff]
      %v1295 = vld [vmem:[%s938 + $0x108] sm:$0xff]
      %v1296 = vld [vmem:[%s938 + $0x110] sm:$0xff]
      %v1297 = vld [vmem:[%s938 + $0x120] sm:$0xff]
      %v1298 = vld [vmem:[%s938 + $0x128] sm:$0xff]
      %v1299 = vld [vmem:[%s938 + $0x138] sm:$0xff]
      %v1300 = vld [vmem:[%s938 + $0x140] sm:$0xff]
      %v1301 = vld [vmem:[%s938 + $0x150] sm:$0xff]
      %v1302 = vld [vmem:[%s938 + $0x158] sm:$0xff]
      %v1303 = vld [vmem:[%s938 + $0x168] sm:$0xff]
      %v1304 = vld [vmem:[%s938 + $0x170] sm:$0xff]
      %v1305 = vlaneseq
      %v1306 = vshrl.u32 %v1305, 7
      %v1307 = vsub.s32 3, %v1306
      %v1308 = vrot.slane %v971, %v1307
      %v1309 = vmul.f32 %v1273, %v1308
      %v1310 = vmul.f32 %v1274, %v1308
      %v1311 = vmul.f32 %v1275, %v1308
      %v1312 = vmul.f32 %v1276, %v1308
      %v1313 = vmul.f32 %v1277, %v1308
      %v1314 = vmul.f32 %v1278, %v1308
      %v1315 = vmul.f32 %v1279, %v1308
      %v1316 = vmul.f32 %v1280, %v1308
      %v1317 = vmul.f32 %v1281, %v1308
      %v1318 = vmul.f32 %v1282, %v1308
      %v1319 = vmul.f32 %v1283, %v1308
      %v1320 = vmul.f32 %v1284, %v1308
      %v1321 = vmul.f32 %v1285, %v1308
      %v1322 = vmul.f32 %v1286, %v1308
      %v1323 = vmul.f32 %v1287, %v1308
      %v1324 = vmul.f32 %v1288, %v1308
      %v1325 = vmul.f32 %v1289, %v1308
      %v1326 = vmul.f32 %v1290, %v1308
      %v1327 = vmul.f32 %v1291, %v1308
      %v1328 = vmul.f32 %v1292, %v1308
      %v1329 = vmul.f32 %v1293, %v1308
      %v1330 = vmul.f32 %v1294, %v1308
      %v1331 = vmul.f32 %v1295, %v1308
      %v1332 = vmul.f32 %v1296, %v1308
      %v1333 = vmul.f32 %v1297, %v1308
      %v1334 = vmul.f32 %v1298, %v1308
      %v1335 = vmul.f32 %v1299, %v1308
      %v1336 = vmul.f32 %v1300, %v1308
      %v1337 = vmul.f32 %v1301, %v1308
      %v1338 = vmul.f32 %v1302, %v1308
      %v1339 = vmul.f32 %v1303, %v1308
      %v1340 = vmul.f32 %v1304, %v1308
      %v1341 = vadd.f32 %v1241, %v1309
      %v1342 = vadd.f32 %v1242, %v1310
      %v1343 = vadd.f32 %v1243, %v1311
      %v1344 = vadd.f32 %v1244, %v1312
      %v1345 = vadd.f32 %v1245, %v1313
      %v1346 = vadd.f32 %v1246, %v1314
      %v1347 = vadd.f32 %v1247, %v1315
      %v1348 = vadd.f32 %v1248, %v1316
      %v1349 = vadd.f32 %v1249, %v1317
      %v1350 = vadd.f32 %v1250, %v1318
      %v1351 = vadd.f32 %v1251, %v1319
      %v1352 = vadd.f32 %v1252, %v1320
      %v1353 = vadd.f32 %v1253, %v1321
      %v1354 = vadd.f32 %v1254, %v1322
      %v1355 = vadd.f32 %v1255, %v1323
      %v1356 = vadd.f32 %v1256, %v1324
      %v1357 = vadd.f32 %v1257, %v1325
      %v1358 = vadd.f32 %v1258, %v1326
      %v1359 = vadd.f32 %v1259, %v1327
      %v1360 = vadd.f32 %v1260, %v1328
      %v1361 = vadd.f32 %v1261, %v1329
      %v1362 = vadd.f32 %v1262, %v1330
      %v1363 = vadd.f32 %v1263, %v1331
      %v1364 = vadd.f32 %v1264, %v1332
      %v1365 = vadd.f32 %v1265, %v1333
      %v1366 = vadd.f32 %v1266, %v1334
      %v1367 = vadd.f32 %v1267, %v1335
      %v1368 = vadd.f32 %v1268, %v1336
      %v1369 = vadd.f32 %v1269, %v1337
      %v1370 = vadd.f32 %v1270, %v1338
      %v1371 = vadd.f32 %v1271, %v1339
      %v1372 = vadd.f32 %v1272, %v1340
      %v1373 = vld [vmem:[%s938 + $0x1] sm:$0xff]
      %v1374 = vld [vmem:[%s938 + $0x9] sm:$0xff]
      %v1375 = vld [vmem:[%s938 + $0x19] sm:$0xff]
      %v1376 = vld [vmem:[%s938 + $0x21] sm:$0xff]
      %v1377 = vld [vmem:[%s938 + $0x31] sm:$0xff]
      %v1378 = vld [vmem:[%s938 + $0x39] sm:$0xff]
      %v1379 = vld [vmem:[%s938 + $0x49] sm:$0xff]
      %v1380 = vld [vmem:[%s938 + $0x51] sm:$0xff]
      %v1381 = vld [vmem:[%s938 + $0x61] sm:$0xff]
      %v1382 = vld [vmem:[%s938 + $0x69] sm:$0xff]
      %v1383 = vld [vmem:[%s938 + $0x79] sm:$0xff]
      %v1384 = vld [vmem:[%s938 + $0x81] sm:$0xff]
      %v1385 = vld [vmem:[%s938 + $0x91] sm:$0xff]
      %v1386 = vld [vmem:[%s938 + $0x99] sm:$0xff]
      %v1387 = vld [vmem:[%s938 + $0xa9] sm:$0xff]
      %v1388 = vld [vmem:[%s938 + $0xb1] sm:$0xff]
      %v1389 = vld [vmem:[%s938 + $0xc1] sm:$0xff]
      %v1390 = vld [vmem:[%s938 + $0xc9] sm:$0xff]
      %v1391 = vld [vmem:[%s938 + $0xd9] sm:$0xff]
      %v1392 = vld [vmem:[%s938 + $0xe1] sm:$0xff]
      %v1393 = vld [vmem:[%s938 + $0xf1] sm:$0xff]
      %v1394 = vld [vmem:[%s938 + $0xf9] sm:$0xff]
      %v1395 = vld [vmem:[%s938 + $0x109] sm:$0xff]
      %v1396 = vld [vmem:[%s938 + $0x111] sm:$0xff]
      %v1397 = vld [vmem:[%s938 + $0x121] sm:$0xff]
      %v1398 = vld [vmem:[%s938 + $0x129] sm:$0xff]
      %v1399 = vld [vmem:[%s938 + $0x139] sm:$0xff]
      %v1400 = vld [vmem:[%s938 + $0x141] sm:$0xff]
      %v1401 = vld [vmem:[%s938 + $0x151] sm:$0xff]
      %v1402 = vld [vmem:[%s938 + $0x159] sm:$0xff]
      %v1403 = vld [vmem:[%s938 + $0x169] sm:$0xff]
      %v1404 = vld [vmem:[%s938 + $0x171] sm:$0xff]
      %v1405 = vlaneseq
      %v1406 = vshrl.u32 %v1405, 7
      %v1407 = vsub.s32 4, %v1406
      %v1408 = vrot.slane %v971, %v1407
      %v1409 = vmul.f32 %v1373, %v1408
      %v1410 = vmul.f32 %v1374, %v1408
      %v1411 = vmul.f32 %v1375, %v1408
      %v1412 = vmul.f32 %v1376, %v1408
      %v1413 = vmul.f32 %v1377, %v1408
      %v1414 = vmul.f32 %v1378, %v1408
      %v1415 = vmul.f32 %v1379, %v1408
      %v1416 = vmul.f32 %v1380, %v1408
      %v1417 = vmul.f32 %v1381, %v1408
      %v1418 = vmul.f32 %v1382, %v1408
      %v1419 = vmul.f32 %v1383, %v1408
      %v1420 = vmul.f32 %v1384, %v1408
      %v1421 = vmul.f32 %v1385, %v1408
      %v1422 = vmul.f32 %v1386, %v1408
      %v1423 = vmul.f32 %v1387, %v1408
      %v1424 = vmul.f32 %v1388, %v1408
      %v1425 = vmul.f32 %v1389, %v1408
      %v1426 = vmul.f32 %v1390, %v1408
      %v1427 = vmul.f32 %v1391, %v1408
      %v1428 = vmul.f32 %v1392, %v1408
      %v1429 = vmul.f32 %v1393, %v1408
      %v1430 = vmul.f32 %v1394, %v1408
      %v1431 = vmul.f32 %v1395, %v1408
      %v1432 = vmul.f32 %v1396, %v1408
      %v1433 = vmul.f32 %v1397, %v1408
      %v1434 = vmul.f32 %v1398, %v1408
      %v1435 = vmul.f32 %v1399, %v1408
      %v1436 = vmul.f32 %v1400, %v1408
      %v1437 = vmul.f32 %v1401, %v1408
      %v1438 = vmul.f32 %v1402, %v1408
      %v1439 = vmul.f32 %v1403, %v1408
      %v1440 = vmul.f32 %v1404, %v1408
      %v1441 = vadd.f32 %v1341, %v1409
      %v1442 = vadd.f32 %v1342, %v1410
      %v1443 = vadd.f32 %v1343, %v1411
      %v1444 = vadd.f32 %v1344, %v1412
      %v1445 = vadd.f32 %v1345, %v1413
      %v1446 = vadd.f32 %v1346, %v1414
      %v1447 = vadd.f32 %v1347, %v1415
      %v1448 = vadd.f32 %v1348, %v1416
      %v1449 = vadd.f32 %v1349, %v1417
      %v1450 = vadd.f32 %v1350, %v1418
      %v1451 = vadd.f32 %v1351, %v1419
      %v1452 = vadd.f32 %v1352, %v1420
      %v1453 = vadd.f32 %v1353, %v1421
      %v1454 = vadd.f32 %v1354, %v1422
      %v1455 = vadd.f32 %v1355, %v1423
      %v1456 = vadd.f32 %v1356, %v1424
      %v1457 = vadd.f32 %v1357, %v1425
      %v1458 = vadd.f32 %v1358, %v1426
      %v1459 = vadd.f32 %v1359, %v1427
      %v1460 = vadd.f32 %v1360, %v1428
      %v1461 = vadd.f32 %v1361, %v1429
      %v1462 = vadd.f32 %v1362, %v1430
      %v1463 = vadd.f32 %v1363, %v1431
      %v1464 = vadd.f32 %v1364, %v1432
      %v1465 = vadd.f32 %v1365, %v1433
      %v1466 = vadd.f32 %v1366, %v1434
      %v1467 = vadd.f32 %v1367, %v1435
      %v1468 = vadd.f32 %v1368, %v1436
      %v1469 = vadd.f32 %v1369, %v1437
      %v1470 = vadd.f32 %v1370, %v1438
      %v1471 = vadd.f32 %v1371, %v1439
      %v1472 = vadd.f32 %v1372, %v1440
      %v1473 = vld [vmem:[%s938 + $0x2] sm:$0xff]
      %v1474 = vld [vmem:[%s938 + $0xa] sm:$0xff]
      %v1475 = vld [vmem:[%s938 + $0x1a] sm:$0xff]
      %v1476 = vld [vmem:[%s938 + $0x22] sm:$0xff]
      %v1477 = vld [vmem:[%s938 + $0x32] sm:$0xff]
      %v1478 = vld [vmem:[%s938 + $0x3a] sm:$0xff]
      %v1479 = vld [vmem:[%s938 + $0x4a] sm:$0xff]
      %v1480 = vld [vmem:[%s938 + $0x52] sm:$0xff]
      %v1481 = vld [vmem:[%s938 + $0x62] sm:$0xff]
      %v1482 = vld [vmem:[%s938 + $0x6a] sm:$0xff]
      %v1483 = vld [vmem:[%s938 + $0x7a] sm:$0xff]
      %v1484 = vld [vmem:[%s938 + $0x82] sm:$0xff]
      %v1485 = vld [vmem:[%s938 + $0x92] sm:$0xff]
      %v1486 = vld [vmem:[%s938 + $0x9a] sm:$0xff]
      %v1487 = vld [vmem:[%s938 + $0xaa] sm:$0xff]
      %v1488 = vld [vmem:[%s938 + $0xb2] sm:$0xff]
      %v1489 = vld [vmem:[%s938 + $0xc2] sm:$0xff]
      %v1490 = vld [vmem:[%s938 + $0xca] sm:$0xff]
      %v1491 = vld [vmem:[%s938 + $0xda] sm:$0xff]
      %v1492 = vld [vmem:[%s938 + $0xe2] sm:$0xff]
      %v1493 = vld [vmem:[%s938 + $0xf2] sm:$0xff]
      %v1494 = vld [vmem:[%s938 + $0xfa] sm:$0xff]
      %v1495 = vld [vmem:[%s938 + $0x10a] sm:$0xff]
      %v1496 = vld [vmem:[%s938 + $0x112] sm:$0xff]
      %v1497 = vld [vmem:[%s938 + $0x122] sm:$0xff]
      %v1498 = vld [vmem:[%s938 + $0x12a] sm:$0xff]
      %v1499 = vld [vmem:[%s938 + $0x13a] sm:$0xff]
      %v1500 = vld [vmem:[%s938 + $0x142] sm:$0xff]
      %v1501 = vld [vmem:[%s938 + $0x152] sm:$0xff]
      %v1502 = vld [vmem:[%s938 + $0x15a] sm:$0xff]
      %v1503 = vld [vmem:[%s938 + $0x16a] sm:$0xff]
      %v1504 = vld [vmem:[%s938 + $0x172] sm:$0xff]
      %v1505 = vlaneseq
      %v1506 = vshrl.u32 %v1505, 7
      %v1507 = vsub.s32 5, %v1506
      %v1508 = vrot.slane %v971, %v1507
      %v1509 = vmul.f32 %v1473, %v1508
      %v1510 = vmul.f32 %v1474, %v1508
      %v1511 = vmul.f32 %v1475, %v1508
      %v1512 = vmul.f32 %v1476, %v1508
      %v1513 = vmul.f32 %v1477, %v1508
      %v1514 = vmul.f32 %v1478, %v1508
      %v1515 = vmul.f32 %v1479, %v1508
      %v1516 = vmul.f32 %v1480, %v1508
      %v1517 = vmul.f32 %v1481, %v1508
      %v1518 = vmul.f32 %v1482, %v1508
      %v1519 = vmul.f32 %v1483, %v1508
      %v1520 = vmul.f32 %v1484, %v1508
      %v1521 = vmul.f32 %v1485, %v1508
      %v1522 = vmul.f32 %v1486, %v1508
      %v1523 = vmul.f32 %v1487, %v1508
      %v1524 = vmul.f32 %v1488, %v1508
      %v1525 = vmul.f32 %v1489, %v1508
      %v1526 = vmul.f32 %v1490, %v1508
      %v1527 = vmul.f32 %v1491, %v1508
      %v1528 = vmul.f32 %v1492, %v1508
      %v1529 = vmul.f32 %v1493, %v1508
      %v1530 = vmul.f32 %v1494, %v1508
      %v1531 = vmul.f32 %v1495, %v1508
      %v1532 = vmul.f32 %v1496, %v1508
      %v1533 = vmul.f32 %v1497, %v1508
      %v1534 = vmul.f32 %v1498, %v1508
      %v1535 = vmul.f32 %v1499, %v1508
      %v1536 = vmul.f32 %v1500, %v1508
      %v1537 = vmul.f32 %v1501, %v1508
      %v1538 = vmul.f32 %v1502, %v1508
      %v1539 = vmul.f32 %v1503, %v1508
      %v1540 = vmul.f32 %v1504, %v1508
      %v1541 = vadd.f32 %v1441, %v1509
      %v1542 = vadd.f32 %v1442, %v1510
      %v1543 = vadd.f32 %v1443, %v1511
      %v1544 = vadd.f32 %v1444, %v1512
      %v1545 = vadd.f32 %v1445, %v1513
      %v1546 = vadd.f32 %v1446, %v1514
      %v1547 = vadd.f32 %v1447, %v1515
      %v1548 = vadd.f32 %v1448, %v1516
      %v1549 = vadd.f32 %v1449, %v1517
      %v1550 = vadd.f32 %v1450, %v1518
      %v1551 = vadd.f32 %v1451, %v1519
      %v1552 = vadd.f32 %v1452, %v1520
      %v1553 = vadd.f32 %v1453, %v1521
      %v1554 = vadd.f32 %v1454, %v1522
      %v1555 = vadd.f32 %v1455, %v1523
      %v1556 = vadd.f32 %v1456, %v1524
      %v1557 = vadd.f32 %v1457, %v1525
      %v1558 = vadd.f32 %v1458, %v1526
      %v1559 = vadd.f32 %v1459, %v1527
      %v1560 = vadd.f32 %v1460, %v1528
      %v1561 = vadd.f32 %v1461, %v1529
      %v1562 = vadd.f32 %v1462, %v1530
      %v1563 = vadd.f32 %v1463, %v1531
      %v1564 = vadd.f32 %v1464, %v1532
      %v1565 = vadd.f32 %v1465, %v1533
      %v1566 = vadd.f32 %v1466, %v1534
      %v1567 = vadd.f32 %v1467, %v1535
      %v1568 = vadd.f32 %v1468, %v1536
      %v1569 = vadd.f32 %v1469, %v1537
      %v1570 = vadd.f32 %v1470, %v1538
      %v1571 = vadd.f32 %v1471, %v1539
      %v1572 = vadd.f32 %v1472, %v1540
      %s1573 = scalar_lea.vmem [#allocation2], 48
      %v1574 = vld [vmem:[%s1573] sm:$0xff]
      %v1575 = vld [vmem:[%s1573 + $0x8] sm:$0xff]
      %v1576 = vld [vmem:[%s1573 + $0x18] sm:$0xff]
      %v1577 = vld [vmem:[%s1573 + $0x20] sm:$0xff]
      %v1578 = vld [vmem:[%s1573 + $0x30] sm:$0xff]
      %v1579 = vld [vmem:[%s1573 + $0x38] sm:$0xff]
      %v1580 = vld [vmem:[%s1573 + $0x48] sm:$0xff]
      %v1581 = vld [vmem:[%s1573 + $0x50] sm:$0xff]
      %v1582 = vld [vmem:[%s1573 + $0x60] sm:$0xff]
      %v1583 = vld [vmem:[%s1573 + $0x68] sm:$0xff]
      %v1584 = vld [vmem:[%s1573 + $0x78] sm:$0xff]
      %v1585 = vld [vmem:[%s1573 + $0x80] sm:$0xff]
      %v1586 = vld [vmem:[%s1573 + $0x90] sm:$0xff]
      %v1587 = vld [vmem:[%s1573 + $0x98] sm:$0xff]
      %v1588 = vld [vmem:[%s1573 + $0xa8] sm:$0xff]
      %v1589 = vld [vmem:[%s1573 + $0xb0] sm:$0xff]
      %v1590 = vld [vmem:[%s1573 + $0xc0] sm:$0xff]
      %v1591 = vld [vmem:[%s1573 + $0xc8] sm:$0xff]
      %v1592 = vld [vmem:[%s1573 + $0xd8] sm:$0xff]
      %v1593 = vld [vmem:[%s1573 + $0xe0] sm:$0xff]
      %v1594 = vld [vmem:[%s1573 + $0xf0] sm:$0xff]
      %v1595 = vld [vmem:[%s1573 + $0xf8] sm:$0xff]
      %v1596 = vld [vmem:[%s1573 + $0x108] sm:$0xff]
      %v1597 = vld [vmem:[%s1573 + $0x110] sm:$0xff]
      %v1598 = vld [vmem:[%s1573 + $0x120] sm:$0xff]
      %v1599 = vld [vmem:[%s1573 + $0x128] sm:$0xff]
      %v1600 = vld [vmem:[%s1573 + $0x138] sm:$0xff]
      %v1601 = vld [vmem:[%s1573 + $0x140] sm:$0xff]
      %v1602 = vld [vmem:[%s1573 + $0x150] sm:$0xff]
      %v1603 = vld [vmem:[%s1573 + $0x158] sm:$0xff]
      %v1604 = vld [vmem:[%s1573 + $0x168] sm:$0xff]
      %v1605 = vld [vmem:[%s1573 + $0x170] sm:$0xff]
      %v1606 = vlaneseq
      %v1607 = vshrl.u32 %v1606, 7
      %v1608 = vsub.s32 6, %v1607
      %v1609 = vrot.slane %v971, %v1608
      %v1610 = vmul.f32 %v1574, %v1609
      %v1611 = vmul.f32 %v1575, %v1609
      %v1612 = vmul.f32 %v1576, %v1609
      %v1613 = vmul.f32 %v1577, %v1609
      %v1614 = vmul.f32 %v1578, %v1609
      %v1615 = vmul.f32 %v1579, %v1609
      %v1616 = vmul.f32 %v1580, %v1609
      %v1617 = vmul.f32 %v1581, %v1609
      %v1618 = vmul.f32 %v1582, %v1609
      %v1619 = vmul.f32 %v1583, %v1609
      %v1620 = vmul.f32 %v1584, %v1609
      %v1621 = vmul.f32 %v1585, %v1609
      %v1622 = vmul.f32 %v1586, %v1609
      %v1623 = vmul.f32 %v1587, %v1609
      %v1624 = vmul.f32 %v1588, %v1609
      %v1625 = vmul.f32 %v1589, %v1609
      %v1626 = vmul.f32 %v1590, %v1609
      %v1627 = vmul.f32 %v1591, %v1609
      %v1628 = vmul.f32 %v1592, %v1609
      %v1629 = vmul.f32 %v1593, %v1609
      %v1630 = vmul.f32 %v1594, %v1609
      %v1631 = vmul.f32 %v1595, %v1609
      %v1632 = vmul.f32 %v1596, %v1609
      %v1633 = vmul.f32 %v1597, %v1609
      %v1634 = vmul.f32 %v1598, %v1609
      %v1635 = vmul.f32 %v1599, %v1609
      %v1636 = vmul.f32 %v1600, %v1609
      %v1637 = vmul.f32 %v1601, %v1609
      %v1638 = vmul.f32 %v1602, %v1609
      %v1639 = vmul.f32 %v1603, %v1609
      %v1640 = vmul.f32 %v1604, %v1609
      %v1641 = vmul.f32 %v1605, %v1609
      %v1642 = vadd.f32 %v1541, %v1610
      %v1643 = vadd.f32 %v1542, %v1611
      %v1644 = vadd.f32 %v1543, %v1612
      %v1645 = vadd.f32 %v1544, %v1613
      %v1646 = vadd.f32 %v1545, %v1614
      %v1647 = vadd.f32 %v1546, %v1615
      %v1648 = vadd.f32 %v1547, %v1616
      %v1649 = vadd.f32 %v1548, %v1617
      %v1650 = vadd.f32 %v1549, %v1618
      %v1651 = vadd.f32 %v1550, %v1619
      %v1652 = vadd.f32 %v1551, %v1620
      %v1653 = vadd.f32 %v1552, %v1621
      %v1654 = vadd.f32 %v1553, %v1622
      %v1655 = vadd.f32 %v1554, %v1623
      %v1656 = vadd.f32 %v1555, %v1624
      %v1657 = vadd.f32 %v1556, %v1625
      %v1658 = vadd.f32 %v1557, %v1626
      %v1659 = vadd.f32 %v1558, %v1627
      %v1660 = vadd.f32 %v1559, %v1628
      %v1661 = vadd.f32 %v1560, %v1629
      %v1662 = vadd.f32 %v1561, %v1630
      %v1663 = vadd.f32 %v1562, %v1631
      %v1664 = vadd.f32 %v1563, %v1632
      %v1665 = vadd.f32 %v1564, %v1633
      %v1666 = vadd.f32 %v1565, %v1634
      %v1667 = vadd.f32 %v1566, %v1635
      %v1668 = vadd.f32 %v1567, %v1636
      %v1669 = vadd.f32 %v1568, %v1637
      %v1670 = vadd.f32 %v1569, %v1638
      %v1671 = vadd.f32 %v1570, %v1639
      %v1672 = vadd.f32 %v1571, %v1640
      %v1673 = vadd.f32 %v1572, %v1641
      %v1674 = vld [vmem:[%s1573 + $0x1] sm:$0xff]
      %v1675 = vld [vmem:[%s1573 + $0x9] sm:$0xff]
      %v1676 = vld [vmem:[%s1573 + $0x19] sm:$0xff]
      %v1677 = vld [vmem:[%s1573 + $0x21] sm:$0xff]
      %v1678 = vld [vmem:[%s1573 + $0x31] sm:$0xff]
      %v1679 = vld [vmem:[%s1573 + $0x39] sm:$0xff]
      %v1680 = vld [vmem:[%s1573 + $0x49] sm:$0xff]
      %v1681 = vld [vmem:[%s1573 + $0x51] sm:$0xff]
      %v1682 = vld [vmem:[%s1573 + $0x61] sm:$0xff]
      %v1683 = vld [vmem:[%s1573 + $0x69] sm:$0xff]
      %v1684 = vld [vmem:[%s1573 + $0x79] sm:$0xff]
      %v1685 = vld [vmem:[%s1573 + $0x81] sm:$0xff]
      %v1686 = vld [vmem:[%s1573 + $0x91] sm:$0xff]
      %v1687 = vld [vmem:[%s1573 + $0x99] sm:$0xff]
      %v1688 = vld [vmem:[%s1573 + $0xa9] sm:$0xff]
      %v1689 = vld [vmem:[%s1573 + $0xb1] sm:$0xff]
      %v1690 = vld [vmem:[%s1573 + $0xc1] sm:$0xff]
      %v1691 = vld [vmem:[%s1573 + $0xc9] sm:$0xff]
      %v1692 = vld [vmem:[%s1573 + $0xd9] sm:$0xff]
      %v1693 = vld [vmem:[%s1573 + $0xe1] sm:$0xff]
      %v1694 = vld [vmem:[%s1573 + $0xf1] sm:$0xff]
      %v1695 = vld [vmem:[%s1573 + $0xf9] sm:$0xff]
      %v1696 = vld [vmem:[%s1573 + $0x109] sm:$0xff]
      %v1697 = vld [vmem:[%s1573 + $0x111] sm:$0xff]
      %v1698 = vld [vmem:[%s1573 + $0x121] sm:$0xff]
      %v1699 = vld [vmem:[%s1573 + $0x129] sm:$0xff]
      %v1700 = vld [vmem:[%s1573 + $0x139] sm:$0xff]
      %v1701 = vld [vmem:[%s1573 + $0x141] sm:$0xff]
      %v1702 = vld [vmem:[%s1573 + $0x151] sm:$0xff]
      %v1703 = vld [vmem:[%s1573 + $0x159] sm:$0xff]
      %v1704 = vld [vmem:[%s1573 + $0x169] sm:$0xff]
      %v1705 = vld [vmem:[%s1573 + $0x171] sm:$0xff]
      %v1706 = vlaneseq
      %v1707 = vshrl.u32 %v1706, 7
      %v1708 = vsub.s32 7, %v1707
      %v1709 = vrot.slane %v971, %v1708
      %v1710 = vmul.f32 %v1674, %v1709
      %v1711 = vmul.f32 %v1675, %v1709
      %v1712 = vmul.f32 %v1676, %v1709
      %v1713 = vmul.f32 %v1677, %v1709
      %v1714 = vmul.f32 %v1678, %v1709
      %v1715 = vmul.f32 %v1679, %v1709
      %v1716 = vmul.f32 %v1680, %v1709
      %v1717 = vmul.f32 %v1681, %v1709
      %v1718 = vmul.f32 %v1682, %v1709
      %v1719 = vmul.f32 %v1683, %v1709
      %v1720 = vmul.f32 %v1684, %v1709
      %v1721 = vmul.f32 %v1685, %v1709
      %v1722 = vmul.f32 %v1686, %v1709
      %v1723 = vmul.f32 %v1687, %v1709
      %v1724 = vmul.f32 %v1688, %v1709
      %v1725 = vmul.f32 %v1689, %v1709
      %v1726 = vmul.f32 %v1690, %v1709
      %v1727 = vmul.f32 %v1691, %v1709
      %v1728 = vmul.f32 %v1692, %v1709
      %v1729 = vmul.f32 %v1693, %v1709
      %v1730 = vmul.f32 %v1694, %v1709
      %v1731 = vmul.f32 %v1695, %v1709
      %v1732 = vmul.f32 %v1696, %v1709
      %v1733 = vmul.f32 %v1697, %v1709
      %v1734 = vmul.f32 %v1698, %v1709
      %v1735 = vmul.f32 %v1699, %v1709
      %v1736 = vmul.f32 %v1700, %v1709
      %v1737 = vmul.f32 %v1701, %v1709
      %v1738 = vmul.f32 %v1702, %v1709
      %v1739 = vmul.f32 %v1703, %v1709
      %v1740 = vmul.f32 %v1704, %v1709
      %v1741 = vmul.f32 %v1705, %v1709
      %v1742 = vadd.f32 %v1642, %v1710
      %v1743 = vadd.f32 %v1643, %v1711
      %v1744 = vadd.f32 %v1644, %v1712
      %v1745 = vadd.f32 %v1645, %v1713
      %v1746 = vadd.f32 %v1646, %v1714
      %v1747 = vadd.f32 %v1647, %v1715
      %v1748 = vadd.f32 %v1648, %v1716
      %v1749 = vadd.f32 %v1649, %v1717
      %v1750 = vadd.f32 %v1650, %v1718
      %v1751 = vadd.f32 %v1651, %v1719
      %v1752 = vadd.f32 %v1652, %v1720
      %v1753 = vadd.f32 %v1653, %v1721
      %v1754 = vadd.f32 %v1654, %v1722
      %v1755 = vadd.f32 %v1655, %v1723
      %v1756 = vadd.f32 %v1656, %v1724
      %v1757 = vadd.f32 %v1657, %v1725
      %v1758 = vadd.f32 %v1658, %v1726
      %v1759 = vadd.f32 %v1659, %v1727
      %v1760 = vadd.f32 %v1660, %v1728
      %v1761 = vadd.f32 %v1661, %v1729
      %v1762 = vadd.f32 %v1662, %v1730
      %v1763 = vadd.f32 %v1663, %v1731
      %v1764 = vadd.f32 %v1664, %v1732
      %v1765 = vadd.f32 %v1665, %v1733
      %v1766 = vadd.f32 %v1666, %v1734
      %v1767 = vadd.f32 %v1667, %v1735
      %v1768 = vadd.f32 %v1668, %v1736
      %v1769 = vadd.f32 %v1669, %v1737
      %v1770 = vadd.f32 %v1670, %v1738
      %v1771 = vadd.f32 %v1671, %v1739
      %v1772 = vadd.f32 %v1672, %v1740
      %v1773 = vadd.f32 %v1673, %v1741
      %v1774 = vld [vmem:[%s1573 + $0x2] sm:$0xff]
      %v1775 = vld [vmem:[%s1573 + $0xa] sm:$0xff]
      %v1776 = vld [vmem:[%s1573 + $0x1a] sm:$0xff]
      %v1777 = vld [vmem:[%s1573 + $0x22] sm:$0xff]
      %v1778 = vld [vmem:[%s1573 + $0x32] sm:$0xff]
      %v1779 = vld [vmem:[%s1573 + $0x3a] sm:$0xff]
      %v1780 = vld [vmem:[%s1573 + $0x4a] sm:$0xff]
      %v1781 = vld [vmem:[%s1573 + $0x52] sm:$0xff]
      %v1782 = vld [vmem:[%s1573 + $0x62] sm:$0xff]
      %v1783 = vld [vmem:[%s1573 + $0x6a] sm:$0xff]
      %v1784 = vld [vmem:[%s1573 + $0x7a] sm:$0xff]
      %v1785 = vld [vmem:[%s1573 + $0x82] sm:$0xff]
      %v1786 = vld [vmem:[%s1573 + $0x92] sm:$0xff]
      %v1787 = vld [vmem:[%s1573 + $0x9a] sm:$0xff]
      %v1788 = vld [vmem:[%s1573 + $0xaa] sm:$0xff]
      %v1789 = vld [vmem:[%s1573 + $0xb2] sm:$0xff]
      %v1790 = vld [vmem:[%s1573 + $0xc2] sm:$0xff]
      %v1791 = vld [vmem:[%s1573 + $0xca] sm:$0xff]
      %v1792 = vld [vmem:[%s1573 + $0xda] sm:$0xff]
      %v1793 = vld [vmem:[%s1573 + $0xe2] sm:$0xff]
      %v1794 = vld [vmem:[%s1573 + $0xf2] sm:$0xff]
      %v1795 = vld [vmem:[%s1573 + $0xfa] sm:$0xff]
      %v1796 = vld [vmem:[%s1573 + $0x10a] sm:$0xff]
      %v1797 = vld [vmem:[%s1573 + $0x112] sm:$0xff]
      %v1798 = vld [vmem:[%s1573 + $0x122] sm:$0xff]
      %v1799 = vld [vmem:[%s1573 + $0x12a] sm:$0xff]
      %v1800 = vld [vmem:[%s1573 + $0x13a] sm:$0xff]
      %v1801 = vld [vmem:[%s1573 + $0x142] sm:$0xff]
      %v1802 = vld [vmem:[%s1573 + $0x152] sm:$0xff]
      %v1803 = vld [vmem:[%s1573 + $0x15a] sm:$0xff]
      %v1804 = vld [vmem:[%s1573 + $0x16a] sm:$0xff]
      %v1805 = vld [vmem:[%s1573 + $0x172] sm:$0xff]
      %v1806 = vlaneseq
      %v1807 = vshrl.u32 %v1806, 7
      %v1808 = vsub.s32 0, %v1807
      %v1809 = vrot.slane %v972, %v1808
      %v1810 = vmul.f32 %v1774, %v1809
      %v1811 = vmul.f32 %v1775, %v1809
      %v1812 = vmul.f32 %v1776, %v1809
      %v1813 = vmul.f32 %v1777, %v1809
      %v1814 = vmul.f32 %v1778, %v1809
      %v1815 = vmul.f32 %v1779, %v1809
      %v1816 = vmul.f32 %v1780, %v1809
      %v1817 = vmul.f32 %v1781, %v1809
      %v1818 = vmul.f32 %v1782, %v1809
      %v1819 = vmul.f32 %v1783, %v1809
      %v1820 = vmul.f32 %v1784, %v1809
      %v1821 = vmul.f32 %v1785, %v1809
      %v1822 = vmul.f32 %v1786, %v1809
      %v1823 = vmul.f32 %v1787, %v1809
      %v1824 = vmul.f32 %v1788, %v1809
      %v1825 = vmul.f32 %v1789, %v1809
      %v1826 = vmul.f32 %v1790, %v1809
      %v1827 = vmul.f32 %v1791, %v1809
      %v1828 = vmul.f32 %v1792, %v1809
      %v1829 = vmul.f32 %v1793, %v1809
      %v1830 = vmul.f32 %v1794, %v1809
      %v1831 = vmul.f32 %v1795, %v1809
      %v1832 = vmul.f32 %v1796, %v1809
      %v1833 = vmul.f32 %v1797, %v1809
      %v1834 = vmul.f32 %v1798, %v1809
      %v1835 = vmul.f32 %v1799, %v1809
      %v1836 = vmul.f32 %v1800, %v1809
      %v1837 = vmul.f32 %v1801, %v1809
      %v1838 = vmul.f32 %v1802, %v1809
      %v1839 = vmul.f32 %v1803, %v1809
      %v1840 = vmul.f32 %v1804, %v1809
      %v1841 = vmul.f32 %v1805, %v1809
      %v1842 = vadd.f32 %v1742, %v1810
      %v1843 = vadd.f32 %v1743, %v1811
      %v1844 = vadd.f32 %v1744, %v1812
      %v1845 = vadd.f32 %v1745, %v1813
      %v1846 = vadd.f32 %v1746, %v1814
      %v1847 = vadd.f32 %v1747, %v1815
      %v1848 = vadd.f32 %v1748, %v1816
      %v1849 = vadd.f32 %v1749, %v1817
      %v1850 = vadd.f32 %v1750, %v1818
      %v1851 = vadd.f32 %v1751, %v1819
      %v1852 = vadd.f32 %v1752, %v1820
      %v1853 = vadd.f32 %v1753, %v1821
      %v1854 = vadd.f32 %v1754, %v1822
      %v1855 = vadd.f32 %v1755, %v1823
      %v1856 = vadd.f32 %v1756, %v1824
      %v1857 = vadd.f32 %v1757, %v1825
      %v1858 = vadd.f32 %v1758, %v1826
      %v1859 = vadd.f32 %v1759, %v1827
      %v1860 = vadd.f32 %v1760, %v1828
      %v1861 = vadd.f32 %v1761, %v1829
      %v1862 = vadd.f32 %v1762, %v1830
      %v1863 = vadd.f32 %v1763, %v1831
      %v1864 = vadd.f32 %v1764, %v1832
      %v1865 = vadd.f32 %v1765, %v1833
      %v1866 = vadd.f32 %v1766, %v1834
      %v1867 = vadd.f32 %v1767, %v1835
      %v1868 = vadd.f32 %v1768, %v1836
      %v1869 = vadd.f32 %v1769, %v1837
      %v1870 = vadd.f32 %v1770, %v1838
      %v1871 = vadd.f32 %v1771, %v1839
      %v1872 = vadd.f32 %v1772, %v1840
      %v1873 = vadd.f32 %v1773, %v1841
      %v1874 = vld [vmem:[%s5] sm:$0x1]
      %v1876 = vlaneseq
      %v1877 = vshrl.u32 %v1876, 7
      %v1878 = vsub.s32 0, %v1877
      %v1879 = vrot.slane %v1874, %v1878
      %v1881 = vmul.f32 %v1842, %v1879
      %v1882 = vmul.f32 %v1843, %v1879
      %v1883 = vmul.f32 %v1844, %v1879
      %v1884 = vmul.f32 %v1845, %v1879
      %v1885 = vmul.f32 %v1846, %v1879
      %v1886 = vmul.f32 %v1847, %v1879
      %v1887 = vmul.f32 %v1848, %v1879
      %v1888 = vmul.f32 %v1849, %v1879
      %v1889 = vmul.f32 %v1850, %v1879
      %v1890 = vmul.f32 %v1851, %v1879
      %v1891 = vmul.f32 %v1852, %v1879
      %v1892 = vmul.f32 %v1853, %v1879
      %v1893 = vmul.f32 %v1854, %v1879
      %v1894 = vmul.f32 %v1855, %v1879
      %v1895 = vmul.f32 %v1856, %v1879
      %v1896 = vmul.f32 %v1857, %v1879
      %v1897 = vmul.f32 %v1858, %v1879
      %v1898 = vmul.f32 %v1859, %v1879
      %v1899 = vmul.f32 %v1860, %v1879
      %v1900 = vmul.f32 %v1861, %v1879
      %v1901 = vmul.f32 %v1862, %v1879
      %v1902 = vmul.f32 %v1863, %v1879
      %v1903 = vmul.f32 %v1864, %v1879
      %v1904 = vmul.f32 %v1865, %v1879
      %v1905 = vmul.f32 %v1866, %v1879
      %v1906 = vmul.f32 %v1867, %v1879
      %v1907 = vmul.f32 %v1868, %v1879
      %v1908 = vmul.f32 %v1869, %v1879
      %v1909 = vmul.f32 %v1870, %v1879
      %v1910 = vmul.f32 %v1871, %v1879
      %v1911 = vmul.f32 %v1872, %v1879
      %v1912 = vmul.f32 %v1873, %v1879
      %v1913 = vld [vmem:[%s6] sm:$0x1]
      %v1915 = vlaneseq
      %v1916 = vshrl.u32 %v1915, 7
      %v1917 = vsub.s32 0, %v1916
      %v1918 = vrot.slane %v1913, %v1917
      %v1920 = vadd.f32 %v1881, %v1918
      %v1921 = vadd.f32 %v1882, %v1918
      %v1922 = vadd.f32 %v1883, %v1918
      %v1923 = vadd.f32 %v1884, %v1918
      %v1924 = vadd.f32 %v1885, %v1918
      %v1925 = vadd.f32 %v1886, %v1918
      %v1926 = vadd.f32 %v1887, %v1918
      %v1927 = vadd.f32 %v1888, %v1918
      %v1928 = vadd.f32 %v1889, %v1918
      %v1929 = vadd.f32 %v1890, %v1918
      %v1930 = vadd.f32 %v1891, %v1918
      %v1931 = vadd.f32 %v1892, %v1918
      %v1932 = vadd.f32 %v1893, %v1918
      %v1933 = vadd.f32 %v1894, %v1918
      %v1934 = vadd.f32 %v1895, %v1918
      %v1935 = vadd.f32 %v1896, %v1918
      %v1936 = vadd.f32 %v1897, %v1918
      %v1937 = vadd.f32 %v1898, %v1918
      %v1938 = vadd.f32 %v1899, %v1918
      %v1939 = vadd.f32 %v1900, %v1918
      %v1940 = vadd.f32 %v1901, %v1918
      %v1941 = vadd.f32 %v1902, %v1918
      %v1942 = vadd.f32 %v1903, %v1918
      %v1943 = vadd.f32 %v1904, %v1918
      %v1944 = vadd.f32 %v1905, %v1918
      %v1945 = vadd.f32 %v1906, %v1918
      %v1946 = vadd.f32 %v1907, %v1918
      %v1947 = vadd.f32 %v1908, %v1918
      %v1948 = vadd.f32 %v1909, %v1918
      %v1949 = vadd.f32 %v1910, %v1918
      %v1950 = vadd.f32 %v1911, %v1918
      %v1951 = vadd.f32 %v1912, %v1918
      %v1952 = vmax.f32 %v1920, 0.0
      %v1953 = vmax.f32 %v1921, 0.0
      %v1954 = vmax.f32 %v1922, 0.0
      %v1955 = vmax.f32 %v1923, 0.0
      %v1956 = vmax.f32 %v1924, 0.0
      %v1957 = vmax.f32 %v1925, 0.0
      %v1958 = vmax.f32 %v1926, 0.0
      %v1959 = vmax.f32 %v1927, 0.0
      %v1960 = vmax.f32 %v1928, 0.0
      %v1961 = vmax.f32 %v1929, 0.0
      %v1962 = vmax.f32 %v1930, 0.0
      %v1963 = vmax.f32 %v1931, 0.0
      %v1964 = vmax.f32 %v1932, 0.0
      %v1965 = vmax.f32 %v1933, 0.0
      %v1966 = vmax.f32 %v1934, 0.0
      %v1967 = vmax.f32 %v1935, 0.0
      %v1968 = vmax.f32 %v1936, 0.0
      %v1969 = vmax.f32 %v1937, 0.0
      %v1970 = vmax.f32 %v1938, 0.0
      %v1971 = vmax.f32 %v1939, 0.0
      %v1972 = vmax.f32 %v1940, 0.0
      %v1973 = vmax.f32 %v1941, 0.0
      %v1974 = vmax.f32 %v1942, 0.0
      %v1975 = vmax.f32 %v1943, 0.0
      %v1976 = vmax.f32 %v1944, 0.0
      %v1977 = vmax.f32 %v1945, 0.0
      %v1978 = vmax.f32 %v1946, 0.0
      %v1979 = vmax.f32 %v1947, 0.0
      %v1980 = vmax.f32 %v1948, 0.0
      %v1981 = vmax.f32 %v1949, 0.0
      %v1982 = vmax.f32 %v1950, 0.0
      %v1983 = vmax.f32 %v1951, 0.0
      %v1984 = vmin.f32 %v1952, 6.0
      %v1985 = vmin.f32 %v1953, 6.0
      %v1986 = vmin.f32 %v1954, 6.0
      %v1987 = vmin.f32 %v1955, 6.0
      %v1988 = vmin.f32 %v1956, 6.0
      %v1989 = vmin.f32 %v1957, 6.0
      %v1990 = vmin.f32 %v1958, 6.0
      %v1991 = vmin.f32 %v1959, 6.0
      %v1992 = vmin.f32 %v1960, 6.0
      %v1993 = vmin.f32 %v1961, 6.0
      %v1994 = vmin.f32 %v1962, 6.0
      %v1995 = vmin.f32 %v1963, 6.0
      %v1996 = vmin.f32 %v1964, 6.0
      %v1997 = vmin.f32 %v1965, 6.0
      %v1998 = vmin.f32 %v1966, 6.0
      %v1999 = vmin.f32 %v1967, 6.0
      %v2000 = vmin.f32 %v1968, 6.0
      %v2001 = vmin.f32 %v1969, 6.0
      %v2002 = vmin.f32 %v1970, 6.0
      %v2003 = vmin.f32 %v1971, 6.0
      %v2004 = vmin.f32 %v1972, 6.0
      %v2005 = vmin.f32 %v1973, 6.0
      %v2006 = vmin.f32 %v1974, 6.0
      %v2007 = vmin.f32 %v1975, 6.0
      %v2008 = vmin.f32 %v1976, 6.0
      %v2009 = vmin.f32 %v1977, 6.0
      %v2010 = vmin.f32 %v1978, 6.0
      %v2011 = vmin.f32 %v1979, 6.0
      %v2012 = vmin.f32 %v1980, 6.0
      %v2013 = vmin.f32 %v1981, 6.0
      %v2014 = vmin.f32 %v1982, 6.0
      %v2015 = vmin.f32 %v1983, 6.0
      %v2016 = vpack.c.bf16 %v1985, %v1984
      %v2017 = vpack.c.bf16 %v1987, %v1986
      %v2018 = vpack.c.bf16 %v1989, %v1988
      %v2019 = vpack.c.bf16 %v1991, %v1990
      %v2020 = vpack.c.bf16 %v1993, %v1992
      %v2021 = vpack.c.bf16 %v1995, %v1994
      %v2022 = vpack.c.bf16 %v1997, %v1996
      %v2023 = vpack.c.bf16 %v1999, %v1998
      %v2024 = vpack.c.bf16 %v2001, %v2000
      %v2025 = vpack.c.bf16 %v2003, %v2002
      %v2026 = vpack.c.bf16 %v2005, %v2004
      %v2027 = vpack.c.bf16 %v2007, %v2006
      %v2028 = vpack.c.bf16 %v2009, %v2008
      %v2029 = vpack.c.bf16 %v2011, %v2010
      %v2030 = vpack.c.bf16 %v2013, %v2012
      %v2031 = vpack.c.bf16 %v2015, %v2014
      %v2032 = vld [vmem:[%s7] sm:$0xf]
      %v2033 = vld [vmem:[%s7 + $0x4] sm:$0xf]
      %v2034 = vld [vmem:[%s7 + $0x8] sm:$0xf]
      %v2035 = vld [vmem:[%s7 + $0xc] sm:$0xf]
      %v2036 = vld [vmem:[%s7 + $0x10] sm:$0xf]
      %v2037 = vld [vmem:[%s7 + $0x14] sm:$0xf]
      %v2038 = vld [vmem:[%s7 + $0x18] sm:$0xf]
      %v2039 = vld [vmem:[%s7 + $0x1c] sm:$0xf]
      %v2040 = vld [vmem:[%s7 + $0x20] sm:$0xf]
      %v2041 = vld [vmem:[%s7 + $0x24] sm:$0xf]
      %v2042 = vld [vmem:[%s7 + $0x28] sm:$0xf]
      %v2043 = vld [vmem:[%s7 + $0x2c] sm:$0xf]
      %v2044 = vld [vmem:[%s7 + $0x30] sm:$0xf]
      %v2045 = vld [vmem:[%s7 + $0x34] sm:$0xf]
      %v2046 = vld [vmem:[%s7 + $0x38] sm:$0xf]
      %v2047 = vld [vmem:[%s7 + $0x3c] sm:$0xf]
      %v2064 = vunpack.c.l.b16 %v2032
      %v2065 = vunpack.c.l.b16 %v2033
      %v2066 = vunpack.c.l.b16 %v2034
      %v2067 = vunpack.c.l.b16 %v2035
      %v2068 = vunpack.c.l.b16 %v2036
      %v2069 = vunpack.c.l.b16 %v2037
      %v2070 = vunpack.c.l.b16 %v2038
      %v2071 = vunpack.c.l.b16 %v2039
      %v2072 = vunpack.c.l.b16 %v2040
      %v2073 = vunpack.c.l.b16 %v2041
      %v2074 = vunpack.c.l.b16 %v2042
      %v2075 = vunpack.c.l.b16 %v2043
      %v2076 = vunpack.c.l.b16 %v2044
      %v2077 = vunpack.c.l.b16 %v2045
      %v2078 = vunpack.c.l.b16 %v2046
      %v2079 = vunpack.c.l.b16 %v2047
      %v2080 = vpack.c.b16 %v2065, %v2064
      %v2081 = vpack.c.b16 %v2067, %v2066
      %v2082 = vpack.c.b16 %v2069, %v2068
      %v2083 = vpack.c.b16 %v2071, %v2070
      %v2084 = vpack.c.b16 %v2073, %v2072
      %v2085 = vpack.c.b16 %v2075, %v2074
      %v2086 = vpack.c.b16 %v2077, %v2076
      %v2087 = vpack.c.b16 %v2079, %v2078
      %2096 = vmatprep.subr.bf16.mxu0 0
      %2097 = vmatpush1.bf16.msra.mxu0 %v2087
      %2098 = vmatprep.subr.bf16.mxu0 0
      %2099 = vmatpush1.bf16.msra.mxu0 %v2086
      %2100 = vmatprep.subr.bf16.mxu0 0
      %2101 = vmatpush1.bf16.msra.mxu0 %v2085
      %2102 = vmatprep.subr.bf16.mxu0 0
      %2103 = vmatpush1.bf16.msra.mxu0 %v2084
      %2104 = vmatprep.subr.bf16.mxu0 0
      %2105 = vmatpush1.bf16.msra.mxu0 %v2083
      %2106 = vmatprep.subr.bf16.mxu0 0
      %2107 = vmatpush1.bf16.msra.mxu0 %v2082
      %2108 = vmatprep.subr.bf16.mxu0 0
      %2109 = vmatpush1.bf16.msra.mxu0 %v2081
      %2110 = vmatprep.subr.bf16.mxu0 0
      %2111 = vmatpush1.bf16.msra.mxu0 %v2080
      %2112 = vmatprep.subr.bf16.mxu0 0
      %2113 = vmatpush2.bf16.msra.mxu0 0
      %2114 = vmatprep.subr.bf16.mxu0 0
      %2115 = vmatpush2.bf16.msra.mxu0 0
      %2116 = vmatprep.subr.bf16.mxu0 0
      %2117 = vmatpush2.bf16.msra.mxu0 0
      %2118 = vmatprep.subr.bf16.mxu0 0
      %2119 = vmatpush2.bf16.msra.mxu0 0
      %2120 = vmatprep.subr.bf16.mxu0 0
      %2121 = vmatpush2.bf16.msra.mxu0 0
      %2122 = vmatprep.subr.bf16.mxu0 0
      %2123 = vmatpush2.bf16.msra.mxu0 0
      %2124 = vmatprep.subr.bf16.mxu0 0
      %2125 = vmatpush2.bf16.msra.mxu0 0
      %2126 = vmatprep.subr.bf16.mxu0 0
      %2127 = vmatpush2.bf16.msra.mxu0 0
      %2128 = vmatprep.mubr.bf16.mxu0 0
      %2129 = vmatmul.mubr.bf16.gmra.mxu0 %v2016
      %v2130 = vpop.f32.mrf.mxu0
      %v2131 = vadd.f32 0.0, %v2130
      %v2132 = vpop.f32.mrf.mxu0
      %v2133 = vpop.f32.mrf.mxu0
      %v2134 = vadd.f32 0.0, %v2133
      %v2135 = vpop.f32.mrf.mxu0
      %2136 = vmatprep.mubr.bf16.mxu0 0
      %2137 = vmatmul.mubr.bf16.gmra.mxu0 %v2017
      %v2138 = vpop.f32.mrf.mxu0
      %v2139 = vadd.f32 0.0, %v2138
      %v2140 = vpop.f32.mrf.mxu0
      %v2141 = vpop.f32.mrf.mxu0
      %v2142 = vadd.f32 0.0, %v2141
      %v2143 = vpop.f32.mrf.mxu0
      %2144 = vmatprep.mubr.bf16.mxu0 0
      %2145 = vmatmul.mubr.bf16.gmra.mxu0 %v2018
      %v2146 = vpop.f32.mrf.mxu0
      %v2147 = vadd.f32 0.0, %v2146
      %v2148 = vpop.f32.mrf.mxu0
      %v2149 = vpop.f32.mrf.mxu0
      %v2150 = vadd.f32 0.0, %v2149
      %v2151 = vpop.f32.mrf.mxu0
      %2152 = vmatprep.mubr.bf16.mxu0 0
      %2153 = vmatmul.mubr.bf16.gmra.mxu0 %v2019
      %v2154 = vpop.f32.mrf.mxu0
      %v2155 = vadd.f32 0.0, %v2154
      %v2156 = vpop.f32.mrf.mxu0
      %v2157 = vpop.f32.mrf.mxu0
      %v2158 = vadd.f32 0.0, %v2157
      %v2159 = vpop.f32.mrf.mxu0
      %2160 = vmatprep.mubr.bf16.mxu0 0
      %2161 = vmatmul.mubr.bf16.gmra.mxu0 %v2020
      %v2162 = vpop.f32.mrf.mxu0
      %v2163 = vadd.f32 0.0, %v2162
      %v2164 = vpop.f32.mrf.mxu0
      %v2165 = vpop.f32.mrf.mxu0
      %v2166 = vadd.f32 0.0, %v2165
      %v2167 = vpop.f32.mrf.mxu0
      %2168 = vmatprep.mubr.bf16.mxu0 0
      %2169 = vmatmul.mubr.bf16.gmra.mxu0 %v2021
      %v2170 = vpop.f32.mrf.mxu0
      %v2171 = vadd.f32 0.0, %v2170
      %v2172 = vpop.f32.mrf.mxu0
      %v2173 = vpop.f32.mrf.mxu0
      %v2174 = vadd.f32 0.0, %v2173
      %v2175 = vpop.f32.mrf.mxu0
      %2176 = vmatprep.mubr.bf16.mxu0 0
      %2177 = vmatmul.mubr.bf16.gmra.mxu0 %v2022
      %v2178 = vpop.f32.mrf.mxu0
      %v2179 = vadd.f32 0.0, %v2178
      %v2180 = vpop.f32.mrf.mxu0
      %v2181 = vpop.f32.mrf.mxu0
      %v2182 = vadd.f32 0.0, %v2181
      %v2183 = vpop.f32.mrf.mxu0
      %2184 = vmatprep.mubr.bf16.mxu0 0
      %2185 = vmatmul.mubr.bf16.gmra.mxu0 %v2023
      %v2186 = vpop.f32.mrf.mxu0
      %v2187 = vadd.f32 0.0, %v2186
      %v2188 = vpop.f32.mrf.mxu0
      %v2189 = vpop.f32.mrf.mxu0
      %v2190 = vadd.f32 0.0, %v2189
      %v2191 = vpop.f32.mrf.mxu0
      %2192 = vmatprep.mubr.bf16.mxu0 0
      %2193 = vmatmul.mubr.bf16.gmra.mxu0 %v2024
      %v2194 = vpop.f32.mrf.mxu0
      %v2195 = vadd.f32 0.0, %v2194
      %v2196 = vpop.f32.mrf.mxu0
      %v2197 = vpop.f32.mrf.mxu0
      %v2198 = vadd.f32 0.0, %v2197
      %v2199 = vpop.f32.mrf.mxu0
      %2200 = vmatprep.mubr.bf16.mxu0 0
      %2201 = vmatmul.mubr.bf16.gmra.mxu0 %v2025
      %v2202 = vpop.f32.mrf.mxu0
      %v2203 = vadd.f32 0.0, %v2202
      %v2204 = vpop.f32.mrf.mxu0
      %v2205 = vpop.f32.mrf.mxu0
      %v2206 = vadd.f32 0.0, %v2205
      %v2207 = vpop.f32.mrf.mxu0
      %2208 = vmatprep.mubr.bf16.mxu0 0
      %2209 = vmatmul.mubr.bf16.gmra.mxu0 %v2026
      %v2210 = vpop.f32.mrf.mxu0
      %v2211 = vadd.f32 0.0, %v2210
      %v2212 = vpop.f32.mrf.mxu0
      %v2213 = vpop.f32.mrf.mxu0
      %v2214 = vadd.f32 0.0, %v2213
      %v2215 = vpop.f32.mrf.mxu0
      %2216 = vmatprep.mubr.bf16.mxu0 0
      %2217 = vmatmul.mubr.bf16.gmra.mxu0 %v2027
      %v2218 = vpop.f32.mrf.mxu0
      %v2219 = vadd.f32 0.0, %v2218
      %v2220 = vpop.f32.mrf.mxu0
      %v2221 = vpop.f32.mrf.mxu0
      %v2222 = vadd.f32 0.0, %v2221
      %v2223 = vpop.f32.mrf.mxu0
      %2224 = vmatprep.mubr.bf16.mxu0 0
      %2225 = vmatmul.mubr.bf16.gmra.mxu0 %v2028
      %v2226 = vpop.f32.mrf.mxu0
      %v2227 = vadd.f32 0.0, %v2226
      %v2228 = vpop.f32.mrf.mxu0
      %v2229 = vpop.f32.mrf.mxu0
      %v2230 = vadd.f32 0.0, %v2229
      %v2231 = vpop.f32.mrf.mxu0
      %2232 = vmatprep.mubr.bf16.mxu0 0
      %2233 = vmatmul.mubr.bf16.gmra.mxu0 %v2029
      %v2234 = vpop.f32.mrf.mxu0
      %v2235 = vadd.f32 0.0, %v2234
      %v2236 = vpop.f32.mrf.mxu0
      %v2237 = vpop.f32.mrf.mxu0
      %v2238 = vadd.f32 0.0, %v2237
      %v2239 = vpop.f32.mrf.mxu0
      %2240 = vmatprep.mubr.bf16.mxu0 0
      %2241 = vmatmul.mubr.bf16.gmra.mxu0 %v2030
      %v2242 = vpop.f32.mrf.mxu0
      %v2243 = vadd.f32 0.0, %v2242
      %v2244 = vpop.f32.mrf.mxu0
      %v2245 = vpop.f32.mrf.mxu0
      %v2246 = vadd.f32 0.0, %v2245
      %v2247 = vpop.f32.mrf.mxu0
      %2248 = vmatprep.mubr.bf16.mxu0 0
      %2249 = vmatmul.mubr.bf16.gmra.mxu0 %v2031
      %v2250 = vpop.f32.mrf.mxu0
      %v2251 = vadd.f32 0.0, %v2250
      %v2252 = vpop.f32.mrf.mxu0
      %v2253 = vpop.f32.mrf.mxu0
      %v2254 = vadd.f32 0.0, %v2253
      %v2255 = vpop.f32.mrf.mxu0
      %2256 = vdwg.mxu0
      %v2257 = vld [vmem:[%s8] sm:$0x1]
      %v2259 = vlaneseq
      %v2260 = vshrl.u32 %v2259, 7
      %v2261 = vsub.s32 0, %v2260
      %v2262 = vrot.slane %v2257, %v2261
      %v2264 = vmul.f32 %v2131, %v2262
      %v2265 = vmul.f32 %v2134, %v2262
      %v2266 = vmul.f32 %v2139, %v2262
      %v2267 = vmul.f32 %v2142, %v2262
      %v2268 = vmul.f32 %v2147, %v2262
      %v2269 = vmul.f32 %v2150, %v2262
      %v2270 = vmul.f32 %v2155, %v2262
      %v2271 = vmul.f32 %v2158, %v2262
      %v2272 = vmul.f32 %v2163, %v2262
      %v2273 = vmul.f32 %v2166, %v2262
      %v2274 = vmul.f32 %v2171, %v2262
      %v2275 = vmul.f32 %v2174, %v2262
      %v2276 = vmul.f32 %v2179, %v2262
      %v2277 = vmul.f32 %v2182, %v2262
      %v2278 = vmul.f32 %v2187, %v2262
      %v2279 = vmul.f32 %v2190, %v2262
      %v2280 = vmul.f32 %v2195, %v2262
      %v2281 = vmul.f32 %v2198, %v2262
      %v2282 = vmul.f32 %v2203, %v2262
      %v2283 = vmul.f32 %v2206, %v2262
      %v2284 = vmul.f32 %v2211, %v2262
      %v2285 = vmul.f32 %v2214, %v2262
      %v2286 = vmul.f32 %v2219, %v2262
      %v2287 = vmul.f32 %v2222, %v2262
      %v2288 = vmul.f32 %v2227, %v2262
      %v2289 = vmul.f32 %v2230, %v2262
      %v2290 = vmul.f32 %v2235, %v2262
      %v2291 = vmul.f32 %v2238, %v2262
      %v2292 = vmul.f32 %v2243, %v2262
      %v2293 = vmul.f32 %v2246, %v2262
      %v2294 = vmul.f32 %v2251, %v2262
      %v2295 = vmul.f32 %v2254, %v2262
      %v2296 = vld [vmem:[%s9] sm:$0x1]
      %v2298 = vlaneseq
      %v2299 = vshrl.u32 %v2298, 7
      %v2300 = vsub.s32 0, %v2299
      %v2301 = vrot.slane %v2296, %v2300
      %v2303 = vadd.f32 %v2264, %v2301
      %v2304 = vadd.f32 %v2265, %v2301
      %v2305 = vadd.f32 %v2266, %v2301
      %v2306 = vadd.f32 %v2267, %v2301
      %v2307 = vadd.f32 %v2268, %v2301
      %v2308 = vadd.f32 %v2269, %v2301
      %v2309 = vadd.f32 %v2270, %v2301
      %v2310 = vadd.f32 %v2271, %v2301
      %v2311 = vadd.f32 %v2272, %v2301
      %v2312 = vadd.f32 %v2273, %v2301
      %v2313 = vadd.f32 %v2274, %v2301
      %v2314 = vadd.f32 %v2275, %v2301
      %v2315 = vadd.f32 %v2276, %v2301
      %v2316 = vadd.f32 %v2277, %v2301
      %v2317 = vadd.f32 %v2278, %v2301
      %v2318 = vadd.f32 %v2279, %v2301
      %v2319 = vadd.f32 %v2280, %v2301
      %v2320 = vadd.f32 %v2281, %v2301
      %v2321 = vadd.f32 %v2282, %v2301
      %v2322 = vadd.f32 %v2283, %v2301
      %v2323 = vadd.f32 %v2284, %v2301
      %v2324 = vadd.f32 %v2285, %v2301
      %v2325 = vadd.f32 %v2286, %v2301
      %v2326 = vadd.f32 %v2287, %v2301
      %v2327 = vadd.f32 %v2288, %v2301
      %v2328 = vadd.f32 %v2289, %v2301
      %v2329 = vadd.f32 %v2290, %v2301
      %v2330 = vadd.f32 %v2291, %v2301
      %v2331 = vadd.f32 %v2292, %v2301
      %v2332 = vadd.f32 %v2293, %v2301
      %v2333 = vadd.f32 %v2294, %v2301
      %v2334 = vadd.f32 %v2295, %v2301
      %v2335 = vmax.f32 %v2303, 0.0
      %v2336 = vmax.f32 %v2304, 0.0
      %v2337 = vmax.f32 %v2305, 0.0
      %v2338 = vmax.f32 %v2306, 0.0
      %v2339 = vmax.f32 %v2307, 0.0
      %v2340 = vmax.f32 %v2308, 0.0
      %v2341 = vmax.f32 %v2309, 0.0
      %v2342 = vmax.f32 %v2310, 0.0
      %v2343 = vmax.f32 %v2311, 0.0
      %v2344 = vmax.f32 %v2312, 0.0
      %v2345 = vmax.f32 %v2313, 0.0
      %v2346 = vmax.f32 %v2314, 0.0
      %v2347 = vmax.f32 %v2315, 0.0
      %v2348 = vmax.f32 %v2316, 0.0
      %v2349 = vmax.f32 %v2317, 0.0
      %v2350 = vmax.f32 %v2318, 0.0
      %v2351 = vmax.f32 %v2319, 0.0
      %v2352 = vmax.f32 %v2320, 0.0
      %v2353 = vmax.f32 %v2321, 0.0
      %v2354 = vmax.f32 %v2322, 0.0
      %v2355 = vmax.f32 %v2323, 0.0
      %v2356 = vmax.f32 %v2324, 0.0
      %v2357 = vmax.f32 %v2325, 0.0
      %v2358 = vmax.f32 %v2326, 0.0
      %v2359 = vmax.f32 %v2327, 0.0
      %v2360 = vmax.f32 %v2328, 0.0
      %v2361 = vmax.f32 %v2329, 0.0
      %v2362 = vmax.f32 %v2330, 0.0
      %v2363 = vmax.f32 %v2331, 0.0
      %v2364 = vmax.f32 %v2332, 0.0
      %v2365 = vmax.f32 %v2333, 0.0
      %v2366 = vmax.f32 %v2334, 0.0
      %v2367 = vmin.f32 %v2335, 6.0
      %v2368 = vmin.f32 %v2336, 6.0
      %v2369 = vmin.f32 %v2337, 6.0
      %v2370 = vmin.f32 %v2338, 6.0
      %v2371 = vmin.f32 %v2339, 6.0
      %v2372 = vmin.f32 %v2340, 6.0
      %v2373 = vmin.f32 %v2341, 6.0
      %v2374 = vmin.f32 %v2342, 6.0
      %v2375 = vmin.f32 %v2343, 6.0
      %v2376 = vmin.f32 %v2344, 6.0
      %v2377 = vmin.f32 %v2345, 6.0
      %v2378 = vmin.f32 %v2346, 6.0
      %v2379 = vmin.f32 %v2347, 6.0
      %v2380 = vmin.f32 %v2348, 6.0
      %v2381 = vmin.f32 %v2349, 6.0
      %v2382 = vmin.f32 %v2350, 6.0
      %v2383 = vmin.f32 %v2351, 6.0
      %v2384 = vmin.f32 %v2352, 6.0
      %v2385 = vmin.f32 %v2353, 6.0
      %v2386 = vmin.f32 %v2354, 6.0
      %v2387 = vmin.f32 %v2355, 6.0
      %v2388 = vmin.f32 %v2356, 6.0
      %v2389 = vmin.f32 %v2357, 6.0
      %v2390 = vmin.f32 %v2358, 6.0
      %v2391 = vmin.f32 %v2359, 6.0
      %v2392 = vmin.f32 %v2360, 6.0
      %v2393 = vmin.f32 %v2361, 6.0
      %v2394 = vmin.f32 %v2362, 6.0
      %v2395 = vmin.f32 %v2363, 6.0
      %v2396 = vmin.f32 %v2364, 6.0
      %v2397 = vmin.f32 %v2365, 6.0
      %v2398 = vmin.f32 %v2366, 6.0
      %v2399 = vadd.f32 %v2367, %v469
      %v2400 = vadd.f32 %v2368, %v470
      %v2401 = vadd.f32 %v2369, %v471
      %v2402 = vadd.f32 %v2370, %v472
      %v2403 = vadd.f32 %v2371, %v473
      %v2404 = vadd.f32 %v2372, %v474
      %v2405 = vadd.f32 %v2373, %v475
      %v2406 = vadd.f32 %v2374, %v476
      %v2407 = vadd.f32 %v2375, %v477
      %v2408 = vadd.f32 %v2376, %v478
      %v2409 = vadd.f32 %v2377, %v479
      %v2410 = vadd.f32 %v2378, %v480
      %v2411 = vadd.f32 %v2379, %v481
      %v2412 = vadd.f32 %v2380, %v482
      %v2413 = vadd.f32 %v2381, %v483
      %v2414 = vadd.f32 %v2382, %v484
      %v2415 = vadd.f32 %v2383, %v485
      %v2416 = vadd.f32 %v2384, %v486
      %v2417 = vadd.f32 %v2385, %v487
      %v2418 = vadd.f32 %v2386, %v488
      %v2419 = vadd.f32 %v2387, %v489
      %v2420 = vadd.f32 %v2388, %v490
      %v2421 = vadd.f32 %v2389, %v491
      %v2422 = vadd.f32 %v2390, %v492
      %v2423 = vadd.f32 %v2391, %v493
      %v2424 = vadd.f32 %v2392, %v494
      %v2425 = vadd.f32 %v2393, %v495
      %v2426 = vadd.f32 %v2394, %v496
      %v2427 = vadd.f32 %v2395, %v497
      %v2428 = vadd.f32 %v2396, %v498
      %v2429 = vadd.f32 %v2397, %v499
      %v2430 = vadd.f32 %v2398, %v500
      %v2431 = vadd.f32 %v2399, %v2400
      %v2432 = vadd.f32 %v2431, %v2401
      %v2433 = vadd.f32 %v2432, %v2402
      %v2434 = vadd.f32 %v2433, %v2403
      %v2435 = vadd.f32 %v2434, %v2404
      %v2436 = vadd.f32 %v2435, %v2405
      %v2437 = vadd.f32 %v2436, %v2406
      %v2438 = vadd.f32 %v2437, %v2407
      %v2439 = vadd.f32 %v2438, %v2408
      %v2440 = vadd.f32 %v2439, %v2409
      %v2441 = vadd.f32 %v2440, %v2410
      %v2442 = vadd.f32 %v2441, %v2411
      %v2443 = vadd.f32 %v2442, %v2412
      %v2444 = vadd.f32 %v2443, %v2413
      %v2445 = vadd.f32 %v2444, %v2414
      %v2446 = vadd.f32 %v2445, %v2415
      %v2447 = vadd.f32 %v2446, %v2416
      %v2448 = vadd.f32 %v2447, %v2417
      %v2449 = vadd.f32 %v2448, %v2418
      %v2450 = vadd.f32 %v2449, %v2419
      %v2451 = vadd.f32 %v2450, %v2420
      %v2452 = vadd.f32 %v2451, %v2421
      %v2453 = vadd.f32 %v2452, %v2422
      %v2454 = vadd.f32 %v2453, %v2423
      %v2455 = vadd.f32 %v2454, %v2424
      %v2456 = vadd.f32 %v2455, %v2425
      %v2457 = vadd.f32 %v2456, %v2426
      %v2458 = vadd.f32 %v2457, %v2427
      %v2459 = vadd.f32 %v2458, %v2428
      %v2460 = vadd.f32 %v2459, %v2429
      %v2461 = vadd.f32 %v2460, %v2430
      %v2462 = vrot.slane %v2461, 4
      %v2463 = vadd.f32 %v2461, %v2462
      %v2464 = vrot.slane %v2463, 2
      %v2465 = vadd.f32 %v2463, %v2464
      %v2466 = vrot.slane %v2465, 1
      %v2467 = vadd.f32 %v2465, %v2466
      %v2468 = vrcp.pop 256.0
      %v2469 = vmul.f32 %v2467, %v2468
      %v2470 = vpack.c.bf16 %v2469, %v2469
      %v2471 = vld [vmem:[%s10] sm:$0xf]
      %v2472 = vld [vmem:[%s10 + $0x4] sm:$0xf]
      %v2473 = vld [vmem:[%s10 + $0x8] sm:$0xf]
      %v2474 = vld [vmem:[%s10 + $0xc] sm:$0xf]
      %v2475 = vld [vmem:[%s10 + $0x10] sm:$0xf]
      %v2476 = vld [vmem:[%s10 + $0x14] sm:$0xf]
      %v2477 = vld [vmem:[%s10 + $0x18] sm:$0xf]
      %v2478 = vld [vmem:[%s10 + $0x1c] sm:$0xf]
      %v2479 = vld [vmem:[%s10 + $0x20] sm:$0xf]
      %v2480 = vld [vmem:[%s10 + $0x24] sm:$0xf]
      %v2481 = vld [vmem:[%s10 + $0x28] sm:$0xf]
      %v2482 = vld [vmem:[%s10 + $0x2c] sm:$0xf]
      %v2483 = vld [vmem:[%s10 + $0x30] sm:$0xf]
      %v2484 = vld [vmem:[%s10 + $0x34] sm:$0xf]
      %v2485 = vld [vmem:[%s10 + $0x38] sm:$0xf]
      %v2486 = vld [vmem:[%s10 + $0x3c] sm:$0xf]
      %v2487 = vld [vmem:[%s11] sm:$0x1]
      %v2504 = vunpack.c.l.b16 %v2471
      %v2505 = vunpack.c.l.b16 %v2472
      %v2506 = vunpack.c.l.b16 %v2473
      %v2507 = vunpack.c.l.b16 %v2474
      %v2508 = vunpack.c.l.b16 %v2475
      %v2509 = vunpack.c.l.b16 %v2476
      %v2510 = vunpack.c.l.b16 %v2477
      %v2511 = vunpack.c.l.b16 %v2478
      %v2512 = vunpack.c.l.b16 %v2479
      %v2513 = vunpack.c.l.b16 %v2480
      %v2514 = vunpack.c.l.b16 %v2481
      %v2515 = vunpack.c.l.b16 %v2482
      %v2516 = vunpack.c.l.b16 %v2483
      %v2517 = vunpack.c.l.b16 %v2484
      %v2518 = vunpack.c.l.b16 %v2485
      %v2519 = vunpack.c.l.b16 %v2486
      %v2520 = vpack.c.b16 %v2505, %v2504
      %v2521 = vpack.c.b16 %v2507, %v2506
      %v2522 = vpack.c.b16 %v2509, %v2508
      %v2523 = vpack.c.b16 %v2511, %v2510
      %v2524 = vpack.c.b16 %v2513, %v2512
      %v2525 = vpack.c.b16 %v2515, %v2514
      %v2526 = vpack.c.b16 %v2517, %v2516
      %v2527 = vpack.c.b16 %v2519, %v2518
      %2536 = vmatprep.subr.bf16.mxu0 0
      %2537 = vmatpush1.bf16.msra.mxu0 %v2527
      %2538 = vmatprep.subr.bf16.mxu0 0
      %2539 = vmatpush1.bf16.msra.mxu0 %v2526
      %2540 = vmatprep.subr.bf16.mxu0 0
      %2541 = vmatpush1.bf16.msra.mxu0 %v2525
      %2542 = vmatprep.subr.bf16.mxu0 0
      %2543 = vmatpush1.bf16.msra.mxu0 %v2524
      %2544 = vmatprep.subr.bf16.mxu0 0
      %2545 = vmatpush1.bf16.msra.mxu0 %v2523
      %2546 = vmatprep.subr.bf16.mxu0 0
      %2547 = vmatpush1.bf16.msra.mxu0 %v2522
      %2548 = vmatprep.subr.bf16.mxu0 0
      %2549 = vmatpush1.bf16.msra.mxu0 %v2521
      %2550 = vmatprep.subr.bf16.mxu0 0
      %2551 = vmatpush1.bf16.msra.mxu0 %v2520
      %2552 = vmatprep.subr.bf16.mxu0 0
      %2553 = vmatpush2.bf16.msra.mxu0 0
      %2554 = vmatprep.subr.bf16.mxu0 0
      %2555 = vmatpush2.bf16.msra.mxu0 0
      %2556 = vmatprep.subr.bf16.mxu0 0
      %2557 = vmatpush2.bf16.msra.mxu0 0
      %2558 = vmatprep.subr.bf16.mxu0 0
      %2559 = vmatpush2.bf16.msra.mxu0 0
      %2560 = vmatprep.subr.bf16.mxu0 0
      %2561 = vmatpush2.bf16.msra.mxu0 0
      %2562 = vmatprep.subr.bf16.mxu0 0
      %2563 = vmatpush2.bf16.msra.mxu0 0
      %2564 = vmatprep.subr.bf16.mxu0 0
      %2565 = vmatpush2.bf16.msra.mxu0 0
      %2566 = vmatprep.subr.bf16.mxu0 0
      %2567 = vmatpush2.bf16.msra.mxu0 0
      %2568 = vmatprep.mubr.bf16.mxu0 0
      %2569 = vmatmul.mubr.bf16.gmra.mxu0 %v2470
      %v2570 = vpop.f32.mrf.mxu0
      %v2571 = vadd.f32 %v2487, %v2570
      %v2572 = vpop.f32.mrf.mxu0
      %v2573 = vpop.f32.mrf.mxu0
      %v2574 = vpop.f32.mrf.mxu0
      %2575 = vdwg.mxu0
      %v2576 = vmax.f32 %v2571, 0.0
      %v2577 = vpack.c.bf16 %v2576, %v2576
      %v2578 = vld [vmem:[%s12] sm:$0xf]
      %v2579 = vld [vmem:[%s12 + $0x4] sm:$0xf]
      %v2580 = vld [vmem:[%s12 + $0x8] sm:$0xf]
      %v2581 = vld [vmem:[%s12 + $0xc] sm:$0xf]
      %v2582 = vld [vmem:[%s12 + $0x10] sm:$0xf]
      %v2583 = vld [vmem:[%s12 + $0x14] sm:$0xf]
      %v2584 = vld [vmem:[%s12 + $0x18] sm:$0xf]
      %v2585 = vld [vmem:[%s12 + $0x1c] sm:$0xf]
      %v2586 = vld [vmem:[%s12 + $0x20] sm:$0xf]
      %v2587 = vld [vmem:[%s12 + $0x24] sm:$0xf]
      %v2588 = vld [vmem:[%s12 + $0x28] sm:$0xf]
      %v2589 = vld [vmem:[%s12 + $0x2c] sm:$0xf]
      %v2590 = vld [vmem:[%s12 + $0x30] sm:$0xf]
      %v2591 = vld [vmem:[%s12 + $0x34] sm:$0xf]
      %v2592 = vld [vmem:[%s12 + $0x38] sm:$0xf]
      %v2593 = vld [vmem:[%s12 + $0x3c] sm:$0xf]
      %v2594 = vld [vmem:[%s13] sm:$0x1]
      %v2611 = vunpack.c.l.b16 %v2578
      %v2612 = vunpack.c.l.b16 %v2579
      %v2613 = vunpack.c.l.b16 %v2580
      %v2614 = vunpack.c.l.b16 %v2581
      %v2615 = vunpack.c.l.b16 %v2582
      %v2616 = vunpack.c.l.b16 %v2583
      %v2617 = vunpack.c.l.b16 %v2584
      %v2618 = vunpack.c.l.b16 %v2585
      %v2619 = vunpack.c.l.b16 %v2586
      %v2620 = vunpack.c.l.b16 %v2587
      %v2621 = vunpack.c.l.b16 %v2588
      %v2622 = vunpack.c.l.b16 %v2589
      %v2623 = vunpack.c.l.b16 %v2590
      %v2624 = vunpack.c.l.b16 %v2591
      %v2625 = vunpack.c.l.b16 %v2592
      %v2626 = vunpack.c.l.b16 %v2593
      %v2627 = vpack.c.b16 %v2612, %v2611
      %v2628 = vpack.c.b16 %v2614, %v2613
      %v2629 = vpack.c.b16 %v2616, %v2615
      %v2630 = vpack.c.b16 %v2618, %v2617
      %v2631 = vpack.c.b16 %v2620, %v2619
      %v2632 = vpack.c.b16 %v2622, %v2621
      %v2633 = vpack.c.b16 %v2624, %v2623
      %v2634 = vpack.c.b16 %v2626, %v2625
      %2643 = vmatprep.subr.bf16.mxu0 0
      %2644 = vmatpush1.bf16.msra.mxu0 %v2634
      %2645 = vmatprep.subr.bf16.mxu0 0
      %2646 = vmatpush1.bf16.msra.mxu0 %v2633
      %2647 = vmatprep.subr.bf16.mxu0 0
      %2648 = vmatpush1.bf16.msra.mxu0 %v2632
      %2649 = vmatprep.subr.bf16.mxu0 0
      %2650 = vmatpush1.bf16.msra.mxu0 %v2631
      %2651 = vmatprep.subr.bf16.mxu0 0
      %2652 = vmatpush1.bf16.msra.mxu0 %v2630
      %2653 = vmatprep.subr.bf16.mxu0 0
      %2654 = vmatpush1.bf16.msra.mxu0 %v2629
      %2655 = vmatprep.subr.bf16.mxu0 0
      %2656 = vmatpush1.bf16.msra.mxu0 %v2628
      %2657 = vmatprep.subr.bf16.mxu0 0
      %2658 = vmatpush1.bf16.msra.mxu0 %v2627
      %2659 = vmatprep.subr.bf16.mxu0 0
      %2660 = vmatpush2.bf16.msra.mxu0 0
      %2661 = vmatprep.subr.bf16.mxu0 0
      %2662 = vmatpush2.bf16.msra.mxu0 0
      %2663 = vmatprep.subr.bf16.mxu0 0
      %2664 = vmatpush2.bf16.msra.mxu0 0
      %2665 = vmatprep.subr.bf16.mxu0 0
      %2666 = vmatpush2.bf16.msra.mxu0 0
      %2667 = vmatprep.subr.bf16.mxu0 0
      %2668 = vmatpush2.bf16.msra.mxu0 0
      %2669 = vmatprep.subr.bf16.mxu0 0
      %2670 = vmatpush2.bf16.msra.mxu0 0
      %2671 = vmatprep.subr.bf16.mxu0 0
      %2672 = vmatpush2.bf16.msra.mxu0 0
      %2673 = vmatprep.subr.bf16.mxu0 0
      %2674 = vmatpush2.bf16.msra.mxu0 0
      %2675 = vmatprep.mubr.bf16.mxu0 0
      %2676 = vmatmul.mubr.bf16.gmra.mxu0 %v2577
      %v2677 = vpop.f32.mrf.mxu0
      %v2678 = vadd.f32 %v2594, %v2677
      %v2679 = vpop.f32.mrf.mxu0
      %v2680 = vpop.f32.mrf.mxu0
      %v2681 = vpop.f32.mrf.mxu0
      %2682 = vdwg.mxu0
      %v2683 = vxor.u32 %v2678, 2147483648
      %v2684 = vmul.f32 %v2683, 1.442695
      %v2685 = vpow.pop %v2684
      %v2686 = vadd.f32 %v2685, 1.0
      %v2687 = vrcp.pop %v2686
      %v2688 = vmul.f32 1.0, %v2687
      %v2689 = vlaneseq
      %v2690 = vshrl.u32 %v2689, 7
      %v2691 = vsub.s32 0, %v2690
      %v2692 = vrot.slane %v2688, %v2691
      %v2693 = vmul.f32 %v2399, %v2692
      %v2694 = vmul.f32 %v2400, %v2692
      %v2695 = vmul.f32 %v2401, %v2692
      %v2696 = vmul.f32 %v2402, %v2692
      %v2697 = vmul.f32 %v2403, %v2692
      %v2698 = vmul.f32 %v2404, %v2692
      %v2699 = vmul.f32 %v2405, %v2692
      %v2700 = vmul.f32 %v2406, %v2692
      %v2701 = vmul.f32 %v2407, %v2692
      %v2702 = vmul.f32 %v2408, %v2692
      %v2703 = vmul.f32 %v2409, %v2692
      %v2704 = vmul.f32 %v2410, %v2692
      %v2705 = vmul.f32 %v2411, %v2692
      %v2706 = vmul.f32 %v2412, %v2692
      %v2707 = vmul.f32 %v2413, %v2692
      %v2708 = vmul.f32 %v2414, %v2692
      %v2709 = vmul.f32 %v2415, %v2692
      %v2710 = vmul.f32 %v2416, %v2692
      %v2711 = vmul.f32 %v2417, %v2692
      %v2712 = vmul.f32 %v2418, %v2692
      %v2713 = vmul.f32 %v2419, %v2692
      %v2714 = vmul.f32 %v2420, %v2692
      %v2715 = vmul.f32 %v2421, %v2692
      %v2716 = vmul.f32 %v2422, %v2692
      %v2717 = vmul.f32 %v2423, %v2692
      %v2718 = vmul.f32 %v2424, %v2692
      %v2719 = vmul.f32 %v2425, %v2692
      %v2720 = vmul.f32 %v2426, %v2692
      %v2721 = vmul.f32 %v2427, %v2692
      %v2722 = vmul.f32 %v2428, %v2692
      %v2723 = vmul.f32 %v2429, %v2692
      %v2724 = vmul.f32 %v2430, %v2692
      %2725 = vst [vmem:[%s467] sm:$0xff] %v2693
      %2726 = vst [vmem:[%s467 + $0x8] sm:$0xff] %v2694
      %2727 = vst [vmem:[%s467 + $0x10] sm:$0xff] %v2695
      %2728 = vst [vmem:[%s467 + $0x18] sm:$0xff] %v2696
      %2729 = vst [vmem:[%s467 + $0x20] sm:$0xff] %v2697
      %2730 = vst [vmem:[%s467 + $0x28] sm:$0xff] %v2698
      %2731 = vst [vmem:[%s467 + $0x30] sm:$0xff] %v2699
      %2732 = vst [vmem:[%s467 + $0x38] sm:$0xff] %v2700
      %2733 = vst [vmem:[%s467 + $0x40] sm:$0xff] %v2701
      %2734 = vst [vmem:[%s467 + $0x48] sm:$0xff] %v2702
      %2735 = vst [vmem:[%s467 + $0x50] sm:$0xff] %v2703
      %2736 = vst [vmem:[%s467 + $0x58] sm:$0xff] %v2704
      %2737 = vst [vmem:[%s467 + $0x60] sm:$0xff] %v2705
      %2738 = vst [vmem:[%s467 + $0x68] sm:$0xff] %v2706
      %2739 = vst [vmem:[%s467 + $0x70] sm:$0xff] %v2707
      %2740 = vst [vmem:[%s467 + $0x78] sm:$0xff] %v2708
      %2741 = vst [vmem:[%s467 + $0x80] sm:$0xff] %v2709
      %2742 = vst [vmem:[%s467 + $0x88] sm:$0xff] %v2710
      %2743 = vst [vmem:[%s467 + $0x90] sm:$0xff] %v2711
      %2744 = vst [vmem:[%s467 + $0x98] sm:$0xff] %v2712
      %2745 = vst [vmem:[%s467 + $0xa0] sm:$0xff] %v2713
      %2746 = vst [vmem:[%s467 + $0xa8] sm:$0xff] %v2714
      %2747 = vst [vmem:[%s467 + $0xb0] sm:$0xff] %v2715
      %2748 = vst [vmem:[%s467 + $0xb8] sm:$0xff] %v2716
      %2749 = vst [vmem:[%s467 + $0xc0] sm:$0xff] %v2717
      %2750 = vst [vmem:[%s467 + $0xc8] sm:$0xff] %v2718
      %2751 = vst [vmem:[%s467 + $0xd0] sm:$0xff] %v2719
      %2752 = vst [vmem:[%s467 + $0xd8] sm:$0xff] %v2720
      %2753 = vst [vmem:[%s467 + $0xe0] sm:$0xff] %v2721
      %2754 = vst [vmem:[%s467 + $0xe8] sm:$0xff] %v2722
      %2755 = vst [vmem:[%s467 + $0xf0] sm:$0xff] %v2723
      %2756 = vst [vmem:[%s467 + $0xf8] sm:$0xff] %v2724
      %p2757 = scmp.lt.s32.totalorder %s25, 1
      %s2758 = scalar_select %p2757, %s25, 1
      %s2759 = smul.addr %s2758, 32
      %s2760 = smul.addr %s2759, 8
      %s2761 = scalar_lea.vmem %s14, %s2760
      // Predicated region
      $region77: #{forward.3} parent=75 // pred_check
        %p2762 = pneg %p342
      $region78: #{forward.3} parent=75 // pred_check_branch
        %2764 = sbr.rel (%p2762) target = $region80
      $region79: #{forward.3} parent=75 // pred_region
        _
      $region80: #{forward.3} parent=75 // pred_fallthru
        _
    $region76: #{forward.3} parent=5 // pred_fallthru
      _
    %p2765 = scmp.le.s32.totalorder 2, %s20
    // Predicated region
    $region81: #{forward.3} parent=5 // pred_check
      %p2766 = pneg %p2765
    $region82: #{forward.3} parent=5 // pred_check_branch
      %2768 = sbr.rel (%p2766) target = $region84
    $region83: #{forward.3} parent=5 // pred_region
      %s2769 = ssub.s32 %s20, 2
      // Predicated region
      $region85: #{forward.3} parent=83 // pred_check
        %p2770 = pneg %p348
      $region86: #{forward.3} parent=83 // pred_check_branch
        %2772 = sbr.rel (%p2770) target = $region88
      $region87: #{forward.3} parent=83 // pred_region
        %p2773 = scmp.lt.s32.totalorder %s26, 1
        %s2774 = scalar_select %p2773, %s26, 1
        %s2775 = smul.addr %s2774, 32
        %s2776 = smul.addr %s2775, 8
        %s2777 = scalar_lea.vmem %s14, %s2776
      $region88: #{forward.3} parent=83 // pred_fallthru
        _
    $region84: #{forward.3} parent=5 // pred_fallthru
      _
  $region6: #{forward.3} parent=0 // loop_footer
    %s24 = sadd.s32 1, %s20
  $region7: #{forward.3} parent=0 // loop_footer_branch
    %19 = sbr.rel target = $region3
  $region8: #{forward.3} parent=0 // loop_exit
    _

</llo_original>
